<compile_context>
chip_gen: v6e
topology: v6e:2x2x1
jax: 0.10.0
libtpu: 0.0.40
codegen_flags: <defaults>
</compile_context>

<pallas_src>
import math

import jax
import jax.numpy as jnp
import numpy as np
from jax import lax
from jax.experimental import pallas as pl
from jax.experimental.pallas import tpu as pltpu

# ---------------- model config (small, consistent with the module) ----------
NUM_LAYERS = 2
NUM_HEADS = 4
D_KEY = 8
D_VALUE = 8
HIDDEN = NUM_HEADS * D_KEY            # 32 (== hidden_units, required by module)
INNER = 64
SEQ = 8
BATCH = 2
EPS = 1e-5
NEG = -1e9
# act = 'relu' (module also supports 'gelu'); attention_dropout = 0 -> identity

BS = BATCH * SEQ

# packed weight slab (input dim = HIDDEN for every block): [Wq|Wk|Wv | Wo | Wf1]
QKV_W = 3 * NUM_HEADS * D_KEY          # 96
WO0 = QKV_W                            # 96
WF10 = WO0 + HIDDEN                    # 128
W_IN_COLS = WF10 + INNER               # 192

# bias / LayerNorm vector slab: (L, 9, 128), one vector per row (lane offset 0)
(ROW_BQKV, ROW_BO, ROW_BF1, ROW_BF2,
 ROW_G1, ROW_BE1, ROW_G2, ROW_BE2, ROW_BH) = range(9)
N_VEC_ROWS = 9
VEC_LANES = 128

# lane-dense output slab layout: [final | enc_inputs (L blocks) | ind (L blocks)]
OFF_FINAL = 0
OFF_ENC = HIDDEN
OFF_IND = OFF_ENC + NUM_LAYERS * HIDDEN
SLAB_USED = OFF_IND + NUM_LAYERS * NUM_HEADS * NUM_HEADS        # 128 here
SLAB_COLS = ((SLAB_USED + 127) // 128) * 128                    # multiple of 128


# ---------------------------- shared math ------------------------------------
def _layer_norm(x, gamma, beta):
    mean = jnp.mean(x, axis=-1, keepdims=True)
    var = jnp.mean((x - mean) ** 2, axis=-1, keepdims=True)
    return (x - mean) * lax.rsqrt(var + EPS) * gamma + beta


# ------------------------------ Pallas kernel --------------------------------
def encoder_kernel(x_ref, bias_ref, w_in_ref, w_f2_ref, w_head_ref, vec_ref,
                   out_ref):
    x = x_ref[...]                                     # (BS, H) f32
    mask_biases = [bias_ref[b] for b in range(BATCH)]  # each (S, S): 0 / -1e9
    scale = jnp.float32(1.0 / math.sqrt(D_KEY))
    nd = NUM_HEADS * D_KEY

    for l in range(NUM_LAYERS):
        w_in = w_in_ref[l]             # (H, 192): [Wq|Wk|Wv|Wo|Wf1]
        w_f2 = w_f2_ref[l]             # (INNER, H)
        w_h = w_head_ref[l]            # (DK, NH)
        vl = vec_ref[l]                # (9, 128)

        # enc_inputs[l] = input to this layer
        out_ref[:, OFF_ENC + l * HIDDEN: OFF_ENC + (l + 1) * HIDDEN] = x

        # fused Q|K|V projection for all B*S rows at once (single MXU pass)
        qkv = jnp.dot(x, w_in[:, 0:QKV_W],
                      preferred_element_type=jnp.float32)
        qkv = qkv + vl[ROW_BQKV:ROW_BQKV + 1, 0:QKV_W]
        q = qkv[:, 0:nd]
        k = qkv[:, nd:2 * nd]
        v = qkv[:, 2 * nd:3 * nd]

        b_h = vl[ROW_BH:ROW_BH + 1, 0:NUM_HEADS]       # (1, NH)
        ind_col0 = OFF_IND + l * NUM_HEADS * NUM_HEADS

        ctx_rows = []
        for b in range(BATCH):
            r0 = b * SEQ
            qb = q[r0:r0 + SEQ, :]
            kb = k[r0:r0 + SEQ, :]
            vb = v[r0:r0 + SEQ, :]
            bias_b = mask_biases[b]                    # (S, S)

            ctx_heads = []
            ind_heads = []
            for h in range(NUM_HEADS):
                c0 = h * D_KEY
                qh = qb[:, c0:c0 + D_KEY]
                kh = kb[:, c0:c0 + D_KEY]
                vh = vb[:, c0:c0 + D_KEY]

                # scores: contract last dims of q,k (no in-kernel transpose)
                s = lax.dot_general(qh, kh, (((1,), (1,)), ((), ())),
                                    preferred_element_type=jnp.float32)
                s = s * scale + bias_b
                m = jnp.max(s, axis=-1, keepdims=True)
                p = jnp.exp(s - m)
                denom = jnp.sum(p, axis=-1, keepdims=True)
                p = p * pl.reciprocal(denom, approx=True)
                ctx_h = jnp.dot(p, vh,
                                preferred_element_type=jnp.float32)  # (S, DK)
                ctx_heads.append(ctx_h)

                # head classifier + log_softmax (Encoder ind_output path)
                logit_h = jnp.dot(ctx_h, w_h,
                                  preferred_element_type=jnp.float32) + b_h
                m2 = jnp.max(logit_h, axis=-1, keepdims=True)
                z = logit_h - m2
                lse = jnp.log(jnp.sum(jnp.exp(z), axis=-1, keepdims=True))
                ind_heads.append(z - lse)                            # (S, NH)

            ctx_rows.append(jnp.concatenate(ctx_heads, axis=1))      # (S, H)
            ind_b = jnp.concatenate(ind_heads, axis=1)               # (S, NH*NH)
            out_ref[r0:r0 + SEQ, ind_col0:ind_col0 + NUM_HEADS * NUM_HEADS] = ind_b

        ctx = jnp.concatenate(ctx_rows, axis=0)                      # (BS, H)

        # attention output projection + residual + LayerNorm
        attn = jnp.dot(ctx, w_in[:, WO0:WO0 + HIDDEN],
                       preferred_element_type=jnp.float32)
        attn = attn + vl[ROW_BO:ROW_BO + 1, 0:HIDDEN]
        x = _layer_norm(attn + x,
                        vl[ROW_G1:ROW_G1 + 1, 0:HIDDEN],
                        vl[ROW_BE1:ROW_BE1 + 1, 0:HIDDEN])

        # FFN (relu) + residual + LayerNorm
        hmid = jnp.dot(x, w_in[:, WF10:WF10 + INNER],
                       preferred_element_type=jnp.float32)
        hmid = jnp.maximum(hmid + vl[ROW_BF1:ROW_BF1 + 1, 0:INNER], 0.0)
        ffn = jnp.dot(hmid, w_f2, preferred_element_type=jnp.float32)
        ffn = ffn + vl[ROW_BF2:ROW_BF2 + 1, 0:HIDDEN]
        x = _layer_norm(ffn + x,
                        vl[ROW_G2:ROW_G2 + 1, 0:HIDDEN],
                        vl[ROW_BE2:ROW_BE2 + 1, 0:HIDDEN])

    out_ref[:, OFF_FINAL:OFF_FINAL + HIDDEN] = x
    if SLAB_COLS > SLAB_USED:   # static; no padding needed at this config
        out_ref[:, SLAB_USED:SLAB_COLS] = jnp.zeros(
            (BS, SLAB_COLS - SLAB_USED), jnp.float32)


# ------------------------- host-side parameter packing -----------------------
def pack_params(layers):
    w_in = jnp.stack([jnp.concatenate(
        [p["wq"], p["wk"], p["wv"], p["wo"], p["wf1"]], axis=1)
        for p in layers])                                  # (L, H, 192)
    w_f2 = jnp.stack([p["wf2"] for p in layers])           # (L, INNER, H)
    w_head = jnp.stack([p["wh"] for p in layers])          # (L, DK, NH)

    vec_list = []
    for p in layers:
        rows = np.zeros((N_VEC_ROWS, VEC_LANES), np.float32)

        def put(r, v):
            v = np.asarray(v, np.float32)
            rows[r, : v.shape[0]] = v

        put(ROW_BQKV, np.concatenate(
            [np.asarray(p["bq"]), np.asarray(p["bk"]), np.asarray(p["bv"])]))
        put(ROW_BO, p["bo"])
        put(ROW_BF1, p["bf1"])
        put(ROW_BF2, p["bf2"])
        put(ROW_G1, p["g1"])
        put(ROW_BE1, p["be1"])
        put(ROW_G2, p["g2"])
        put(ROW_BE2, p["be2"])
        put(ROW_BH, p["bh"])
        vec_list.append(rows)
    vecs = jnp.asarray(np.stack(vec_list))                 # (L, 9, 128)
    return w_in, w_f2, w_head, vecs


# ------------------------------ host wrapper ---------------------------------
def encoder_forward(logits, mask, layers):
    B, S, H = logits.shape
    x_flat = logits.reshape(B * S, H)
    mask_bias = (mask.astype(jnp.float32) - 1.0) * 1e9     # 0 attend / -1e9 mask
    w_in, w_f2, w_head, vecs = pack_params(layers)

    slab = pl.pallas_call(
        encoder_kernel,
        out_shape=jax.ShapeDtypeStruct((BS, SLAB_COLS), jnp.float32),
        grid_spec=pltpu.PrefetchScalarGridSpec(
            num_scalar_prefetch=0,
            grid=(1,),
            in_specs=[
                pl.BlockSpec((BS, HIDDEN), lambda i: (0, 0)),
                pl.BlockSpec((BATCH, SEQ, SEQ), lambda i: (0, 0, 0)),
                pl.BlockSpec((NUM_LAYERS, HIDDEN, W_IN_COLS), lambda i: (0, 0, 0)),
                pl.BlockSpec((NUM_LAYERS, INNER, HIDDEN), lambda i: (0, 0, 0)),
                pl.BlockSpec((NUM_LAYERS, D_KEY, NUM_HEADS), lambda i: (0, 0, 0)),
                pl.BlockSpec((NUM_LAYERS, N_VEC_ROWS, VEC_LANES), lambda i: (0, 0, 0)),
            ],
            out_specs=pl.BlockSpec((BS, SLAB_COLS), lambda i: (0, 0)),
        ),
        compiler_params=pltpu.CompilerParams(
            dimension_semantics=("arbitrary",)),
    )(x_flat, mask_bias, w_in, w_f2, w_head, vecs)

    out_logits = slab[:, OFF_FINAL:OFF_FINAL + H].reshape(B, S, H)
    enc_inputs = [slab[:, OFF_ENC + l * H: OFF_ENC + (l + 1) * H].reshape(B, S, H)
                  for l in range(NUM_LAYERS)]
    nn = NUM_HEADS * NUM_HEADS
    ind_outputs = [slab[:, OFF_IND + l * nn: OFF_IND + (l + 1) * nn]
                   .reshape(B, S, NUM_HEADS, NUM_HEADS)
                   for l in range(NUM_LAYERS)]
    return out_logits, enc_inputs, ind_outputs


# --------------------------- pure-JAX reference ------------------------------
def encoder_ref(logits, mask, layers):
    B, S, H = logits.shape
    x = logits
    enc_inputs, ind_outputs = [], []
    for p in layers:
        enc_inputs.append(x)
        q = x @ p["wq"] + p["bq"]
        k = x @ p["wk"] + p["bk"]
        v = x @ p["wv"] + p["bv"]

        def split(t, d):
            return t.reshape(B, S, NUM_HEADS, d).transpose(0, 2, 1, 3)

        qh, kh, vh = split(q, D_KEY), split(k, D_KEY), split(v, D_VALUE)
        scores = jnp.einsum("bhqd,bhkd->bhqk", qh, kh) / math.sqrt(D_KEY)
        scores = jnp.where(mask[:, None, :, :] == 0, NEG, scores)
        w = jax.nn.softmax(scores, axis=-1)
        ctx = jnp.einsum("bhqk,bhkd->bhqd", w, vh).transpose(0, 2, 1, 3)  # (B,S,NH,DV)

        attn = ctx.reshape(B, S, NUM_HEADS * D_VALUE) @ p["wo"] + p["bo"]
        x = _layer_norm(attn + x, p["g1"], p["be1"])
        hmid = jnp.maximum(x @ p["wf1"] + p["bf1"], 0.0)
        ffn = hmid @ p["wf2"] + p["bf2"]
        x = _layer_norm(ffn + x, p["g2"], p["be2"])

        ind = ctx @ p["wh"] + p["bh"]                                     # (B,S,NH,NH)
        ind_outputs.append(jax.nn.log_softmax(ind, axis=3))
    return x, enc_inputs, ind_outputs


# ------------------------------ parameter init -------------------------------
def make_params(key):
    layers = []
    for lk in jax.random.split(key, NUM_LAYERS):
        ks = jax.random.split(lk, 7)

        def lin(k, din, dout):
            bound = 1.0 / math.sqrt(din)
            kw, kb = jax.random.split(k)
            w = jax.random.uniform(kw, (din, dout), jnp.float32, -bound, bound)
            b = jax.random.uniform(kb, (dout,), jnp.float32, -bound, bound)
            return w, b

        wq, bq = lin(ks[0], HIDDEN, NUM_HEADS * D_KEY)
        wk, bk = lin(ks[1], HIDDEN, NUM_HEADS * D_KEY)
        wv, bv = lin(ks[2], HIDDEN, NUM_HEADS * D_VALUE)
        wo, bo = lin(ks[3], NUM_HEADS * D_KEY, HIDDEN)
        wf1, bf1 = lin(ks[4], HIDDEN, INNER)
        wf2, bf2 = lin(ks[5], INNER, HIDDEN)
        wh, bh = lin(ks[6], D_KEY, NUM_HEADS)
        layers.append(dict(
            wq=wq, bq=bq, wk=wk, bk=bk, wv=wv, bv=bv, wo=wo, bo=bo,
            g1=jnp.ones((HIDDEN,), jnp.float32), be1=jnp.zeros((HIDDEN,), jnp.float32),
            wf1=wf1, bf1=bf1, wf2=wf2, bf2=bf2,
            g2=jnp.ones((HIDDEN,), jnp.float32), be2=jnp.zeros((HIDDEN,), jnp.float32),
            wh=wh, bh=bh))
    return layers


# ----------------------------------- main -------------------------------------
if __name__ == "__main__":
    key = jax.random.PRNGKey(0)
    k_x, k_p = jax.random.split(key, 2)

    x = jax.random.normal(k_x, (BATCH, SEQ, HIDDEN), jnp.float32)
    # key-padding mask (1 = attend, 0 = masked), per-batch valid lengths
    lengths = jnp.array([SEQ, 5], jnp.int32)
    key_valid = (jnp.arange(SEQ)[None, :] < lengths[:, None]).astype(jnp.float32)
    mask = jnp.broadcast_to(key_valid[:, None, :], (BATCH, SEQ, SEQ))

    layers = make_params(k_p)

    out_logits, enc_inputs, ind_outputs = encoder_forward(x, mask, layers)
    out_logits = jax.block_until_ready(out_logits)

    ref_logits, ref_enc, ref_ind = encoder_ref(x, mask, layers)

    # tolerance covers pl.reciprocal(approx=True) in the softmax (~1e-4 rel err)
    TOL = dict(rtol=5e-3, atol=5e-3)
    np.testing.assert_allclose(np.asarray(out_logits), np.asarray(ref_logits), **TOL)
    for a, b in zip(enc_inputs, ref_enc):
        np.testing.assert_allclose(np.asarray(a), np.asarray(b), **TOL)
    for a, b in zip(ind_outputs, ref_ind):
        np.testing.assert_allclose(np.asarray(a), np.asarray(b), **TOL)

    print("KERNEL_OK")
</pallas_src>

<mosaic_0001>
module attributes {stable_mosaic.version = 11 : i64} {
  func.func @encoder_kernel(%arg0: i32, %arg1: memref<16x32xf32, #tpu.memory_space<vmem>>, %arg2: memref<2x8x8xf32, #tpu.memory_space<vmem>>, %arg3: memref<2x32x192xf32, #tpu.memory_space<vmem>>, %arg4: memref<2x64x32xf32, #tpu.memory_space<vmem>>, %arg5: memref<2x8x4xf32, #tpu.memory_space<vmem>>, %arg6: memref<2x9x128xf32, #tpu.memory_space<vmem>>, %arg7: memref<16x128xf32, #tpu.memory_space<vmem>>) attributes {dimension_semantics = [#tpu.dimension_semantics<arbitrary>], iteration_bounds = array<i64: 1>, scalar_prefetch = 0 : i64, scratch_operands = 0 : i64, tpu.core_type = #tpu.core_type<tc>, window_params = [{pipeline_mode = #tpu.pipeline_mode<synchronous>, transform_indices = @transform_0, window_bounds = array<i64: 16, 32>}, {pipeline_mode = #tpu.pipeline_mode<synchronous>, transform_indices = @transform_1, window_bounds = array<i64: 2, 8, 8>}, {pipeline_mode = #tpu.pipeline_mode<synchronous>, transform_indices = @transform_2, window_bounds = array<i64: 2, 32, 192>}, {pipeline_mode = #tpu.pipeline_mode<synchronous>, transform_indices = @transform_3, window_bounds = array<i64: 2, 64, 32>}, {pipeline_mode = #tpu.pipeline_mode<synchronous>, transform_indices = @transform_4, window_bounds = array<i64: 2, 8, 4>}, {pipeline_mode = #tpu.pipeline_mode<synchronous>, transform_indices = @transform_5, window_bounds = array<i64: 2, 9, 128>}, {pipeline_mode = #tpu.pipeline_mode<synchronous>, transform_indices = @transform_6, window_bounds = array<i64: 16, 128>}]} {
    %c0 = arith.constant 0 : index
    %c0_0 = arith.constant 0 : index
    %0 = vector.load %arg1[%c0, %c0_0] : memref<16x32xf32, #tpu.memory_space<vmem>>, vector<16x32xf32>
    %c0_1 = arith.constant 0 : index
    %c0_2 = arith.constant 0 : index
    %c0_3 = arith.constant 0 : index
    %1 = vector.load %arg2[%c0_1, %c0_2, %c0_3] : memref<2x8x8xf32, #tpu.memory_space<vmem>>, vector<1x8x8xf32>
    %2 = vector.shape_cast %1 : vector<1x8x8xf32> to vector<8x8xf32>
    %c1 = arith.constant 1 : index
    %c0_4 = arith.constant 0 : index
    %c0_5 = arith.constant 0 : index
    %3 = vector.load %arg2[%c1, %c0_4, %c0_5] : memref<2x8x8xf32, #tpu.memory_space<vmem>>, vector<1x8x8xf32>
    %4 = vector.shape_cast %3 : vector<1x8x8xf32> to vector<8x8xf32>
    %c0_6 = arith.constant 0 : index
    %c0_7 = arith.constant 0 : index
    %c0_8 = arith.constant 0 : index
    %5 = vector.load %arg3[%c0_6, %c0_7, %c0_8] : memref<2x32x192xf32, #tpu.memory_space<vmem>>, vector<1x32x192xf32>
    %6 = vector.shape_cast %5 : vector<1x32x192xf32> to vector<32x192xf32>
    %c0_9 = arith.constant 0 : index
    %c0_10 = arith.constant 0 : index
    %c0_11 = arith.constant 0 : index
    %7 = vector.load %arg4[%c0_9, %c0_10, %c0_11] : memref<2x64x32xf32, #tpu.memory_space<vmem>>, vector<1x64x32xf32>
    %8 = vector.shape_cast %7 : vector<1x64x32xf32> to vector<64x32xf32>
    %c0_12 = arith.constant 0 : index
    %c0_13 = arith.constant 0 : index
    %c0_14 = arith.constant 0 : index
    %9 = vector.load %arg5[%c0_12, %c0_13, %c0_14] : memref<2x8x4xf32, #tpu.memory_space<vmem>>, vector<1x8x4xf32>
    %10 = vector.shape_cast %9 : vector<1x8x4xf32> to vector<8x4xf32>
    %c0_15 = arith.constant 0 : index
    %c0_16 = arith.constant 0 : index
    %c0_17 = arith.constant 0 : index
    %11 = vector.load %arg6[%c0_15, %c0_16, %c0_17] : memref<2x9x128xf32, #tpu.memory_space<vmem>>, vector<1x9x128xf32>
    %12 = vector.shape_cast %11 : vector<1x9x128xf32> to vector<9x128xf32>
    %c0_18 = arith.constant 0 : index
    %c32 = arith.constant 32 : index
    %13 = vector.load %arg7[%c0_18, %c32] : memref<16x128xf32, #tpu.memory_space<vmem>>, vector<16x32xf32>
    tpu.vector_store %arg7[%c0_18, %c32], %0 {strides = array<i32>} : memref<16x128xf32, #tpu.memory_space<vmem>>, vector<16x32xf32>,
    %14 = vector.extract_strided_slice %6 {offsets = [0, 0], sizes = [32, 96], strides = [1, 1]} : vector<32x192xf32> to vector<32x96xf32>
    %cst = arith.constant dense<0.000000e+00> : vector<16x96xf32>
    %15 = tpu.matmul %0, %14, %cst {dimension_numbers = #tpu.dot_dimension_numbers<[1], [0], [0], [1], [0, 0, 1, 1], [], []>} : vector<16x32xf32>, vector<32x96xf32>, vector<16x96xf32> -> vector<16x96xf32>
    %16 = vector.extract_strided_slice %12 {offsets = [0, 0], sizes = [1, 96], strides = [1, 1]} : vector<9x128xf32> to vector<1x96xf32>
    %17 = vector.broadcast %16 : vector<1x96xf32> to vector<16x96xf32>
    %18 = arith.addf %15, %17 : vector<16x96xf32>
    %19 = vector.extract_strided_slice %18 {offsets = [0, 0], sizes = [16, 32], strides = [1, 1]} : vector<16x96xf32> to vector<16x32xf32>
    %20 = vector.extract_strided_slice %18 {offsets = [0, 32], sizes = [16, 32], strides = [1, 1]} : vector<16x96xf32> to vector<16x32xf32>
    %21 = vector.extract_strided_slice %18 {offsets = [0, 64], sizes = [16, 32], strides = [1, 1]} : vector<16x96xf32> to vector<16x32xf32>
    %22 = vector.extract_strided_slice %12 {offsets = [8, 0], sizes = [1, 4], strides = [1, 1]} : vector<9x128xf32> to vector<1x4xf32>
    %23 = vector.extract_strided_slice %19 {offsets = [0, 0], sizes = [8, 32], strides = [1, 1]} : vector<16x32xf32> to vector<8x32xf32>
    %24 = vector.extract_strided_slice %20 {offsets = [0, 0], sizes = [8, 32], strides = [1, 1]} : vector<16x32xf32> to vector<8x32xf32>
    %25 = vector.extract_strided_slice %21 {offsets = [0, 0], sizes = [8, 32], strides = [1, 1]} : vector<16x32xf32> to vector<8x32xf32>
    %26 = vector.extract_strided_slice %23 {offsets = [0, 0], sizes = [8, 8], strides = [1, 1]} : vector<8x32xf32> to vector<8x8xf32>
    %27 = vector.extract_strided_slice %24 {offsets = [0, 0], sizes = [8, 8], strides = [1, 1]} : vector<8x32xf32> to vector<8x8xf32>
    %28 = vector.extract_strided_slice %25 {offsets = [0, 0], sizes = [8, 8], strides = [1, 1]} : vector<8x32xf32> to vector<8x8xf32>
    %cst_19 = arith.constant dense<0.000000e+00> : vector<8x8xf32>
    %29 = tpu.matmul %26, %27, %cst_19 {dimension_numbers = #tpu.dot_dimension_numbers<[1], [1], [0], [0], [0, 0, 1, 0], [], []>} : vector<8x8xf32>, vector<8x8xf32>, vector<8x8xf32> -> vector<8x8xf32>
    %cst_20 = arith.constant 0.353553385 : f32
    %30 = vector.broadcast %cst_20 : f32 to vector<8x8xf32>
    %31 = arith.mulf %29, %30 : vector<8x8xf32>
    %32 = arith.addf %31, %2 : vector<8x8xf32>
    %cst_21 = arith.constant dense<0xFF800000> : vector<8xf32>
    %33 = vector.multi_reduction <maximumf>, %32, %cst_21 [1] : vector<8x8xf32> to vector<8xf32>
    %34 = vector.shape_cast %33 : vector<8xf32> to vector<8x1xf32>
    %35 = vector.broadcast %34 : vector<8x1xf32> to vector<8x8xf32>
    %36 = arith.subf %32, %35 : vector<8x8xf32>
    %37 = math.exp %36 : vector<8x8xf32>
    %cst_22 = arith.constant dense<0.000000e+00> : vector<8xf32>
    %38 = vector.multi_reduction <add>, %37, %cst_22 [1] : vector<8x8xf32> to vector<8xf32>
    %39 = vector.shape_cast %38 : vector<8xf32> to vector<8x1xf32>
    %40 = tpu.reciprocal %39 {approx = true} : vector<8x1xf32> -> vector<8x1xf32>
    %41 = vector.broadcast %40 : vector<8x1xf32> to vector<8x8xf32>
    %42 = arith.mulf %37, %41 : vector<8x8xf32>
    %cst_23 = arith.constant dense<0.000000e+00> : vector<8x8xf32>
    %43 = tpu.matmul %42, %28, %cst_23 {dimension_numbers = #tpu.dot_dimension_numbers<[1], [0], [0], [1], [0, 0, 1, 1], [], []>} : vector<8x8xf32>, vector<8x8xf32>, vector<8x8xf32> -> vector<8x8xf32>
    %cst_24 = arith.constant dense<0.000000e+00> : vector<8x4xf32>
    %44 = tpu.matmul %43, %10, %cst_24 {dimension_numbers = #tpu.dot_dimension_numbers<[1], [0], [0], [1], [0, 0, 1, 1], [], []>} : vector<8x8xf32>, vector<8x4xf32>, vector<8x4xf32> -> vector<8x4xf32>
    %45 = vector.broadcast %22 : vector<1x4xf32> to vector<8x4xf32>
    %46 = arith.addf %44, %45 : vector<8x4xf32>
    %cst_25 = arith.constant dense<0xFF800000> : vector<8xf32>
    %47 = vector.multi_reduction <maximumf>, %46, %cst_25 [1] : vector<8x4xf32> to vector<8xf32>
    %48 = vector.shape_cast %47 : vector<8xf32> to vector<8x1xf32>
    %49 = vector.broadcast %48 : vector<8x1xf32> to vector<8x4xf32>
    %50 = arith.subf %46, %49 : vector<8x4xf32>
    %51 = math.exp %50 : vector<8x4xf32>
    %cst_26 = arith.constant dense<0.000000e+00> : vector<8xf32>
    %52 = vector.multi_reduction <add>, %51, %cst_26 [1] : vector<8x4xf32> to vector<8xf32>
    %53 = vector.shape_cast %52 : vector<8xf32> to vector<8x1xf32>
    %54 = math.log %53 : vector<8x1xf32>
    %55 = vector.broadcast %54 : vector<8x1xf32> to vector<8x4xf32>
    %56 = arith.subf %50, %55 : vector<8x4xf32>
    %57 = vector.extract_strided_slice %23 {offsets = [0, 8], sizes = [8, 8], strides = [1, 1]} : vector<8x32xf32> to vector<8x8xf32>
    %58 = vector.extract_strided_slice %24 {offsets = [0, 8], sizes = [8, 8], strides = [1, 1]} : vector<8x32xf32> to vector<8x8xf32>
    %59 = vector.extract_strided_slice %25 {offsets = [0, 8], sizes = [8, 8], strides = [1, 1]} : vector<8x32xf32> to vector<8x8xf32>
    %cst_27 = arith.constant dense<0.000000e+00> : vector<8x8xf32>
    %60 = tpu.matmul %57, %58, %cst_27 {dimension_numbers = #tpu.dot_dimension_numbers<[1], [1], [0], [0], [0, 0, 1, 0], [], []>} : vector<8x8xf32>, vector<8x8xf32>, vector<8x8xf32> -> vector<8x8xf32>
    %cst_28 = arith.constant 0.353553385 : f32
    %61 = vector.broadcast %cst_28 : f32 to vector<8x8xf32>
    %62 = arith.mulf %60, %61 : vector<8x8xf32>
    %63 = arith.addf %62, %2 : vector<8x8xf32>
    %cst_29 = arith.constant dense<0xFF800000> : vector<8xf32>
    %64 = vector.multi_reduction <maximumf>, %63, %cst_29 [1] : vector<8x8xf32> to vector<8xf32>
    %65 = vector.shape_cast %64 : vector<8xf32> to vector<8x1xf32>
    %66 = vector.broadcast %65 : vector<8x1xf32> to vector<8x8xf32>
    %67 = arith.subf %63, %66 : vector<8x8xf32>
    %68 = math.exp %67 : vector<8x8xf32>
    %cst_30 = arith.constant dense<0.000000e+00> : vector<8xf32>
    %69 = vector.multi_reduction <add>, %68, %cst_30 [1] : vector<8x8xf32> to vector<8xf32>
    %70 = vector.shape_cast %69 : vector<8xf32> to vector<8x1xf32>
    %71 = tpu.reciprocal %70 {approx = true} : vector<8x1xf32> -> vector<8x1xf32>
    %72 = vector.broadcast %71 : vector<8x1xf32> to vector<8x8xf32>
    %73 = arith.mulf %68, %72 : vector<8x8xf32>
    %cst_31 = arith.constant dense<0.000000e+00> : vector<8x8xf32>
    %74 = tpu.matmul %73, %59, %cst_31 {dimension_numbers = #tpu.dot_dimension_numbers<[1], [0], [0], [1], [0, 0, 1, 1], [], []>} : vector<8x8xf32>, vector<8x8xf32>, vector<8x8xf32> -> vector<8x8xf32>
    %cst_32 = arith.constant dense<0.000000e+00> : vector<8x4xf32>
    %75 = tpu.matmul %74, %10, %cst_32 {dimension_numbers = #tpu.dot_dimension_numbers<[1], [0], [0], [1], [0, 0, 1, 1], [], []>} : vector<8x8xf32>, vector<8x4xf32>, vector<8x4xf32> -> vector<8x4xf32>
    %76 = vector.broadcast %22 : vector<1x4xf32> to vector<8x4xf32>
    %77 = arith.addf %75, %76 : vector<8x4xf32>
    %cst_33 = arith.constant dense<0xFF800000> : vector<8xf32>
    %78 = vector.multi_reduction <maximumf>, %77, %cst_33 [1] : vector<8x4xf32> to vector<8xf32>
    %79 = vector.shape_cast %78 : vector<8xf32> to vector<8x1xf32>
    %80 = vector.broadcast %79 : vector<8x1xf32> to vector<8x4xf32>
    %81 = arith.subf %77, %80 : vector<8x4xf32>
    %82 = math.exp %81 : vector<8x4xf32>
    %cst_34 = arith.constant dense<0.000000e+00> : vector<8xf32>
    %83 = vector.multi_reduction <add>, %82, %cst_34 [1] : vector<8x4xf32> to vector<8xf32>
    %84 = vector.shape_cast %83 : vector<8xf32> to vector<8x1xf32>
    %85 = math.log %84 : vector<8x1xf32>
    %86 = vector.broadcast %85 : vector<8x1xf32> to vector<8x4xf32>
    %87 = arith.subf %81, %86 : vector<8x4xf32>
    %88 = vector.extract_strided_slice %23 {offsets = [0, 16], sizes = [8, 8], strides = [1, 1]} : vector<8x32xf32> to vector<8x8xf32>
    %89 = vector.extract_strided_slice %24 {offsets = [0, 16], sizes = [8, 8], strides = [1, 1]} : vector<8x32xf32> to vector<8x8xf32>
    %90 = vector.extract_strided_slice %25 {offsets = [0, 16], sizes = [8, 8], strides = [1, 1]} : vector<8x32xf32> to vector<8x8xf32>
    %cst_35 = arith.constant dense<0.000000e+00> : vector<8x8xf32>
    %91 = tpu.matmul %88, %89, %cst_35 {dimension_numbers = #tpu.dot_dimension_numbers<[1], [1], [0], [0], [0, 0, 1, 0], [], []>} : vector<8x8xf32>, vector<8x8xf32>, vector<8x8xf32> -> vector<8x8xf32>
    %cst_36 = arith.constant 0.353553385 : f32
    %92 = vector.broadcast %cst_36 : f32 to vector<8x8xf32>
    %93 = arith.mulf %91, %92 : vector<8x8xf32>
    %94 = arith.addf %93, %2 : vector<8x8xf32>
    %cst_37 = arith.constant dense<0xFF800000> : vector<8xf32>
    %95 = vector.multi_reduction <maximumf>, %94, %cst_37 [1] : vector<8x8xf32> to vector<8xf32>
    %96 = vector.shape_cast %95 : vector<8xf32> to vector<8x1xf32>
    %97 = vector.broadcast %96 : vector<8x1xf32> to vector<8x8xf32>
    %98 = arith.subf %94, %97 : vector<8x8xf32>
    %99 = math.exp %98 : vector<8x8xf32>
    %cst_38 = arith.constant dense<0.000000e+00> : vector<8xf32>
    %100 = vector.multi_reduction <add>, %99, %cst_38 [1] : vector<8x8xf32> to vector<8xf32>
    %101 = vector.shape_cast %100 : vector<8xf32> to vector<8x1xf32>
    %102 = tpu.reciprocal %101 {approx = true} : vector<8x1xf32> -> vector<8x1xf32>
    %103 = vector.broadcast %102 : vector<8x1xf32> to vector<8x8xf32>
    %104 = arith.mulf %99, %103 : vector<8x8xf32>
    %cst_39 = arith.constant dense<0.000000e+00> : vector<8x8xf32>
    %105 = tpu.matmul %104, %90, %cst_39 {dimension_numbers = #tpu.dot_dimension_numbers<[1], [0], [0], [1], [0, 0, 1, 1], [], []>} : vector<8x8xf32>, vector<8x8xf32>, vector<8x8xf32> -> vector<8x8xf32>
    %cst_40 = arith.constant dense<0.000000e+00> : vector<8x4xf32>
    %106 = tpu.matmul %105, %10, %cst_40 {dimension_numbers = #tpu.dot_dimension_numbers<[1], [0], [0], [1], [0, 0, 1, 1], [], []>} : vector<8x8xf32>, vector<8x4xf32>, vector<8x4xf32> -> vector<8x4xf32>
    %107 = vector.broadcast %22 : vector<1x4xf32> to vector<8x4xf32>
    %108 = arith.addf %106, %107 : vector<8x4xf32>
    %cst_41 = arith.constant dense<0xFF800000> : vector<8xf32>
    %109 = vector.multi_reduction <maximumf>, %108, %cst_41 [1] : vector<8x4xf32> to vector<8xf32>
    %110 = vector.shape_cast %109 : vector<8xf32> to vector<8x1xf32>
    %111 = vector.broadcast %110 : vector<8x1xf32> to vector<8x4xf32>
    %112 = arith.subf %108, %111 : vector<8x4xf32>
    %113 = math.exp %112 : vector<8x4xf32>
    %cst_42 = arith.constant dense<0.000000e+00> : vector<8xf32>
    %114 = vector.multi_reduction <add>, %113, %cst_42 [1] : vector<8x4xf32> to vector<8xf32>
    %115 = vector.shape_cast %114 : vector<8xf32> to vector<8x1xf32>
    %116 = math.log %115 : vector<8x1xf32>
    %117 = vector.broadcast %116 : vector<8x1xf32> to vector<8x4xf32>
    %118 = arith.subf %112, %117 : vector<8x4xf32>
    %119 = vector.extract_strided_slice %23 {offsets = [0, 24], sizes = [8, 8], strides = [1, 1]} : vector<8x32xf32> to vector<8x8xf32>
    %120 = vector.extract_strided_slice %24 {offsets = [0, 24], sizes = [8, 8], strides = [1, 1]} : vector<8x32xf32> to vector<8x8xf32>
    %121 = vector.extract_strided_slice %25 {offsets = [0, 24], sizes = [8, 8], strides = [1, 1]} : vector<8x32xf32> to vector<8x8xf32>
    %cst_43 = arith.constant dense<0.000000e+00> : vector<8x8xf32>
    %122 = tpu.matmul %119, %120, %cst_43 {dimension_numbers = #tpu.dot_dimension_numbers<[1], [1], [0], [0], [0, 0, 1, 0], [], []>} : vector<8x8xf32>, vector<8x8xf32>, vector<8x8xf32> -> vector<8x8xf32>
    %cst_44 = arith.constant 0.353553385 : f32
    %123 = vector.broadcast %cst_44 : f32 to vector<8x8xf32>
    %124 = arith.mulf %122, %123 : vector<8x8xf32>
    %125 = arith.addf %124, %2 : vector<8x8xf32>
    %cst_45 = arith.constant dense<0xFF800000> : vector<8xf32>
    %126 = vector.multi_reduction <maximumf>, %125, %cst_45 [1] : vector<8x8xf32> to vector<8xf32>
    %127 = vector.shape_cast %126 : vector<8xf32> to vector<8x1xf32>
    %128 = vector.broadcast %127 : vector<8x1xf32> to vector<8x8xf32>
    %129 = arith.subf %125, %128 : vector<8x8xf32>
    %130 = math.exp %129 : vector<8x8xf32>
    %cst_46 = arith.constant dense<0.000000e+00> : vector<8xf32>
    %131 = vector.multi_reduction <add>, %130, %cst_46 [1] : vector<8x8xf32> to vector<8xf32>
    %132 = vector.shape_cast %131 : vector<8xf32> to vector<8x1xf32>
    %133 = tpu.reciprocal %132 {approx = true} : vector<8x1xf32> -> vector<8x1xf32>
    %134 = vector.broadcast %133 : vector<8x1xf32> to vector<8x8xf32>
    %135 = arith.mulf %130, %134 : vector<8x8xf32>
    %cst_47 = arith.constant dense<0.000000e+00> : vector<8x8xf32>
    %136 = tpu.matmul %135, %121, %cst_47 {dimension_numbers = #tpu.dot_dimension_numbers<[1], [0], [0], [1], [0, 0, 1, 1], [], []>} : vector<8x8xf32>, vector<8x8xf32>, vector<8x8xf32> -> vector<8x8xf32>
    %cst_48 = arith.constant dense<0.000000e+00> : vector<8x4xf32>
    %137 = tpu.matmul %136, %10, %cst_48 {dimension_numbers = #tpu.dot_dimension_numbers<[1], [0], [0], [1], [0, 0, 1, 1], [], []>} : vector<8x8xf32>, vector<8x4xf32>, vector<8x4xf32> -> vector<8x4xf32>
    %138 = vector.broadcast %22 : vector<1x4xf32> to vector<8x4xf32>
    %139 = arith.addf %137, %138 : vector<8x4xf32>
    %cst_49 = arith.constant dense<0xFF800000> : vector<8xf32>
    %140 = vector.multi_reduction <maximumf>, %139, %cst_49 [1] : vector<8x4xf32> to vector<8xf32>
    %141 = vector.shape_cast %140 : vector<8xf32> to vector<8x1xf32>
    %142 = vector.broadcast %141 : vector<8x1xf32> to vector<8x4xf32>
    %143 = arith.subf %139, %142 : vector<8x4xf32>
    %144 = math.exp %143 : vector<8x4xf32>
    %cst_50 = arith.constant dense<0.000000e+00> : vector<8xf32>
    %145 = vector.multi_reduction <add>, %144, %cst_50 [1] : vector<8x4xf32> to vector<8xf32>
    %146 = vector.shape_cast %145 : vector<8xf32> to vector<8x1xf32>
    %147 = math.log %146 : vector<8x1xf32>
    %148 = vector.broadcast %147 : vector<8x1xf32> to vector<8x4xf32>
    %149 = arith.subf %143, %148 : vector<8x4xf32>
    %150 = tpu.concatenate %43, %74, %105, %136 in 1 : vector<8x8xf32>, vector<8x8xf32>, vector<8x8xf32>, vector<8x8xf32> -> vector<8x32xf32>
    %151 = tpu.concatenate %56, %87, %118, %149 in 1 : vector<8x4xf32>, vector<8x4xf32>, vector<8x4xf32>, vector<8x4xf32> -> vector<8x16xf32>
    %c0_51 = arith.constant 0 : index
    %c96 = arith.constant 96 : index
    %152 = vector.load %arg7[%c0_51, %c96] : memref<16x128xf32, #tpu.memory_space<vmem>>, vector<8x16xf32>
    tpu.vector_store %arg7[%c0_51, %c96], %151 {strides = array<i32>} : memref<16x128xf32, #tpu.memory_space<vmem>>, vector<8x16xf32>,
    %153 = vector.extract_strided_slice %19 {offsets = [8, 0], sizes = [8, 32], strides = [1, 1]} : vector<16x32xf32> to vector<8x32xf32>
    %154 = vector.extract_strided_slice %20 {offsets = [8, 0], sizes = [8, 32], strides = [1, 1]} : vector<16x32xf32> to vector<8x32xf32>
    %155 = vector.extract_strided_slice %21 {offsets = [8, 0], sizes = [8, 32], strides = [1, 1]} : vector<16x32xf32> to vector<8x32xf32>
    %156 = vector.extract_strided_slice %153 {offsets = [0, 0], sizes = [8, 8], strides = [1, 1]} : vector<8x32xf32> to vector<8x8xf32>
    %157 = vector.extract_strided_slice %154 {offsets = [0, 0], sizes = [8, 8], strides = [1, 1]} : vector<8x32xf32> to vector<8x8xf32>
    %158 = vector.extract_strided_slice %155 {offsets = [0, 0], sizes = [8, 8], strides = [1, 1]} : vector<8x32xf32> to vector<8x8xf32>
    %cst_52 = arith.constant dense<0.000000e+00> : vector<8x8xf32>
    %159 = tpu.matmul %156, %157, %cst_52 {dimension_numbers = #tpu.dot_dimension_numbers<[1], [1], [0], [0], [0, 0, 1, 0], [], []>} : vector<8x8xf32>, vector<8x8xf32>, vector<8x8xf32> -> vector<8x8xf32>
    %cst_53 = arith.constant 0.353553385 : f32
    %160 = vector.broadcast %cst_53 : f32 to vector<8x8xf32>
    %161 = arith.mulf %159, %160 : vector<8x8xf32>
    %162 = arith.addf %161, %4 : vector<8x8xf32>
    %cst_54 = arith.constant dense<0xFF800000> : vector<8xf32>
    %163 = vector.multi_reduction <maximumf>, %162, %cst_54 [1] : vector<8x8xf32> to vector<8xf32>
    %164 = vector.shape_cast %163 : vector<8xf32> to vector<8x1xf32>
    %165 = vector.broadcast %164 : vector<8x1xf32> to vector<8x8xf32>
    %166 = arith.subf %162, %165 : vector<8x8xf32>
    %167 = math.exp %166 : vector<8x8xf32>
    %cst_55 = arith.constant dense<0.000000e+00> : vector<8xf32>
    %168 = vector.multi_reduction <add>, %167, %cst_55 [1] : vector<8x8xf32> to vector<8xf32>
    %169 = vector.shape_cast %168 : vector<8xf32> to vector<8x1xf32>
    %170 = tpu.reciprocal %169 {approx = true} : vector<8x1xf32> -> vector<8x1xf32>
    %171 = vector.broadcast %170 : vector<8x1xf32> to vector<8x8xf32>
    %172 = arith.mulf %167, %171 : vector<8x8xf32>
    %cst_56 = arith.constant dense<0.000000e+00> : vector<8x8xf32>
    %173 = tpu.matmul %172, %158, %cst_56 {dimension_numbers = #tpu.dot_dimension_numbers<[1], [0], [0], [1], [0, 0, 1, 1], [], []>} : vector<8x8xf32>, vector<8x8xf32>, vector<8x8xf32> -> vector<8x8xf32>
    %cst_57 = arith.constant dense<0.000000e+00> : vector<8x4xf32>
    %174 = tpu.matmul %173, %10, %cst_57 {dimension_numbers = #tpu.dot_dimension_numbers<[1], [0], [0], [1], [0, 0, 1, 1], [], []>} : vector<8x8xf32>, vector<8x4xf32>, vector<8x4xf32> -> vector<8x4xf32>
    %175 = vector.broadcast %22 : vector<1x4xf32> to vector<8x4xf32>
    %176 = arith.addf %174, %175 : vector<8x4xf32>
    %cst_58 = arith.constant dense<0xFF800000> : vector<8xf32>
    %177 = vector.multi_reduction <maximumf>, %176, %cst_58 [1] : vector<8x4xf32> to vector<8xf32>
    %178 = vector.shape_cast %177 : vector<8xf32> to vector<8x1xf32>
    %179 = vector.broadcast %178 : vector<8x1xf32> to vector<8x4xf32>
    %180 = arith.subf %176, %179 : vector<8x4xf32>
    %181 = math.exp %180 : vector<8x4xf32>
    %cst_59 = arith.constant dense<0.000000e+00> : vector<8xf32>
    %182 = vector.multi_reduction <add>, %181, %cst_59 [1] : vector<8x4xf32> to vector<8xf32>
    %183 = vector.shape_cast %182 : vector<8xf32> to vector<8x1xf32>
    %184 = math.log %183 : vector<8x1xf32>
    %185 = vector.broadcast %184 : vector<8x1xf32> to vector<8x4xf32>
    %186 = arith.subf %180, %185 : vector<8x4xf32>
    %187 = vector.extract_strided_slice %153 {offsets = [0, 8], sizes = [8, 8], strides = [1, 1]} : vector<8x32xf32> to vector<8x8xf32>
    %188 = vector.extract_strided_slice %154 {offsets = [0, 8], sizes = [8, 8], strides = [1, 1]} : vector<8x32xf32> to vector<8x8xf32>
    %189 = vector.extract_strided_slice %155 {offsets = [0, 8], sizes = [8, 8], strides = [1, 1]} : vector<8x32xf32> to vector<8x8xf32>
    %cst_60 = arith.constant dense<0.000000e+00> : vector<8x8xf32>
    %190 = tpu.matmul %187, %188, %cst_60 {dimension_numbers = #tpu.dot_dimension_numbers<[1], [1], [0], [0], [0, 0, 1, 0], [], []>} : vector<8x8xf32>, vector<8x8xf32>, vector<8x8xf32> -> vector<8x8xf32>
    %cst_61 = arith.constant 0.353553385 : f32
    %191 = vector.broadcast %cst_61 : f32 to vector<8x8xf32>
    %192 = arith.mulf %190, %191 : vector<8x8xf32>
    %193 = arith.addf %192, %4 : vector<8x8xf32>
    %cst_62 = arith.constant dense<0xFF800000> : vector<8xf32>
    %194 = vector.multi_reduction <maximumf>, %193, %cst_62 [1] : vector<8x8xf32> to vector<8xf32>
    %195 = vector.shape_cast %194 : vector<8xf32> to vector<8x1xf32>
    %196 = vector.broadcast %195 : vector<8x1xf32> to vector<8x8xf32>
    %197 = arith.subf %193, %196 : vector<8x8xf32>
    %198 = math.exp %197 : vector<8x8xf32>
    %cst_63 = arith.constant dense<0.000000e+00> : vector<8xf32>
    %199 = vector.multi_reduction <add>, %198, %cst_63 [1] : vector<8x8xf32> to vector<8xf32>
    %200 = vector.shape_cast %199 : vector<8xf32> to vector<8x1xf32>
    %201 = tpu.reciprocal %200 {approx = true} : vector<8x1xf32> -> vector<8x1xf32>
    %202 = vector.broadcast %201 : vector<8x1xf32> to vector<8x8xf32>
    %203 = arith.mulf %198, %202 : vector<8x8xf32>
    %cst_64 = arith.constant dense<0.000000e+00> : vector<8x8xf32>
    %204 = tpu.matmul %203, %189, %cst_64 {dimension_numbers = #tpu.dot_dimension_numbers<[1], [0], [0], [1], [0, 0, 1, 1], [], []>} : vector<8x8xf32>, vector<8x8xf32>, vector<8x8xf32> -> vector<8x8xf32>
    %cst_65 = arith.constant dense<0.000000e+00> : vector<8x4xf32>
    %205 = tpu.matmul %204, %10, %cst_65 {dimension_numbers = #tpu.dot_dimension_numbers<[1], [0], [0], [1], [0, 0, 1, 1], [], []>} : vector<8x8xf32>, vector<8x4xf32>, vector<8x4xf32> -> vector<8x4xf32>
    %206 = vector.broadcast %22 : vector<1x4xf32> to vector<8x4xf32>
    %207 = arith.addf %205, %206 : vector<8x4xf32>
    %cst_66 = arith.constant dense<0xFF800000> : vector<8xf32>
    %208 = vector.multi_reduction <maximumf>, %207, %cst_66 [1] : vector<8x4xf32> to vector<8xf32>
    %209 = vector.shape_cast %208 : vector<8xf32> to vector<8x1xf32>
    %210 = vector.broadcast %209 : vector<8x1xf32> to vector<8x4xf32>
    %211 = arith.subf %207, %210 : vector<8x4xf32>
    %212 = math.exp %211 : vector<8x4xf32>
    %cst_67 = arith.constant dense<0.000000e+00> : vector<8xf32>
    %213 = vector.multi_reduction <add>, %212, %cst_67 [1] : vector<8x4xf32> to vector<8xf32>
    %214 = vector.shape_cast %213 : vector<8xf32> to vector<8x1xf32>
    %215 = math.log %214 : vector<8x1xf32>
    %216 = vector.broadcast %215 : vector<8x1xf32> to vector<8x4xf32>
    %217 = arith.subf %211, %216 : vector<8x4xf32>
    %218 = vector.extract_strided_slice %153 {offsets = [0, 16], sizes = [8, 8], strides = [1, 1]} : vector<8x32xf32> to vector<8x8xf32>
    %219 = vector.extract_strided_slice %154 {offsets = [0, 16], sizes = [8, 8], strides = [1, 1]} : vector<8x32xf32> to vector<8x8xf32>
    %220 = vector.extract_strided_slice %155 {offsets = [0, 16], sizes = [8, 8], strides = [1, 1]} : vector<8x32xf32> to vector<8x8xf32>
    %cst_68 = arith.constant dense<0.000000e+00> : vector<8x8xf32>
    %221 = tpu.matmul %218, %219, %cst_68 {dimension_numbers = #tpu.dot_dimension_numbers<[1], [1], [0], [0], [0, 0, 1, 0], [], []>} : vector<8x8xf32>, vector<8x8xf32>, vector<8x8xf32> -> vector<8x8xf32>
    %cst_69 = arith.constant 0.353553385 : f32
    %222 = vector.broadcast %cst_69 : f32 to vector<8x8xf32>
    %223 = arith.mulf %221, %222 : vector<8x8xf32>
    %224 = arith.addf %223, %4 : vector<8x8xf32>
    %cst_70 = arith.constant dense<0xFF800000> : vector<8xf32>
    %225 = vector.multi_reduction <maximumf>, %224, %cst_70 [1] : vector<8x8xf32> to vector<8xf32>
    %226 = vector.shape_cast %225 : vector<8xf32> to vector<8x1xf32>
    %227 = vector.broadcast %226 : vector<8x1xf32> to vector<8x8xf32>
    %228 = arith.subf %224, %227 : vector<8x8xf32>
    %229 = math.exp %228 : vector<8x8xf32>
    %cst_71 = arith.constant dense<0.000000e+00> : vector<8xf32>
    %230 = vector.multi_reduction <add>, %229, %cst_71 [1] : vector<8x8xf32> to vector<8xf32>
    %231 = vector.shape_cast %230 : vector<8xf32> to vector<8x1xf32>
    %232 = tpu.reciprocal %231 {approx = true} : vector<8x1xf32> -> vector<8x1xf32>
    %233 = vector.broadcast %232 : vector<8x1xf32> to vector<8x8xf32>
    %234 = arith.mulf %229, %233 : vector<8x8xf32>
    %cst_72 = arith.constant dense<0.000000e+00> : vector<8x8xf32>
    %235 = tpu.matmul %234, %220, %cst_72 {dimension_numbers = #tpu.dot_dimension_numbers<[1], [0], [0], [1], [0, 0, 1, 1], [], []>} : vector<8x8xf32>, vector<8x8xf32>, vector<8x8xf32> -> vector<8x8xf32>
    %cst_73 = arith.constant dense<0.000000e+00> : vector<8x4xf32>
    %236 = tpu.matmul %235, %10, %cst_73 {dimension_numbers = #tpu.dot_dimension_numbers<[1], [0], [0], [1], [0, 0, 1, 1], [], []>} : vector<8x8xf32>, vector<8x4xf32>, vector<8x4xf32> -> vector<8x4xf32>
    %237 = vector.broadcast %22 : vector<1x4xf32> to vector<8x4xf32>
    %238 = arith.addf %236, %237 : vector<8x4xf32>
    %cst_74 = arith.constant dense<0xFF800000> : vector<8xf32>
    %239 = vector.multi_reduction <maximumf>, %238, %cst_74 [1] : vector<8x4xf32> to vector<8xf32>
    %240 = vector.shape_cast %239 : vector<8xf32> to vector<8x1xf32>
    %241 = vector.broadcast %240 : vector<8x1xf32> to vector<8x4xf32>
    %242 = arith.subf %238, %241 : vector<8x4xf32>
    %243 = math.exp %242 : vector<8x4xf32>
    %cst_75 = arith.constant dense<0.000000e+00> : vector<8xf32>
    %244 = vector.multi_reduction <add>, %243, %cst_75 [1] : vector<8x4xf32> to vector<8xf32>
    %245 = vector.shape_cast %244 : vector<8xf32> to vector<8x1xf32>
    %246 = math.log %245 : vector<8x1xf32>
    %247 = vector.broadcast %246 : vector<8x1xf32> to vector<8x4xf32>
    %248 = arith.subf %242, %247 : vector<8x4xf32>
    %249 = vector.extract_strided_slice %153 {offsets = [0, 24], sizes = [8, 8], strides = [1, 1]} : vector<8x32xf32> to vector<8x8xf32>
    %250 = vector.extract_strided_slice %154 {offsets = [0, 24], sizes = [8, 8], strides = [1, 1]} : vector<8x32xf32> to vector<8x8xf32>
    %251 = vector.extract_strided_slice %155 {offsets = [0, 24], sizes = [8, 8], strides = [1, 1]} : vector<8x32xf32> to vector<8x8xf32>
    %cst_76 = arith.constant dense<0.000000e+00> : vector<8x8xf32>
    %252 = tpu.matmul %249, %250, %cst_76 {dimension_numbers = #tpu.dot_dimension_numbers<[1], [1], [0], [0], [0, 0, 1, 0], [], []>} : vector<8x8xf32>, vector<8x8xf32>, vector<8x8xf32> -> vector<8x8xf32>
    %cst_77 = arith.constant 0.353553385 : f32
    %253 = vector.broadcast %cst_77 : f32 to vector<8x8xf32>
    %254 = arith.mulf %252, %253 : vector<8x8xf32>
    %255 = arith.addf %254, %4 : vector<8x8xf32>
    %cst_78 = arith.constant dense<0xFF800000> : vector<8xf32>
    %256 = vector.multi_reduction <maximumf>, %255, %cst_78 [1] : vector<8x8xf32> to vector<8xf32>
    %257 = vector.shape_cast %256 : vector<8xf32> to vector<8x1xf32>
    %258 = vector.broadcast %257 : vector<8x1xf32> to vector<8x8xf32>
    %259 = arith.subf %255, %258 : vector<8x8xf32>
    %260 = math.exp %259 : vector<8x8xf32>
    %cst_79 = arith.constant dense<0.000000e+00> : vector<8xf32>
    %261 = vector.multi_reduction <add>, %260, %cst_79 [1] : vector<8x8xf32> to vector<8xf32>
    %262 = vector.shape_cast %261 : vector<8xf32> to vector<8x1xf32>
    %263 = tpu.reciprocal %262 {approx = true} : vector<8x1xf32> -> vector<8x1xf32>
    %264 = vector.broadcast %263 : vector<8x1xf32> to vector<8x8xf32>
    %265 = arith.mulf %260, %264 : vector<8x8xf32>
    %cst_80 = arith.constant dense<0.000000e+00> : vector<8x8xf32>
    %266 = tpu.matmul %265, %251, %cst_80 {dimension_numbers = #tpu.dot_dimension_numbers<[1], [0], [0], [1], [0, 0, 1, 1], [], []>} : vector<8x8xf32>, vector<8x8xf32>, vector<8x8xf32> -> vector<8x8xf32>
    %cst_81 = arith.constant dense<0.000000e+00> : vector<8x4xf32>
    %267 = tpu.matmul %266, %10, %cst_81 {dimension_numbers = #tpu.dot_dimension_numbers<[1], [0], [0], [1], [0, 0, 1, 1], [], []>} : vector<8x8xf32>, vector<8x4xf32>, vector<8x4xf32> -> vector<8x4xf32>
    %268 = vector.broadcast %22 : vector<1x4xf32> to vector<8x4xf32>
    %269 = arith.addf %267, %268 : vector<8x4xf32>
    %cst_82 = arith.constant dense<0xFF800000> : vector<8xf32>
    %270 = vector.multi_reduction <maximumf>, %269, %cst_82 [1] : vector<8x4xf32> to vector<8xf32>
    %271 = vector.shape_cast %270 : vector<8xf32> to vector<8x1xf32>
    %272 = vector.broadcast %271 : vector<8x1xf32> to vector<8x4xf32>
    %273 = arith.subf %269, %272 : vector<8x4xf32>
    %274 = math.exp %273 : vector<8x4xf32>
    %cst_83 = arith.constant dense<0.000000e+00> : vector<8xf32>
    %275 = vector.multi_reduction <add>, %274, %cst_83 [1] : vector<8x4xf32> to vector<8xf32>
    %276 = vector.shape_cast %275 : vector<8xf32> to vector<8x1xf32>
    %277 = math.log %276 : vector<8x1xf32>
    %278 = vector.broadcast %277 : vector<8x1xf32> to vector<8x4xf32>
    %279 = arith.subf %273, %278 : vector<8x4xf32>
    %280 = tpu.concatenate %173, %204, %235, %266 in 1 : vector<8x8xf32>, vector<8x8xf32>, vector<8x8xf32>, vector<8x8xf32> -> vector<8x32xf32>
    %281 = tpu.concatenate %186, %217, %248, %279 in 1 : vector<8x4xf32>, vector<8x4xf32>, vector<8x4xf32>, vector<8x4xf32> -> vector<8x16xf32>
    %c8 = arith.constant 8 : index
    %c96_84 = arith.constant 96 : index
    %282 = vector.load %arg7[%c8, %c96_84] : memref<16x128xf32, #tpu.memory_space<vmem>>, vector<8x16xf32>
    tpu.vector_store %arg7[%c8, %c96_84], %281 {strides = array<i32>} : memref<16x128xf32, #tpu.memory_space<vmem>>, vector<8x16xf32>,
    %283 = tpu.concatenate %150, %280 in 0 : vector<8x32xf32>, vector<8x32xf32> -> vector<16x32xf32>
    %284 = vector.extract_strided_slice %6 {offsets = [0, 96], sizes = [32, 32], strides = [1, 1]} : vector<32x192xf32> to vector<32x32xf32>
    %cst_85 = arith.constant dense<0.000000e+00> : vector<16x32xf32>
    %285 = tpu.matmul %283, %284, %cst_85 {dimension_numbers = #tpu.dot_dimension_numbers<[1], [0], [0], [1], [0, 0, 1, 1], [], []>} : vector<16x32xf32>, vector<32x32xf32>, vector<16x32xf32> -> vector<16x32xf32>
    %286 = vector.extract_strided_slice %12 {offsets = [1, 0], sizes = [1, 32], strides = [1, 1]} : vector<9x128xf32> to vector<1x32xf32>
    %287 = vector.broadcast %286 : vector<1x32xf32> to vector<16x32xf32>
    %288 = arith.addf %285, %287 : vector<16x32xf32>
    %289 = arith.addf %288, %0 : vector<16x32xf32>
    %290 = vector.extract_strided_slice %12 {offsets = [4, 0], sizes = [1, 32], strides = [1, 1]} : vector<9x128xf32> to vector<1x32xf32>
    %291 = vector.extract_strided_slice %12 {offsets = [5, 0], sizes = [1, 32], strides = [1, 1]} : vector<9x128xf32> to vector<1x32xf32>
    %cst_86 = arith.constant dense<0.000000e+00> : vector<16xf32>
    %292 = vector.multi_reduction <add>, %289, %cst_86 [1] : vector<16x32xf32> to vector<16xf32>
    %293 = vector.shape_cast %292 : vector<16xf32> to vector<16x1xf32>
    %cst_87 = arith.constant 3.200000e+01 : f32
    %294 = vector.broadcast %cst_87 : f32 to vector<16x1xf32>
    %295 = arith.divf %293, %294 : vector<16x1xf32>
    %296 = vector.broadcast %295 : vector<16x1xf32> to vector<16x32xf32>
    %297 = arith.subf %289, %296 : vector<16x32xf32>
    %298 = arith.mulf %297, %297 : vector<16x32xf32>
    %cst_88 = arith.constant dense<0.000000e+00> : vector<16xf32>
    %299 = vector.multi_reduction <add>, %298, %cst_88 [1] : vector<16x32xf32> to vector<16xf32>
    %300 = vector.shape_cast %299 : vector<16xf32> to vector<16x1xf32>
    %cst_89 = arith.constant 3.200000e+01 : f32
    %301 = vector.broadcast %cst_89 : f32 to vector<16x1xf32>
    %302 = arith.divf %300, %301 : vector<16x1xf32>
    %303 = vector.broadcast %295 : vector<16x1xf32> to vector<16x32xf32>
    %304 = arith.subf %289, %303 : vector<16x32xf32>
    %cst_90 = arith.constant 9.99999974E-6 : f32
    %305 = vector.broadcast %cst_90 : f32 to vector<16x1xf32>
    %306 = arith.addf %302, %305 : vector<16x1xf32>
    %307 = math.rsqrt %306 : vector<16x1xf32>
    %308 = vector.broadcast %307 : vector<16x1xf32> to vector<16x32xf32>
    %309 = arith.mulf %304, %308 : vector<16x32xf32>
    %310 = vector.broadcast %290 : vector<1x32xf32> to vector<16x32xf32>
    %311 = arith.mulf %309, %310 : vector<16x32xf32>
    %312 = vector.broadcast %291 : vector<1x32xf32> to vector<16x32xf32>
    %313 = arith.addf %311, %312 : vector<16x32xf32>
    %314 = vector.extract_strided_slice %6 {offsets = [0, 128], sizes = [32, 64], strides = [1, 1]} : vector<32x192xf32> to vector<32x64xf32>
    %cst_91 = arith.constant dense<0.000000e+00> : vector<16x64xf32>
    %315 = tpu.matmul %313, %314, %cst_91 {dimension_numbers = #tpu.dot_dimension_numbers<[1], [0], [0], [1], [0, 0, 1, 1], [], []>} : vector<16x32xf32>, vector<32x64xf32>, vector<16x64xf32> -> vector<16x64xf32>
    %316 = vector.extract_strided_slice %12 {offsets = [2, 0], sizes = [1, 64], strides = [1, 1]} : vector<9x128xf32> to vector<1x64xf32>
    %317 = vector.broadcast %316 : vector<1x64xf32> to vector<16x64xf32>
    %318 = arith.addf %315, %317 : vector<16x64xf32>
    %cst_92 = arith.constant 0.000000e+00 : f32
    %319 = vector.broadcast %cst_92 : f32 to vector<16x64xf32>
    %320 = arith.maximumf %318, %319 : vector<16x64xf32>
    %cst_93 = arith.constant dense<0.000000e+00> : vector<16x32xf32>
    %321 = tpu.matmul %320, %8, %cst_93 {dimension_numbers = #tpu.dot_dimension_numbers<[1], [0], [0], [1], [0, 0, 1, 1], [], []>} : vector<16x64xf32>, vector<64x32xf32>, vector<16x32xf32> -> vector<16x32xf32>
    %322 = vector.extract_strided_slice %12 {offsets = [3, 0], sizes = [1, 32], strides = [1, 1]} : vector<9x128xf32> to vector<1x32xf32>
    %323 = vector.broadcast %322 : vector<1x32xf32> to vector<16x32xf32>
    %324 = arith.addf %321, %323 : vector<16x32xf32>
    %325 = arith.addf %324, %313 : vector<16x32xf32>
    %326 = vector.extract_strided_slice %12 {offsets = [6, 0], sizes = [1, 32], strides = [1, 1]} : vector<9x128xf32> to vector<1x32xf32>
    %327 = vector.extract_strided_slice %12 {offsets = [7, 0], sizes = [1, 32], strides = [1, 1]} : vector<9x128xf32> to vector<1x32xf32>
    %cst_94 = arith.constant dense<0.000000e+00> : vector<16xf32>
    %328 = vector.multi_reduction <add>, %325, %cst_94 [1] : vector<16x32xf32> to vector<16xf32>
    %329 = vector.shape_cast %328 : vector<16xf32> to vector<16x1xf32>
    %cst_95 = arith.constant 3.200000e+01 : f32
    %330 = vector.broadcast %cst_95 : f32 to vector<16x1xf32>
    %331 = arith.divf %329, %330 : vector<16x1xf32>
    %332 = vector.broadcast %331 : vector<16x1xf32> to vector<16x32xf32>
    %333 = arith.subf %325, %332 : vector<16x32xf32>
    %334 = arith.mulf %333, %333 : vector<16x32xf32>
    %cst_96 = arith.constant dense<0.000000e+00> : vector<16xf32>
    %335 = vector.multi_reduction <add>, %334, %cst_96 [1] : vector<16x32xf32> to vector<16xf32>
    %336 = vector.shape_cast %335 : vector<16xf32> to vector<16x1xf32>
    %cst_97 = arith.constant 3.200000e+01 : f32
    %337 = vector.broadcast %cst_97 : f32 to vector<16x1xf32>
    %338 = arith.divf %336, %337 : vector<16x1xf32>
    %339 = vector.broadcast %331 : vector<16x1xf32> to vector<16x32xf32>
    %340 = arith.subf %325, %339 : vector<16x32xf32>
    %cst_98 = arith.constant 9.99999974E-6 : f32
    %341 = vector.broadcast %cst_98 : f32 to vector<16x1xf32>
    %342 = arith.addf %338, %341 : vector<16x1xf32>
    %343 = math.rsqrt %342 : vector<16x1xf32>
    %344 = vector.broadcast %343 : vector<16x1xf32> to vector<16x32xf32>
    %345 = arith.mulf %340, %344 : vector<16x32xf32>
    %346 = vector.broadcast %326 : vector<1x32xf32> to vector<16x32xf32>
    %347 = arith.mulf %345, %346 : vector<16x32xf32>
    %348 = vector.broadcast %327 : vector<1x32xf32> to vector<16x32xf32>
    %349 = arith.addf %347, %348 : vector<16x32xf32>
    %c1_99 = arith.constant 1 : index
    %c0_100 = arith.constant 0 : index
    %c0_101 = arith.constant 0 : index
    %350 = vector.load %arg3[%c1_99, %c0_100, %c0_101] : memref<2x32x192xf32, #tpu.memory_space<vmem>>, vector<1x32x192xf32>
    %351 = vector.shape_cast %350 : vector<1x32x192xf32> to vector<32x192xf32>
    %c1_102 = arith.constant 1 : index
    %c0_103 = arith.constant 0 : index
    %c0_104 = arith.constant 0 : index
    %352 = vector.load %arg4[%c1_102, %c0_103, %c0_104] : memref<2x64x32xf32, #tpu.memory_space<vmem>>, vector<1x64x32xf32>
    %353 = vector.shape_cast %352 : vector<1x64x32xf32> to vector<64x32xf32>
    %c1_105 = arith.constant 1 : index
    %c0_106 = arith.constant 0 : index
    %c0_107 = arith.constant 0 : index
    %354 = vector.load %arg5[%c1_105, %c0_106, %c0_107] : memref<2x8x4xf32, #tpu.memory_space<vmem>>, vector<1x8x4xf32>
    %355 = vector.shape_cast %354 : vector<1x8x4xf32> to vector<8x4xf32>
    %c1_108 = arith.constant 1 : index
    %c0_109 = arith.constant 0 : index
    %c0_110 = arith.constant 0 : index
    %356 = vector.load %arg6[%c1_108, %c0_109, %c0_110] : memref<2x9x128xf32, #tpu.memory_space<vmem>>, vector<1x9x128xf32>
    %357 = vector.shape_cast %356 : vector<1x9x128xf32> to vector<9x128xf32>
    %c0_111 = arith.constant 0 : index
    %c64 = arith.constant 64 : index
    %358 = vector.load %arg7[%c0_111, %c64] : memref<16x128xf32, #tpu.memory_space<vmem>>, vector<16x32xf32>
    tpu.vector_store %arg7[%c0_111, %c64], %349 {strides = array<i32>} : memref<16x128xf32, #tpu.memory_space<vmem>>, vector<16x32xf32>,
    %359 = vector.extract_strided_slice %351 {offsets = [0, 0], sizes = [32, 96], strides = [1, 1]} : vector<32x192xf32> to vector<32x96xf32>
    %cst_112 = arith.constant dense<0.000000e+00> : vector<16x96xf32>
    %360 = tpu.matmul %349, %359, %cst_112 {dimension_numbers = #tpu.dot_dimension_numbers<[1], [0], [0], [1], [0, 0, 1, 1], [], []>} : vector<16x32xf32>, vector<32x96xf32>, vector<16x96xf32> -> vector<16x96xf32>
    %361 = vector.extract_strided_slice %357 {offsets = [0, 0], sizes = [1, 96], strides = [1, 1]} : vector<9x128xf32> to vector<1x96xf32>
    %362 = vector.broadcast %361 : vector<1x96xf32> to vector<16x96xf32>
    %363 = arith.addf %360, %362 : vector<16x96xf32>
    %364 = vector.extract_strided_slice %363 {offsets = [0, 0], sizes = [16, 32], strides = [1, 1]} : vector<16x96xf32> to vector<16x32xf32>
    %365 = vector.extract_strided_slice %363 {offsets = [0, 32], sizes = [16, 32], strides = [1, 1]} : vector<16x96xf32> to vector<16x32xf32>
    %366 = vector.extract_strided_slice %363 {offsets = [0, 64], sizes = [16, 32], strides = [1, 1]} : vector<16x96xf32> to vector<16x32xf32>
    %367 = vector.extract_strided_slice %357 {offsets = [8, 0], sizes = [1, 4], strides = [1, 1]} : vector<9x128xf32> to vector<1x4xf32>
    %368 = vector.extract_strided_slice %364 {offsets = [0, 0], sizes = [8, 32], strides = [1, 1]} : vector<16x32xf32> to vector<8x32xf32>
    %369 = vector.extract_strided_slice %365 {offsets = [0, 0], sizes = [8, 32], strides = [1, 1]} : vector<16x32xf32> to vector<8x32xf32>
    %370 = vector.extract_strided_slice %366 {offsets = [0, 0], sizes = [8, 32], strides = [1, 1]} : vector<16x32xf32> to vector<8x32xf32>
    %371 = vector.extract_strided_slice %368 {offsets = [0, 0], sizes = [8, 8], strides = [1, 1]} : vector<8x32xf32> to vector<8x8xf32>
    %372 = vector.extract_strided_slice %369 {offsets = [0, 0], sizes = [8, 8], strides = [1, 1]} : vector<8x32xf32> to vector<8x8xf32>
    %373 = vector.extract_strided_slice %370 {offsets = [0, 0], sizes = [8, 8], strides = [1, 1]} : vector<8x32xf32> to vector<8x8xf32>
    %cst_113 = arith.constant dense<0.000000e+00> : vector<8x8xf32>
    %374 = tpu.matmul %371, %372, %cst_113 {dimension_numbers = #tpu.dot_dimension_numbers<[1], [1], [0], [0], [0, 0, 1, 0], [], []>} : vector<8x8xf32>, vector<8x8xf32>, vector<8x8xf32> -> vector<8x8xf32>
    %cst_114 = arith.constant 0.353553385 : f32
    %375 = vector.broadcast %cst_114 : f32 to vector<8x8xf32>
    %376 = arith.mulf %374, %375 : vector<8x8xf32>
    %377 = arith.addf %376, %2 : vector<8x8xf32>
    %cst_115 = arith.constant dense<0xFF800000> : vector<8xf32>
    %378 = vector.multi_reduction <maximumf>, %377, %cst_115 [1] : vector<8x8xf32> to vector<8xf32>
    %379 = vector.shape_cast %378 : vector<8xf32> to vector<8x1xf32>
    %380 = vector.broadcast %379 : vector<8x1xf32> to vector<8x8xf32>
    %381 = arith.subf %377, %380 : vector<8x8xf32>
    %382 = math.exp %381 : vector<8x8xf32>
    %cst_116 = arith.constant dense<0.000000e+00> : vector<8xf32>
    %383 = vector.multi_reduction <add>, %382, %cst_116 [1] : vector<8x8xf32> to vector<8xf32>
    %384 = vector.shape_cast %383 : vector<8xf32> to vector<8x1xf32>
    %385 = tpu.reciprocal %384 {approx = true} : vector<8x1xf32> -> vector<8x1xf32>
    %386 = vector.broadcast %385 : vector<8x1xf32> to vector<8x8xf32>
    %387 = arith.mulf %382, %386 : vector<8x8xf32>
    %cst_117 = arith.constant dense<0.000000e+00> : vector<8x8xf32>
    %388 = tpu.matmul %387, %373, %cst_117 {dimension_numbers = #tpu.dot_dimension_numbers<[1], [0], [0], [1], [0, 0, 1, 1], [], []>} : vector<8x8xf32>, vector<8x8xf32>, vector<8x8xf32> -> vector<8x8xf32>
    %cst_118 = arith.constant dense<0.000000e+00> : vector<8x4xf32>
    %389 = tpu.matmul %388, %355, %cst_118 {dimension_numbers = #tpu.dot_dimension_numbers<[1], [0], [0], [1], [0, 0, 1, 1], [], []>} : vector<8x8xf32>, vector<8x4xf32>, vector<8x4xf32> -> vector<8x4xf32>
    %390 = vector.broadcast %367 : vector<1x4xf32> to vector<8x4xf32>
    %391 = arith.addf %389, %390 : vector<8x4xf32>
    %cst_119 = arith.constant dense<0xFF800000> : vector<8xf32>
    %392 = vector.multi_reduction <maximumf>, %391, %cst_119 [1] : vector<8x4xf32> to vector<8xf32>
    %393 = vector.shape_cast %392 : vector<8xf32> to vector<8x1xf32>
    %394 = vector.broadcast %393 : vector<8x1xf32> to vector<8x4xf32>
    %395 = arith.subf %391, %394 : vector<8x4xf32>
    %396 = math.exp %395 : vector<8x4xf32>
    %cst_120 = arith.constant dense<0.000000e+00> : vector<8xf32>
    %397 = vector.multi_reduction <add>, %396, %cst_120 [1] : vector<8x4xf32> to vector<8xf32>
    %398 = vector.shape_cast %397 : vector<8xf32> to vector<8x1xf32>
    %399 = math.log %398 : vector<8x1xf32>
    %400 = vector.broadcast %399 : vector<8x1xf32> to vector<8x4xf32>
    %401 = arith.subf %395, %400 : vector<8x4xf32>
    %402 = vector.extract_strided_slice %368 {offsets = [0, 8], sizes = [8, 8], strides = [1, 1]} : vector<8x32xf32> to vector<8x8xf32>
    %403 = vector.extract_strided_slice %369 {offsets = [0, 8], sizes = [8, 8], strides = [1, 1]} : vector<8x32xf32> to vector<8x8xf32>
    %404 = vector.extract_strided_slice %370 {offsets = [0, 8], sizes = [8, 8], strides = [1, 1]} : vector<8x32xf32> to vector<8x8xf32>
    %cst_121 = arith.constant dense<0.000000e+00> : vector<8x8xf32>
    %405 = tpu.matmul %402, %403, %cst_121 {dimension_numbers = #tpu.dot_dimension_numbers<[1], [1], [0], [0], [0, 0, 1, 0], [], []>} : vector<8x8xf32>, vector<8x8xf32>, vector<8x8xf32> -> vector<8x8xf32>
    %cst_122 = arith.constant 0.353553385 : f32
    %406 = vector.broadcast %cst_122 : f32 to vector<8x8xf32>
    %407 = arith.mulf %405, %406 : vector<8x8xf32>
    %408 = arith.addf %407, %2 : vector<8x8xf32>
    %cst_123 = arith.constant dense<0xFF800000> : vector<8xf32>
    %409 = vector.multi_reduction <maximumf>, %408, %cst_123 [1] : vector<8x8xf32> to vector<8xf32>
    %410 = vector.shape_cast %409 : vector<8xf32> to vector<8x1xf32>
    %411 = vector.broadcast %410 : vector<8x1xf32> to vector<8x8xf32>
    %412 = arith.subf %408, %411 : vector<8x8xf32>
    %413 = math.exp %412 : vector<8x8xf32>
    %cst_124 = arith.constant dense<0.000000e+00> : vector<8xf32>
    %414 = vector.multi_reduction <add>, %413, %cst_124 [1] : vector<8x8xf32> to vector<8xf32>
    %415 = vector.shape_cast %414 : vector<8xf32> to vector<8x1xf32>
    %416 = tpu.reciprocal %415 {approx = true} : vector<8x1xf32> -> vector<8x1xf32>
    %417 = vector.broadcast %416 : vector<8x1xf32> to vector<8x8xf32>
    %418 = arith.mulf %413, %417 : vector<8x8xf32>
    %cst_125 = arith.constant dense<0.000000e+00> : vector<8x8xf32>
    %419 = tpu.matmul %418, %404, %cst_125 {dimension_numbers = #tpu.dot_dimension_numbers<[1], [0], [0], [1], [0, 0, 1, 1], [], []>} : vector<8x8xf32>, vector<8x8xf32>, vector<8x8xf32> -> vector<8x8xf32>
    %cst_126 = arith.constant dense<0.000000e+00> : vector<8x4xf32>
    %420 = tpu.matmul %419, %355, %cst_126 {dimension_numbers = #tpu.dot_dimension_numbers<[1], [0], [0], [1], [0, 0, 1, 1], [], []>} : vector<8x8xf32>, vector<8x4xf32>, vector<8x4xf32> -> vector<8x4xf32>
    %421 = vector.broadcast %367 : vector<1x4xf32> to vector<8x4xf32>
    %422 = arith.addf %420, %421 : vector<8x4xf32>
    %cst_127 = arith.constant dense<0xFF800000> : vector<8xf32>
    %423 = vector.multi_reduction <maximumf>, %422, %cst_127 [1] : vector<8x4xf32> to vector<8xf32>
    %424 = vector.shape_cast %423 : vector<8xf32> to vector<8x1xf32>
    %425 = vector.broadcast %424 : vector<8x1xf32> to vector<8x4xf32>
    %426 = arith.subf %422, %425 : vector<8x4xf32>
    %427 = math.exp %426 : vector<8x4xf32>
    %cst_128 = arith.constant dense<0.000000e+00> : vector<8xf32>
    %428 = vector.multi_reduction <add>, %427, %cst_128 [1] : vector<8x4xf32> to vector<8xf32>
    %429 = vector.shape_cast %428 : vector<8xf32> to vector<8x1xf32>
    %430 = math.log %429 : vector<8x1xf32>
    %431 = vector.broadcast %430 : vector<8x1xf32> to vector<8x4xf32>
    %432 = arith.subf %426, %431 : vector<8x4xf32>
    %433 = vector.extract_strided_slice %368 {offsets = [0, 16], sizes = [8, 8], strides = [1, 1]} : vector<8x32xf32> to vector<8x8xf32>
    %434 = vector.extract_strided_slice %369 {offsets = [0, 16], sizes = [8, 8], strides = [1, 1]} : vector<8x32xf32> to vector<8x8xf32>
    %435 = vector.extract_strided_slice %370 {offsets = [0, 16], sizes = [8, 8], strides = [1, 1]} : vector<8x32xf32> to vector<8x8xf32>
    %cst_129 = arith.constant dense<0.000000e+00> : vector<8x8xf32>
    %436 = tpu.matmul %433, %434, %cst_129 {dimension_numbers = #tpu.dot_dimension_numbers<[1], [1], [0], [0], [0, 0, 1, 0], [], []>} : vector<8x8xf32>, vector<8x8xf32>, vector<8x8xf32> -> vector<8x8xf32>
    %cst_130 = arith.constant 0.353553385 : f32
    %437 = vector.broadcast %cst_130 : f32 to vector<8x8xf32>
    %438 = arith.mulf %436, %437 : vector<8x8xf32>
    %439 = arith.addf %438, %2 : vector<8x8xf32>
    %cst_131 = arith.constant dense<0xFF800000> : vector<8xf32>
    %440 = vector.multi_reduction <maximumf>, %439, %cst_131 [1] : vector<8x8xf32> to vector<8xf32>
    %441 = vector.shape_cast %440 : vector<8xf32> to vector<8x1xf32>
    %442 = vector.broadcast %441 : vector<8x1xf32> to vector<8x8xf32>
    %443 = arith.subf %439, %442 : vector<8x8xf32>
    %444 = math.exp %443 : vector<8x8xf32>
    %cst_132 = arith.constant dense<0.000000e+00> : vector<8xf32>
    %445 = vector.multi_reduction <add>, %444, %cst_132 [1] : vector<8x8xf32> to vector<8xf32>
    %446 = vector.shape_cast %445 : vector<8xf32> to vector<8x1xf32>
    %447 = tpu.reciprocal %446 {approx = true} : vector<8x1xf32> -> vector<8x1xf32>
    %448 = vector.broadcast %447 : vector<8x1xf32> to vector<8x8xf32>
    %449 = arith.mulf %444, %448 : vector<8x8xf32>
    %cst_133 = arith.constant dense<0.000000e+00> : vector<8x8xf32>
    %450 = tpu.matmul %449, %435, %cst_133 {dimension_numbers = #tpu.dot_dimension_numbers<[1], [0], [0], [1], [0, 0, 1, 1], [], []>} : vector<8x8xf32>, vector<8x8xf32>, vector<8x8xf32> -> vector<8x8xf32>
    %cst_134 = arith.constant dense<0.000000e+00> : vector<8x4xf32>
    %451 = tpu.matmul %450, %355, %cst_134 {dimension_numbers = #tpu.dot_dimension_numbers<[1], [0], [0], [1], [0, 0, 1, 1], [], []>} : vector<8x8xf32>, vector<8x4xf32>, vector<8x4xf32> -> vector<8x4xf32>
    %452 = vector.broadcast %367 : vector<1x4xf32> to vector<8x4xf32>
    %453 = arith.addf %451, %452 : vector<8x4xf32>
    %cst_135 = arith.constant dense<0xFF800000> : vector<8xf32>
    %454 = vector.multi_reduction <maximumf>, %453, %cst_135 [1] : vector<8x4xf32> to vector<8xf32>
    %455 = vector.shape_cast %454 : vector<8xf32> to vector<8x1xf32>
    %456 = vector.broadcast %455 : vector<8x1xf32> to vector<8x4xf32>
    %457 = arith.subf %453, %456 : vector<8x4xf32>
    %458 = math.exp %457 : vector<8x4xf32>
    %cst_136 = arith.constant dense<0.000000e+00> : vector<8xf32>
    %459 = vector.multi_reduction <add>, %458, %cst_136 [1] : vector<8x4xf32> to vector<8xf32>
    %460 = vector.shape_cast %459 : vector<8xf32> to vector<8x1xf32>
    %461 = math.log %460 : vector<8x1xf32>
    %462 = vector.broadcast %461 : vector<8x1xf32> to vector<8x4xf32>
    %463 = arith.subf %457, %462 : vector<8x4xf32>
    %464 = vector.extract_strided_slice %368 {offsets = [0, 24], sizes = [8, 8], strides = [1, 1]} : vector<8x32xf32> to vector<8x8xf32>
    %465 = vector.extract_strided_slice %369 {offsets = [0, 24], sizes = [8, 8], strides = [1, 1]} : vector<8x32xf32> to vector<8x8xf32>
    %466 = vector.extract_strided_slice %370 {offsets = [0, 24], sizes = [8, 8], strides = [1, 1]} : vector<8x32xf32> to vector<8x8xf32>
    %cst_137 = arith.constant dense<0.000000e+00> : vector<8x8xf32>
    %467 = tpu.matmul %464, %465, %cst_137 {dimension_numbers = #tpu.dot_dimension_numbers<[1], [1], [0], [0], [0, 0, 1, 0], [], []>} : vector<8x8xf32>, vector<8x8xf32>, vector<8x8xf32> -> vector<8x8xf32>
    %cst_138 = arith.constant 0.353553385 : f32
    %468 = vector.broadcast %cst_138 : f32 to vector<8x8xf32>
    %469 = arith.mulf %467, %468 : vector<8x8xf32>
    %470 = arith.addf %469, %2 : vector<8x8xf32>
    %cst_139 = arith.constant dense<0xFF800000> : vector<8xf32>
    %471 = vector.multi_reduction <maximumf>, %470, %cst_139 [1] : vector<8x8xf32> to vector<8xf32>
    %472 = vector.shape_cast %471 : vector<8xf32> to vector<8x1xf32>
    %473 = vector.broadcast %472 : vector<8x1xf32> to vector<8x8xf32>
    %474 = arith.subf %470, %473 : vector<8x8xf32>
    %475 = math.exp %474 : vector<8x8xf32>
    %cst_140 = arith.constant dense<0.000000e+00> : vector<8xf32>
    %476 = vector.multi_reduction <add>, %475, %cst_140 [1] : vector<8x8xf32> to vector<8xf32>
    %477 = vector.shape_cast %476 : vector<8xf32> to vector<8x1xf32>
    %478 = tpu.reciprocal %477 {approx = true} : vector<8x1xf32> -> vector<8x1xf32>
    %479 = vector.broadcast %478 : vector<8x1xf32> to vector<8x8xf32>
    %480 = arith.mulf %475, %479 : vector<8x8xf32>
    %cst_141 = arith.constant dense<0.000000e+00> : vector<8x8xf32>
    %481 = tpu.matmul %480, %466, %cst_141 {dimension_numbers = #tpu.dot_dimension_numbers<[1], [0], [0], [1], [0, 0, 1, 1], [], []>} : vector<8x8xf32>, vector<8x8xf32>, vector<8x8xf32> -> vector<8x8xf32>
    %cst_142 = arith.constant dense<0.000000e+00> : vector<8x4xf32>
    %482 = tpu.matmul %481, %355, %cst_142 {dimension_numbers = #tpu.dot_dimension_numbers<[1], [0], [0], [1], [0, 0, 1, 1], [], []>} : vector<8x8xf32>, vector<8x4xf32>, vector<8x4xf32> -> vector<8x4xf32>
    %483 = vector.broadcast %367 : vector<1x4xf32> to vector<8x4xf32>
    %484 = arith.addf %482, %483 : vector<8x4xf32>
    %cst_143 = arith.constant dense<0xFF800000> : vector<8xf32>
    %485 = vector.multi_reduction <maximumf>, %484, %cst_143 [1] : vector<8x4xf32> to vector<8xf32>
    %486 = vector.shape_cast %485 : vector<8xf32> to vector<8x1xf32>
    %487 = vector.broadcast %486 : vector<8x1xf32> to vector<8x4xf32>
    %488 = arith.subf %484, %487 : vector<8x4xf32>
    %489 = math.exp %488 : vector<8x4xf32>
    %cst_144 = arith.constant dense<0.000000e+00> : vector<8xf32>
    %490 = vector.multi_reduction <add>, %489, %cst_144 [1] : vector<8x4xf32> to vector<8xf32>
    %491 = vector.shape_cast %490 : vector<8xf32> to vector<8x1xf32>
    %492 = math.log %491 : vector<8x1xf32>
    %493 = vector.broadcast %492 : vector<8x1xf32> to vector<8x4xf32>
    %494 = arith.subf %488, %493 : vector<8x4xf32>
    %495 = tpu.concatenate %388, %419, %450, %481 in 1 : vector<8x8xf32>, vector<8x8xf32>, vector<8x8xf32>, vector<8x8xf32> -> vector<8x32xf32>
    %496 = tpu.concatenate %401, %432, %463, %494 in 1 : vector<8x4xf32>, vector<8x4xf32>, vector<8x4xf32>, vector<8x4xf32> -> vector<8x16xf32>
    %c0_145 = arith.constant 0 : index
    %c112 = arith.constant 112 : index
    %497 = vector.load %arg7[%c0_145, %c112] : memref<16x128xf32, #tpu.memory_space<vmem>>, vector<8x16xf32>
    tpu.vector_store %arg7[%c0_145, %c112], %496 {strides = array<i32>} : memref<16x128xf32, #tpu.memory_space<vmem>>, vector<8x16xf32>,
    %498 = vector.extract_strided_slice %364 {offsets = [8, 0], sizes = [8, 32], strides = [1, 1]} : vector<16x32xf32> to vector<8x32xf32>
    %499 = vector.extract_strided_slice %365 {offsets = [8, 0], sizes = [8, 32], strides = [1, 1]} : vector<16x32xf32> to vector<8x32xf32>
    %500 = vector.extract_strided_slice %366 {offsets = [8, 0], sizes = [8, 32], strides = [1, 1]} : vector<16x32xf32> to vector<8x32xf32>
    %501 = vector.extract_strided_slice %498 {offsets = [0, 0], sizes = [8, 8], strides = [1, 1]} : vector<8x32xf32> to vector<8x8xf32>
    %502 = vector.extract_strided_slice %499 {offsets = [0, 0], sizes = [8, 8], strides = [1, 1]} : vector<8x32xf32> to vector<8x8xf32>
    %503 = vector.extract_strided_slice %500 {offsets = [0, 0], sizes = [8, 8], strides = [1, 1]} : vector<8x32xf32> to vector<8x8xf32>
    %cst_146 = arith.constant dense<0.000000e+00> : vector<8x8xf32>
    %504 = tpu.matmul %501, %502, %cst_146 {dimension_numbers = #tpu.dot_dimension_numbers<[1], [1], [0], [0], [0, 0, 1, 0], [], []>} : vector<8x8xf32>, vector<8x8xf32>, vector<8x8xf32> -> vector<8x8xf32>
    %cst_147 = arith.constant 0.353553385 : f32
    %505 = vector.broadcast %cst_147 : f32 to vector<8x8xf32>
    %506 = arith.mulf %504, %505 : vector<8x8xf32>
    %507 = arith.addf %506, %4 : vector<8x8xf32>
    %cst_148 = arith.constant dense<0xFF800000> : vector<8xf32>
    %508 = vector.multi_reduction <maximumf>, %507, %cst_148 [1] : vector<8x8xf32> to vector<8xf32>
    %509 = vector.shape_cast %508 : vector<8xf32> to vector<8x1xf32>
    %510 = vector.broadcast %509 : vector<8x1xf32> to vector<8x8xf32>
    %511 = arith.subf %507, %510 : vector<8x8xf32>
    %512 = math.exp %511 : vector<8x8xf32>
    %cst_149 = arith.constant dense<0.000000e+00> : vector<8xf32>
    %513 = vector.multi_reduction <add>, %512, %cst_149 [1] : vector<8x8xf32> to vector<8xf32>
    %514 = vector.shape_cast %513 : vector<8xf32> to vector<8x1xf32>
    %515 = tpu.reciprocal %514 {approx = true} : vector<8x1xf32> -> vector<8x1xf32>
    %516 = vector.broadcast %515 : vector<8x1xf32> to vector<8x8xf32>
    %517 = arith.mulf %512, %516 : vector<8x8xf32>
    %cst_150 = arith.constant dense<0.000000e+00> : vector<8x8xf32>
    %518 = tpu.matmul %517, %503, %cst_150 {dimension_numbers = #tpu.dot_dimension_numbers<[1], [0], [0], [1], [0, 0, 1, 1], [], []>} : vector<8x8xf32>, vector<8x8xf32>, vector<8x8xf32> -> vector<8x8xf32>
    %cst_151 = arith.constant dense<0.000000e+00> : vector<8x4xf32>
    %519 = tpu.matmul %518, %355, %cst_151 {dimension_numbers = #tpu.dot_dimension_numbers<[1], [0], [0], [1], [0, 0, 1, 1], [], []>} : vector<8x8xf32>, vector<8x4xf32>, vector<8x4xf32> -> vector<8x4xf32>
    %520 = vector.broadcast %367 : vector<1x4xf32> to vector<8x4xf32>
    %521 = arith.addf %519, %520 : vector<8x4xf32>
    %cst_152 = arith.constant dense<0xFF800000> : vector<8xf32>
    %522 = vector.multi_reduction <maximumf>, %521, %cst_152 [1] : vector<8x4xf32> to vector<8xf32>
    %523 = vector.shape_cast %522 : vector<8xf32> to vector<8x1xf32>
    %524 = vector.broadcast %523 : vector<8x1xf32> to vector<8x4xf32>
    %525 = arith.subf %521, %524 : vector<8x4xf32>
    %526 = math.exp %525 : vector<8x4xf32>
    %cst_153 = arith.constant dense<0.000000e+00> : vector<8xf32>
    %527 = vector.multi_reduction <add>, %526, %cst_153 [1] : vector<8x4xf32> to vector<8xf32>
    %528 = vector.shape_cast %527 : vector<8xf32> to vector<8x1xf32>
    %529 = math.log %528 : vector<8x1xf32>
    %530 = vector.broadcast %529 : vector<8x1xf32> to vector<8x4xf32>
    %531 = arith.subf %525, %530 : vector<8x4xf32>
    %532 = vector.extract_strided_slice %498 {offsets = [0, 8], sizes = [8, 8], strides = [1, 1]} : vector<8x32xf32> to vector<8x8xf32>
    %533 = vector.extract_strided_slice %499 {offsets = [0, 8], sizes = [8, 8], strides = [1, 1]} : vector<8x32xf32> to vector<8x8xf32>
    %534 = vector.extract_strided_slice %500 {offsets = [0, 8], sizes = [8, 8], strides = [1, 1]} : vector<8x32xf32> to vector<8x8xf32>
    %cst_154 = arith.constant dense<0.000000e+00> : vector<8x8xf32>
    %535 = tpu.matmul %532, %533, %cst_154 {dimension_numbers = #tpu.dot_dimension_numbers<[1], [1], [0], [0], [0, 0, 1, 0], [], []>} : vector<8x8xf32>, vector<8x8xf32>, vector<8x8xf32> -> vector<8x8xf32>
    %cst_155 = arith.constant 0.353553385 : f32
    %536 = vector.broadcast %cst_155 : f32 to vector<8x8xf32>
    %537 = arith.mulf %535, %536 : vector<8x8xf32>
    %538 = arith.addf %537, %4 : vector<8x8xf32>
    %cst_156 = arith.constant dense<0xFF800000> : vector<8xf32>
    %539 = vector.multi_reduction <maximumf>, %538, %cst_156 [1] : vector<8x8xf32> to vector<8xf32>
    %540 = vector.shape_cast %539 : vector<8xf32> to vector<8x1xf32>
    %541 = vector.broadcast %540 : vector<8x1xf32> to vector<8x8xf32>
    %542 = arith.subf %538, %541 : vector<8x8xf32>
    %543 = math.exp %542 : vector<8x8xf32>
    %cst_157 = arith.constant dense<0.000000e+00> : vector<8xf32>
    %544 = vector.multi_reduction <add>, %543, %cst_157 [1] : vector<8x8xf32> to vector<8xf32>
    %545 = vector.shape_cast %544 : vector<8xf32> to vector<8x1xf32>
    %546 = tpu.reciprocal %545 {approx = true} : vector<8x1xf32> -> vector<8x1xf32>
    %547 = vector.broadcast %546 : vector<8x1xf32> to vector<8x8xf32>
    %548 = arith.mulf %543, %547 : vector<8x8xf32>
    %cst_158 = arith.constant dense<0.000000e+00> : vector<8x8xf32>
    %549 = tpu.matmul %548, %534, %cst_158 {dimension_numbers = #tpu.dot_dimension_numbers<[1], [0], [0], [1], [0, 0, 1, 1], [], []>} : vector<8x8xf32>, vector<8x8xf32>, vector<8x8xf32> -> vector<8x8xf32>
    %cst_159 = arith.constant dense<0.000000e+00> : vector<8x4xf32>
    %550 = tpu.matmul %549, %355, %cst_159 {dimension_numbers = #tpu.dot_dimension_numbers<[1], [0], [0], [1], [0, 0, 1, 1], [], []>} : vector<8x8xf32>, vector<8x4xf32>, vector<8x4xf32> -> vector<8x4xf32>
    %551 = vector.broadcast %367 : vector<1x4xf32> to vector<8x4xf32>
    %552 = arith.addf %550, %551 : vector<8x4xf32>
    %cst_160 = arith.constant dense<0xFF800000> : vector<8xf32>
    %553 = vector.multi_reduction <maximumf>, %552, %cst_160 [1] : vector<8x4xf32> to vector<8xf32>
    %554 = vector.shape_cast %553 : vector<8xf32> to vector<8x1xf32>
    %555 = vector.broadcast %554 : vector<8x1xf32> to vector<8x4xf32>
    %556 = arith.subf %552, %555 : vector<8x4xf32>
    %557 = math.exp %556 : vector<8x4xf32>
    %cst_161 = arith.constant dense<0.000000e+00> : vector<8xf32>
    %558 = vector.multi_reduction <add>, %557, %cst_161 [1] : vector<8x4xf32> to vector<8xf32>
    %559 = vector.shape_cast %558 : vector<8xf32> to vector<8x1xf32>
    %560 = math.log %559 : vector<8x1xf32>
    %561 = vector.broadcast %560 : vector<8x1xf32> to vector<8x4xf32>
    %562 = arith.subf %556, %561 : vector<8x4xf32>
    %563 = vector.extract_strided_slice %498 {offsets = [0, 16], sizes = [8, 8], strides = [1, 1]} : vector<8x32xf32> to vector<8x8xf32>
    %564 = vector.extract_strided_slice %499 {offsets = [0, 16], sizes = [8, 8], strides = [1, 1]} : vector<8x32xf32> to vector<8x8xf32>
    %565 = vector.extract_strided_slice %500 {offsets = [0, 16], sizes = [8, 8], strides = [1, 1]} : vector<8x32xf32> to vector<8x8xf32>
    %cst_162 = arith.constant dense<0.000000e+00> : vector<8x8xf32>
    %566 = tpu.matmul %563, %564, %cst_162 {dimension_numbers = #tpu.dot_dimension_numbers<[1], [1], [0], [0], [0, 0, 1, 0], [], []>} : vector<8x8xf32>, vector<8x8xf32>, vector<8x8xf32> -> vector<8x8xf32>
    %cst_163 = arith.constant 0.353553385 : f32
    %567 = vector.broadcast %cst_163 : f32 to vector<8x8xf32>
    %568 = arith.mulf %566, %567 : vector<8x8xf32>
    %569 = arith.addf %568, %4 : vector<8x8xf32>
    %cst_164 = arith.constant dense<0xFF800000> : vector<8xf32>
    %570 = vector.multi_reduction <maximumf>, %569, %cst_164 [1] : vector<8x8xf32> to vector<8xf32>
    %571 = vector.shape_cast %570 : vector<8xf32> to vector<8x1xf32>
    %572 = vector.broadcast %571 : vector<8x1xf32> to vector<8x8xf32>
    %573 = arith.subf %569, %572 : vector<8x8xf32>
    %574 = math.exp %573 : vector<8x8xf32>
    %cst_165 = arith.constant dense<0.000000e+00> : vector<8xf32>
    %575 = vector.multi_reduction <add>, %574, %cst_165 [1] : vector<8x8xf32> to vector<8xf32>
    %576 = vector.shape_cast %575 : vector<8xf32> to vector<8x1xf32>
    %577 = tpu.reciprocal %576 {approx = true} : vector<8x1xf32> -> vector<8x1xf32>
    %578 = vector.broadcast %577 : vector<8x1xf32> to vector<8x8xf32>
    %579 = arith.mulf %574, %578 : vector<8x8xf32>
    %cst_166 = arith.constant dense<0.000000e+00> : vector<8x8xf32>
    %580 = tpu.matmul %579, %565, %cst_166 {dimension_numbers = #tpu.dot_dimension_numbers<[1], [0], [0], [1], [0, 0, 1, 1], [], []>} : vector<8x8xf32>, vector<8x8xf32>, vector<8x8xf32> -> vector<8x8xf32>
    %cst_167 = arith.constant dense<0.000000e+00> : vector<8x4xf32>
    %581 = tpu.matmul %580, %355, %cst_167 {dimension_numbers = #tpu.dot_dimension_numbers<[1], [0], [0], [1], [0, 0, 1, 1], [], []>} : vector<8x8xf32>, vector<8x4xf32>, vector<8x4xf32> -> vector<8x4xf32>
    %582 = vector.broadcast %367 : vector<1x4xf32> to vector<8x4xf32>
    %583 = arith.addf %581, %582 : vector<8x4xf32>
    %cst_168 = arith.constant dense<0xFF800000> : vector<8xf32>
    %584 = vector.multi_reduction <maximumf>, %583, %cst_168 [1] : vector<8x4xf32> to vector<8xf32>
    %585 = vector.shape_cast %584 : vector<8xf32> to vector<8x1xf32>
    %586 = vector.broadcast %585 : vector<8x1xf32> to vector<8x4xf32>
    %587 = arith.subf %583, %586 : vector<8x4xf32>
    %588 = math.exp %587 : vector<8x4xf32>
    %cst_169 = arith.constant dense<0.000000e+00> : vector<8xf32>
    %589 = vector.multi_reduction <add>, %588, %cst_169 [1] : vector<8x4xf32> to vector<8xf32>
    %590 = vector.shape_cast %589 : vector<8xf32> to vector<8x1xf32>
    %591 = math.log %590 : vector<8x1xf32>
    %592 = vector.broadcast %591 : vector<8x1xf32> to vector<8x4xf32>
    %593 = arith.subf %587, %592 : vector<8x4xf32>
    %594 = vector.extract_strided_slice %498 {offsets = [0, 24], sizes = [8, 8], strides = [1, 1]} : vector<8x32xf32> to vector<8x8xf32>
    %595 = vector.extract_strided_slice %499 {offsets = [0, 24], sizes = [8, 8], strides = [1, 1]} : vector<8x32xf32> to vector<8x8xf32>
    %596 = vector.extract_strided_slice %500 {offsets = [0, 24], sizes = [8, 8], strides = [1, 1]} : vector<8x32xf32> to vector<8x8xf32>
    %cst_170 = arith.constant dense<0.000000e+00> : vector<8x8xf32>
    %597 = tpu.matmul %594, %595, %cst_170 {dimension_numbers = #tpu.dot_dimension_numbers<[1], [1], [0], [0], [0, 0, 1, 0], [], []>} : vector<8x8xf32>, vector<8x8xf32>, vector<8x8xf32> -> vector<8x8xf32>
    %cst_171 = arith.constant 0.353553385 : f32
    %598 = vector.broadcast %cst_171 : f32 to vector<8x8xf32>
    %599 = arith.mulf %597, %598 : vector<8x8xf32>
    %600 = arith.addf %599, %4 : vector<8x8xf32>
    %cst_172 = arith.constant dense<0xFF800000> : vector<8xf32>
    %601 = vector.multi_reduction <maximumf>, %600, %cst_172 [1] : vector<8x8xf32> to vector<8xf32>
    %602 = vector.shape_cast %601 : vector<8xf32> to vector<8x1xf32>
    %603 = vector.broadcast %602 : vector<8x1xf32> to vector<8x8xf32>
    %604 = arith.subf %600, %603 : vector<8x8xf32>
    %605 = math.exp %604 : vector<8x8xf32>
    %cst_173 = arith.constant dense<0.000000e+00> : vector<8xf32>
    %606 = vector.multi_reduction <add>, %605, %cst_173 [1] : vector<8x8xf32> to vector<8xf32>
    %607 = vector.shape_cast %606 : vector<8xf32> to vector<8x1xf32>
    %608 = tpu.reciprocal %607 {approx = true} : vector<8x1xf32> -> vector<8x1xf32>
    %609 = vector.broadcast %608 : vector<8x1xf32> to vector<8x8xf32>
    %610 = arith.mulf %605, %609 : vector<8x8xf32>
    %cst_174 = arith.constant dense<0.000000e+00> : vector<8x8xf32>
    %611 = tpu.matmul %610, %596, %cst_174 {dimension_numbers = #tpu.dot_dimension_numbers<[1], [0], [0], [1], [0, 0, 1, 1], [], []>} : vector<8x8xf32>, vector<8x8xf32>, vector<8x8xf32> -> vector<8x8xf32>
    %cst_175 = arith.constant dense<0.000000e+00> : vector<8x4xf32>
    %612 = tpu.matmul %611, %355, %cst_175 {dimension_numbers = #tpu.dot_dimension_numbers<[1], [0], [0], [1], [0, 0, 1, 1], [], []>} : vector<8x8xf32>, vector<8x4xf32>, vector<8x4xf32> -> vector<8x4xf32>
    %613 = vector.broadcast %367 : vector<1x4xf32> to vector<8x4xf32>
    %614 = arith.addf %612, %613 : vector<8x4xf32>
    %cst_176 = arith.constant dense<0xFF800000> : vector<8xf32>
    %615 = vector.multi_reduction <maximumf>, %614, %cst_176 [1] : vector<8x4xf32> to vector<8xf32>
    %616 = vector.shape_cast %615 : vector<8xf32> to vector<8x1xf32>
    %617 = vector.broadcast %616 : vector<8x1xf32> to vector<8x4xf32>
    %618 = arith.subf %614, %617 : vector<8x4xf32>
    %619 = math.exp %618 : vector<8x4xf32>
    %cst_177 = arith.constant dense<0.000000e+00> : vector<8xf32>
    %620 = vector.multi_reduction <add>, %619, %cst_177 [1] : vector<8x4xf32> to vector<8xf32>
    %621 = vector.shape_cast %620 : vector<8xf32> to vector<8x1xf32>
    %622 = math.log %621 : vector<8x1xf32>
    %623 = vector.broadcast %622 : vector<8x1xf32> to vector<8x4xf32>
    %624 = arith.subf %618, %623 : vector<8x4xf32>
    %625 = tpu.concatenate %518, %549, %580, %611 in 1 : vector<8x8xf32>, vector<8x8xf32>, vector<8x8xf32>, vector<8x8xf32> -> vector<8x32xf32>
    %626 = tpu.concatenate %531, %562, %593, %624 in 1 : vector<8x4xf32>, vector<8x4xf32>, vector<8x4xf32>, vector<8x4xf32> -> vector<8x16xf32>
    %c8_178 = arith.constant 8 : index
    %c112_179 = arith.constant 112 : index
    %627 = vector.load %arg7[%c8_178, %c112_179] : memref<16x128xf32, #tpu.memory_space<vmem>>, vector<8x16xf32>
    tpu.vector_store %arg7[%c8_178, %c112_179], %626 {strides = array<i32>} : memref<16x128xf32, #tpu.memory_space<vmem>>, vector<8x16xf32>,
    %628 = tpu.concatenate %495, %625 in 0 : vector<8x32xf32>, vector<8x32xf32> -> vector<16x32xf32>
    %629 = vector.extract_strided_slice %351 {offsets = [0, 96], sizes = [32, 32], strides = [1, 1]} : vector<32x192xf32> to vector<32x32xf32>
    %cst_180 = arith.constant dense<0.000000e+00> : vector<16x32xf32>
    %630 = tpu.matmul %628, %629, %cst_180 {dimension_numbers = #tpu.dot_dimension_numbers<[1], [0], [0], [1], [0, 0, 1, 1], [], []>} : vector<16x32xf32>, vector<32x32xf32>, vector<16x32xf32> -> vector<16x32xf32>
    %631 = vector.extract_strided_slice %357 {offsets = [1, 0], sizes = [1, 32], strides = [1, 1]} : vector<9x128xf32> to vector<1x32xf32>
    %632 = vector.broadcast %631 : vector<1x32xf32> to vector<16x32xf32>
    %633 = arith.addf %630, %632 : vector<16x32xf32>
    %634 = arith.addf %633, %349 : vector<16x32xf32>
    %635 = vector.extract_strided_slice %357 {offsets = [4, 0], sizes = [1, 32], strides = [1, 1]} : vector<9x128xf32> to vector<1x32xf32>
    %636 = vector.extract_strided_slice %357 {offsets = [5, 0], sizes = [1, 32], strides = [1, 1]} : vector<9x128xf32> to vector<1x32xf32>
    %cst_181 = arith.constant dense<0.000000e+00> : vector<16xf32>
    %637 = vector.multi_reduction <add>, %634, %cst_181 [1] : vector<16x32xf32> to vector<16xf32>
    %638 = vector.shape_cast %637 : vector<16xf32> to vector<16x1xf32>
    %cst_182 = arith.constant 3.200000e+01 : f32
    %639 = vector.broadcast %cst_182 : f32 to vector<16x1xf32>
    %640 = arith.divf %638, %639 : vector<16x1xf32>
    %641 = vector.broadcast %640 : vector<16x1xf32> to vector<16x32xf32>
    %642 = arith.subf %634, %641 : vector<16x32xf32>
    %643 = arith.mulf %642, %642 : vector<16x32xf32>
    %cst_183 = arith.constant dense<0.000000e+00> : vector<16xf32>
    %644 = vector.multi_reduction <add>, %643, %cst_183 [1] : vector<16x32xf32> to vector<16xf32>
    %645 = vector.shape_cast %644 : vector<16xf32> to vector<16x1xf32>
    %cst_184 = arith.constant 3.200000e+01 : f32
    %646 = vector.broadcast %cst_184 : f32 to vector<16x1xf32>
    %647 = arith.divf %645, %646 : vector<16x1xf32>
    %648 = vector.broadcast %640 : vector<16x1xf32> to vector<16x32xf32>
    %649 = arith.subf %634, %648 : vector<16x32xf32>
    %cst_185 = arith.constant 9.99999974E-6 : f32
    %650 = vector.broadcast %cst_185 : f32 to vector<16x1xf32>
    %651 = arith.addf %647, %650 : vector<16x1xf32>
    %652 = math.rsqrt %651 : vector<16x1xf32>
    %653 = vector.broadcast %652 : vector<16x1xf32> to vector<16x32xf32>
    %654 = arith.mulf %649, %653 : vector<16x32xf32>
    %655 = vector.broadcast %635 : vector<1x32xf32> to vector<16x32xf32>
    %656 = arith.mulf %654, %655 : vector<16x32xf32>
    %657 = vector.broadcast %636 : vector<1x32xf32> to vector<16x32xf32>
    %658 = arith.addf %656, %657 : vector<16x32xf32>
    %659 = vector.extract_strided_slice %351 {offsets = [0, 128], sizes = [32, 64], strides = [1, 1]} : vector<32x192xf32> to vector<32x64xf32>
    %cst_186 = arith.constant dense<0.000000e+00> : vector<16x64xf32>
    %660 = tpu.matmul %658, %659, %cst_186 {dimension_numbers = #tpu.dot_dimension_numbers<[1], [0], [0], [1], [0, 0, 1, 1], [], []>} : vector<16x32xf32>, vector<32x64xf32>, vector<16x64xf32> -> vector<16x64xf32>
    %661 = vector.extract_strided_slice %357 {offsets = [2, 0], sizes = [1, 64], strides = [1, 1]} : vector<9x128xf32> to vector<1x64xf32>
    %662 = vector.broadcast %661 : vector<1x64xf32> to vector<16x64xf32>
    %663 = arith.addf %660, %662 : vector<16x64xf32>
    %cst_187 = arith.constant 0.000000e+00 : f32
    %664 = vector.broadcast %cst_187 : f32 to vector<16x64xf32>
    %665 = arith.maximumf %663, %664 : vector<16x64xf32>
    %cst_188 = arith.constant dense<0.000000e+00> : vector<16x32xf32>
    %666 = tpu.matmul %665, %353, %cst_188 {dimension_numbers = #tpu.dot_dimension_numbers<[1], [0], [0], [1], [0, 0, 1, 1], [], []>} : vector<16x64xf32>, vector<64x32xf32>, vector<16x32xf32> -> vector<16x32xf32>
    %667 = vector.extract_strided_slice %357 {offsets = [3, 0], sizes = [1, 32], strides = [1, 1]} : vector<9x128xf32> to vector<1x32xf32>
    %668 = vector.broadcast %667 : vector<1x32xf32> to vector<16x32xf32>
    %669 = arith.addf %666, %668 : vector<16x32xf32>
    %670 = arith.addf %669, %658 : vector<16x32xf32>
    %671 = vector.extract_strided_slice %357 {offsets = [6, 0], sizes = [1, 32], strides = [1, 1]} : vector<9x128xf32> to vector<1x32xf32>
    %672 = vector.extract_strided_slice %357 {offsets = [7, 0], sizes = [1, 32], strides = [1, 1]} : vector<9x128xf32> to vector<1x32xf32>
    %cst_189 = arith.constant dense<0.000000e+00> : vector<16xf32>
    %673 = vector.multi_reduction <add>, %670, %cst_189 [1] : vector<16x32xf32> to vector<16xf32>
    %674 = vector.shape_cast %673 : vector<16xf32> to vector<16x1xf32>
    %cst_190 = arith.constant 3.200000e+01 : f32
    %675 = vector.broadcast %cst_190 : f32 to vector<16x1xf32>
    %676 = arith.divf %674, %675 : vector<16x1xf32>
    %677 = vector.broadcast %676 : vector<16x1xf32> to vector<16x32xf32>
    %678 = arith.subf %670, %677 : vector<16x32xf32>
    %679 = arith.mulf %678, %678 : vector<16x32xf32>
    %cst_191 = arith.constant dense<0.000000e+00> : vector<16xf32>
    %680 = vector.multi_reduction <add>, %679, %cst_191 [1] : vector<16x32xf32> to vector<16xf32>
    %681 = vector.shape_cast %680 : vector<16xf32> to vector<16x1xf32>
    %cst_192 = arith.constant 3.200000e+01 : f32
    %682 = vector.broadcast %cst_192 : f32 to vector<16x1xf32>
    %683 = arith.divf %681, %682 : vector<16x1xf32>
    %684 = vector.broadcast %676 : vector<16x1xf32> to vector<16x32xf32>
    %685 = arith.subf %670, %684 : vector<16x32xf32>
    %cst_193 = arith.constant 9.99999974E-6 : f32
    %686 = vector.broadcast %cst_193 : f32 to vector<16x1xf32>
    %687 = arith.addf %683, %686 : vector<16x1xf32>
    %688 = math.rsqrt %687 : vector<16x1xf32>
    %689 = vector.broadcast %688 : vector<16x1xf32> to vector<16x32xf32>
    %690 = arith.mulf %685, %689 : vector<16x32xf32>
    %691 = vector.broadcast %671 : vector<1x32xf32> to vector<16x32xf32>
    %692 = arith.mulf %690, %691 : vector<16x32xf32>
    %693 = vector.broadcast %672 : vector<1x32xf32> to vector<16x32xf32>
    %694 = arith.addf %692, %693 : vector<16x32xf32>
    %c0_194 = arith.constant 0 : index
    %c0_195 = arith.constant 0 : index
    %695 = vector.load %arg7[%c0_194, %c0_195] : memref<16x128xf32, #tpu.memory_space<vmem>>, vector<16x32xf32>
    tpu.vector_store %arg7[%c0_194, %c0_195], %694 {strides = array<i32>} : memref<16x128xf32, #tpu.memory_space<vmem>>, vector<16x32xf32>,
    return
  }
  func.func @transform_0(%arg0: i32) -> (i32, i32) {
    %c0_i32 = arith.constant 0 : i32
    %c0_i32_0 = arith.constant 0 : i32
    %c0_i32_1 = arith.constant 0 : i32
    return %c0_i32, %c0_i32_0 : i32, i32
  }
  func.func @transform_1(%arg0: i32) -> (i32, i32, i32) {
    %c0_i32 = arith.constant 0 : i32
    %c0_i32_0 = arith.constant 0 : i32
    %c0_i32_1 = arith.constant 0 : i32
    %c0_i32_2 = arith.constant 0 : i32
    return %c0_i32, %c0_i32_0, %c0_i32_1 : i32, i32, i32
  }
  func.func @transform_2(%arg0: i32) -> (i32, i32, i32) {
    %c0_i32 = arith.constant 0 : i32
    %c0_i32_0 = arith.constant 0 : i32
    %c0_i32_1 = arith.constant 0 : i32
    %c0_i32_2 = arith.constant 0 : i32
    return %c0_i32, %c0_i32_0, %c0_i32_1 : i32, i32, i32
  }
  func.func @transform_3(%arg0: i32) -> (i32, i32, i32) {
    %c0_i32 = arith.constant 0 : i32
    %c0_i32_0 = arith.constant 0 : i32
    %c0_i32_1 = arith.constant 0 : i32
    %c0_i32_2 = arith.constant 0 : i32
    return %c0_i32, %c0_i32_0, %c0_i32_1 : i32, i32, i32
  }
  func.func @transform_4(%arg0: i32) -> (i32, i32, i32) {
    %c0_i32 = arith.constant 0 : i32
    %c0_i32_0 = arith.constant 0 : i32
    %c0_i32_1 = arith.constant 0 : i32
    %c0_i32_2 = arith.constant 0 : i32
    return %c0_i32, %c0_i32_0, %c0_i32_1 : i32, i32, i32
  }
  func.func @transform_5(%arg0: i32) -> (i32, i32, i32) {
    %c0_i32 = arith.constant 0 : i32
    %c0_i32_0 = arith.constant 0 : i32
    %c0_i32_1 = arith.constant 0 : i32
    %c0_i32_2 = arith.constant 0 : i32
    return %c0_i32, %c0_i32_0, %c0_i32_1 : i32, i32, i32
  }
  func.func @transform_6(%arg0: i32) -> (i32, i32) {
    %c0_i32 = arith.constant 0 : i32
    %c0_i32_0 = arith.constant 0 : i32
    %c0_i32_1 = arith.constant 0 : i32
    return %c0_i32, %c0_i32_0 : i32, i32
  }
}

</mosaic_0001>

<llo_original>
// kernel: tpu_custom_call.1
$region0: #{tpu_custom_call.1}
  #allocation0 [shape = 'u32[]', space=smem, size = 0x4, offset = 0x4, fixed_abs, tag = 'smem constant byte address 0x4 - core index']
  #allocation1 [shape = 'u32[144,128]{1,0:T(1,128)}', space=vmem, size = 0x12000, scoped, tag = 'internal scratch']
  %s0 = inlined_call_operand.vmem [shape: f32[16,32], index: 0, kind: input, shape index: {}]
  %s1 = inlined_call_operand.vmem [shape: f32[2,8,8], index: 1, kind: input, shape index: {}]
  %s2 = inlined_call_operand.vmem [shape: f32[2,32,192], index: 2, kind: input, shape index: {}]
  %s3 = inlined_call_operand.vmem [shape: f32[2,64,32], index: 3, kind: input, shape index: {}]
  %s4 = inlined_call_operand.vmem [shape: f32[2,8,4], index: 4, kind: input, shape index: {}]
  %s5 = inlined_call_operand.vmem [shape: f32[2,9,128], index: 5, kind: input, shape index: {}]
  %s6 = inlined_call_operand.hbm [shape: f32[16,128], index: 6, kind: output, shape index: {}]
  %s7 = sld [smem:[#allocation0]]
  $region34: #{tpu_custom_call.1} parent=0
    _
  %s9 = ssub.s32 1, %s7
  %s10 = scalar_select 0, %s9, %s7
  $region1: #{tpu_custom_call.1} parent=0
    #allocation2 [shape = 'u8[8192]{0}', space=vmem, size = 0x2000, scoped, tag = 'output window, operand 0, single buffered']
    #allocation3 [shape = 's32[1]{0}', space=sflag, size = 0x4, scoped, tag = 'scoped memory for tpu_custom_call.1']
    %11 = vsyncpa [#allocation3], 0
    // Predicated region
    $region2: #{tpu_custom_call.1} parent=1 // pred_check
      _
    $region3: #{tpu_custom_call.1} parent=1 // pred_check_branch
      %13 = sbr.rel (0) target = $region5
    $region4: #{tpu_custom_call.1} parent=1 // pred_region
      _
    $region5: #{tpu_custom_call.1} parent=1 // pred_fallthru
      _
    // Predicated region
    $region6: #{tpu_custom_call.1} parent=1 // pred_check
      _
    $region7: #{tpu_custom_call.1} parent=1 // pred_check_branch
      %15 = sbr.rel (0) target = $region9
    $region8: #{tpu_custom_call.1} parent=1 // pred_region
      _
    $region9: #{tpu_custom_call.1} parent=1 // pred_fallthru
      _
    // Predicated region
    $region10: #{tpu_custom_call.1} parent=1 // pred_check
      _
    $region11: #{tpu_custom_call.1} parent=1 // pred_check_branch
      %17 = sbr.rel (0) target = $region13
    $region12: #{tpu_custom_call.1} parent=1 // pred_region
      _
    $region13: #{tpu_custom_call.1} parent=1 // pred_fallthru
      _
    // Predicated region
    $region14: #{tpu_custom_call.1} parent=1 // pred_check
      _
    $region15: #{tpu_custom_call.1} parent=1 // pred_check_branch
      %19 = sbr.rel (0) target = $region17
    $region16: #{tpu_custom_call.1} parent=1 // pred_region
      _
    $region17: #{tpu_custom_call.1} parent=1 // pred_fallthru
      _
    // Predicated region
    $region18: #{tpu_custom_call.1} parent=1 // pred_check
      _
    $region19: #{tpu_custom_call.1} parent=1 // pred_check_branch
      %21 = sbr.rel (0) target = $region21
    $region20: #{tpu_custom_call.1} parent=1 // pred_region
      _
    $region21: #{tpu_custom_call.1} parent=1 // pred_fallthru
      _
    // Predicated region
    $region22: #{tpu_custom_call.1} parent=1 // pred_check
      _
    $region23: #{tpu_custom_call.1} parent=1 // pred_check_branch
      %23 = sbr.rel (0) target = $region25
    $region24: #{tpu_custom_call.1} parent=1 // pred_region
      _
    $region25: #{tpu_custom_call.1} parent=1 // pred_fallthru
      _
    %v24 = vld [vmem:[%s0] sm:$0xff]
    %v25 = vld [vmem:[%s0 + $0x8] sm:$0xff]
    %v26 = vld [vmem:[%s1] sm:$0xff]
    %s27 = scalar_lea.vmem %s1, 8
    %v28 = vld [vmem:[%s27] sm:$0xff]
    %v29 = vld [vmem:[%s2] sm:$0xff]
    %v30 = vld [vmem:[%s2 + $0x8] sm:$0xff]
    %v31 = vld [vmem:[%s2 + $0x10] sm:$0xff]
    %v32 = vld [vmem:[%s2 + $0x18] sm:$0xff]
    %v33 = vld [vmem:[%s2 + $0x20] sm:$0xff]
    %v34 = vld [vmem:[%s2 + $0x28] sm:$0xff]
    %v35 = vld [vmem:[%s2 + $0x30] sm:$0xff]
    %v36 = vld [vmem:[%s2 + $0x38] sm:$0xff]
    %v37 = vld [vmem:[%s3] sm:$0xff]
    %v38 = vld [vmem:[%s3 + $0x8] sm:$0xff]
    %v39 = vld [vmem:[%s3 + $0x10] sm:$0xff]
    %v40 = vld [vmem:[%s3 + $0x18] sm:$0xff]
    %v41 = vld [vmem:[%s3 + $0x20] sm:$0xff]
    %v42 = vld [vmem:[%s3 + $0x28] sm:$0xff]
    %v43 = vld [vmem:[%s3 + $0x30] sm:$0xff]
    %v44 = vld [vmem:[%s3 + $0x38] sm:$0xff]
    %v45 = vld [vmem:[%s4] sm:$0xff]
    %v46 = vld [vmem:[%s5] sm:$0xff]
    %v47 = vld [vmem:[%s5 + $0x8] sm:$0x1]
    %50 = vrot.lane.b32.xlu0 %v24, 32
    %v51 = vpop.permute.xlu0 %50
    %52 = vrot.lane.b32.xlu0 %v25, 32
    %v53 = vpop.permute.xlu0 %52
    %vm56 = vcmask 523520
    %57 = vst.msk [vmem:[#allocation2] sm:$0xff] %vm56, %v51
    %58 = vst.msk [vmem:[#allocation2 + $0x8] sm:$0xff] %vm56, %v53
    %v59 = vlaneseq
    %v60 = vshrl.u32 %v59, 7
    %v61 = vsub.s32 0, %v60
    %v62 = vrot.slane %v46, %v61
    %vm63 = vcmask 261120
    %v64 = vsel %vm63, %v24, 0
    %v66 = vsel %vm63, %v25, 0
    %68 = vmatprep.subr.mxu0 0.0
    %69 = vmatpush1.msra.mxu0 0.0
    %70 = vmatprep.subr.mxu0 0.0
    %71 = vmatpush1.msra.mxu0 0.0
    %72 = vmatprep.subr.mxu0 0.0
    %73 = vmatpush1.msra.mxu0 0.0
    %74 = vmatprep.subr.mxu0 0.0
    %75 = vmatpush1.msra.mxu0 0.0
    %76 = vmatprep.subr.mxu0 0.0
    %77 = vmatpush1.msra.mxu0 0.0
    %78 = vmatprep.subr.mxu0 0.0
    %79 = vmatpush1.msra.mxu0 0.0
    %80 = vmatprep.subr.mxu0 0.0
    %81 = vmatpush1.msra.mxu0 0.0
    %82 = vmatprep.subr.mxu0 0.0
    %83 = vmatpush1.msra.mxu0 0.0
    %84 = vmatprep.subr.mxu0 0.0
    %85 = vmatpush1.msra.mxu0 0.0
    %86 = vmatprep.subr.mxu0 0.0
    %87 = vmatpush1.msra.mxu0 0.0
    %88 = vmatprep.subr.mxu0 0.0
    %89 = vmatpush1.msra.mxu0 0.0
    %90 = vmatprep.subr.mxu0 0.0
    %91 = vmatpush1.msra.mxu0 0.0
    %92 = vmatprep.subr.mxu0 0.0
    %93 = vmatpush1.msra.mxu0 %v35
    %94 = vmatprep.subr.mxu0 0.0
    %95 = vmatpush1.msra.mxu0 %v33
    %96 = vmatprep.subr.mxu0 0.0
    %97 = vmatpush1.msra.mxu0 %v31
    %98 = vmatprep.subr.mxu0 0.0
    %99 = vmatpush1.msra.mxu0 %v29
    %100 = vmatprep.subr.mxu0 0.0
    %101 = vmatpush2.msra.mxu0 0.0
    %102 = vmatprep.subr.mxu0 0.0
    %103 = vmatpush2.msra.mxu0 0.0
    %104 = vmatprep.subr.mxu0 0.0
    %105 = vmatpush2.msra.mxu0 0.0
    %106 = vmatprep.subr.mxu0 0.0
    %107 = vmatpush2.msra.mxu0 0.0
    %108 = vmatprep.subr.mxu0 0.0
    %109 = vmatpush2.msra.mxu0 0.0
    %110 = vmatprep.subr.mxu0 0.0
    %111 = vmatpush2.msra.mxu0 0.0
    %112 = vmatprep.subr.mxu0 0.0
    %113 = vmatpush2.msra.mxu0 0.0
    %114 = vmatprep.subr.mxu0 0.0
    %115 = vmatpush2.msra.mxu0 0.0
    %116 = vmatprep.subr.mxu0 0.0
    %117 = vmatpush2.msra.mxu0 0.0
    %118 = vmatprep.subr.mxu0 0.0
    %119 = vmatpush2.msra.mxu0 0.0
    %120 = vmatprep.subr.mxu0 0.0
    %121 = vmatpush2.msra.mxu0 0.0
    %122 = vmatprep.subr.mxu0 0.0
    %123 = vmatpush2.msra.mxu0 0.0
    %124 = vmatprep.subr.mxu0 0.0
    %125 = vmatpush2.msra.mxu0 0.0
    %126 = vmatprep.subr.mxu0 0.0
    %127 = vmatpush2.msra.mxu0 0.0
    %128 = vmatprep.subr.mxu0 0.0
    %129 = vmatpush2.msra.mxu0 0.0
    %130 = vmatprep.subr.mxu0 0.0
    %131 = vmatpush2.msra.mxu0 0.0
    %132 = vmatprep.mubr.f32.mxu0 0.0
    %133 = vmatmul.mubr.f32.gmra.mxu0 %v64
    %v134 = vpop.f32.mrf.mxu0
    %v135 = vadd.f32 %v62, %v134
    %v136 = vpop.f32.mrf.mxu0
    %137 = vmatprep.mubr.f32.mxu0 0.0
    %138 = vmatmul.mubr.f32.gmra.mxu0 %v66
    %v139 = vpop.f32.mrf.mxu0
    %v140 = vadd.f32 %v62, %v139
    %v141 = vpop.f32.mrf.mxu0
    %142 = vdwg.mxu0
    %144 = vrot.lane.b32.xlu0 %v135, 96
    %v145 = vpop.permute.xlu0 %144
    %vm146 = vcmask 64512
    %v147 = vsel %vm146, %v135, 0
    %v149 = vsel %vm146, %v145, 0
    %151 = vmatprep.subr.mxu0 0.0
    %152 = vmatpush1.xpose.msra.mxu0 0.0
    %153 = vmatprep.subr.mxu0 0.0
    %154 = vmatpush1.xpose.msra.mxu0 0.0
    %155 = vmatprep.subr.mxu0 0.0
    %156 = vmatpush1.xpose.msra.mxu0 0.0
    %157 = vmatprep.subr.mxu0 0.0
    %158 = vmatpush1.xpose.msra.mxu0 0.0
    %159 = vmatprep.subr.mxu0 0.0
    %160 = vmatpush1.xpose.msra.mxu0 0.0
    %161 = vmatprep.subr.mxu0 0.0
    %162 = vmatpush1.xpose.msra.mxu0 0.0
    %163 = vmatprep.subr.mxu0 0.0
    %164 = vmatpush1.xpose.msra.mxu0 0.0
    %165 = vmatprep.subr.mxu0 0.0
    %166 = vmatpush1.xpose.msra.mxu0 0.0
    %167 = vmatprep.subr.mxu0 0.0
    %168 = vmatpush1.xpose.msra.mxu0 0.0
    %169 = vmatprep.subr.mxu0 0.0
    %170 = vmatpush1.xpose.msra.mxu0 0.0
    %171 = vmatprep.subr.mxu0 0.0
    %172 = vmatpush1.xpose.msra.mxu0 0.0
    %173 = vmatprep.subr.mxu0 0.0
    %174 = vmatpush1.xpose.msra.mxu0 0.0
    %175 = vmatprep.subr.mxu0 0.0
    %176 = vmatpush1.xpose.msra.mxu0 0.0
    %177 = vmatprep.subr.mxu0 0.0
    %178 = vmatpush1.xpose.msra.mxu0 0.0
    %179 = vmatprep.subr.mxu0 0.0
    %180 = vmatpush1.xpose.msra.mxu0 0.0
    %181 = vmatprep.subr.mxu0 0.0
    %182 = vmatpush1.xpose.msra.mxu0 %v149
    %183 = vmatprep.subr.mxu0 0.0
    %184 = vmatpush2.xpose.msra.mxu0 0.0
    %185 = vmatprep.subr.mxu0 0.0
    %186 = vmatpush2.xpose.msra.mxu0 0.0
    %187 = vmatprep.subr.mxu0 0.0
    %188 = vmatpush2.xpose.msra.mxu0 0.0
    %189 = vmatprep.subr.mxu0 0.0
    %190 = vmatpush2.xpose.msra.mxu0 0.0
    %191 = vmatprep.subr.mxu0 0.0
    %192 = vmatpush2.xpose.msra.mxu0 0.0
    %193 = vmatprep.subr.mxu0 0.0
    %194 = vmatpush2.xpose.msra.mxu0 0.0
    %195 = vmatprep.subr.mxu0 0.0
    %196 = vmatpush2.xpose.msra.mxu0 0.0
    %197 = vmatprep.subr.mxu0 0.0
    %198 = vmatpush2.xpose.msra.mxu0 0.0
    %199 = vmatprep.subr.mxu0 0.0
    %200 = vmatpush2.xpose.msra.mxu0 0.0
    %201 = vmatprep.subr.mxu0 0.0
    %202 = vmatpush2.xpose.msra.mxu0 0.0
    %203 = vmatprep.subr.mxu0 0.0
    %204 = vmatpush2.xpose.msra.mxu0 0.0
    %205 = vmatprep.subr.mxu0 0.0
    %206 = vmatpush2.xpose.msra.mxu0 0.0
    %207 = vmatprep.subr.mxu0 0.0
    %208 = vmatpush2.xpose.msra.mxu0 0.0
    %209 = vmatprep.subr.mxu0 0.0
    %210 = vmatpush2.xpose.msra.mxu0 0.0
    %211 = vmatprep.subr.mxu0 0.0
    %212 = vmatpush2.xpose.msra.mxu0 0.0
    %213 = vmatprep.subr.mxu0 0.0
    %214 = vmatpush2.xpose.msra.mxu0 0.0
    %215 = vmatprep.mubr.f32.mxu0 0.0
    %216 = vmatmul.mubr.f32.gmra.mxu0 %v147
    %v217 = vpop.f32.mrf.mxu0
    %v218 = vadd.f32 0.0, %v217
    %v219 = vpop.f32.mrf.mxu0
    %220 = vdwg.mxu0
    %v221 = vmul.f32 %v218, 0.35355338
    %v222 = vadd.f32 %v221, %v26
    %v223 = vsel %vm146, %v222, -inf
    %224 = vmax.xlane.f32.xlu0 %v223
    %v225 = vpop.xlane.xlu0 %224
    %v226 = vsub.f32 %v222, %v225
    %v227 = vmul.f32 %v226, 1.442695
    %v228 = vpow.pop %v227
    %v229 = vsel %vm146, %v228, 0.0
    %230 = vadd.xlane.f32.xlu0 %v229
    %v231 = vpop.xlane.xlu0 %230
    %v232 = vrcp.pop %v231
    %v233 = vmul.f32 %v228, %v232
    %234 = vrot.lane.b32.xlu0 %v135, 64
    %v235 = vpop.permute.xlu0 %234
    %v238 = vsel %vm146, %v233, 0
    %240 = vmatprep.subr.mxu0 0.0
    %241 = vmatpush1.msra.mxu0 0.0
    %242 = vmatprep.subr.mxu0 0.0
    %243 = vmatpush1.msra.mxu0 0.0
    %244 = vmatprep.subr.mxu0 0.0
    %245 = vmatpush1.msra.mxu0 0.0
    %246 = vmatprep.subr.mxu0 0.0
    %247 = vmatpush1.msra.mxu0 0.0
    %248 = vmatprep.subr.mxu0 0.0
    %249 = vmatpush1.msra.mxu0 0.0
    %250 = vmatprep.subr.mxu0 0.0
    %251 = vmatpush1.msra.mxu0 0.0
    %252 = vmatprep.subr.mxu0 0.0
    %253 = vmatpush1.msra.mxu0 0.0
    %254 = vmatprep.subr.mxu0 0.0
    %255 = vmatpush1.msra.mxu0 0.0
    %256 = vmatprep.subr.mxu0 0.0
    %257 = vmatpush1.msra.mxu0 0.0
    %258 = vmatprep.subr.mxu0 0.0
    %259 = vmatpush1.msra.mxu0 0.0
    %260 = vmatprep.subr.mxu0 0.0
    %261 = vmatpush1.msra.mxu0 0.0
    %262 = vmatprep.subr.mxu0 0.0
    %263 = vmatpush1.msra.mxu0 0.0
    %264 = vmatprep.subr.mxu0 0.0
    %265 = vmatpush1.msra.mxu0 0.0
    %266 = vmatprep.subr.mxu0 0.0
    %267 = vmatpush1.msra.mxu0 0.0
    %268 = vmatprep.subr.mxu0 0.0
    %269 = vmatpush1.msra.mxu0 0.0
    %270 = vmatprep.subr.mxu0 0.0
    %271 = vmatpush1.msra.mxu0 %v235
    %272 = vmatprep.subr.mxu0 0.0
    %273 = vmatpush2.msra.mxu0 0.0
    %274 = vmatprep.subr.mxu0 0.0
    %275 = vmatpush2.msra.mxu0 0.0
    %276 = vmatprep.subr.mxu0 0.0
    %277 = vmatpush2.msra.mxu0 0.0
    %278 = vmatprep.subr.mxu0 0.0
    %279 = vmatpush2.msra.mxu0 0.0
    %280 = vmatprep.subr.mxu0 0.0
    %281 = vmatpush2.msra.mxu0 0.0
    %282 = vmatprep.subr.mxu0 0.0
    %283 = vmatpush2.msra.mxu0 0.0
    %284 = vmatprep.subr.mxu0 0.0
    %285 = vmatpush2.msra.mxu0 0.0
    %286 = vmatprep.subr.mxu0 0.0
    %287 = vmatpush2.msra.mxu0 0.0
    %288 = vmatprep.subr.mxu0 0.0
    %289 = vmatpush2.msra.mxu0 0.0
    %290 = vmatprep.subr.mxu0 0.0
    %291 = vmatpush2.msra.mxu0 0.0
    %292 = vmatprep.subr.mxu0 0.0
    %293 = vmatpush2.msra.mxu0 0.0
    %294 = vmatprep.subr.mxu0 0.0
    %295 = vmatpush2.msra.mxu0 0.0
    %296 = vmatprep.subr.mxu0 0.0
    %297 = vmatpush2.msra.mxu0 0.0
    %298 = vmatprep.subr.mxu0 0.0
    %299 = vmatpush2.msra.mxu0 0.0
    %300 = vmatprep.subr.mxu0 0.0
    %301 = vmatpush2.msra.mxu0 0.0
    %302 = vmatprep.subr.mxu0 0.0
    %303 = vmatpush2.msra.mxu0 0.0
    %304 = vmatprep.mubr.f32.mxu0 0.0
    %305 = vmatmul.mubr.f32.gmra.mxu0 %v238
    %v306 = vpop.f32.mrf.mxu0
    %v307 = vadd.f32 0.0, %v306
    %v308 = vpop.f32.mrf.mxu0
    %309 = vdwg.mxu0
    %v310 = vlaneseq
    %v311 = vshrl.u32 %v310, 7
    %v312 = vsub.s32 0, %v311
    %v313 = vrot.slane %v47, %v312
    %v315 = vsel %vm146, %v307, 0
    %317 = vmatprep.subr.mxu0 0.0
    %318 = vmatpush1.msra.mxu0 0.0
    %319 = vmatprep.subr.mxu0 0.0
    %320 = vmatpush1.msra.mxu0 0.0
    %321 = vmatprep.subr.mxu0 0.0
    %322 = vmatpush1.msra.mxu0 0.0
    %323 = vmatprep.subr.mxu0 0.0
    %324 = vmatpush1.msra.mxu0 0.0
    %325 = vmatprep.subr.mxu0 0.0
    %326 = vmatpush1.msra.mxu0 0.0
    %327 = vmatprep.subr.mxu0 0.0
    %328 = vmatpush1.msra.mxu0 0.0
    %329 = vmatprep.subr.mxu0 0.0
    %330 = vmatpush1.msra.mxu0 0.0
    %331 = vmatprep.subr.mxu0 0.0
    %332 = vmatpush1.msra.mxu0 0.0
    %333 = vmatprep.subr.mxu0 0.0
    %334 = vmatpush1.msra.mxu0 0.0
    %335 = vmatprep.subr.mxu0 0.0
    %336 = vmatpush1.msra.mxu0 0.0
    %337 = vmatprep.subr.mxu0 0.0
    %338 = vmatpush1.msra.mxu0 0.0
    %339 = vmatprep.subr.mxu0 0.0
    %340 = vmatpush1.msra.mxu0 0.0
    %341 = vmatprep.subr.mxu0 0.0
    %342 = vmatpush1.msra.mxu0 0.0
    %343 = vmatprep.subr.mxu0 0.0
    %344 = vmatpush1.msra.mxu0 0.0
    %345 = vmatprep.subr.mxu0 0.0
    %346 = vmatpush1.msra.mxu0 0.0
    %347 = vmatprep.subr.mxu0 0.0
    %348 = vmatpush1.msra.mxu0 %v45
    %349 = vmatprep.subr.mxu0 0.0
    %350 = vmatpush2.msra.mxu0 0.0
    %351 = vmatprep.subr.mxu0 0.0
    %352 = vmatpush2.msra.mxu0 0.0
    %353 = vmatprep.subr.mxu0 0.0
    %354 = vmatpush2.msra.mxu0 0.0
    %355 = vmatprep.subr.mxu0 0.0
    %356 = vmatpush2.msra.mxu0 0.0
    %357 = vmatprep.subr.mxu0 0.0
    %358 = vmatpush2.msra.mxu0 0.0
    %359 = vmatprep.subr.mxu0 0.0
    %360 = vmatpush2.msra.mxu0 0.0
    %361 = vmatprep.subr.mxu0 0.0
    %362 = vmatpush2.msra.mxu0 0.0
    %363 = vmatprep.subr.mxu0 0.0
    %364 = vmatpush2.msra.mxu0 0.0
    %365 = vmatprep.subr.mxu0 0.0
    %366 = vmatpush2.msra.mxu0 0.0
    %367 = vmatprep.subr.mxu0 0.0
    %368 = vmatpush2.msra.mxu0 0.0
    %369 = vmatprep.subr.mxu0 0.0
    %370 = vmatpush2.msra.mxu0 0.0
    %371 = vmatprep.subr.mxu0 0.0
    %372 = vmatpush2.msra.mxu0 0.0
    %373 = vmatprep.subr.mxu0 0.0
    %374 = vmatpush2.msra.mxu0 0.0
    %375 = vmatprep.subr.mxu0 0.0
    %376 = vmatpush2.msra.mxu0 0.0
    %377 = vmatprep.subr.mxu0 0.0
    %378 = vmatpush2.msra.mxu0 0.0
    %379 = vmatprep.subr.mxu0 0.0
    %380 = vmatpush2.msra.mxu0 0.0
    %381 = vmatprep.mubr.f32.mxu0 0.0
    %382 = vmatmul.mubr.f32.gmra.mxu0 %v315
    %v383 = vpop.f32.mrf.mxu0
    %v384 = vadd.f32 %v313, %v383
    %v385 = vpop.f32.mrf.mxu0
    %386 = vdwg.mxu0
    %vm387 = vcmask 31744
    %v388 = vsel %vm387, %v384, -inf
    %389 = vmax.xlane.f32.xlu0 %v388
    %v390 = vpop.xlane.xlu0 %389
    %v391 = vsub.f32 %v384, %v390
    %v392 = vmul.f32 %v391, 1.442695
    %v393 = vpow.pop %v392
    %v394 = vsel %vm387, %v393, 0.0
    %395 = vadd.xlane.f32.xlu0 %v394
    %v396 = vpop.xlane.xlu0 %395
    %v397 = vlog2.pop %v396
    %v398 = vmul.f32 %v397, 0.6931472
    %v399 = vsub.f32 %v391, %v398
    %400 = vrot.lane.b32.xlu0 %v135, 120
    %v401 = vpop.permute.xlu0 %400
    %402 = vrot.lane.b32.xlu0 %v135, 88
    %v403 = vpop.permute.xlu0 %402
    %v404 = vsel %vm146, %v401, 0
    %v406 = vsel %vm146, %v403, 0
    %408 = vmatprep.subr.mxu0 0.0
    %409 = vmatpush1.xpose.msra.mxu0 0.0
    %410 = vmatprep.subr.mxu0 0.0
    %411 = vmatpush1.xpose.msra.mxu0 0.0
    %412 = vmatprep.subr.mxu0 0.0
    %413 = vmatpush1.xpose.msra.mxu0 0.0
    %414 = vmatprep.subr.mxu0 0.0
    %415 = vmatpush1.xpose.msra.mxu0 0.0
    %416 = vmatprep.subr.mxu0 0.0
    %417 = vmatpush1.xpose.msra.mxu0 0.0
    %418 = vmatprep.subr.mxu0 0.0
    %419 = vmatpush1.xpose.msra.mxu0 0.0
    %420 = vmatprep.subr.mxu0 0.0
    %421 = vmatpush1.xpose.msra.mxu0 0.0
    %422 = vmatprep.subr.mxu0 0.0
    %423 = vmatpush1.xpose.msra.mxu0 0.0
    %424 = vmatprep.subr.mxu0 0.0
    %425 = vmatpush1.xpose.msra.mxu0 0.0
    %426 = vmatprep.subr.mxu0 0.0
    %427 = vmatpush1.xpose.msra.mxu0 0.0
    %428 = vmatprep.subr.mxu0 0.0
    %429 = vmatpush1.xpose.msra.mxu0 0.0
    %430 = vmatprep.subr.mxu0 0.0
    %431 = vmatpush1.xpose.msra.mxu0 0.0
    %432 = vmatprep.subr.mxu0 0.0
    %433 = vmatpush1.xpose.msra.mxu0 0.0
    %434 = vmatprep.subr.mxu0 0.0
    %435 = vmatpush1.xpose.msra.mxu0 0.0
    %436 = vmatprep.subr.mxu0 0.0
    %437 = vmatpush1.xpose.msra.mxu0 0.0
    %438 = vmatprep.subr.mxu0 0.0
    %439 = vmatpush1.xpose.msra.mxu0 %v406
    %440 = vmatprep.subr.mxu0 0.0
    %441 = vmatpush2.xpose.msra.mxu0 0.0
    %442 = vmatprep.subr.mxu0 0.0
    %443 = vmatpush2.xpose.msra.mxu0 0.0
    %444 = vmatprep.subr.mxu0 0.0
    %445 = vmatpush2.xpose.msra.mxu0 0.0
    %446 = vmatprep.subr.mxu0 0.0
    %447 = vmatpush2.xpose.msra.mxu0 0.0
    %448 = vmatprep.subr.mxu0 0.0
    %449 = vmatpush2.xpose.msra.mxu0 0.0
    %450 = vmatprep.subr.mxu0 0.0
    %451 = vmatpush2.xpose.msra.mxu0 0.0
    %452 = vmatprep.subr.mxu0 0.0
    %453 = vmatpush2.xpose.msra.mxu0 0.0
    %454 = vmatprep.subr.mxu0 0.0
    %455 = vmatpush2.xpose.msra.mxu0 0.0
    %456 = vmatprep.subr.mxu0 0.0
    %457 = vmatpush2.xpose.msra.mxu0 0.0
    %458 = vmatprep.subr.mxu0 0.0
    %459 = vmatpush2.xpose.msra.mxu0 0.0
    %460 = vmatprep.subr.mxu0 0.0
    %461 = vmatpush2.xpose.msra.mxu0 0.0
    %462 = vmatprep.subr.mxu0 0.0
    %463 = vmatpush2.xpose.msra.mxu0 0.0
    %464 = vmatprep.subr.mxu0 0.0
    %465 = vmatpush2.xpose.msra.mxu0 0.0
    %466 = vmatprep.subr.mxu0 0.0
    %467 = vmatpush2.xpose.msra.mxu0 0.0
    %468 = vmatprep.subr.mxu0 0.0
    %469 = vmatpush2.xpose.msra.mxu0 0.0
    %470 = vmatprep.subr.mxu0 0.0
    %471 = vmatpush2.xpose.msra.mxu0 0.0
    %472 = vmatprep.mubr.f32.mxu0 0.0
    %473 = vmatmul.mubr.f32.gmra.mxu0 %v404
    %v474 = vpop.f32.mrf.mxu0
    %v475 = vadd.f32 0.0, %v474
    %v476 = vpop.f32.mrf.mxu0
    %477 = vdwg.mxu0
    %v478 = vmul.f32 %v475, 0.35355338
    %v479 = vadd.f32 %v478, %v26
    %v480 = vsel %vm146, %v479, -inf
    %481 = vmax.xlane.f32.xlu0 %v480
    %v482 = vpop.xlane.xlu0 %481
    %v483 = vsub.f32 %v479, %v482
    %v484 = vmul.f32 %v483, 1.442695
    %v485 = vpow.pop %v484
    %v486 = vsel %vm146, %v485, 0.0
    %487 = vadd.xlane.f32.xlu0 %v486
    %v488 = vpop.xlane.xlu0 %487
    %v489 = vrcp.pop %v488
    %v490 = vmul.f32 %v485, %v489
    %491 = vrot.lane.b32.xlu0 %v135, 56
    %v492 = vpop.permute.xlu0 %491
    %v495 = vsel %vm146, %v490, 0
    %497 = vmatprep.subr.mxu0 0.0
    %498 = vmatpush1.msra.mxu0 0.0
    %499 = vmatprep.subr.mxu0 0.0
    %500 = vmatpush1.msra.mxu0 0.0
    %501 = vmatprep.subr.mxu0 0.0
    %502 = vmatpush1.msra.mxu0 0.0
    %503 = vmatprep.subr.mxu0 0.0
    %504 = vmatpush1.msra.mxu0 0.0
    %505 = vmatprep.subr.mxu0 0.0
    %506 = vmatpush1.msra.mxu0 0.0
    %507 = vmatprep.subr.mxu0 0.0
    %508 = vmatpush1.msra.mxu0 0.0
    %509 = vmatprep.subr.mxu0 0.0
    %510 = vmatpush1.msra.mxu0 0.0
    %511 = vmatprep.subr.mxu0 0.0
    %512 = vmatpush1.msra.mxu0 0.0
    %513 = vmatprep.subr.mxu0 0.0
    %514 = vmatpush1.msra.mxu0 0.0
    %515 = vmatprep.subr.mxu0 0.0
    %516 = vmatpush1.msra.mxu0 0.0
    %517 = vmatprep.subr.mxu0 0.0
    %518 = vmatpush1.msra.mxu0 0.0
    %519 = vmatprep.subr.mxu0 0.0
    %520 = vmatpush1.msra.mxu0 0.0
    %521 = vmatprep.subr.mxu0 0.0
    %522 = vmatpush1.msra.mxu0 0.0
    %523 = vmatprep.subr.mxu0 0.0
    %524 = vmatpush1.msra.mxu0 0.0
    %525 = vmatprep.subr.mxu0 0.0
    %526 = vmatpush1.msra.mxu0 0.0
    %527 = vmatprep.subr.mxu0 0.0
    %528 = vmatpush1.msra.mxu0 %v492
    %529 = vmatprep.subr.mxu0 0.0
    %530 = vmatpush2.msra.mxu0 0.0
    %531 = vmatprep.subr.mxu0 0.0
    %532 = vmatpush2.msra.mxu0 0.0
    %533 = vmatprep.subr.mxu0 0.0
    %534 = vmatpush2.msra.mxu0 0.0
    %535 = vmatprep.subr.mxu0 0.0
    %536 = vmatpush2.msra.mxu0 0.0
    %537 = vmatprep.subr.mxu0 0.0
    %538 = vmatpush2.msra.mxu0 0.0
    %539 = vmatprep.subr.mxu0 0.0
    %540 = vmatpush2.msra.mxu0 0.0
    %541 = vmatprep.subr.mxu0 0.0
    %542 = vmatpush2.msra.mxu0 0.0
    %543 = vmatprep.subr.mxu0 0.0
    %544 = vmatpush2.msra.mxu0 0.0
    %545 = vmatprep.subr.mxu0 0.0
    %546 = vmatpush2.msra.mxu0 0.0
    %547 = vmatprep.subr.mxu0 0.0
    %548 = vmatpush2.msra.mxu0 0.0
    %549 = vmatprep.subr.mxu0 0.0
    %550 = vmatpush2.msra.mxu0 0.0
    %551 = vmatprep.subr.mxu0 0.0
    %552 = vmatpush2.msra.mxu0 0.0
    %553 = vmatprep.subr.mxu0 0.0
    %554 = vmatpush2.msra.mxu0 0.0
    %555 = vmatprep.subr.mxu0 0.0
    %556 = vmatpush2.msra.mxu0 0.0
    %557 = vmatprep.subr.mxu0 0.0
    %558 = vmatpush2.msra.mxu0 0.0
    %559 = vmatprep.subr.mxu0 0.0
    %560 = vmatpush2.msra.mxu0 0.0
    %561 = vmatprep.mubr.f32.mxu0 0.0
    %562 = vmatmul.mubr.f32.gmra.mxu0 %v495
    %v563 = vpop.f32.mrf.mxu0
    %v564 = vadd.f32 0.0, %v563
    %v565 = vpop.f32.mrf.mxu0
    %566 = vdwg.mxu0
    %v568 = vsel %vm146, %v564, 0
    %570 = vmatprep.subr.mxu0 0.0
    %571 = vmatpush1.msra.mxu0 0.0
    %572 = vmatprep.subr.mxu0 0.0
    %573 = vmatpush1.msra.mxu0 0.0
    %574 = vmatprep.subr.mxu0 0.0
    %575 = vmatpush1.msra.mxu0 0.0
    %576 = vmatprep.subr.mxu0 0.0
    %577 = vmatpush1.msra.mxu0 0.0
    %578 = vmatprep.subr.mxu0 0.0
    %579 = vmatpush1.msra.mxu0 0.0
    %580 = vmatprep.subr.mxu0 0.0
    %581 = vmatpush1.msra.mxu0 0.0
    %582 = vmatprep.subr.mxu0 0.0
    %583 = vmatpush1.msra.mxu0 0.0
    %584 = vmatprep.subr.mxu0 0.0
    %585 = vmatpush1.msra.mxu0 0.0
    %586 = vmatprep.subr.mxu0 0.0
    %587 = vmatpush1.msra.mxu0 0.0
    %588 = vmatprep.subr.mxu0 0.0
    %589 = vmatpush1.msra.mxu0 0.0
    %590 = vmatprep.subr.mxu0 0.0
    %591 = vmatpush1.msra.mxu0 0.0
    %592 = vmatprep.subr.mxu0 0.0
    %593 = vmatpush1.msra.mxu0 0.0
    %594 = vmatprep.subr.mxu0 0.0
    %595 = vmatpush1.msra.mxu0 0.0
    %596 = vmatprep.subr.mxu0 0.0
    %597 = vmatpush1.msra.mxu0 0.0
    %598 = vmatprep.subr.mxu0 0.0
    %599 = vmatpush1.msra.mxu0 0.0
    %600 = vmatprep.subr.mxu0 0.0
    %601 = vmatpush1.msra.mxu0 %v45
    %602 = vmatprep.subr.mxu0 0.0
    %603 = vmatpush2.msra.mxu0 0.0
    %604 = vmatprep.subr.mxu0 0.0
    %605 = vmatpush2.msra.mxu0 0.0
    %606 = vmatprep.subr.mxu0 0.0
    %607 = vmatpush2.msra.mxu0 0.0
    %608 = vmatprep.subr.mxu0 0.0
    %609 = vmatpush2.msra.mxu0 0.0
    %610 = vmatprep.subr.mxu0 0.0
    %611 = vmatpush2.msra.mxu0 0.0
    %612 = vmatprep.subr.mxu0 0.0
    %613 = vmatpush2.msra.mxu0 0.0
    %614 = vmatprep.subr.mxu0 0.0
    %615 = vmatpush2.msra.mxu0 0.0
    %616 = vmatprep.subr.mxu0 0.0
    %617 = vmatpush2.msra.mxu0 0.0
    %618 = vmatprep.subr.mxu0 0.0
    %619 = vmatpush2.msra.mxu0 0.0
    %620 = vmatprep.subr.mxu0 0.0
    %621 = vmatpush2.msra.mxu0 0.0
    %622 = vmatprep.subr.mxu0 0.0
    %623 = vmatpush2.msra.mxu0 0.0
    %624 = vmatprep.subr.mxu0 0.0
    %625 = vmatpush2.msra.mxu0 0.0
    %626 = vmatprep.subr.mxu0 0.0
    %627 = vmatpush2.msra.mxu0 0.0
    %628 = vmatprep.subr.mxu0 0.0
    %629 = vmatpush2.msra.mxu0 0.0
    %630 = vmatprep.subr.mxu0 0.0
    %631 = vmatpush2.msra.mxu0 0.0
    %632 = vmatprep.subr.mxu0 0.0
    %633 = vmatpush2.msra.mxu0 0.0
    %634 = vmatprep.mubr.f32.mxu0 0.0
    %635 = vmatmul.mubr.f32.gmra.mxu0 %v568
    %v636 = vpop.f32.mrf.mxu0
    %v637 = vadd.f32 %v313, %v636
    %v638 = vpop.f32.mrf.mxu0
    %639 = vdwg.mxu0
    %v640 = vsel %vm387, %v637, -inf
    %641 = vmax.xlane.f32.xlu0 %v640
    %v642 = vpop.xlane.xlu0 %641
    %v643 = vsub.f32 %v637, %v642
    %v644 = vmul.f32 %v643, 1.442695
    %v645 = vpow.pop %v644
    %v646 = vsel %vm387, %v645, 0.0
    %647 = vadd.xlane.f32.xlu0 %v646
    %v648 = vpop.xlane.xlu0 %647
    %v649 = vlog2.pop %v648
    %v650 = vmul.f32 %v649, 0.6931472
    %v651 = vsub.f32 %v643, %v650
    %652 = vrot.lane.b32.xlu0 %v135, 112
    %v653 = vpop.permute.xlu0 %652
    %654 = vrot.lane.b32.xlu0 %v135, 80
    %v655 = vpop.permute.xlu0 %654
    %v656 = vsel %vm146, %v653, 0
    %v658 = vsel %vm146, %v655, 0
    %660 = vmatprep.subr.mxu0 0.0
    %661 = vmatpush1.xpose.msra.mxu0 0.0
    %662 = vmatprep.subr.mxu0 0.0
    %663 = vmatpush1.xpose.msra.mxu0 0.0
    %664 = vmatprep.subr.mxu0 0.0
    %665 = vmatpush1.xpose.msra.mxu0 0.0
    %666 = vmatprep.subr.mxu0 0.0
    %667 = vmatpush1.xpose.msra.mxu0 0.0
    %668 = vmatprep.subr.mxu0 0.0
    %669 = vmatpush1.xpose.msra.mxu0 0.0
    %670 = vmatprep.subr.mxu0 0.0
    %671 = vmatpush1.xpose.msra.mxu0 0.0
    %672 = vmatprep.subr.mxu0 0.0
    %673 = vmatpush1.xpose.msra.mxu0 0.0
    %674 = vmatprep.subr.mxu0 0.0
    %675 = vmatpush1.xpose.msra.mxu0 0.0
    %676 = vmatprep.subr.mxu0 0.0
    %677 = vmatpush1.xpose.msra.mxu0 0.0
    %678 = vmatprep.subr.mxu0 0.0
    %679 = vmatpush1.xpose.msra.mxu0 0.0
    %680 = vmatprep.subr.mxu0 0.0
    %681 = vmatpush1.xpose.msra.mxu0 0.0
    %682 = vmatprep.subr.mxu0 0.0
    %683 = vmatpush1.xpose.msra.mxu0 0.0
    %684 = vmatprep.subr.mxu0 0.0
    %685 = vmatpush1.xpose.msra.mxu0 0.0
    %686 = vmatprep.subr.mxu0 0.0
    %687 = vmatpush1.xpose.msra.mxu0 0.0
    %688 = vmatprep.subr.mxu0 0.0
    %689 = vmatpush1.xpose.msra.mxu0 0.0
    %690 = vmatprep.subr.mxu0 0.0
    %691 = vmatpush1.xpose.msra.mxu0 %v658
    %692 = vmatprep.subr.mxu0 0.0
    %693 = vmatpush2.xpose.msra.mxu0 0.0
    %694 = vmatprep.subr.mxu0 0.0
    %695 = vmatpush2.xpose.msra.mxu0 0.0
    %696 = vmatprep.subr.mxu0 0.0
    %697 = vmatpush2.xpose.msra.mxu0 0.0
    %698 = vmatprep.subr.mxu0 0.0
    %699 = vmatpush2.xpose.msra.mxu0 0.0
    %700 = vmatprep.subr.mxu0 0.0
    %701 = vmatpush2.xpose.msra.mxu0 0.0
    %702 = vmatprep.subr.mxu0 0.0
    %703 = vmatpush2.xpose.msra.mxu0 0.0
    %704 = vmatprep.subr.mxu0 0.0
    %705 = vmatpush2.xpose.msra.mxu0 0.0
    %706 = vmatprep.subr.mxu0 0.0
    %707 = vmatpush2.xpose.msra.mxu0 0.0
    %708 = vmatprep.subr.mxu0 0.0
    %709 = vmatpush2.xpose.msra.mxu0 0.0
    %710 = vmatprep.subr.mxu0 0.0
    %711 = vmatpush2.xpose.msra.mxu0 0.0
    %712 = vmatprep.subr.mxu0 0.0
    %713 = vmatpush2.xpose.msra.mxu0 0.0
    %714 = vmatprep.subr.mxu0 0.0
    %715 = vmatpush2.xpose.msra.mxu0 0.0
    %716 = vmatprep.subr.mxu0 0.0
    %717 = vmatpush2.xpose.msra.mxu0 0.0
    %718 = vmatprep.subr.mxu0 0.0
    %719 = vmatpush2.xpose.msra.mxu0 0.0
    %720 = vmatprep.subr.mxu0 0.0
    %721 = vmatpush2.xpose.msra.mxu0 0.0
    %722 = vmatprep.subr.mxu0 0.0
    %723 = vmatpush2.xpose.msra.mxu0 0.0
    %724 = vmatprep.mubr.f32.mxu0 0.0
    %725 = vmatmul.mubr.f32.gmra.mxu0 %v656
    %v726 = vpop.f32.mrf.mxu0
    %v727 = vadd.f32 0.0, %v726
    %v728 = vpop.f32.mrf.mxu0
    %729 = vdwg.mxu0
    %v730 = vmul.f32 %v727, 0.35355338
    %v731 = vadd.f32 %v730, %v26
    %v732 = vsel %vm146, %v731, -inf
    %733 = vmax.xlane.f32.xlu0 %v732
    %v734 = vpop.xlane.xlu0 %733
    %v735 = vsub.f32 %v731, %v734
    %v736 = vmul.f32 %v735, 1.442695
    %v737 = vpow.pop %v736
    %v738 = vsel %vm146, %v737, 0.0
    %739 = vadd.xlane.f32.xlu0 %v738
    %v740 = vpop.xlane.xlu0 %739
    %v741 = vrcp.pop %v740
    %v742 = vmul.f32 %v737, %v741
    %743 = vrot.lane.b32.xlu0 %v135, 48
    %v744 = vpop.permute.xlu0 %743
    %v747 = vsel %vm146, %v742, 0
    %749 = vmatprep.subr.mxu0 0.0
    %750 = vmatpush1.msra.mxu0 0.0
    %751 = vmatprep.subr.mxu0 0.0
    %752 = vmatpush1.msra.mxu0 0.0
    %753 = vmatprep.subr.mxu0 0.0
    %754 = vmatpush1.msra.mxu0 0.0
    %755 = vmatprep.subr.mxu0 0.0
    %756 = vmatpush1.msra.mxu0 0.0
    %757 = vmatprep.subr.mxu0 0.0
    %758 = vmatpush1.msra.mxu0 0.0
    %759 = vmatprep.subr.mxu0 0.0
    %760 = vmatpush1.msra.mxu0 0.0
    %761 = vmatprep.subr.mxu0 0.0
    %762 = vmatpush1.msra.mxu0 0.0
    %763 = vmatprep.subr.mxu0 0.0
    %764 = vmatpush1.msra.mxu0 0.0
    %765 = vmatprep.subr.mxu0 0.0
    %766 = vmatpush1.msra.mxu0 0.0
    %767 = vmatprep.subr.mxu0 0.0
    %768 = vmatpush1.msra.mxu0 0.0
    %769 = vmatprep.subr.mxu0 0.0
    %770 = vmatpush1.msra.mxu0 0.0
    %771 = vmatprep.subr.mxu0 0.0
    %772 = vmatpush1.msra.mxu0 0.0
    %773 = vmatprep.subr.mxu0 0.0
    %774 = vmatpush1.msra.mxu0 0.0
    %775 = vmatprep.subr.mxu0 0.0
    %776 = vmatpush1.msra.mxu0 0.0
    %777 = vmatprep.subr.mxu0 0.0
    %778 = vmatpush1.msra.mxu0 0.0
    %779 = vmatprep.subr.mxu0 0.0
    %780 = vmatpush1.msra.mxu0 %v744
    %781 = vmatprep.subr.mxu0 0.0
    %782 = vmatpush2.msra.mxu0 0.0
    %783 = vmatprep.subr.mxu0 0.0
    %784 = vmatpush2.msra.mxu0 0.0
    %785 = vmatprep.subr.mxu0 0.0
    %786 = vmatpush2.msra.mxu0 0.0
    %787 = vmatprep.subr.mxu0 0.0
    %788 = vmatpush2.msra.mxu0 0.0
    %789 = vmatprep.subr.mxu0 0.0
    %790 = vmatpush2.msra.mxu0 0.0
    %791 = vmatprep.subr.mxu0 0.0
    %792 = vmatpush2.msra.mxu0 0.0
    %793 = vmatprep.subr.mxu0 0.0
    %794 = vmatpush2.msra.mxu0 0.0
    %795 = vmatprep.subr.mxu0 0.0
    %796 = vmatpush2.msra.mxu0 0.0
    %797 = vmatprep.subr.mxu0 0.0
    %798 = vmatpush2.msra.mxu0 0.0
    %799 = vmatprep.subr.mxu0 0.0
    %800 = vmatpush2.msra.mxu0 0.0
    %801 = vmatprep.subr.mxu0 0.0
    %802 = vmatpush2.msra.mxu0 0.0
    %803 = vmatprep.subr.mxu0 0.0
    %804 = vmatpush2.msra.mxu0 0.0
    %805 = vmatprep.subr.mxu0 0.0
    %806 = vmatpush2.msra.mxu0 0.0
    %807 = vmatprep.subr.mxu0 0.0
    %808 = vmatpush2.msra.mxu0 0.0
    %809 = vmatprep.subr.mxu0 0.0
    %810 = vmatpush2.msra.mxu0 0.0
    %811 = vmatprep.subr.mxu0 0.0
    %812 = vmatpush2.msra.mxu0 0.0
    %813 = vmatprep.mubr.f32.mxu0 0.0
    %814 = vmatmul.mubr.f32.gmra.mxu0 %v747
    %v815 = vpop.f32.mrf.mxu0
    %v816 = vadd.f32 0.0, %v815
    %v817 = vpop.f32.mrf.mxu0
    %818 = vdwg.mxu0
    %v820 = vsel %vm146, %v816, 0
    %822 = vmatprep.subr.mxu0 0.0
    %823 = vmatpush1.msra.mxu0 0.0
    %824 = vmatprep.subr.mxu0 0.0
    %825 = vmatpush1.msra.mxu0 0.0
    %826 = vmatprep.subr.mxu0 0.0
    %827 = vmatpush1.msra.mxu0 0.0
    %828 = vmatprep.subr.mxu0 0.0
    %829 = vmatpush1.msra.mxu0 0.0
    %830 = vmatprep.subr.mxu0 0.0
    %831 = vmatpush1.msra.mxu0 0.0
    %832 = vmatprep.subr.mxu0 0.0
    %833 = vmatpush1.msra.mxu0 0.0
    %834 = vmatprep.subr.mxu0 0.0
    %835 = vmatpush1.msra.mxu0 0.0
    %836 = vmatprep.subr.mxu0 0.0
    %837 = vmatpush1.msra.mxu0 0.0
    %838 = vmatprep.subr.mxu0 0.0
    %839 = vmatpush1.msra.mxu0 0.0
    %840 = vmatprep.subr.mxu0 0.0
    %841 = vmatpush1.msra.mxu0 0.0
    %842 = vmatprep.subr.mxu0 0.0
    %843 = vmatpush1.msra.mxu0 0.0
    %844 = vmatprep.subr.mxu0 0.0
    %845 = vmatpush1.msra.mxu0 0.0
    %846 = vmatprep.subr.mxu0 0.0
    %847 = vmatpush1.msra.mxu0 0.0
    %848 = vmatprep.subr.mxu0 0.0
    %849 = vmatpush1.msra.mxu0 0.0
    %850 = vmatprep.subr.mxu0 0.0
    %851 = vmatpush1.msra.mxu0 0.0
    %852 = vmatprep.subr.mxu0 0.0
    %853 = vmatpush1.msra.mxu0 %v45
    %854 = vmatprep.subr.mxu0 0.0
    %855 = vmatpush2.msra.mxu0 0.0
    %856 = vmatprep.subr.mxu0 0.0
    %857 = vmatpush2.msra.mxu0 0.0
    %858 = vmatprep.subr.mxu0 0.0
    %859 = vmatpush2.msra.mxu0 0.0
    %860 = vmatprep.subr.mxu0 0.0
    %861 = vmatpush2.msra.mxu0 0.0
    %862 = vmatprep.subr.mxu0 0.0
    %863 = vmatpush2.msra.mxu0 0.0
    %864 = vmatprep.subr.mxu0 0.0
    %865 = vmatpush2.msra.mxu0 0.0
    %866 = vmatprep.subr.mxu0 0.0
    %867 = vmatpush2.msra.mxu0 0.0
    %868 = vmatprep.subr.mxu0 0.0
    %869 = vmatpush2.msra.mxu0 0.0
    %870 = vmatprep.subr.mxu0 0.0
    %871 = vmatpush2.msra.mxu0 0.0
    %872 = vmatprep.subr.mxu0 0.0
    %873 = vmatpush2.msra.mxu0 0.0
    %874 = vmatprep.subr.mxu0 0.0
    %875 = vmatpush2.msra.mxu0 0.0
    %876 = vmatprep.subr.mxu0 0.0
    %877 = vmatpush2.msra.mxu0 0.0
    %878 = vmatprep.subr.mxu0 0.0
    %879 = vmatpush2.msra.mxu0 0.0
    %880 = vmatprep.subr.mxu0 0.0
    %881 = vmatpush2.msra.mxu0 0.0
    %882 = vmatprep.subr.mxu0 0.0
    %883 = vmatpush2.msra.mxu0 0.0
    %884 = vmatprep.subr.mxu0 0.0
    %885 = vmatpush2.msra.mxu0 0.0
    %886 = vmatprep.mubr.f32.mxu0 0.0
    %887 = vmatmul.mubr.f32.gmra.mxu0 %v820
    %v888 = vpop.f32.mrf.mxu0
    %v889 = vadd.f32 %v313, %v888
    %v890 = vpop.f32.mrf.mxu0
    %891 = vdwg.mxu0
    %v892 = vsel %vm387, %v889, -inf
    %893 = vmax.xlane.f32.xlu0 %v892
    %v894 = vpop.xlane.xlu0 %893
    %v895 = vsub.f32 %v889, %v894
    %v896 = vmul.f32 %v895, 1.442695
    %v897 = vpow.pop %v896
    %v898 = vsel %vm387, %v897, 0.0
    %899 = vadd.xlane.f32.xlu0 %v898
    %v900 = vpop.xlane.xlu0 %899
    %v901 = vlog2.pop %v900
    %v902 = vmul.f32 %v901, 0.6931472
    %v903 = vsub.f32 %v895, %v902
    %904 = vrot.lane.b32.xlu0 %v135, 104
    %v905 = vpop.permute.xlu0 %904
    %906 = vrot.lane.b32.xlu0 %v135, 72
    %v907 = vpop.permute.xlu0 %906
    %v908 = vsel %vm146, %v905, 0
    %v910 = vsel %vm146, %v907, 0
    %912 = vmatprep.subr.mxu0 0.0
    %913 = vmatpush1.xpose.msra.mxu0 0.0
    %914 = vmatprep.subr.mxu0 0.0
    %915 = vmatpush1.xpose.msra.mxu0 0.0
    %916 = vmatprep.subr.mxu0 0.0
    %917 = vmatpush1.xpose.msra.mxu0 0.0
    %918 = vmatprep.subr.mxu0 0.0
    %919 = vmatpush1.xpose.msra.mxu0 0.0
    %920 = vmatprep.subr.mxu0 0.0
    %921 = vmatpush1.xpose.msra.mxu0 0.0
    %922 = vmatprep.subr.mxu0 0.0
    %923 = vmatpush1.xpose.msra.mxu0 0.0
    %924 = vmatprep.subr.mxu0 0.0
    %925 = vmatpush1.xpose.msra.mxu0 0.0
    %926 = vmatprep.subr.mxu0 0.0
    %927 = vmatpush1.xpose.msra.mxu0 0.0
    %928 = vmatprep.subr.mxu0 0.0
    %929 = vmatpush1.xpose.msra.mxu0 0.0
    %930 = vmatprep.subr.mxu0 0.0
    %931 = vmatpush1.xpose.msra.mxu0 0.0
    %932 = vmatprep.subr.mxu0 0.0
    %933 = vmatpush1.xpose.msra.mxu0 0.0
    %934 = vmatprep.subr.mxu0 0.0
    %935 = vmatpush1.xpose.msra.mxu0 0.0
    %936 = vmatprep.subr.mxu0 0.0
    %937 = vmatpush1.xpose.msra.mxu0 0.0
    %938 = vmatprep.subr.mxu0 0.0
    %939 = vmatpush1.xpose.msra.mxu0 0.0
    %940 = vmatprep.subr.mxu0 0.0
    %941 = vmatpush1.xpose.msra.mxu0 0.0
    %942 = vmatprep.subr.mxu0 0.0
    %943 = vmatpush1.xpose.msra.mxu0 %v910
    %944 = vmatprep.subr.mxu0 0.0
    %945 = vmatpush2.xpose.msra.mxu0 0.0
    %946 = vmatprep.subr.mxu0 0.0
    %947 = vmatpush2.xpose.msra.mxu0 0.0
    %948 = vmatprep.subr.mxu0 0.0
    %949 = vmatpush2.xpose.msra.mxu0 0.0
    %950 = vmatprep.subr.mxu0 0.0
    %951 = vmatpush2.xpose.msra.mxu0 0.0
    %952 = vmatprep.subr.mxu0 0.0
    %953 = vmatpush2.xpose.msra.mxu0 0.0
    %954 = vmatprep.subr.mxu0 0.0
    %955 = vmatpush2.xpose.msra.mxu0 0.0
    %956 = vmatprep.subr.mxu0 0.0
    %957 = vmatpush2.xpose.msra.mxu0 0.0
    %958 = vmatprep.subr.mxu0 0.0
    %959 = vmatpush2.xpose.msra.mxu0 0.0
    %960 = vmatprep.subr.mxu0 0.0
    %961 = vmatpush2.xpose.msra.mxu0 0.0
    %962 = vmatprep.subr.mxu0 0.0
    %963 = vmatpush2.xpose.msra.mxu0 0.0
    %964 = vmatprep.subr.mxu0 0.0
    %965 = vmatpush2.xpose.msra.mxu0 0.0
    %966 = vmatprep.subr.mxu0 0.0
    %967 = vmatpush2.xpose.msra.mxu0 0.0
    %968 = vmatprep.subr.mxu0 0.0
    %969 = vmatpush2.xpose.msra.mxu0 0.0
    %970 = vmatprep.subr.mxu0 0.0
    %971 = vmatpush2.xpose.msra.mxu0 0.0
    %972 = vmatprep.subr.mxu0 0.0
    %973 = vmatpush2.xpose.msra.mxu0 0.0
    %974 = vmatprep.subr.mxu0 0.0
    %975 = vmatpush2.xpose.msra.mxu0 0.0
    %976 = vmatprep.mubr.f32.mxu0 0.0
    %977 = vmatmul.mubr.f32.gmra.mxu0 %v908
    %v978 = vpop.f32.mrf.mxu0
    %v979 = vadd.f32 0.0, %v978
    %v980 = vpop.f32.mrf.mxu0
    %981 = vdwg.mxu0
    %v982 = vmul.f32 %v979, 0.35355338
    %v983 = vadd.f32 %v982, %v26
    %v984 = vsel %vm146, %v983, -inf
    %985 = vmax.xlane.f32.xlu0 %v984
    %v986 = vpop.xlane.xlu0 %985
    %v987 = vsub.f32 %v983, %v986
    %v988 = vmul.f32 %v987, 1.442695
    %v989 = vpow.pop %v988
    %v990 = vsel %vm146, %v989, 0.0
    %991 = vadd.xlane.f32.xlu0 %v990
    %v992 = vpop.xlane.xlu0 %991
    %v993 = vrcp.pop %v992
    %v994 = vmul.f32 %v989, %v993
    %995 = vrot.lane.b32.xlu0 %v135, 40
    %v996 = vpop.permute.xlu0 %995
    %v999 = vsel %vm146, %v994, 0
    %1001 = vmatprep.subr.mxu0 0.0
    %1002 = vmatpush1.msra.mxu0 0.0
    %1003 = vmatprep.subr.mxu0 0.0
    %1004 = vmatpush1.msra.mxu0 0.0
    %1005 = vmatprep.subr.mxu0 0.0
    %1006 = vmatpush1.msra.mxu0 0.0
    %1007 = vmatprep.subr.mxu0 0.0
    %1008 = vmatpush1.msra.mxu0 0.0
    %1009 = vmatprep.subr.mxu0 0.0
    %1010 = vmatpush1.msra.mxu0 0.0
    %1011 = vmatprep.subr.mxu0 0.0
    %1012 = vmatpush1.msra.mxu0 0.0
    %1013 = vmatprep.subr.mxu0 0.0
    %1014 = vmatpush1.msra.mxu0 0.0
    %1015 = vmatprep.subr.mxu0 0.0
    %1016 = vmatpush1.msra.mxu0 0.0
    %1017 = vmatprep.subr.mxu0 0.0
    %1018 = vmatpush1.msra.mxu0 0.0
    %1019 = vmatprep.subr.mxu0 0.0
    %1020 = vmatpush1.msra.mxu0 0.0
    %1021 = vmatprep.subr.mxu0 0.0
    %1022 = vmatpush1.msra.mxu0 0.0
    %1023 = vmatprep.subr.mxu0 0.0
    %1024 = vmatpush1.msra.mxu0 0.0
    %1025 = vmatprep.subr.mxu0 0.0
    %1026 = vmatpush1.msra.mxu0 0.0
    %1027 = vmatprep.subr.mxu0 0.0
    %1028 = vmatpush1.msra.mxu0 0.0
    %1029 = vmatprep.subr.mxu0 0.0
    %1030 = vmatpush1.msra.mxu0 0.0
    %1031 = vmatprep.subr.mxu0 0.0
    %1032 = vmatpush1.msra.mxu0 %v996
    %1033 = vmatprep.subr.mxu0 0.0
    %1034 = vmatpush2.msra.mxu0 0.0
    %1035 = vmatprep.subr.mxu0 0.0
    %1036 = vmatpush2.msra.mxu0 0.0
    %1037 = vmatprep.subr.mxu0 0.0
    %1038 = vmatpush2.msra.mxu0 0.0
    %1039 = vmatprep.subr.mxu0 0.0
    %1040 = vmatpush2.msra.mxu0 0.0
    %1041 = vmatprep.subr.mxu0 0.0
    %1042 = vmatpush2.msra.mxu0 0.0
    %1043 = vmatprep.subr.mxu0 0.0
    %1044 = vmatpush2.msra.mxu0 0.0
    %1045 = vmatprep.subr.mxu0 0.0
    %1046 = vmatpush2.msra.mxu0 0.0
    %1047 = vmatprep.subr.mxu0 0.0
    %1048 = vmatpush2.msra.mxu0 0.0
    %1049 = vmatprep.subr.mxu0 0.0
    %1050 = vmatpush2.msra.mxu0 0.0
    %1051 = vmatprep.subr.mxu0 0.0
    %1052 = vmatpush2.msra.mxu0 0.0
    %1053 = vmatprep.subr.mxu0 0.0
    %1054 = vmatpush2.msra.mxu0 0.0
    %1055 = vmatprep.subr.mxu0 0.0
    %1056 = vmatpush2.msra.mxu0 0.0
    %1057 = vmatprep.subr.mxu0 0.0
    %1058 = vmatpush2.msra.mxu0 0.0
    %1059 = vmatprep.subr.mxu0 0.0
    %1060 = vmatpush2.msra.mxu0 0.0
    %1061 = vmatprep.subr.mxu0 0.0
    %1062 = vmatpush2.msra.mxu0 0.0
    %1063 = vmatprep.subr.mxu0 0.0
    %1064 = vmatpush2.msra.mxu0 0.0
    %1065 = vmatprep.mubr.f32.mxu0 0.0
    %1066 = vmatmul.mubr.f32.gmra.mxu0 %v999
    %v1067 = vpop.f32.mrf.mxu0
    %v1068 = vadd.f32 0.0, %v1067
    %v1069 = vpop.f32.mrf.mxu0
    %1070 = vdwg.mxu0
    %v1072 = vsel %vm146, %v1068, 0
    %1074 = vmatprep.subr.mxu0 0.0
    %1075 = vmatpush1.msra.mxu0 0.0
    %1076 = vmatprep.subr.mxu0 0.0
    %1077 = vmatpush1.msra.mxu0 0.0
    %1078 = vmatprep.subr.mxu0 0.0
    %1079 = vmatpush1.msra.mxu0 0.0
    %1080 = vmatprep.subr.mxu0 0.0
    %1081 = vmatpush1.msra.mxu0 0.0
    %1082 = vmatprep.subr.mxu0 0.0
    %1083 = vmatpush1.msra.mxu0 0.0
    %1084 = vmatprep.subr.mxu0 0.0
    %1085 = vmatpush1.msra.mxu0 0.0
    %1086 = vmatprep.subr.mxu0 0.0
    %1087 = vmatpush1.msra.mxu0 0.0
    %1088 = vmatprep.subr.mxu0 0.0
    %1089 = vmatpush1.msra.mxu0 0.0
    %1090 = vmatprep.subr.mxu0 0.0
    %1091 = vmatpush1.msra.mxu0 0.0
    %1092 = vmatprep.subr.mxu0 0.0
    %1093 = vmatpush1.msra.mxu0 0.0
    %1094 = vmatprep.subr.mxu0 0.0
    %1095 = vmatpush1.msra.mxu0 0.0
    %1096 = vmatprep.subr.mxu0 0.0
    %1097 = vmatpush1.msra.mxu0 0.0
    %1098 = vmatprep.subr.mxu0 0.0
    %1099 = vmatpush1.msra.mxu0 0.0
    %1100 = vmatprep.subr.mxu0 0.0
    %1101 = vmatpush1.msra.mxu0 0.0
    %1102 = vmatprep.subr.mxu0 0.0
    %1103 = vmatpush1.msra.mxu0 0.0
    %1104 = vmatprep.subr.mxu0 0.0
    %1105 = vmatpush1.msra.mxu0 %v45
    %1106 = vmatprep.subr.mxu0 0.0
    %1107 = vmatpush2.msra.mxu0 0.0
    %1108 = vmatprep.subr.mxu0 0.0
    %1109 = vmatpush2.msra.mxu0 0.0
    %1110 = vmatprep.subr.mxu0 0.0
    %1111 = vmatpush2.msra.mxu0 0.0
    %1112 = vmatprep.subr.mxu0 0.0
    %1113 = vmatpush2.msra.mxu0 0.0
    %1114 = vmatprep.subr.mxu0 0.0
    %1115 = vmatpush2.msra.mxu0 0.0
    %1116 = vmatprep.subr.mxu0 0.0
    %1117 = vmatpush2.msra.mxu0 0.0
    %1118 = vmatprep.subr.mxu0 0.0
    %1119 = vmatpush2.msra.mxu0 0.0
    %1120 = vmatprep.subr.mxu0 0.0
    %1121 = vmatpush2.msra.mxu0 0.0
    %1122 = vmatprep.subr.mxu0 0.0
    %1123 = vmatpush2.msra.mxu0 0.0
    %1124 = vmatprep.subr.mxu0 0.0
    %1125 = vmatpush2.msra.mxu0 0.0
    %1126 = vmatprep.subr.mxu0 0.0
    %1127 = vmatpush2.msra.mxu0 0.0
    %1128 = vmatprep.subr.mxu0 0.0
    %1129 = vmatpush2.msra.mxu0 0.0
    %1130 = vmatprep.subr.mxu0 0.0
    %1131 = vmatpush2.msra.mxu0 0.0
    %1132 = vmatprep.subr.mxu0 0.0
    %1133 = vmatpush2.msra.mxu0 0.0
    %1134 = vmatprep.subr.mxu0 0.0
    %1135 = vmatpush2.msra.mxu0 0.0
    %1136 = vmatprep.subr.mxu0 0.0
    %1137 = vmatpush2.msra.mxu0 0.0
    %1138 = vmatprep.mubr.f32.mxu0 0.0
    %1139 = vmatmul.mubr.f32.gmra.mxu0 %v1072
    %v1140 = vpop.f32.mrf.mxu0
    %v1141 = vadd.f32 %v313, %v1140
    %v1142 = vpop.f32.mrf.mxu0
    %1143 = vdwg.mxu0
    %v1144 = vsel %vm387, %v1141, -inf
    %1145 = vmax.xlane.f32.xlu0 %v1144
    %v1146 = vpop.xlane.xlu0 %1145
    %v1147 = vsub.f32 %v1141, %v1146
    %v1148 = vmul.f32 %v1147, 1.442695
    %v1149 = vpow.pop %v1148
    %v1150 = vsel %vm387, %v1149, 0.0
    %1151 = vadd.xlane.f32.xlu0 %v1150
    %v1152 = vpop.xlane.xlu0 %1151
    %v1153 = vlog2.pop %v1152
    %v1154 = vmul.f32 %v1153, 0.6931472
    %v1155 = vsub.f32 %v1147, %v1154
    %1156 = vrot.lane.b32.xlu0 %v564, 8
    %v1157 = vpop.permute.xlu0 %1156
    %1159 = vrot.lane.b32.xlu0 %v816, 16
    %v1160 = vpop.permute.xlu0 %1159
    %1162 = vrot.lane.b32.xlu0 %v1068, 24
    %v1163 = vpop.permute.xlu0 %1162
    %v1165 = vsel %vm146, %v307, %v1157
    %vm1166 = vcmask 130048
    %v1167 = vsel %vm1166, %v1165, %v1160
    %vm1168 = vcmask 195584
    %v1169 = vsel %vm1168, %v1167, %v1163
    %1171 = vrot.lane.b32.xlu0 %v651, 4
    %v1172 = vpop.permute.xlu0 %1171
    %1175 = vrot.lane.b32.xlu0 %v903, 8
    %v1176 = vpop.permute.xlu0 %1175
    %1179 = vrot.lane.b32.xlu0 %v1155, 12
    %v1180 = vpop.permute.xlu0 %1179
    %v1182 = vsel %vm387, %v399, %v1172
    %v1183 = vsel %vm146, %v1182, %v1176
    %vm1184 = vcmask 97280
    %v1185 = vsel %vm1184, %v1183, %v1180
    %1187 = vrot.lane.b32.xlu0 %v1185, 96
    %v1188 = vpop.permute.xlu0 %1187
    %vm1190 = vcmask 917248
    %1191 = vst.msk [vmem:[#allocation2] sm:$0xff] %vm1190, %v1188
    %1193 = vrot.lane.b32.xlu0 %v140, 96
    %v1194 = vpop.permute.xlu0 %1193
    %v1195 = vsel %vm146, %v140, 0
    %v1197 = vsel %vm146, %v1194, 0
    %1199 = vmatprep.subr.mxu0 0.0
    %1200 = vmatpush1.xpose.msra.mxu0 0.0
    %1201 = vmatprep.subr.mxu0 0.0
    %1202 = vmatpush1.xpose.msra.mxu0 0.0
    %1203 = vmatprep.subr.mxu0 0.0
    %1204 = vmatpush1.xpose.msra.mxu0 0.0
    %1205 = vmatprep.subr.mxu0 0.0
    %1206 = vmatpush1.xpose.msra.mxu0 0.0
    %1207 = vmatprep.subr.mxu0 0.0
    %1208 = vmatpush1.xpose.msra.mxu0 0.0
    %1209 = vmatprep.subr.mxu0 0.0
    %1210 = vmatpush1.xpose.msra.mxu0 0.0
    %1211 = vmatprep.subr.mxu0 0.0
    %1212 = vmatpush1.xpose.msra.mxu0 0.0
    %1213 = vmatprep.subr.mxu0 0.0
    %1214 = vmatpush1.xpose.msra.mxu0 0.0
    %1215 = vmatprep.subr.mxu0 0.0
    %1216 = vmatpush1.xpose.msra.mxu0 0.0
    %1217 = vmatprep.subr.mxu0 0.0
    %1218 = vmatpush1.xpose.msra.mxu0 0.0
    %1219 = vmatprep.subr.mxu0 0.0
    %1220 = vmatpush1.xpose.msra.mxu0 0.0
    %1221 = vmatprep.subr.mxu0 0.0
    %1222 = vmatpush1.xpose.msra.mxu0 0.0
    %1223 = vmatprep.subr.mxu0 0.0
    %1224 = vmatpush1.xpose.msra.mxu0 0.0
    %1225 = vmatprep.subr.mxu0 0.0
    %1226 = vmatpush1.xpose.msra.mxu0 0.0
    %1227 = vmatprep.subr.mxu0 0.0
    %1228 = vmatpush1.xpose.msra.mxu0 0.0
    %1229 = vmatprep.subr.mxu0 0.0
    %1230 = vmatpush1.xpose.msra.mxu0 %v1197
    %1231 = vmatprep.subr.mxu0 0.0
    %1232 = vmatpush2.xpose.msra.mxu0 0.0
    %1233 = vmatprep.subr.mxu0 0.0
    %1234 = vmatpush2.xpose.msra.mxu0 0.0
    %1235 = vmatprep.subr.mxu0 0.0
    %1236 = vmatpush2.xpose.msra.mxu0 0.0
    %1237 = vmatprep.subr.mxu0 0.0
    %1238 = vmatpush2.xpose.msra.mxu0 0.0
    %1239 = vmatprep.subr.mxu0 0.0
    %1240 = vmatpush2.xpose.msra.mxu0 0.0
    %1241 = vmatprep.subr.mxu0 0.0
    %1242 = vmatpush2.xpose.msra.mxu0 0.0
    %1243 = vmatprep.subr.mxu0 0.0
    %1244 = vmatpush2.xpose.msra.mxu0 0.0
    %1245 = vmatprep.subr.mxu0 0.0
    %1246 = vmatpush2.xpose.msra.mxu0 0.0
    %1247 = vmatprep.subr.mxu0 0.0
    %1248 = vmatpush2.xpose.msra.mxu0 0.0
    %1249 = vmatprep.subr.mxu0 0.0
    %1250 = vmatpush2.xpose.msra.mxu0 0.0
    %1251 = vmatprep.subr.mxu0 0.0
    %1252 = vmatpush2.xpose.msra.mxu0 0.0
    %1253 = vmatprep.subr.mxu0 0.0
    %1254 = vmatpush2.xpose.msra.mxu0 0.0
    %1255 = vmatprep.subr.mxu0 0.0
    %1256 = vmatpush2.xpose.msra.mxu0 0.0
    %1257 = vmatprep.subr.mxu0 0.0
    %1258 = vmatpush2.xpose.msra.mxu0 0.0
    %1259 = vmatprep.subr.mxu0 0.0
    %1260 = vmatpush2.xpose.msra.mxu0 0.0
    %1261 = vmatprep.subr.mxu0 0.0
    %1262 = vmatpush2.xpose.msra.mxu0 0.0
    %1263 = vmatprep.mubr.f32.mxu0 0.0
    %1264 = vmatmul.mubr.f32.gmra.mxu0 %v1195
    %v1265 = vpop.f32.mrf.mxu0
    %v1266 = vadd.f32 0.0, %v1265
    %v1267 = vpop.f32.mrf.mxu0
    %1268 = vdwg.mxu0
    %v1269 = vmul.f32 %v1266, 0.35355338
    %v1270 = vadd.f32 %v1269, %v28
    %v1271 = vsel %vm146, %v1270, -inf
    %1272 = vmax.xlane.f32.xlu0 %v1271
    %v1273 = vpop.xlane.xlu0 %1272
    %v1274 = vsub.f32 %v1270, %v1273
    %v1275 = vmul.f32 %v1274, 1.442695
    %v1276 = vpow.pop %v1275
    %v1277 = vsel %vm146, %v1276, 0.0
    %1278 = vadd.xlane.f32.xlu0 %v1277
    %v1279 = vpop.xlane.xlu0 %1278
    %v1280 = vrcp.pop %v1279
    %v1281 = vmul.f32 %v1276, %v1280
    %1282 = vrot.lane.b32.xlu0 %v140, 64
    %v1283 = vpop.permute.xlu0 %1282
    %v1286 = vsel %vm146, %v1281, 0
    %1288 = vmatprep.subr.mxu0 0.0
    %1289 = vmatpush1.msra.mxu0 0.0
    %1290 = vmatprep.subr.mxu0 0.0
    %1291 = vmatpush1.msra.mxu0 0.0
    %1292 = vmatprep.subr.mxu0 0.0
    %1293 = vmatpush1.msra.mxu0 0.0
    %1294 = vmatprep.subr.mxu0 0.0
    %1295 = vmatpush1.msra.mxu0 0.0
    %1296 = vmatprep.subr.mxu0 0.0
    %1297 = vmatpush1.msra.mxu0 0.0
    %1298 = vmatprep.subr.mxu0 0.0
    %1299 = vmatpush1.msra.mxu0 0.0
    %1300 = vmatprep.subr.mxu0 0.0
    %1301 = vmatpush1.msra.mxu0 0.0
    %1302 = vmatprep.subr.mxu0 0.0
    %1303 = vmatpush1.msra.mxu0 0.0
    %1304 = vmatprep.subr.mxu0 0.0
    %1305 = vmatpush1.msra.mxu0 0.0
    %1306 = vmatprep.subr.mxu0 0.0
    %1307 = vmatpush1.msra.mxu0 0.0
    %1308 = vmatprep.subr.mxu0 0.0
    %1309 = vmatpush1.msra.mxu0 0.0
    %1310 = vmatprep.subr.mxu0 0.0
    %1311 = vmatpush1.msra.mxu0 0.0
    %1312 = vmatprep.subr.mxu0 0.0
    %1313 = vmatpush1.msra.mxu0 0.0
    %1314 = vmatprep.subr.mxu0 0.0
    %1315 = vmatpush1.msra.mxu0 0.0
    %1316 = vmatprep.subr.mxu0 0.0
    %1317 = vmatpush1.msra.mxu0 0.0
    %1318 = vmatprep.subr.mxu0 0.0
    %1319 = vmatpush1.msra.mxu0 %v1283
    %1320 = vmatprep.subr.mxu0 0.0
    %1321 = vmatpush2.msra.mxu0 0.0
    %1322 = vmatprep.subr.mxu0 0.0
    %1323 = vmatpush2.msra.mxu0 0.0
    %1324 = vmatprep.subr.mxu0 0.0
    %1325 = vmatpush2.msra.mxu0 0.0
    %1326 = vmatprep.subr.mxu0 0.0
    %1327 = vmatpush2.msra.mxu0 0.0
    %1328 = vmatprep.subr.mxu0 0.0
    %1329 = vmatpush2.msra.mxu0 0.0
    %1330 = vmatprep.subr.mxu0 0.0
    %1331 = vmatpush2.msra.mxu0 0.0
    %1332 = vmatprep.subr.mxu0 0.0
    %1333 = vmatpush2.msra.mxu0 0.0
    %1334 = vmatprep.subr.mxu0 0.0
    %1335 = vmatpush2.msra.mxu0 0.0
    %1336 = vmatprep.subr.mxu0 0.0
    %1337 = vmatpush2.msra.mxu0 0.0
    %1338 = vmatprep.subr.mxu0 0.0
    %1339 = vmatpush2.msra.mxu0 0.0
    %1340 = vmatprep.subr.mxu0 0.0
    %1341 = vmatpush2.msra.mxu0 0.0
    %1342 = vmatprep.subr.mxu0 0.0
    %1343 = vmatpush2.msra.mxu0 0.0
    %1344 = vmatprep.subr.mxu0 0.0
    %1345 = vmatpush2.msra.mxu0 0.0
    %1346 = vmatprep.subr.mxu0 0.0
    %1347 = vmatpush2.msra.mxu0 0.0
    %1348 = vmatprep.subr.mxu0 0.0
    %1349 = vmatpush2.msra.mxu0 0.0
    %1350 = vmatprep.subr.mxu0 0.0
    %1351 = vmatpush2.msra.mxu0 0.0
    %1352 = vmatprep.mubr.f32.mxu0 0.0
    %1353 = vmatmul.mubr.f32.gmra.mxu0 %v1286
    %v1354 = vpop.f32.mrf.mxu0
    %v1355 = vadd.f32 0.0, %v1354
    %v1356 = vpop.f32.mrf.mxu0
    %1357 = vdwg.mxu0
    %v1359 = vsel %vm146, %v1355, 0
    %1361 = vmatprep.subr.mxu0 0.0
    %1362 = vmatpush1.msra.mxu0 0.0
    %1363 = vmatprep.subr.mxu0 0.0
    %1364 = vmatpush1.msra.mxu0 0.0
    %1365 = vmatprep.subr.mxu0 0.0
    %1366 = vmatpush1.msra.mxu0 0.0
    %1367 = vmatprep.subr.mxu0 0.0
    %1368 = vmatpush1.msra.mxu0 0.0
    %1369 = vmatprep.subr.mxu0 0.0
    %1370 = vmatpush1.msra.mxu0 0.0
    %1371 = vmatprep.subr.mxu0 0.0
    %1372 = vmatpush1.msra.mxu0 0.0
    %1373 = vmatprep.subr.mxu0 0.0
    %1374 = vmatpush1.msra.mxu0 0.0
    %1375 = vmatprep.subr.mxu0 0.0
    %1376 = vmatpush1.msra.mxu0 0.0
    %1377 = vmatprep.subr.mxu0 0.0
    %1378 = vmatpush1.msra.mxu0 0.0
    %1379 = vmatprep.subr.mxu0 0.0
    %1380 = vmatpush1.msra.mxu0 0.0
    %1381 = vmatprep.subr.mxu0 0.0
    %1382 = vmatpush1.msra.mxu0 0.0
    %1383 = vmatprep.subr.mxu0 0.0
    %1384 = vmatpush1.msra.mxu0 0.0
    %1385 = vmatprep.subr.mxu0 0.0
    %1386 = vmatpush1.msra.mxu0 0.0
    %1387 = vmatprep.subr.mxu0 0.0
    %1388 = vmatpush1.msra.mxu0 0.0
    %1389 = vmatprep.subr.mxu0 0.0
    %1390 = vmatpush1.msra.mxu0 0.0
    %1391 = vmatprep.subr.mxu0 0.0
    %1392 = vmatpush1.msra.mxu0 %v45
    %1393 = vmatprep.subr.mxu0 0.0
    %1394 = vmatpush2.msra.mxu0 0.0
    %1395 = vmatprep.subr.mxu0 0.0
    %1396 = vmatpush2.msra.mxu0 0.0
    %1397 = vmatprep.subr.mxu0 0.0
    %1398 = vmatpush2.msra.mxu0 0.0
    %1399 = vmatprep.subr.mxu0 0.0
    %1400 = vmatpush2.msra.mxu0 0.0
    %1401 = vmatprep.subr.mxu0 0.0
    %1402 = vmatpush2.msra.mxu0 0.0
    %1403 = vmatprep.subr.mxu0 0.0
    %1404 = vmatpush2.msra.mxu0 0.0
    %1405 = vmatprep.subr.mxu0 0.0
    %1406 = vmatpush2.msra.mxu0 0.0
    %1407 = vmatprep.subr.mxu0 0.0
    %1408 = vmatpush2.msra.mxu0 0.0
    %1409 = vmatprep.subr.mxu0 0.0
    %1410 = vmatpush2.msra.mxu0 0.0
    %1411 = vmatprep.subr.mxu0 0.0
    %1412 = vmatpush2.msra.mxu0 0.0
    %1413 = vmatprep.subr.mxu0 0.0
    %1414 = vmatpush2.msra.mxu0 0.0
    %1415 = vmatprep.subr.mxu0 0.0
    %1416 = vmatpush2.msra.mxu0 0.0
    %1417 = vmatprep.subr.mxu0 0.0
    %1418 = vmatpush2.msra.mxu0 0.0
    %1419 = vmatprep.subr.mxu0 0.0
    %1420 = vmatpush2.msra.mxu0 0.0
    %1421 = vmatprep.subr.mxu0 0.0
    %1422 = vmatpush2.msra.mxu0 0.0
    %1423 = vmatprep.subr.mxu0 0.0
    %1424 = vmatpush2.msra.mxu0 0.0
    %1425 = vmatprep.mubr.f32.mxu0 0.0
    %1426 = vmatmul.mubr.f32.gmra.mxu0 %v1359
    %v1427 = vpop.f32.mrf.mxu0
    %v1428 = vadd.f32 %v313, %v1427
    %v1429 = vpop.f32.mrf.mxu0
    %1430 = vdwg.mxu0
    %v1431 = vsel %vm387, %v1428, -inf
    %1432 = vmax.xlane.f32.xlu0 %v1431
    %v1433 = vpop.xlane.xlu0 %1432
    %v1434 = vsub.f32 %v1428, %v1433
    %v1435 = vmul.f32 %v1434, 1.442695
    %v1436 = vpow.pop %v1435
    %v1437 = vsel %vm387, %v1436, 0.0
    %1438 = vadd.xlane.f32.xlu0 %v1437
    %v1439 = vpop.xlane.xlu0 %1438
    %v1440 = vlog2.pop %v1439
    %v1441 = vmul.f32 %v1440, 0.6931472
    %v1442 = vsub.f32 %v1434, %v1441
    %1443 = vrot.lane.b32.xlu0 %v140, 120
    %v1444 = vpop.permute.xlu0 %1443
    %1445 = vrot.lane.b32.xlu0 %v140, 88
    %v1446 = vpop.permute.xlu0 %1445
    %v1447 = vsel %vm146, %v1444, 0
    %v1449 = vsel %vm146, %v1446, 0
    %1451 = vmatprep.subr.mxu0 0.0
    %1452 = vmatpush1.xpose.msra.mxu0 0.0
    %1453 = vmatprep.subr.mxu0 0.0
    %1454 = vmatpush1.xpose.msra.mxu0 0.0
    %1455 = vmatprep.subr.mxu0 0.0
    %1456 = vmatpush1.xpose.msra.mxu0 0.0
    %1457 = vmatprep.subr.mxu0 0.0
    %1458 = vmatpush1.xpose.msra.mxu0 0.0
    %1459 = vmatprep.subr.mxu0 0.0
    %1460 = vmatpush1.xpose.msra.mxu0 0.0
    %1461 = vmatprep.subr.mxu0 0.0
    %1462 = vmatpush1.xpose.msra.mxu0 0.0
    %1463 = vmatprep.subr.mxu0 0.0
    %1464 = vmatpush1.xpose.msra.mxu0 0.0
    %1465 = vmatprep.subr.mxu0 0.0
    %1466 = vmatpush1.xpose.msra.mxu0 0.0
    %1467 = vmatprep.subr.mxu0 0.0
    %1468 = vmatpush1.xpose.msra.mxu0 0.0
    %1469 = vmatprep.subr.mxu0 0.0
    %1470 = vmatpush1.xpose.msra.mxu0 0.0
    %1471 = vmatprep.subr.mxu0 0.0
    %1472 = vmatpush1.xpose.msra.mxu0 0.0
    %1473 = vmatprep.subr.mxu0 0.0
    %1474 = vmatpush1.xpose.msra.mxu0 0.0
    %1475 = vmatprep.subr.mxu0 0.0
    %1476 = vmatpush1.xpose.msra.mxu0 0.0
    %1477 = vmatprep.subr.mxu0 0.0
    %1478 = vmatpush1.xpose.msra.mxu0 0.0
    %1479 = vmatprep.subr.mxu0 0.0
    %1480 = vmatpush1.xpose.msra.mxu0 0.0
    %1481 = vmatprep.subr.mxu0 0.0
    %1482 = vmatpush1.xpose.msra.mxu0 %v1449
    %1483 = vmatprep.subr.mxu0 0.0
    %1484 = vmatpush2.xpose.msra.mxu0 0.0
    %1485 = vmatprep.subr.mxu0 0.0
    %1486 = vmatpush2.xpose.msra.mxu0 0.0
    %1487 = vmatprep.subr.mxu0 0.0
    %1488 = vmatpush2.xpose.msra.mxu0 0.0
    %1489 = vmatprep.subr.mxu0 0.0
    %1490 = vmatpush2.xpose.msra.mxu0 0.0
    %1491 = vmatprep.subr.mxu0 0.0
    %1492 = vmatpush2.xpose.msra.mxu0 0.0
    %1493 = vmatprep.subr.mxu0 0.0
    %1494 = vmatpush2.xpose.msra.mxu0 0.0
    %1495 = vmatprep.subr.mxu0 0.0
    %1496 = vmatpush2.xpose.msra.mxu0 0.0
    %1497 = vmatprep.subr.mxu0 0.0
    %1498 = vmatpush2.xpose.msra.mxu0 0.0
    %1499 = vmatprep.subr.mxu0 0.0
    %1500 = vmatpush2.xpose.msra.mxu0 0.0
    %1501 = vmatprep.subr.mxu0 0.0
    %1502 = vmatpush2.xpose.msra.mxu0 0.0
    %1503 = vmatprep.subr.mxu0 0.0
    %1504 = vmatpush2.xpose.msra.mxu0 0.0
    %1505 = vmatprep.subr.mxu0 0.0
    %1506 = vmatpush2.xpose.msra.mxu0 0.0
    %1507 = vmatprep.subr.mxu0 0.0
    %1508 = vmatpush2.xpose.msra.mxu0 0.0
    %1509 = vmatprep.subr.mxu0 0.0
    %1510 = vmatpush2.xpose.msra.mxu0 0.0
    %1511 = vmatprep.subr.mxu0 0.0
    %1512 = vmatpush2.xpose.msra.mxu0 0.0
    %1513 = vmatprep.subr.mxu0 0.0
    %1514 = vmatpush2.xpose.msra.mxu0 0.0
    %1515 = vmatprep.mubr.f32.mxu0 0.0
    %1516 = vmatmul.mubr.f32.gmra.mxu0 %v1447
    %v1517 = vpop.f32.mrf.mxu0
    %v1518 = vadd.f32 0.0, %v1517
    %v1519 = vpop.f32.mrf.mxu0
    %1520 = vdwg.mxu0
    %v1521 = vmul.f32 %v1518, 0.35355338
    %v1522 = vadd.f32 %v1521, %v28
    %v1523 = vsel %vm146, %v1522, -inf
    %1524 = vmax.xlane.f32.xlu0 %v1523
    %v1525 = vpop.xlane.xlu0 %1524
    %v1526 = vsub.f32 %v1522, %v1525
    %v1527 = vmul.f32 %v1526, 1.442695
    %v1528 = vpow.pop %v1527
    %v1529 = vsel %vm146, %v1528, 0.0
    %1530 = vadd.xlane.f32.xlu0 %v1529
    %v1531 = vpop.xlane.xlu0 %1530
    %v1532 = vrcp.pop %v1531
    %v1533 = vmul.f32 %v1528, %v1532
    %1534 = vrot.lane.b32.xlu0 %v140, 56
    %v1535 = vpop.permute.xlu0 %1534
    %v1538 = vsel %vm146, %v1533, 0
    %1540 = vmatprep.subr.mxu0 0.0
    %1541 = vmatpush1.msra.mxu0 0.0
    %1542 = vmatprep.subr.mxu0 0.0
    %1543 = vmatpush1.msra.mxu0 0.0
    %1544 = vmatprep.subr.mxu0 0.0
    %1545 = vmatpush1.msra.mxu0 0.0
    %1546 = vmatprep.subr.mxu0 0.0
    %1547 = vmatpush1.msra.mxu0 0.0
    %1548 = vmatprep.subr.mxu0 0.0
    %1549 = vmatpush1.msra.mxu0 0.0
    %1550 = vmatprep.subr.mxu0 0.0
    %1551 = vmatpush1.msra.mxu0 0.0
    %1552 = vmatprep.subr.mxu0 0.0
    %1553 = vmatpush1.msra.mxu0 0.0
    %1554 = vmatprep.subr.mxu0 0.0
    %1555 = vmatpush1.msra.mxu0 0.0
    %1556 = vmatprep.subr.mxu0 0.0
    %1557 = vmatpush1.msra.mxu0 0.0
    %1558 = vmatprep.subr.mxu0 0.0
    %1559 = vmatpush1.msra.mxu0 0.0
    %1560 = vmatprep.subr.mxu0 0.0
    %1561 = vmatpush1.msra.mxu0 0.0
    %1562 = vmatprep.subr.mxu0 0.0
    %1563 = vmatpush1.msra.mxu0 0.0
    %1564 = vmatprep.subr.mxu0 0.0
    %1565 = vmatpush1.msra.mxu0 0.0
    %1566 = vmatprep.subr.mxu0 0.0
    %1567 = vmatpush1.msra.mxu0 0.0
    %1568 = vmatprep.subr.mxu0 0.0
    %1569 = vmatpush1.msra.mxu0 0.0
    %1570 = vmatprep.subr.mxu0 0.0
    %1571 = vmatpush1.msra.mxu0 %v1535
    %1572 = vmatprep.subr.mxu0 0.0
    %1573 = vmatpush2.msra.mxu0 0.0
    %1574 = vmatprep.subr.mxu0 0.0
    %1575 = vmatpush2.msra.mxu0 0.0
    %1576 = vmatprep.subr.mxu0 0.0
    %1577 = vmatpush2.msra.mxu0 0.0
    %1578 = vmatprep.subr.mxu0 0.0
    %1579 = vmatpush2.msra.mxu0 0.0
    %1580 = vmatprep.subr.mxu0 0.0
    %1581 = vmatpush2.msra.mxu0 0.0
    %1582 = vmatprep.subr.mxu0 0.0
    %1583 = vmatpush2.msra.mxu0 0.0
    %1584 = vmatprep.subr.mxu0 0.0
    %1585 = vmatpush2.msra.mxu0 0.0
    %1586 = vmatprep.subr.mxu0 0.0
    %1587 = vmatpush2.msra.mxu0 0.0
    %1588 = vmatprep.subr.mxu0 0.0
    %1589 = vmatpush2.msra.mxu0 0.0
    %1590 = vmatprep.subr.mxu0 0.0
    %1591 = vmatpush2.msra.mxu0 0.0
    %1592 = vmatprep.subr.mxu0 0.0
    %1593 = vmatpush2.msra.mxu0 0.0
    %1594 = vmatprep.subr.mxu0 0.0
    %1595 = vmatpush2.msra.mxu0 0.0
    %1596 = vmatprep.subr.mxu0 0.0
    %1597 = vmatpush2.msra.mxu0 0.0
    %1598 = vmatprep.subr.mxu0 0.0
    %1599 = vmatpush2.msra.mxu0 0.0
    %1600 = vmatprep.subr.mxu0 0.0
    %1601 = vmatpush2.msra.mxu0 0.0
    %1602 = vmatprep.subr.mxu0 0.0
    %1603 = vmatpush2.msra.mxu0 0.0
    %1604 = vmatprep.mubr.f32.mxu0 0.0
    %1605 = vmatmul.mubr.f32.gmra.mxu0 %v1538
    %v1606 = vpop.f32.mrf.mxu0
    %v1607 = vadd.f32 0.0, %v1606
    %v1608 = vpop.f32.mrf.mxu0
    %1609 = vdwg.mxu0
    %v1611 = vsel %vm146, %v1607, 0
    %1613 = vmatprep.subr.mxu0 0.0
    %1614 = vmatpush1.msra.mxu0 0.0
    %1615 = vmatprep.subr.mxu0 0.0
    %1616 = vmatpush1.msra.mxu0 0.0
    %1617 = vmatprep.subr.mxu0 0.0
    %1618 = vmatpush1.msra.mxu0 0.0
    %1619 = vmatprep.subr.mxu0 0.0
    %1620 = vmatpush1.msra.mxu0 0.0
    %1621 = vmatprep.subr.mxu0 0.0
    %1622 = vmatpush1.msra.mxu0 0.0
    %1623 = vmatprep.subr.mxu0 0.0
    %1624 = vmatpush1.msra.mxu0 0.0
    %1625 = vmatprep.subr.mxu0 0.0
    %1626 = vmatpush1.msra.mxu0 0.0
    %1627 = vmatprep.subr.mxu0 0.0
    %1628 = vmatpush1.msra.mxu0 0.0
    %1629 = vmatprep.subr.mxu0 0.0
    %1630 = vmatpush1.msra.mxu0 0.0
    %1631 = vmatprep.subr.mxu0 0.0
    %1632 = vmatpush1.msra.mxu0 0.0
    %1633 = vmatprep.subr.mxu0 0.0
    %1634 = vmatpush1.msra.mxu0 0.0
    %1635 = vmatprep.subr.mxu0 0.0
    %1636 = vmatpush1.msra.mxu0 0.0
    %1637 = vmatprep.subr.mxu0 0.0
    %1638 = vmatpush1.msra.mxu0 0.0
    %1639 = vmatprep.subr.mxu0 0.0
    %1640 = vmatpush1.msra.mxu0 0.0
    %1641 = vmatprep.subr.mxu0 0.0
    %1642 = vmatpush1.msra.mxu0 0.0
    %1643 = vmatprep.subr.mxu0 0.0
    %1644 = vmatpush1.msra.mxu0 %v45
    %1645 = vmatprep.subr.mxu0 0.0
    %1646 = vmatpush2.msra.mxu0 0.0
    %1647 = vmatprep.subr.mxu0 0.0
    %1648 = vmatpush2.msra.mxu0 0.0
    %1649 = vmatprep.subr.mxu0 0.0
    %1650 = vmatpush2.msra.mxu0 0.0
    %1651 = vmatprep.subr.mxu0 0.0
    %1652 = vmatpush2.msra.mxu0 0.0
    %1653 = vmatprep.subr.mxu0 0.0
    %1654 = vmatpush2.msra.mxu0 0.0
    %1655 = vmatprep.subr.mxu0 0.0
    %1656 = vmatpush2.msra.mxu0 0.0
    %1657 = vmatprep.subr.mxu0 0.0
    %1658 = vmatpush2.msra.mxu0 0.0
    %1659 = vmatprep.subr.mxu0 0.0
    %1660 = vmatpush2.msra.mxu0 0.0
    %1661 = vmatprep.subr.mxu0 0.0
    %1662 = vmatpush2.msra.mxu0 0.0
    %1663 = vmatprep.subr.mxu0 0.0
    %1664 = vmatpush2.msra.mxu0 0.0
    %1665 = vmatprep.subr.mxu0 0.0
    %1666 = vmatpush2.msra.mxu0 0.0
    %1667 = vmatprep.subr.mxu0 0.0
    %1668 = vmatpush2.msra.mxu0 0.0
    %1669 = vmatprep.subr.mxu0 0.0
    %1670 = vmatpush2.msra.mxu0 0.0
    %1671 = vmatprep.subr.mxu0 0.0
    %1672 = vmatpush2.msra.mxu0 0.0
    %1673 = vmatprep.subr.mxu0 0.0
    %1674 = vmatpush2.msra.mxu0 0.0
    %1675 = vmatprep.subr.mxu0 0.0
    %1676 = vmatpush2.msra.mxu0 0.0
    %1677 = vmatprep.mubr.f32.mxu0 0.0
    %1678 = vmatmul.mubr.f32.gmra.mxu0 %v1611
    %v1679 = vpop.f32.mrf.mxu0
    %v1680 = vadd.f32 %v313, %v1679
    %v1681 = vpop.f32.mrf.mxu0
    %1682 = vdwg.mxu0
    %v1683 = vsel %vm387, %v1680, -inf
    %1684 = vmax.xlane.f32.xlu0 %v1683
    %v1685 = vpop.xlane.xlu0 %1684
    %v1686 = vsub.f32 %v1680, %v1685
    %v1687 = vmul.f32 %v1686, 1.442695
    %v1688 = vpow.pop %v1687
    %v1689 = vsel %vm387, %v1688, 0.0
    %1690 = vadd.xlane.f32.xlu0 %v1689
    %v1691 = vpop.xlane.xlu0 %1690
    %v1692 = vlog2.pop %v1691
    %v1693 = vmul.f32 %v1692, 0.6931472
    %v1694 = vsub.f32 %v1686, %v1693
    %1695 = vrot.lane.b32.xlu0 %v140, 112
    %v1696 = vpop.permute.xlu0 %1695
    %1697 = vrot.lane.b32.xlu0 %v140, 80
    %v1698 = vpop.permute.xlu0 %1697
    %v1699 = vsel %vm146, %v1696, 0
    %v1701 = vsel %vm146, %v1698, 0
    %1703 = vmatprep.subr.mxu0 0.0
    %1704 = vmatpush1.xpose.msra.mxu0 0.0
    %1705 = vmatprep.subr.mxu0 0.0
    %1706 = vmatpush1.xpose.msra.mxu0 0.0
    %1707 = vmatprep.subr.mxu0 0.0
    %1708 = vmatpush1.xpose.msra.mxu0 0.0
    %1709 = vmatprep.subr.mxu0 0.0
    %1710 = vmatpush1.xpose.msra.mxu0 0.0
    %1711 = vmatprep.subr.mxu0 0.0
    %1712 = vmatpush1.xpose.msra.mxu0 0.0
    %1713 = vmatprep.subr.mxu0 0.0
    %1714 = vmatpush1.xpose.msra.mxu0 0.0
    %1715 = vmatprep.subr.mxu0 0.0
    %1716 = vmatpush1.xpose.msra.mxu0 0.0
    %1717 = vmatprep.subr.mxu0 0.0
    %1718 = vmatpush1.xpose.msra.mxu0 0.0
    %1719 = vmatprep.subr.mxu0 0.0
    %1720 = vmatpush1.xpose.msra.mxu0 0.0
    %1721 = vmatprep.subr.mxu0 0.0
    %1722 = vmatpush1.xpose.msra.mxu0 0.0
    %1723 = vmatprep.subr.mxu0 0.0
    %1724 = vmatpush1.xpose.msra.mxu0 0.0
    %1725 = vmatprep.subr.mxu0 0.0
    %1726 = vmatpush1.xpose.msra.mxu0 0.0
    %1727 = vmatprep.subr.mxu0 0.0
    %1728 = vmatpush1.xpose.msra.mxu0 0.0
    %1729 = vmatprep.subr.mxu0 0.0
    %1730 = vmatpush1.xpose.msra.mxu0 0.0
    %1731 = vmatprep.subr.mxu0 0.0
    %1732 = vmatpush1.xpose.msra.mxu0 0.0
    %1733 = vmatprep.subr.mxu0 0.0
    %1734 = vmatpush1.xpose.msra.mxu0 %v1701
    %1735 = vmatprep.subr.mxu0 0.0
    %1736 = vmatpush2.xpose.msra.mxu0 0.0
    %1737 = vmatprep.subr.mxu0 0.0
    %1738 = vmatpush2.xpose.msra.mxu0 0.0
    %1739 = vmatprep.subr.mxu0 0.0
    %1740 = vmatpush2.xpose.msra.mxu0 0.0
    %1741 = vmatprep.subr.mxu0 0.0
    %1742 = vmatpush2.xpose.msra.mxu0 0.0
    %1743 = vmatprep.subr.mxu0 0.0
    %1744 = vmatpush2.xpose.msra.mxu0 0.0
    %1745 = vmatprep.subr.mxu0 0.0
    %1746 = vmatpush2.xpose.msra.mxu0 0.0
    %1747 = vmatprep.subr.mxu0 0.0
    %1748 = vmatpush2.xpose.msra.mxu0 0.0
    %1749 = vmatprep.subr.mxu0 0.0
    %1750 = vmatpush2.xpose.msra.mxu0 0.0
    %1751 = vmatprep.subr.mxu0 0.0
    %1752 = vmatpush2.xpose.msra.mxu0 0.0
    %1753 = vmatprep.subr.mxu0 0.0
    %1754 = vmatpush2.xpose.msra.mxu0 0.0
    %1755 = vmatprep.subr.mxu0 0.0
    %1756 = vmatpush2.xpose.msra.mxu0 0.0
    %1757 = vmatprep.subr.mxu0 0.0
    %1758 = vmatpush2.xpose.msra.mxu0 0.0
    %1759 = vmatprep.subr.mxu0 0.0
    %1760 = vmatpush2.xpose.msra.mxu0 0.0
    %1761 = vmatprep.subr.mxu0 0.0
    %1762 = vmatpush2.xpose.msra.mxu0 0.0
    %1763 = vmatprep.subr.mxu0 0.0
    %1764 = vmatpush2.xpose.msra.mxu0 0.0
    %1765 = vmatprep.subr.mxu0 0.0
    %1766 = vmatpush2.xpose.msra.mxu0 0.0
    %1767 = vmatprep.mubr.f32.mxu0 0.0
    %1768 = vmatmul.mubr.f32.gmra.mxu0 %v1699
    %v1769 = vpop.f32.mrf.mxu0
    %v1770 = vadd.f32 0.0, %v1769
    %v1771 = vpop.f32.mrf.mxu0
    %1772 = vdwg.mxu0
    %v1773 = vmul.f32 %v1770, 0.35355338
    %v1774 = vadd.f32 %v1773, %v28
    %v1775 = vsel %vm146, %v1774, -inf
    %1776 = vmax.xlane.f32.xlu0 %v1775
    %v1777 = vpop.xlane.xlu0 %1776
    %v1778 = vsub.f32 %v1774, %v1777
    %v1779 = vmul.f32 %v1778, 1.442695
    %v1780 = vpow.pop %v1779
    %v1781 = vsel %vm146, %v1780, 0.0
    %1782 = vadd.xlane.f32.xlu0 %v1781
    %v1783 = vpop.xlane.xlu0 %1782
    %v1784 = vrcp.pop %v1783
    %v1785 = vmul.f32 %v1780, %v1784
    %1786 = vrot.lane.b32.xlu0 %v140, 48
    %v1787 = vpop.permute.xlu0 %1786
    %v1790 = vsel %vm146, %v1785, 0
    %1792 = vmatprep.subr.mxu0 0.0
    %1793 = vmatpush1.msra.mxu0 0.0
    %1794 = vmatprep.subr.mxu0 0.0
    %1795 = vmatpush1.msra.mxu0 0.0
    %1796 = vmatprep.subr.mxu0 0.0
    %1797 = vmatpush1.msra.mxu0 0.0
    %1798 = vmatprep.subr.mxu0 0.0
    %1799 = vmatpush1.msra.mxu0 0.0
    %1800 = vmatprep.subr.mxu0 0.0
    %1801 = vmatpush1.msra.mxu0 0.0
    %1802 = vmatprep.subr.mxu0 0.0
    %1803 = vmatpush1.msra.mxu0 0.0
    %1804 = vmatprep.subr.mxu0 0.0
    %1805 = vmatpush1.msra.mxu0 0.0
    %1806 = vmatprep.subr.mxu0 0.0
    %1807 = vmatpush1.msra.mxu0 0.0
    %1808 = vmatprep.subr.mxu0 0.0
    %1809 = vmatpush1.msra.mxu0 0.0
    %1810 = vmatprep.subr.mxu0 0.0
    %1811 = vmatpush1.msra.mxu0 0.0
    %1812 = vmatprep.subr.mxu0 0.0
    %1813 = vmatpush1.msra.mxu0 0.0
    %1814 = vmatprep.subr.mxu0 0.0
    %1815 = vmatpush1.msra.mxu0 0.0
    %1816 = vmatprep.subr.mxu0 0.0
    %1817 = vmatpush1.msra.mxu0 0.0
    %1818 = vmatprep.subr.mxu0 0.0
    %1819 = vmatpush1.msra.mxu0 0.0
    %1820 = vmatprep.subr.mxu0 0.0
    %1821 = vmatpush1.msra.mxu0 0.0
    %1822 = vmatprep.subr.mxu0 0.0
    %1823 = vmatpush1.msra.mxu0 %v1787
    %1824 = vmatprep.subr.mxu0 0.0
    %1825 = vmatpush2.msra.mxu0 0.0
    %1826 = vmatprep.subr.mxu0 0.0
    %1827 = vmatpush2.msra.mxu0 0.0
    %1828 = vmatprep.subr.mxu0 0.0
    %1829 = vmatpush2.msra.mxu0 0.0
    %1830 = vmatprep.subr.mxu0 0.0
    %1831 = vmatpush2.msra.mxu0 0.0
    %1832 = vmatprep.subr.mxu0 0.0
    %1833 = vmatpush2.msra.mxu0 0.0
    %1834 = vmatprep.subr.mxu0 0.0
    %1835 = vmatpush2.msra.mxu0 0.0
    %1836 = vmatprep.subr.mxu0 0.0
    %1837 = vmatpush2.msra.mxu0 0.0
    %1838 = vmatprep.subr.mxu0 0.0
    %1839 = vmatpush2.msra.mxu0 0.0
    %1840 = vmatprep.subr.mxu0 0.0
    %1841 = vmatpush2.msra.mxu0 0.0
    %1842 = vmatprep.subr.mxu0 0.0
    %1843 = vmatpush2.msra.mxu0 0.0
    %1844 = vmatprep.subr.mxu0 0.0
    %1845 = vmatpush2.msra.mxu0 0.0
    %1846 = vmatprep.subr.mxu0 0.0
    %1847 = vmatpush2.msra.mxu0 0.0
    %1848 = vmatprep.subr.mxu0 0.0
    %1849 = vmatpush2.msra.mxu0 0.0
    %1850 = vmatprep.subr.mxu0 0.0
    %1851 = vmatpush2.msra.mxu0 0.0
    %1852 = vmatprep.subr.mxu0 0.0
    %1853 = vmatpush2.msra.mxu0 0.0
    %1854 = vmatprep.subr.mxu0 0.0
    %1855 = vmatpush2.msra.mxu0 0.0
    %1856 = vmatprep.mubr.f32.mxu0 0.0
    %1857 = vmatmul.mubr.f32.gmra.mxu0 %v1790
    %v1858 = vpop.f32.mrf.mxu0
    %v1859 = vadd.f32 0.0, %v1858
    %v1860 = vpop.f32.mrf.mxu0
    %1861 = vdwg.mxu0
    %v1863 = vsel %vm146, %v1859, 0
    %1865 = vmatprep.subr.mxu0 0.0
    %1866 = vmatpush1.msra.mxu0 0.0
    %1867 = vmatprep.subr.mxu0 0.0
    %1868 = vmatpush1.msra.mxu0 0.0
    %1869 = vmatprep.subr.mxu0 0.0
    %1870 = vmatpush1.msra.mxu0 0.0
    %1871 = vmatprep.subr.mxu0 0.0
    %1872 = vmatpush1.msra.mxu0 0.0
    %1873 = vmatprep.subr.mxu0 0.0
    %1874 = vmatpush1.msra.mxu0 0.0
    %1875 = vmatprep.subr.mxu0 0.0
    %1876 = vmatpush1.msra.mxu0 0.0
    %1877 = vmatprep.subr.mxu0 0.0
    %1878 = vmatpush1.msra.mxu0 0.0
    %1879 = vmatprep.subr.mxu0 0.0
    %1880 = vmatpush1.msra.mxu0 0.0
    %1881 = vmatprep.subr.mxu0 0.0
    %1882 = vmatpush1.msra.mxu0 0.0
    %1883 = vmatprep.subr.mxu0 0.0
    %1884 = vmatpush1.msra.mxu0 0.0
    %1885 = vmatprep.subr.mxu0 0.0
    %1886 = vmatpush1.msra.mxu0 0.0
    %1887 = vmatprep.subr.mxu0 0.0
    %1888 = vmatpush1.msra.mxu0 0.0
    %1889 = vmatprep.subr.mxu0 0.0
    %1890 = vmatpush1.msra.mxu0 0.0
    %1891 = vmatprep.subr.mxu0 0.0
    %1892 = vmatpush1.msra.mxu0 0.0
    %1893 = vmatprep.subr.mxu0 0.0
    %1894 = vmatpush1.msra.mxu0 0.0
    %1895 = vmatprep.subr.mxu0 0.0
    %1896 = vmatpush1.msra.mxu0 %v45
    %1897 = vmatprep.subr.mxu0 0.0
    %1898 = vmatpush2.msra.mxu0 0.0
    %1899 = vmatprep.subr.mxu0 0.0
    %1900 = vmatpush2.msra.mxu0 0.0
    %1901 = vmatprep.subr.mxu0 0.0
    %1902 = vmatpush2.msra.mxu0 0.0
    %1903 = vmatprep.subr.mxu0 0.0
    %1904 = vmatpush2.msra.mxu0 0.0
    %1905 = vmatprep.subr.mxu0 0.0
    %1906 = vmatpush2.msra.mxu0 0.0
    %1907 = vmatprep.subr.mxu0 0.0
    %1908 = vmatpush2.msra.mxu0 0.0
    %1909 = vmatprep.subr.mxu0 0.0
    %1910 = vmatpush2.msra.mxu0 0.0
    %1911 = vmatprep.subr.mxu0 0.0
    %1912 = vmatpush2.msra.mxu0 0.0
    %1913 = vmatprep.subr.mxu0 0.0
    %1914 = vmatpush2.msra.mxu0 0.0
    %1915 = vmatprep.subr.mxu0 0.0
    %1916 = vmatpush2.msra.mxu0 0.0
    %1917 = vmatprep.subr.mxu0 0.0
    %1918 = vmatpush2.msra.mxu0 0.0
    %1919 = vmatprep.subr.mxu0 0.0
    %1920 = vmatpush2.msra.mxu0 0.0
    %1921 = vmatprep.subr.mxu0 0.0
    %1922 = vmatpush2.msra.mxu0 0.0
    %1923 = vmatprep.subr.mxu0 0.0
    %1924 = vmatpush2.msra.mxu0 0.0
    %1925 = vmatprep.subr.mxu0 0.0
    %1926 = vmatpush2.msra.mxu0 0.0
    %1927 = vmatprep.subr.mxu0 0.0
    %1928 = vmatpush2.msra.mxu0 0.0
    %1929 = vmatprep.mubr.f32.mxu0 0.0
    %1930 = vmatmul.mubr.f32.gmra.mxu0 %v1863
    %v1931 = vpop.f32.mrf.mxu0
    %v1932 = vadd.f32 %v313, %v1931
    %v1933 = vpop.f32.mrf.mxu0
    %1934 = vdwg.mxu0
    %v1935 = vsel %vm387, %v1932, -inf
    %1936 = vmax.xlane.f32.xlu0 %v1935
    %v1937 = vpop.xlane.xlu0 %1936
    %v1938 = vsub.f32 %v1932, %v1937
    %v1939 = vmul.f32 %v1938, 1.442695
    %v1940 = vpow.pop %v1939
    %v1941 = vsel %vm387, %v1940, 0.0
    %1942 = vadd.xlane.f32.xlu0 %v1941
    %v1943 = vpop.xlane.xlu0 %1942
    %v1944 = vlog2.pop %v1943
    %v1945 = vmul.f32 %v1944, 0.6931472
    %v1946 = vsub.f32 %v1938, %v1945
    %1947 = vrot.lane.b32.xlu0 %v140, 104
    %v1948 = vpop.permute.xlu0 %1947
    %1949 = vrot.lane.b32.xlu0 %v140, 72
    %v1950 = vpop.permute.xlu0 %1949
    %v1951 = vsel %vm146, %v1948, 0
    %v1953 = vsel %vm146, %v1950, 0
    %1955 = vmatprep.subr.mxu0 0.0
    %1956 = vmatpush1.xpose.msra.mxu0 0.0
    %1957 = vmatprep.subr.mxu0 0.0
    %1958 = vmatpush1.xpose.msra.mxu0 0.0
    %1959 = vmatprep.subr.mxu0 0.0
    %1960 = vmatpush1.xpose.msra.mxu0 0.0
    %1961 = vmatprep.subr.mxu0 0.0
    %1962 = vmatpush1.xpose.msra.mxu0 0.0
    %1963 = vmatprep.subr.mxu0 0.0
    %1964 = vmatpush1.xpose.msra.mxu0 0.0
    %1965 = vmatprep.subr.mxu0 0.0
    %1966 = vmatpush1.xpose.msra.mxu0 0.0
    %1967 = vmatprep.subr.mxu0 0.0
    %1968 = vmatpush1.xpose.msra.mxu0 0.0
    %1969 = vmatprep.subr.mxu0 0.0
    %1970 = vmatpush1.xpose.msra.mxu0 0.0
    %1971 = vmatprep.subr.mxu0 0.0
    %1972 = vmatpush1.xpose.msra.mxu0 0.0
    %1973 = vmatprep.subr.mxu0 0.0
    %1974 = vmatpush1.xpose.msra.mxu0 0.0
    %1975 = vmatprep.subr.mxu0 0.0
    %1976 = vmatpush1.xpose.msra.mxu0 0.0
    %1977 = vmatprep.subr.mxu0 0.0
    %1978 = vmatpush1.xpose.msra.mxu0 0.0
    %1979 = vmatprep.subr.mxu0 0.0
    %1980 = vmatpush1.xpose.msra.mxu0 0.0
    %1981 = vmatprep.subr.mxu0 0.0
    %1982 = vmatpush1.xpose.msra.mxu0 0.0
    %1983 = vmatprep.subr.mxu0 0.0
    %1984 = vmatpush1.xpose.msra.mxu0 0.0
    %1985 = vmatprep.subr.mxu0 0.0
    %1986 = vmatpush1.xpose.msra.mxu0 %v1953
    %1987 = vmatprep.subr.mxu0 0.0
    %1988 = vmatpush2.xpose.msra.mxu0 0.0
    %1989 = vmatprep.subr.mxu0 0.0
    %1990 = vmatpush2.xpose.msra.mxu0 0.0
    %1991 = vmatprep.subr.mxu0 0.0
    %1992 = vmatpush2.xpose.msra.mxu0 0.0
    %1993 = vmatprep.subr.mxu0 0.0
    %1994 = vmatpush2.xpose.msra.mxu0 0.0
    %1995 = vmatprep.subr.mxu0 0.0
    %1996 = vmatpush2.xpose.msra.mxu0 0.0
    %1997 = vmatprep.subr.mxu0 0.0
    %1998 = vmatpush2.xpose.msra.mxu0 0.0
    %1999 = vmatprep.subr.mxu0 0.0
    %2000 = vmatpush2.xpose.msra.mxu0 0.0
    %2001 = vmatprep.subr.mxu0 0.0
    %2002 = vmatpush2.xpose.msra.mxu0 0.0
    %2003 = vmatprep.subr.mxu0 0.0
    %2004 = vmatpush2.xpose.msra.mxu0 0.0
    %2005 = vmatprep.subr.mxu0 0.0
    %2006 = vmatpush2.xpose.msra.mxu0 0.0
    %2007 = vmatprep.subr.mxu0 0.0
    %2008 = vmatpush2.xpose.msra.mxu0 0.0
    %2009 = vmatprep.subr.mxu0 0.0
    %2010 = vmatpush2.xpose.msra.mxu0 0.0
    %2011 = vmatprep.subr.mxu0 0.0
    %2012 = vmatpush2.xpose.msra.mxu0 0.0
    %2013 = vmatprep.subr.mxu0 0.0
    %2014 = vmatpush2.xpose.msra.mxu0 0.0
    %2015 = vmatprep.subr.mxu0 0.0
    %2016 = vmatpush2.xpose.msra.mxu0 0.0
    %2017 = vmatprep.subr.mxu0 0.0
    %2018 = vmatpush2.xpose.msra.mxu0 0.0
    %2019 = vmatprep.mubr.f32.mxu0 0.0
    %2020 = vmatmul.mubr.f32.gmra.mxu0 %v1951
    %v2021 = vpop.f32.mrf.mxu0
    %v2022 = vadd.f32 0.0, %v2021
    %v2023 = vpop.f32.mrf.mxu0
    %2024 = vdwg.mxu0
    %v2025 = vmul.f32 %v2022, 0.35355338
    %v2026 = vadd.f32 %v2025, %v28
    %v2027 = vsel %vm146, %v2026, -inf
    %2028 = vmax.xlane.f32.xlu0 %v2027
    %v2029 = vpop.xlane.xlu0 %2028
    %v2030 = vsub.f32 %v2026, %v2029
    %v2031 = vmul.f32 %v2030, 1.442695
    %v2032 = vpow.pop %v2031
    %v2033 = vsel %vm146, %v2032, 0.0
    %2034 = vadd.xlane.f32.xlu0 %v2033
    %v2035 = vpop.xlane.xlu0 %2034
    %v2036 = vrcp.pop %v2035
    %v2037 = vmul.f32 %v2032, %v2036
    %2038 = vrot.lane.b32.xlu0 %v140, 40
    %v2039 = vpop.permute.xlu0 %2038
    %v2042 = vsel %vm146, %v2037, 0
    %2044 = vmatprep.subr.mxu0 0.0
    %2045 = vmatpush1.msra.mxu0 0.0
    %2046 = vmatprep.subr.mxu0 0.0
    %2047 = vmatpush1.msra.mxu0 0.0
    %2048 = vmatprep.subr.mxu0 0.0
    %2049 = vmatpush1.msra.mxu0 0.0
    %2050 = vmatprep.subr.mxu0 0.0
    %2051 = vmatpush1.msra.mxu0 0.0
    %2052 = vmatprep.subr.mxu0 0.0
    %2053 = vmatpush1.msra.mxu0 0.0
    %2054 = vmatprep.subr.mxu0 0.0
    %2055 = vmatpush1.msra.mxu0 0.0
    %2056 = vmatprep.subr.mxu0 0.0
    %2057 = vmatpush1.msra.mxu0 0.0
    %2058 = vmatprep.subr.mxu0 0.0
    %2059 = vmatpush1.msra.mxu0 0.0
    %2060 = vmatprep.subr.mxu0 0.0
    %2061 = vmatpush1.msra.mxu0 0.0
    %2062 = vmatprep.subr.mxu0 0.0
    %2063 = vmatpush1.msra.mxu0 0.0
    %2064 = vmatprep.subr.mxu0 0.0
    %2065 = vmatpush1.msra.mxu0 0.0
    %2066 = vmatprep.subr.mxu0 0.0
    %2067 = vmatpush1.msra.mxu0 0.0
    %2068 = vmatprep.subr.mxu0 0.0
    %2069 = vmatpush1.msra.mxu0 0.0
    %2070 = vmatprep.subr.mxu0 0.0
    %2071 = vmatpush1.msra.mxu0 0.0
    %2072 = vmatprep.subr.mxu0 0.0
    %2073 = vmatpush1.msra.mxu0 0.0
    %2074 = vmatprep.subr.mxu0 0.0
    %2075 = vmatpush1.msra.mxu0 %v2039
    %2076 = vmatprep.subr.mxu0 0.0
    %2077 = vmatpush2.msra.mxu0 0.0
    %2078 = vmatprep.subr.mxu0 0.0
    %2079 = vmatpush2.msra.mxu0 0.0
    %2080 = vmatprep.subr.mxu0 0.0
    %2081 = vmatpush2.msra.mxu0 0.0
    %2082 = vmatprep.subr.mxu0 0.0
    %2083 = vmatpush2.msra.mxu0 0.0
    %2084 = vmatprep.subr.mxu0 0.0
    %2085 = vmatpush2.msra.mxu0 0.0
    %2086 = vmatprep.subr.mxu0 0.0
    %2087 = vmatpush2.msra.mxu0 0.0
    %2088 = vmatprep.subr.mxu0 0.0
    %2089 = vmatpush2.msra.mxu0 0.0
    %2090 = vmatprep.subr.mxu0 0.0
    %2091 = vmatpush2.msra.mxu0 0.0
    %2092 = vmatprep.subr.mxu0 0.0
    %2093 = vmatpush2.msra.mxu0 0.0
    %2094 = vmatprep.subr.mxu0 0.0
    %2095 = vmatpush2.msra.mxu0 0.0
    %2096 = vmatprep.subr.mxu0 0.0
    %2097 = vmatpush2.msra.mxu0 0.0
    %2098 = vmatprep.subr.mxu0 0.0
    %2099 = vmatpush2.msra.mxu0 0.0
    %2100 = vmatprep.subr.mxu0 0.0
    %2101 = vmatpush2.msra.mxu0 0.0
    %2102 = vmatprep.subr.mxu0 0.0
    %2103 = vmatpush2.msra.mxu0 0.0
    %2104 = vmatprep.subr.mxu0 0.0
    %2105 = vmatpush2.msra.mxu0 0.0
    %2106 = vmatprep.subr.mxu0 0.0
    %2107 = vmatpush2.msra.mxu0 0.0
    %2108 = vmatprep.mubr.f32.mxu0 0.0
    %2109 = vmatmul.mubr.f32.gmra.mxu0 %v2042
    %v2110 = vpop.f32.mrf.mxu0
    %v2111 = vadd.f32 0.0, %v2110
    %v2112 = vpop.f32.mrf.mxu0
    %2113 = vdwg.mxu0
    %v2115 = vsel %vm146, %v2111, 0
    %2117 = vmatprep.subr.mxu0 0.0
    %2118 = vmatpush1.msra.mxu0 0.0
    %2119 = vmatprep.subr.mxu0 0.0
    %2120 = vmatpush1.msra.mxu0 0.0
    %2121 = vmatprep.subr.mxu0 0.0
    %2122 = vmatpush1.msra.mxu0 0.0
    %2123 = vmatprep.subr.mxu0 0.0
    %2124 = vmatpush1.msra.mxu0 0.0
    %2125 = vmatprep.subr.mxu0 0.0
    %2126 = vmatpush1.msra.mxu0 0.0
    %2127 = vmatprep.subr.mxu0 0.0
    %2128 = vmatpush1.msra.mxu0 0.0
    %2129 = vmatprep.subr.mxu0 0.0
    %2130 = vmatpush1.msra.mxu0 0.0
    %2131 = vmatprep.subr.mxu0 0.0
    %2132 = vmatpush1.msra.mxu0 0.0
    %2133 = vmatprep.subr.mxu0 0.0
    %2134 = vmatpush1.msra.mxu0 0.0
    %2135 = vmatprep.subr.mxu0 0.0
    %2136 = vmatpush1.msra.mxu0 0.0
    %2137 = vmatprep.subr.mxu0 0.0
    %2138 = vmatpush1.msra.mxu0 0.0
    %2139 = vmatprep.subr.mxu0 0.0
    %2140 = vmatpush1.msra.mxu0 0.0
    %2141 = vmatprep.subr.mxu0 0.0
    %2142 = vmatpush1.msra.mxu0 0.0
    %2143 = vmatprep.subr.mxu0 0.0
    %2144 = vmatpush1.msra.mxu0 0.0
    %2145 = vmatprep.subr.mxu0 0.0
    %2146 = vmatpush1.msra.mxu0 0.0
    %2147 = vmatprep.subr.mxu0 0.0
    %2148 = vmatpush1.msra.mxu0 %v45
    %2149 = vmatprep.subr.mxu0 0.0
    %2150 = vmatpush2.msra.mxu0 0.0
    %2151 = vmatprep.subr.mxu0 0.0
    %2152 = vmatpush2.msra.mxu0 0.0
    %2153 = vmatprep.subr.mxu0 0.0
    %2154 = vmatpush2.msra.mxu0 0.0
    %2155 = vmatprep.subr.mxu0 0.0
    %2156 = vmatpush2.msra.mxu0 0.0
    %2157 = vmatprep.subr.mxu0 0.0
    %2158 = vmatpush2.msra.mxu0 0.0
    %2159 = vmatprep.subr.mxu0 0.0
    %2160 = vmatpush2.msra.mxu0 0.0
    %2161 = vmatprep.subr.mxu0 0.0
    %2162 = vmatpush2.msra.mxu0 0.0
    %2163 = vmatprep.subr.mxu0 0.0
    %2164 = vmatpush2.msra.mxu0 0.0
    %2165 = vmatprep.subr.mxu0 0.0
    %2166 = vmatpush2.msra.mxu0 0.0
    %2167 = vmatprep.subr.mxu0 0.0
    %2168 = vmatpush2.msra.mxu0 0.0
    %2169 = vmatprep.subr.mxu0 0.0
    %2170 = vmatpush2.msra.mxu0 0.0
    %2171 = vmatprep.subr.mxu0 0.0
    %2172 = vmatpush2.msra.mxu0 0.0
    %2173 = vmatprep.subr.mxu0 0.0
    %2174 = vmatpush2.msra.mxu0 0.0
    %2175 = vmatprep.subr.mxu0 0.0
    %2176 = vmatpush2.msra.mxu0 0.0
    %2177 = vmatprep.subr.mxu0 0.0
    %2178 = vmatpush2.msra.mxu0 0.0
    %2179 = vmatprep.subr.mxu0 0.0
    %2180 = vmatpush2.msra.mxu0 0.0
    %2181 = vmatprep.mubr.f32.mxu0 0.0
    %2182 = vmatmul.mubr.f32.gmra.mxu0 %v2115
    %v2183 = vpop.f32.mrf.mxu0
    %v2184 = vadd.f32 %v313, %v2183
    %v2185 = vpop.f32.mrf.mxu0
    %2186 = vdwg.mxu0
    %v2187 = vsel %vm387, %v2184, -inf
    %2188 = vmax.xlane.f32.xlu0 %v2187
    %v2189 = vpop.xlane.xlu0 %2188
    %v2190 = vsub.f32 %v2184, %v2189
    %v2191 = vmul.f32 %v2190, 1.442695
    %v2192 = vpow.pop %v2191
    %v2193 = vsel %vm387, %v2192, 0.0
    %2194 = vadd.xlane.f32.xlu0 %v2193
    %v2195 = vpop.xlane.xlu0 %2194
    %v2196 = vlog2.pop %v2195
    %v2197 = vmul.f32 %v2196, 0.6931472
    %v2198 = vsub.f32 %v2190, %v2197
    %2199 = vrot.lane.b32.xlu0 %v1607, 8
    %v2200 = vpop.permute.xlu0 %2199
    %2202 = vrot.lane.b32.xlu0 %v1859, 16
    %v2203 = vpop.permute.xlu0 %2202
    %2205 = vrot.lane.b32.xlu0 %v2111, 24
    %v2206 = vpop.permute.xlu0 %2205
    %v2208 = vsel %vm146, %v1355, %v2200
    %v2209 = vsel %vm1166, %v2208, %v2203
    %v2210 = vsel %vm1168, %v2209, %v2206
    %2212 = vrot.lane.b32.xlu0 %v1694, 4
    %v2213 = vpop.permute.xlu0 %2212
    %2216 = vrot.lane.b32.xlu0 %v1946, 8
    %v2217 = vpop.permute.xlu0 %2216
    %2220 = vrot.lane.b32.xlu0 %v2198, 12
    %v2221 = vpop.permute.xlu0 %2220
    %v2223 = vsel %vm387, %v1442, %v2213
    %v2224 = vsel %vm146, %v2223, %v2217
    %v2225 = vsel %vm1184, %v2224, %v2221
    %2227 = vrot.lane.b32.xlu0 %v2225, 96
    %v2228 = vpop.permute.xlu0 %2227
    %2230 = vst.msk [vmem:[#allocation2 + $0x8] sm:$0xff] %vm1190, %v2228
    %v2231 = vlaneseq
    %v2232 = vshrl.u32 %v2231, 7
    %v2233 = vsub.s32 1, %v2232
    %v2234 = vrot.slane %v46, %v2233
    %2239 = vrot.lane.b32.xlu0 %v29, 32
    %v2240 = vpop.permute.xlu0 %2239
    %2241 = vrot.lane.b32.xlu0 %v31, 32
    %v2242 = vpop.permute.xlu0 %2241
    %2243 = vrot.lane.b32.xlu0 %v33, 32
    %v2244 = vpop.permute.xlu0 %2243
    %2245 = vrot.lane.b32.xlu0 %v35, 32
    %v2246 = vpop.permute.xlu0 %2245
    %v2252 = vsel %vm63, %v1169, 0
    %v2255 = vsel %vm63, %v2210, 0
    %2257 = vmatprep.subr.mxu0 0.0
    %2258 = vmatpush1.msra.mxu0 0.0
    %2259 = vmatprep.subr.mxu0 0.0
    %2260 = vmatpush1.msra.mxu0 0.0
    %2261 = vmatprep.subr.mxu0 0.0
    %2262 = vmatpush1.msra.mxu0 0.0
    %2263 = vmatprep.subr.mxu0 0.0
    %2264 = vmatpush1.msra.mxu0 0.0
    %2265 = vmatprep.subr.mxu0 0.0
    %2266 = vmatpush1.msra.mxu0 0.0
    %2267 = vmatprep.subr.mxu0 0.0
    %2268 = vmatpush1.msra.mxu0 0.0
    %2269 = vmatprep.subr.mxu0 0.0
    %2270 = vmatpush1.msra.mxu0 0.0
    %2271 = vmatprep.subr.mxu0 0.0
    %2272 = vmatpush1.msra.mxu0 0.0
    %2273 = vmatprep.subr.mxu0 0.0
    %2274 = vmatpush1.msra.mxu0 0.0
    %2275 = vmatprep.subr.mxu0 0.0
    %2276 = vmatpush1.msra.mxu0 0.0
    %2277 = vmatprep.subr.mxu0 0.0
    %2278 = vmatpush1.msra.mxu0 0.0
    %2279 = vmatprep.subr.mxu0 0.0
    %2280 = vmatpush1.msra.mxu0 0.0
    %2281 = vmatprep.subr.mxu0 0.0
    %2282 = vmatpush1.msra.mxu0 %v2246
    %2283 = vmatprep.subr.mxu0 0.0
    %2284 = vmatpush1.msra.mxu0 %v2244
    %2285 = vmatprep.subr.mxu0 0.0
    %2286 = vmatpush1.msra.mxu0 %v2242
    %2287 = vmatprep.subr.mxu0 0.0
    %2288 = vmatpush1.msra.mxu0 %v2240
    %2289 = vmatprep.subr.mxu0 0.0
    %2290 = vmatpush2.msra.mxu0 0.0
    %2291 = vmatprep.subr.mxu0 0.0
    %2292 = vmatpush2.msra.mxu0 0.0
    %2293 = vmatprep.subr.mxu0 0.0
    %2294 = vmatpush2.msra.mxu0 0.0
    %2295 = vmatprep.subr.mxu0 0.0
    %2296 = vmatpush2.msra.mxu0 0.0
    %2297 = vmatprep.subr.mxu0 0.0
    %2298 = vmatpush2.msra.mxu0 0.0
    %2299 = vmatprep.subr.mxu0 0.0
    %2300 = vmatpush2.msra.mxu0 0.0
    %2301 = vmatprep.subr.mxu0 0.0
    %2302 = vmatpush2.msra.mxu0 0.0
    %2303 = vmatprep.subr.mxu0 0.0
    %2304 = vmatpush2.msra.mxu0 0.0
    %2305 = vmatprep.subr.mxu0 0.0
    %2306 = vmatpush2.msra.mxu0 0.0
    %2307 = vmatprep.subr.mxu0 0.0
    %2308 = vmatpush2.msra.mxu0 0.0
    %2309 = vmatprep.subr.mxu0 0.0
    %2310 = vmatpush2.msra.mxu0 0.0
    %2311 = vmatprep.subr.mxu0 0.0
    %2312 = vmatpush2.msra.mxu0 0.0
    %2313 = vmatprep.subr.mxu0 0.0
    %2314 = vmatpush2.msra.mxu0 0.0
    %2315 = vmatprep.subr.mxu0 0.0
    %2316 = vmatpush2.msra.mxu0 0.0
    %2317 = vmatprep.subr.mxu0 0.0
    %2318 = vmatpush2.msra.mxu0 0.0
    %2319 = vmatprep.subr.mxu0 0.0
    %2320 = vmatpush2.msra.mxu0 0.0
    %2321 = vmatprep.mubr.f32.mxu0 0.0
    %2322 = vmatmul.mubr.f32.gmra.mxu0 %v2252
    %v2323 = vpop.f32.mrf.mxu0
    %v2324 = vadd.f32 %v2234, %v2323
    %v2325 = vpop.f32.mrf.mxu0
    %2326 = vmatprep.mubr.f32.mxu0 0.0
    %2327 = vmatmul.mubr.f32.gmra.mxu0 %v2255
    %v2328 = vpop.f32.mrf.mxu0
    %v2329 = vadd.f32 %v2234, %v2328
    %v2330 = vpop.f32.mrf.mxu0
    %2331 = vdwg.mxu0
    %v2332 = vadd.f32 %v2324, %v24
    %v2333 = vadd.f32 %v2329, %v25
    %v2334 = vsel %vm63, %v2332, 0.0
    %2335 = vadd.xlane.f32.xlu0 %v2334
    %v2336 = vpop.xlane.xlu0 %2335
    %v2337 = vsel %vm63, %v2333, 0.0
    %2338 = vadd.xlane.f32.xlu0 %v2337
    %v2339 = vpop.xlane.xlu0 %2338
    %v2340 = vrcp.pop 32.0
    %v2341 = vmul.f32 %v2336, %v2340
    %v2342 = vmul.f32 %v2339, %v2340
    %v2343 = vsub.f32 %v2332, %v2341
    %v2344 = vsub.f32 %v2333, %v2342
    %v2345 = vmul.f32 %v2343, %v2343
    %v2346 = vmul.f32 %v2344, %v2344
    %v2347 = vsel %vm63, %v2345, 0.0
    %2348 = vadd.xlane.f32.xlu0 %v2347
    %v2349 = vpop.xlane.xlu0 %2348
    %v2350 = vsel %vm63, %v2346, 0.0
    %2351 = vadd.xlane.f32.xlu0 %v2350
    %v2352 = vpop.xlane.xlu0 %2351
    %v2353 = vmul.f32 %v2349, %v2340
    %v2354 = vmul.f32 %v2352, %v2340
    %v2355 = vadd.f32 %v2353, 1e-05
    %v2356 = vadd.f32 %v2354, 1e-05
    %v2357 = vrsqrt.pop %v2355
    %v2358 = vrsqrt.pop %v2356
    %v2359 = vmul.f32 %v2343, %v2357
    %v2360 = vmul.f32 %v2344, %v2358
    %v2361 = vlaneseq
    %v2362 = vshrl.u32 %v2361, 7
    %v2363 = vsub.s32 4, %v2362
    %v2364 = vrot.slane %v46, %v2363
    %v2365 = vmul.f32 %v2359, %v2364
    %v2366 = vmul.f32 %v2360, %v2364
    %v2367 = vlaneseq
    %v2368 = vshrl.u32 %v2367, 7
    %v2369 = vsub.s32 5, %v2368
    %v2370 = vrot.slane %v46, %v2369
    %v2371 = vadd.f32 %v2365, %v2370
    %v2372 = vadd.f32 %v2366, %v2370
    %v2373 = vlaneseq
    %v2374 = vshrl.u32 %v2373, 7
    %v2375 = vsub.s32 2, %v2374
    %v2376 = vrot.slane %v46, %v2375
    %v2378 = vsel %vm63, %v2371, 0
    %v2381 = vsel %vm63, %v2372, 0
    %2383 = vmatprep.subr.mxu0 0.0
    %2384 = vmatpush1.msra.mxu0 0.0
    %2385 = vmatprep.subr.mxu0 0.0
    %2386 = vmatpush1.msra.mxu0 0.0
    %2387 = vmatprep.subr.mxu0 0.0
    %2388 = vmatpush1.msra.mxu0 0.0
    %2389 = vmatprep.subr.mxu0 0.0
    %2390 = vmatpush1.msra.mxu0 0.0
    %2391 = vmatprep.subr.mxu0 0.0
    %2392 = vmatpush1.msra.mxu0 0.0
    %2393 = vmatprep.subr.mxu0 0.0
    %2394 = vmatpush1.msra.mxu0 0.0
    %2395 = vmatprep.subr.mxu0 0.0
    %2396 = vmatpush1.msra.mxu0 0.0
    %2397 = vmatprep.subr.mxu0 0.0
    %2398 = vmatpush1.msra.mxu0 0.0
    %2399 = vmatprep.subr.mxu0 0.0
    %2400 = vmatpush1.msra.mxu0 0.0
    %2401 = vmatprep.subr.mxu0 0.0
    %2402 = vmatpush1.msra.mxu0 0.0
    %2403 = vmatprep.subr.mxu0 0.0
    %2404 = vmatpush1.msra.mxu0 0.0
    %2405 = vmatprep.subr.mxu0 0.0
    %2406 = vmatpush1.msra.mxu0 0.0
    %2407 = vmatprep.subr.mxu0 0.0
    %2408 = vmatpush1.msra.mxu0 %v36
    %2409 = vmatprep.subr.mxu0 0.0
    %2410 = vmatpush1.msra.mxu0 %v34
    %2411 = vmatprep.subr.mxu0 0.0
    %2412 = vmatpush1.msra.mxu0 %v32
    %2413 = vmatprep.subr.mxu0 0.0
    %2414 = vmatpush1.msra.mxu0 %v30
    %2415 = vmatprep.subr.mxu0 0.0
    %2416 = vmatpush2.msra.mxu0 0.0
    %2417 = vmatprep.subr.mxu0 0.0
    %2418 = vmatpush2.msra.mxu0 0.0
    %2419 = vmatprep.subr.mxu0 0.0
    %2420 = vmatpush2.msra.mxu0 0.0
    %2421 = vmatprep.subr.mxu0 0.0
    %2422 = vmatpush2.msra.mxu0 0.0
    %2423 = vmatprep.subr.mxu0 0.0
    %2424 = vmatpush2.msra.mxu0 0.0
    %2425 = vmatprep.subr.mxu0 0.0
    %2426 = vmatpush2.msra.mxu0 0.0
    %2427 = vmatprep.subr.mxu0 0.0
    %2428 = vmatpush2.msra.mxu0 0.0
    %2429 = vmatprep.subr.mxu0 0.0
    %2430 = vmatpush2.msra.mxu0 0.0
    %2431 = vmatprep.subr.mxu0 0.0
    %2432 = vmatpush2.msra.mxu0 0.0
    %2433 = vmatprep.subr.mxu0 0.0
    %2434 = vmatpush2.msra.mxu0 0.0
    %2435 = vmatprep.subr.mxu0 0.0
    %2436 = vmatpush2.msra.mxu0 0.0
    %2437 = vmatprep.subr.mxu0 0.0
    %2438 = vmatpush2.msra.mxu0 0.0
    %2439 = vmatprep.subr.mxu0 0.0
    %2440 = vmatpush2.msra.mxu0 0.0
    %2441 = vmatprep.subr.mxu0 0.0
    %2442 = vmatpush2.msra.mxu0 0.0
    %2443 = vmatprep.subr.mxu0 0.0
    %2444 = vmatpush2.msra.mxu0 0.0
    %2445 = vmatprep.subr.mxu0 0.0
    %2446 = vmatpush2.msra.mxu0 0.0
    %2447 = vmatprep.mubr.f32.mxu0 0.0
    %2448 = vmatmul.mubr.f32.gmra.mxu0 %v2378
    %v2449 = vpop.f32.mrf.mxu0
    %v2450 = vadd.f32 %v2376, %v2449
    %v2451 = vpop.f32.mrf.mxu0
    %2452 = vmatprep.mubr.f32.mxu0 0.0
    %2453 = vmatmul.mubr.f32.gmra.mxu0 %v2381
    %v2454 = vpop.f32.mrf.mxu0
    %v2455 = vadd.f32 %v2376, %v2454
    %v2456 = vpop.f32.mrf.mxu0
    %2457 = vdwg.mxu0
    %v2458 = vmax.f32 %v2450, 0.0
    %v2459 = vmax.f32 %v2455, 0.0
    %v2460 = vlaneseq
    %v2461 = vshrl.u32 %v2460, 7
    %v2462 = vsub.s32 3, %v2461
    %v2463 = vrot.slane %v46, %v2462
    %vm2464 = vcmask 523264
    %v2466 = vsel %vm2464, %v2458, 0
    %v2469 = vsel %vm2464, %v2459, 0
    %2471 = vmatprep.subr.mxu0 0.0
    %2472 = vmatpush1.msra.mxu0 0.0
    %2473 = vmatprep.subr.mxu0 0.0
    %2474 = vmatpush1.msra.mxu0 0.0
    %2475 = vmatprep.subr.mxu0 0.0
    %2476 = vmatpush1.msra.mxu0 0.0
    %2477 = vmatprep.subr.mxu0 0.0
    %2478 = vmatpush1.msra.mxu0 0.0
    %2479 = vmatprep.subr.mxu0 0.0
    %2480 = vmatpush1.msra.mxu0 0.0
    %2481 = vmatprep.subr.mxu0 0.0
    %2482 = vmatpush1.msra.mxu0 0.0
    %2483 = vmatprep.subr.mxu0 0.0
    %2484 = vmatpush1.msra.mxu0 0.0
    %2485 = vmatprep.subr.mxu0 0.0
    %2486 = vmatpush1.msra.mxu0 0.0
    %2487 = vmatprep.subr.mxu0 0.0
    %2488 = vmatpush1.msra.mxu0 %v44
    %2489 = vmatprep.subr.mxu0 0.0
    %2490 = vmatpush1.msra.mxu0 %v43
    %2491 = vmatprep.subr.mxu0 0.0
    %2492 = vmatpush1.msra.mxu0 %v42
    %2493 = vmatprep.subr.mxu0 0.0
    %2494 = vmatpush1.msra.mxu0 %v41
    %2495 = vmatprep.subr.mxu0 0.0
    %2496 = vmatpush1.msra.mxu0 %v40
    %2497 = vmatprep.subr.mxu0 0.0
    %2498 = vmatpush1.msra.mxu0 %v39
    %2499 = vmatprep.subr.mxu0 0.0
    %2500 = vmatpush1.msra.mxu0 %v38
    %2501 = vmatprep.subr.mxu0 0.0
    %2502 = vmatpush1.msra.mxu0 %v37
    %2503 = vmatprep.subr.mxu0 0.0
    %2504 = vmatpush2.msra.mxu0 0.0
    %2505 = vmatprep.subr.mxu0 0.0
    %2506 = vmatpush2.msra.mxu0 0.0
    %2507 = vmatprep.subr.mxu0 0.0
    %2508 = vmatpush2.msra.mxu0 0.0
    %2509 = vmatprep.subr.mxu0 0.0
    %2510 = vmatpush2.msra.mxu0 0.0
    %2511 = vmatprep.subr.mxu0 0.0
    %2512 = vmatpush2.msra.mxu0 0.0
    %2513 = vmatprep.subr.mxu0 0.0
    %2514 = vmatpush2.msra.mxu0 0.0
    %2515 = vmatprep.subr.mxu0 0.0
    %2516 = vmatpush2.msra.mxu0 0.0
    %2517 = vmatprep.subr.mxu0 0.0
    %2518 = vmatpush2.msra.mxu0 0.0
    %2519 = vmatprep.subr.mxu0 0.0
    %2520 = vmatpush2.msra.mxu0 0.0
    %2521 = vmatprep.subr.mxu0 0.0
    %2522 = vmatpush2.msra.mxu0 0.0
    %2523 = vmatprep.subr.mxu0 0.0
    %2524 = vmatpush2.msra.mxu0 0.0
    %2525 = vmatprep.subr.mxu0 0.0
    %2526 = vmatpush2.msra.mxu0 0.0
    %2527 = vmatprep.subr.mxu0 0.0
    %2528 = vmatpush2.msra.mxu0 0.0
    %2529 = vmatprep.subr.mxu0 0.0
    %2530 = vmatpush2.msra.mxu0 0.0
    %2531 = vmatprep.subr.mxu0 0.0
    %2532 = vmatpush2.msra.mxu0 0.0
    %2533 = vmatprep.subr.mxu0 0.0
    %2534 = vmatpush2.msra.mxu0 0.0
    %2535 = vmatprep.mubr.f32.mxu0 0.0
    %2536 = vmatmul.mubr.f32.gmra.mxu0 %v2466
    %v2537 = vpop.f32.mrf.mxu0
    %v2538 = vadd.f32 %v2463, %v2537
    %v2539 = vpop.f32.mrf.mxu0
    %2540 = vmatprep.mubr.f32.mxu0 0.0
    %2541 = vmatmul.mubr.f32.gmra.mxu0 %v2469
    %v2542 = vpop.f32.mrf.mxu0
    %v2543 = vadd.f32 %v2463, %v2542
    %v2544 = vpop.f32.mrf.mxu0
    %2545 = vdwg.mxu0
    %v2546 = vadd.f32 %v2538, %v2371
    %v2547 = vadd.f32 %v2543, %v2372
    %v2548 = vsel %vm63, %v2546, 0.0
    %2549 = vadd.xlane.f32.xlu0 %v2548
    %v2550 = vpop.xlane.xlu0 %2549
    %v2551 = vsel %vm63, %v2547, 0.0
    %2552 = vadd.xlane.f32.xlu0 %v2551
    %v2553 = vpop.xlane.xlu0 %2552
    %v2554 = vmul.f32 %v2550, %v2340
    %v2555 = vmul.f32 %v2553, %v2340
    %v2556 = vsub.f32 %v2546, %v2554
    %v2557 = vsub.f32 %v2547, %v2555
    %v2558 = vmul.f32 %v2556, %v2556
    %v2559 = vmul.f32 %v2557, %v2557
    %v2560 = vsel %vm63, %v2558, 0.0
    %2561 = vadd.xlane.f32.xlu0 %v2560
    %v2562 = vpop.xlane.xlu0 %2561
    %v2563 = vsel %vm63, %v2559, 0.0
    %2564 = vadd.xlane.f32.xlu0 %v2563
    %v2565 = vpop.xlane.xlu0 %2564
    %v2566 = vmul.f32 %v2562, %v2340
    %v2567 = vmul.f32 %v2565, %v2340
    %v2568 = vadd.f32 %v2566, 1e-05
    %v2569 = vadd.f32 %v2567, 1e-05
    %v2570 = vrsqrt.pop %v2568
    %v2571 = vrsqrt.pop %v2569
    %v2572 = vmul.f32 %v2556, %v2570
    %v2573 = vmul.f32 %v2557, %v2571
    %v2574 = vlaneseq
    %v2575 = vshrl.u32 %v2574, 7
    %v2576 = vsub.s32 6, %v2575
    %v2577 = vrot.slane %v46, %v2576
    %v2578 = vmul.f32 %v2572, %v2577
    %v2579 = vmul.f32 %v2573, %v2577
    %v2580 = vlaneseq
    %v2581 = vshrl.u32 %v2580, 7
    %v2582 = vsub.s32 7, %v2581
    %v2583 = vrot.slane %v46, %v2582
    %v2584 = vadd.f32 %v2578, %v2583
    %v2585 = vadd.f32 %v2579, %v2583
    %s2586 = scalar_lea.vmem %s2, 64
    %v2587 = vld [vmem:[%s2586] sm:$0xff]
    %v2588 = vld [vmem:[%s2586 + $0x8] sm:$0xff]
    %v2589 = vld [vmem:[%s2586 + $0x10] sm:$0xff]
    %v2590 = vld [vmem:[%s2586 + $0x18] sm:$0xff]
    %v2591 = vld [vmem:[%s2586 + $0x20] sm:$0xff]
    %v2592 = vld [vmem:[%s2586 + $0x28] sm:$0xff]
    %v2593 = vld [vmem:[%s2586 + $0x30] sm:$0xff]
    %v2594 = vld [vmem:[%s2586 + $0x38] sm:$0xff]
    %s2595 = scalar_lea.vmem %s3, 64
    %v2596 = vld [vmem:[%s2595] sm:$0xff]
    %v2597 = vld [vmem:[%s2595 + $0x8] sm:$0xff]
    %v2598 = vld [vmem:[%s2595 + $0x10] sm:$0xff]
    %v2599 = vld [vmem:[%s2595 + $0x18] sm:$0xff]
    %v2600 = vld [vmem:[%s2595 + $0x20] sm:$0xff]
    %v2601 = vld [vmem:[%s2595 + $0x28] sm:$0xff]
    %v2602 = vld [vmem:[%s2595 + $0x30] sm:$0xff]
    %v2603 = vld [vmem:[%s2595 + $0x38] sm:$0xff]
    %s2604 = scalar_lea.vmem %s4, 8
    %v2605 = vld [vmem:[%s2604] sm:$0xff]
    %s2606 = scalar_lea.vmem %s5, 16
    %v2607 = vld [vmem:[%s2606] sm:$0xff]
    %v2608 = vld [vmem:[%s2606 + $0x8] sm:$0x1]
    %2611 = vrot.lane.b32.xlu0 %v2584, 64
    %v2612 = vpop.permute.xlu0 %2611
    %2613 = vrot.lane.b32.xlu0 %v2585, 64
    %v2614 = vpop.permute.xlu0 %2613
    %vm2617 = vcmask 785920
    %2618 = vst.msk [vmem:[#allocation2] sm:$0xff] %vm2617, %v2612
    %2619 = vst.msk [vmem:[#allocation2 + $0x8] sm:$0xff] %vm2617, %v2614
    %v2620 = vlaneseq
    %v2621 = vshrl.u32 %v2620, 7
    %v2622 = vsub.s32 0, %v2621
    %v2623 = vrot.slane %v2607, %v2622
    %v2624 = vsel %vm63, %v2584, 0
    %v2626 = vsel %vm63, %v2585, 0
    %2628 = vmatprep.subr.mxu0 0.0
    %2629 = vmatpush1.msra.mxu0 0.0
    %2630 = vmatprep.subr.mxu0 0.0
    %2631 = vmatpush1.msra.mxu0 0.0
    %2632 = vmatprep.subr.mxu0 0.0
    %2633 = vmatpush1.msra.mxu0 0.0
    %2634 = vmatprep.subr.mxu0 0.0
    %2635 = vmatpush1.msra.mxu0 0.0
    %2636 = vmatprep.subr.mxu0 0.0
    %2637 = vmatpush1.msra.mxu0 0.0
    %2638 = vmatprep.subr.mxu0 0.0
    %2639 = vmatpush1.msra.mxu0 0.0
    %2640 = vmatprep.subr.mxu0 0.0
    %2641 = vmatpush1.msra.mxu0 0.0
    %2642 = vmatprep.subr.mxu0 0.0
    %2643 = vmatpush1.msra.mxu0 0.0
    %2644 = vmatprep.subr.mxu0 0.0
    %2645 = vmatpush1.msra.mxu0 0.0
    %2646 = vmatprep.subr.mxu0 0.0
    %2647 = vmatpush1.msra.mxu0 0.0
    %2648 = vmatprep.subr.mxu0 0.0
    %2649 = vmatpush1.msra.mxu0 0.0
    %2650 = vmatprep.subr.mxu0 0.0
    %2651 = vmatpush1.msra.mxu0 0.0
    %2652 = vmatprep.subr.mxu0 0.0
    %2653 = vmatpush1.msra.mxu0 %v2593
    %2654 = vmatprep.subr.mxu0 0.0
    %2655 = vmatpush1.msra.mxu0 %v2591
    %2656 = vmatprep.subr.mxu0 0.0
    %2657 = vmatpush1.msra.mxu0 %v2589
    %2658 = vmatprep.subr.mxu0 0.0
    %2659 = vmatpush1.msra.mxu0 %v2587
    %2660 = vmatprep.subr.mxu0 0.0
    %2661 = vmatpush2.msra.mxu0 0.0
    %2662 = vmatprep.subr.mxu0 0.0
    %2663 = vmatpush2.msra.mxu0 0.0
    %2664 = vmatprep.subr.mxu0 0.0
    %2665 = vmatpush2.msra.mxu0 0.0
    %2666 = vmatprep.subr.mxu0 0.0
    %2667 = vmatpush2.msra.mxu0 0.0
    %2668 = vmatprep.subr.mxu0 0.0
    %2669 = vmatpush2.msra.mxu0 0.0
    %2670 = vmatprep.subr.mxu0 0.0
    %2671 = vmatpush2.msra.mxu0 0.0
    %2672 = vmatprep.subr.mxu0 0.0
    %2673 = vmatpush2.msra.mxu0 0.0
    %2674 = vmatprep.subr.mxu0 0.0
    %2675 = vmatpush2.msra.mxu0 0.0
    %2676 = vmatprep.subr.mxu0 0.0
    %2677 = vmatpush2.msra.mxu0 0.0
    %2678 = vmatprep.subr.mxu0 0.0
    %2679 = vmatpush2.msra.mxu0 0.0
    %2680 = vmatprep.subr.mxu0 0.0
    %2681 = vmatpush2.msra.mxu0 0.0
    %2682 = vmatprep.subr.mxu0 0.0
    %2683 = vmatpush2.msra.mxu0 0.0
    %2684 = vmatprep.subr.mxu0 0.0
    %2685 = vmatpush2.msra.mxu0 0.0
    %2686 = vmatprep.subr.mxu0 0.0
    %2687 = vmatpush2.msra.mxu0 0.0
    %2688 = vmatprep.subr.mxu0 0.0
    %2689 = vmatpush2.msra.mxu0 0.0
    %2690 = vmatprep.subr.mxu0 0.0
    %2691 = vmatpush2.msra.mxu0 0.0
    %2692 = vmatprep.mubr.f32.mxu0 0.0
    %2693 = vmatmul.mubr.f32.gmra.mxu0 %v2624
    %v2694 = vpop.f32.mrf.mxu0
    %v2695 = vadd.f32 %v2623, %v2694
    %v2696 = vpop.f32.mrf.mxu0
    %2697 = vmatprep.mubr.f32.mxu0 0.0
    %2698 = vmatmul.mubr.f32.gmra.mxu0 %v2626
    %v2699 = vpop.f32.mrf.mxu0
    %v2700 = vadd.f32 %v2623, %v2699
    %v2701 = vpop.f32.mrf.mxu0
    %2702 = vdwg.mxu0
    %2704 = vrot.lane.b32.xlu0 %v2695, 96
    %v2705 = vpop.permute.xlu0 %2704
    %v2706 = vsel %vm146, %v2695, 0
    %v2708 = vsel %vm146, %v2705, 0
    %2710 = vmatprep.subr.mxu0 0.0
    %2711 = vmatpush1.xpose.msra.mxu0 0.0
    %2712 = vmatprep.subr.mxu0 0.0
    %2713 = vmatpush1.xpose.msra.mxu0 0.0
    %2714 = vmatprep.subr.mxu0 0.0
    %2715 = vmatpush1.xpose.msra.mxu0 0.0
    %2716 = vmatprep.subr.mxu0 0.0
    %2717 = vmatpush1.xpose.msra.mxu0 0.0
    %2718 = vmatprep.subr.mxu0 0.0
    %2719 = vmatpush1.xpose.msra.mxu0 0.0
    %2720 = vmatprep.subr.mxu0 0.0
    %2721 = vmatpush1.xpose.msra.mxu0 0.0
    %2722 = vmatprep.subr.mxu0 0.0
    %2723 = vmatpush1.xpose.msra.mxu0 0.0
    %2724 = vmatprep.subr.mxu0 0.0
    %2725 = vmatpush1.xpose.msra.mxu0 0.0
    %2726 = vmatprep.subr.mxu0 0.0
    %2727 = vmatpush1.xpose.msra.mxu0 0.0
    %2728 = vmatprep.subr.mxu0 0.0
    %2729 = vmatpush1.xpose.msra.mxu0 0.0
    %2730 = vmatprep.subr.mxu0 0.0
    %2731 = vmatpush1.xpose.msra.mxu0 0.0
    %2732 = vmatprep.subr.mxu0 0.0
    %2733 = vmatpush1.xpose.msra.mxu0 0.0
    %2734 = vmatprep.subr.mxu0 0.0
    %2735 = vmatpush1.xpose.msra.mxu0 0.0
    %2736 = vmatprep.subr.mxu0 0.0
    %2737 = vmatpush1.xpose.msra.mxu0 0.0
    %2738 = vmatprep.subr.mxu0 0.0
    %2739 = vmatpush1.xpose.msra.mxu0 0.0
    %2740 = vmatprep.subr.mxu0 0.0
    %2741 = vmatpush1.xpose.msra.mxu0 %v2708
    %2742 = vmatprep.subr.mxu0 0.0
    %2743 = vmatpush2.xpose.msra.mxu0 0.0
    %2744 = vmatprep.subr.mxu0 0.0
    %2745 = vmatpush2.xpose.msra.mxu0 0.0
    %2746 = vmatprep.subr.mxu0 0.0
    %2747 = vmatpush2.xpose.msra.mxu0 0.0
    %2748 = vmatprep.subr.mxu0 0.0
    %2749 = vmatpush2.xpose.msra.mxu0 0.0
    %2750 = vmatprep.subr.mxu0 0.0
    %2751 = vmatpush2.xpose.msra.mxu0 0.0
    %2752 = vmatprep.subr.mxu0 0.0
    %2753 = vmatpush2.xpose.msra.mxu0 0.0
    %2754 = vmatprep.subr.mxu0 0.0
    %2755 = vmatpush2.xpose.msra.mxu0 0.0
    %2756 = vmatprep.subr.mxu0 0.0
    %2757 = vmatpush2.xpose.msra.mxu0 0.0
    %2758 = vmatprep.subr.mxu0 0.0
    %2759 = vmatpush2.xpose.msra.mxu0 0.0
    %2760 = vmatprep.subr.mxu0 0.0
    %2761 = vmatpush2.xpose.msra.mxu0 0.0
    %2762 = vmatprep.subr.mxu0 0.0
    %2763 = vmatpush2.xpose.msra.mxu0 0.0
    %2764 = vmatprep.subr.mxu0 0.0
    %2765 = vmatpush2.xpose.msra.mxu0 0.0
    %2766 = vmatprep.subr.mxu0 0.0
    %2767 = vmatpush2.xpose.msra.mxu0 0.0
    %2768 = vmatprep.subr.mxu0 0.0
    %2769 = vmatpush2.xpose.msra.mxu0 0.0
    %2770 = vmatprep.subr.mxu0 0.0
    %2771 = vmatpush2.xpose.msra.mxu0 0.0
    %2772 = vmatprep.subr.mxu0 0.0
    %2773 = vmatpush2.xpose.msra.mxu0 0.0
    %2774 = vmatprep.mubr.f32.mxu0 0.0
    %2775 = vmatmul.mubr.f32.gmra.mxu0 %v2706
    %v2776 = vpop.f32.mrf.mxu0
    %v2777 = vadd.f32 0.0, %v2776
    %v2778 = vpop.f32.mrf.mxu0
    %2779 = vdwg.mxu0
    %v2780 = vmul.f32 %v2777, 0.35355338
    %v2781 = vadd.f32 %v2780, %v26
    %v2782 = vsel %vm146, %v2781, -inf
    %2783 = vmax.xlane.f32.xlu0 %v2782
    %v2784 = vpop.xlane.xlu0 %2783
    %v2785 = vsub.f32 %v2781, %v2784
    %v2786 = vmul.f32 %v2785, 1.442695
    %v2787 = vpow.pop %v2786
    %v2788 = vsel %vm146, %v2787, 0.0
    %2789 = vadd.xlane.f32.xlu0 %v2788
    %v2790 = vpop.xlane.xlu0 %2789
    %v2791 = vrcp.pop %v2790
    %v2792 = vmul.f32 %v2787, %v2791
    %2793 = vrot.lane.b32.xlu0 %v2695, 64
    %v2794 = vpop.permute.xlu0 %2793
    %v2797 = vsel %vm146, %v2792, 0
    %2799 = vmatprep.subr.mxu0 0.0
    %2800 = vmatpush1.msra.mxu0 0.0
    %2801 = vmatprep.subr.mxu0 0.0
    %2802 = vmatpush1.msra.mxu0 0.0
    %2803 = vmatprep.subr.mxu0 0.0
    %2804 = vmatpush1.msra.mxu0 0.0
    %2805 = vmatprep.subr.mxu0 0.0
    %2806 = vmatpush1.msra.mxu0 0.0
    %2807 = vmatprep.subr.mxu0 0.0
    %2808 = vmatpush1.msra.mxu0 0.0
    %2809 = vmatprep.subr.mxu0 0.0
    %2810 = vmatpush1.msra.mxu0 0.0
    %2811 = vmatprep.subr.mxu0 0.0
    %2812 = vmatpush1.msra.mxu0 0.0
    %2813 = vmatprep.subr.mxu0 0.0
    %2814 = vmatpush1.msra.mxu0 0.0
    %2815 = vmatprep.subr.mxu0 0.0
    %2816 = vmatpush1.msra.mxu0 0.0
    %2817 = vmatprep.subr.mxu0 0.0
    %2818 = vmatpush1.msra.mxu0 0.0
    %2819 = vmatprep.subr.mxu0 0.0
    %2820 = vmatpush1.msra.mxu0 0.0
    %2821 = vmatprep.subr.mxu0 0.0
    %2822 = vmatpush1.msra.mxu0 0.0
    %2823 = vmatprep.subr.mxu0 0.0
    %2824 = vmatpush1.msra.mxu0 0.0
    %2825 = vmatprep.subr.mxu0 0.0
    %2826 = vmatpush1.msra.mxu0 0.0
    %2827 = vmatprep.subr.mxu0 0.0
    %2828 = vmatpush1.msra.mxu0 0.0
    %2829 = vmatprep.subr.mxu0 0.0
    %2830 = vmatpush1.msra.mxu0 %v2794
    %2831 = vmatprep.subr.mxu0 0.0
    %2832 = vmatpush2.msra.mxu0 0.0
    %2833 = vmatprep.subr.mxu0 0.0
    %2834 = vmatpush2.msra.mxu0 0.0
    %2835 = vmatprep.subr.mxu0 0.0
    %2836 = vmatpush2.msra.mxu0 0.0
    %2837 = vmatprep.subr.mxu0 0.0
    %2838 = vmatpush2.msra.mxu0 0.0
    %2839 = vmatprep.subr.mxu0 0.0
    %2840 = vmatpush2.msra.mxu0 0.0
    %2841 = vmatprep.subr.mxu0 0.0
    %2842 = vmatpush2.msra.mxu0 0.0
    %2843 = vmatprep.subr.mxu0 0.0
    %2844 = vmatpush2.msra.mxu0 0.0
    %2845 = vmatprep.subr.mxu0 0.0
    %2846 = vmatpush2.msra.mxu0 0.0
    %2847 = vmatprep.subr.mxu0 0.0
    %2848 = vmatpush2.msra.mxu0 0.0
    %2849 = vmatprep.subr.mxu0 0.0
    %2850 = vmatpush2.msra.mxu0 0.0
    %2851 = vmatprep.subr.mxu0 0.0
    %2852 = vmatpush2.msra.mxu0 0.0
    %2853 = vmatprep.subr.mxu0 0.0
    %2854 = vmatpush2.msra.mxu0 0.0
    %2855 = vmatprep.subr.mxu0 0.0
    %2856 = vmatpush2.msra.mxu0 0.0
    %2857 = vmatprep.subr.mxu0 0.0
    %2858 = vmatpush2.msra.mxu0 0.0
    %2859 = vmatprep.subr.mxu0 0.0
    %2860 = vmatpush2.msra.mxu0 0.0
    %2861 = vmatprep.subr.mxu0 0.0
    %2862 = vmatpush2.msra.mxu0 0.0
    %2863 = vmatprep.mubr.f32.mxu0 0.0
    %2864 = vmatmul.mubr.f32.gmra.mxu0 %v2797
    %v2865 = vpop.f32.mrf.mxu0
    %v2866 = vadd.f32 0.0, %v2865
    %v2867 = vpop.f32.mrf.mxu0
    %2868 = vdwg.mxu0
    %v2869 = vlaneseq
    %v2870 = vshrl.u32 %v2869, 7
    %v2871 = vsub.s32 0, %v2870
    %v2872 = vrot.slane %v2608, %v2871
    %v2874 = vsel %vm146, %v2866, 0
    %2876 = vmatprep.subr.mxu0 0.0
    %2877 = vmatpush1.msra.mxu0 0.0
    %2878 = vmatprep.subr.mxu0 0.0
    %2879 = vmatpush1.msra.mxu0 0.0
    %2880 = vmatprep.subr.mxu0 0.0
    %2881 = vmatpush1.msra.mxu0 0.0
    %2882 = vmatprep.subr.mxu0 0.0
    %2883 = vmatpush1.msra.mxu0 0.0
    %2884 = vmatprep.subr.mxu0 0.0
    %2885 = vmatpush1.msra.mxu0 0.0
    %2886 = vmatprep.subr.mxu0 0.0
    %2887 = vmatpush1.msra.mxu0 0.0
    %2888 = vmatprep.subr.mxu0 0.0
    %2889 = vmatpush1.msra.mxu0 0.0
    %2890 = vmatprep.subr.mxu0 0.0
    %2891 = vmatpush1.msra.mxu0 0.0
    %2892 = vmatprep.subr.mxu0 0.0
    %2893 = vmatpush1.msra.mxu0 0.0
    %2894 = vmatprep.subr.mxu0 0.0
    %2895 = vmatpush1.msra.mxu0 0.0
    %2896 = vmatprep.subr.mxu0 0.0
    %2897 = vmatpush1.msra.mxu0 0.0
    %2898 = vmatprep.subr.mxu0 0.0
    %2899 = vmatpush1.msra.mxu0 0.0
    %2900 = vmatprep.subr.mxu0 0.0
    %2901 = vmatpush1.msra.mxu0 0.0
    %2902 = vmatprep.subr.mxu0 0.0
    %2903 = vmatpush1.msra.mxu0 0.0
    %2904 = vmatprep.subr.mxu0 0.0
    %2905 = vmatpush1.msra.mxu0 0.0
    %2906 = vmatprep.subr.mxu0 0.0
    %2907 = vmatpush1.msra.mxu0 %v2605
    %2908 = vmatprep.subr.mxu0 0.0
    %2909 = vmatpush2.msra.mxu0 0.0
    %2910 = vmatprep.subr.mxu0 0.0
    %2911 = vmatpush2.msra.mxu0 0.0
    %2912 = vmatprep.subr.mxu0 0.0
    %2913 = vmatpush2.msra.mxu0 0.0
    %2914 = vmatprep.subr.mxu0 0.0
    %2915 = vmatpush2.msra.mxu0 0.0
    %2916 = vmatprep.subr.mxu0 0.0
    %2917 = vmatpush2.msra.mxu0 0.0
    %2918 = vmatprep.subr.mxu0 0.0
    %2919 = vmatpush2.msra.mxu0 0.0
    %2920 = vmatprep.subr.mxu0 0.0
    %2921 = vmatpush2.msra.mxu0 0.0
    %2922 = vmatprep.subr.mxu0 0.0
    %2923 = vmatpush2.msra.mxu0 0.0
    %2924 = vmatprep.subr.mxu0 0.0
    %2925 = vmatpush2.msra.mxu0 0.0
    %2926 = vmatprep.subr.mxu0 0.0
    %2927 = vmatpush2.msra.mxu0 0.0
    %2928 = vmatprep.subr.mxu0 0.0
    %2929 = vmatpush2.msra.mxu0 0.0
    %2930 = vmatprep.subr.mxu0 0.0
    %2931 = vmatpush2.msra.mxu0 0.0
    %2932 = vmatprep.subr.mxu0 0.0
    %2933 = vmatpush2.msra.mxu0 0.0
    %2934 = vmatprep.subr.mxu0 0.0
    %2935 = vmatpush2.msra.mxu0 0.0
    %2936 = vmatprep.subr.mxu0 0.0
    %2937 = vmatpush2.msra.mxu0 0.0
    %2938 = vmatprep.subr.mxu0 0.0
    %2939 = vmatpush2.msra.mxu0 0.0
    %2940 = vmatprep.mubr.f32.mxu0 0.0
    %2941 = vmatmul.mubr.f32.gmra.mxu0 %v2874
    %v2942 = vpop.f32.mrf.mxu0
    %v2943 = vadd.f32 %v2872, %v2942
    %v2944 = vpop.f32.mrf.mxu0
    %2945 = vdwg.mxu0
    %v2946 = vsel %vm387, %v2943, -inf
    %2947 = vmax.xlane.f32.xlu0 %v2946
    %v2948 = vpop.xlane.xlu0 %2947
    %v2949 = vsub.f32 %v2943, %v2948
    %v2950 = vmul.f32 %v2949, 1.442695
    %v2951 = vpow.pop %v2950
    %v2952 = vsel %vm387, %v2951, 0.0
    %2953 = vadd.xlane.f32.xlu0 %v2952
    %v2954 = vpop.xlane.xlu0 %2953
    %v2955 = vlog2.pop %v2954
    %v2956 = vmul.f32 %v2955, 0.6931472
    %v2957 = vsub.f32 %v2949, %v2956
    %2958 = vrot.lane.b32.xlu0 %v2695, 120
    %v2959 = vpop.permute.xlu0 %2958
    %2960 = vrot.lane.b32.xlu0 %v2695, 88
    %v2961 = vpop.permute.xlu0 %2960
    %v2962 = vsel %vm146, %v2959, 0
    %v2964 = vsel %vm146, %v2961, 0
    %2966 = vmatprep.subr.mxu0 0.0
    %2967 = vmatpush1.xpose.msra.mxu0 0.0
    %2968 = vmatprep.subr.mxu0 0.0
    %2969 = vmatpush1.xpose.msra.mxu0 0.0
    %2970 = vmatprep.subr.mxu0 0.0
    %2971 = vmatpush1.xpose.msra.mxu0 0.0
    %2972 = vmatprep.subr.mxu0 0.0
    %2973 = vmatpush1.xpose.msra.mxu0 0.0
    %2974 = vmatprep.subr.mxu0 0.0
    %2975 = vmatpush1.xpose.msra.mxu0 0.0
    %2976 = vmatprep.subr.mxu0 0.0
    %2977 = vmatpush1.xpose.msra.mxu0 0.0
    %2978 = vmatprep.subr.mxu0 0.0
    %2979 = vmatpush1.xpose.msra.mxu0 0.0
    %2980 = vmatprep.subr.mxu0 0.0
    %2981 = vmatpush1.xpose.msra.mxu0 0.0
    %2982 = vmatprep.subr.mxu0 0.0
    %2983 = vmatpush1.xpose.msra.mxu0 0.0
    %2984 = vmatprep.subr.mxu0 0.0
    %2985 = vmatpush1.xpose.msra.mxu0 0.0
    %2986 = vmatprep.subr.mxu0 0.0
    %2987 = vmatpush1.xpose.msra.mxu0 0.0
    %2988 = vmatprep.subr.mxu0 0.0
    %2989 = vmatpush1.xpose.msra.mxu0 0.0
    %2990 = vmatprep.subr.mxu0 0.0
    %2991 = vmatpush1.xpose.msra.mxu0 0.0
    %2992 = vmatprep.subr.mxu0 0.0
    %2993 = vmatpush1.xpose.msra.mxu0 0.0
    %2994 = vmatprep.subr.mxu0 0.0
    %2995 = vmatpush1.xpose.msra.mxu0 0.0
    %2996 = vmatprep.subr.mxu0 0.0
    %2997 = vmatpush1.xpose.msra.mxu0 %v2964
    %2998 = vmatprep.subr.mxu0 0.0
    %2999 = vmatpush2.xpose.msra.mxu0 0.0
    %3000 = vmatprep.subr.mxu0 0.0
    %3001 = vmatpush2.xpose.msra.mxu0 0.0
    %3002 = vmatprep.subr.mxu0 0.0
    %3003 = vmatpush2.xpose.msra.mxu0 0.0
    %3004 = vmatprep.subr.mxu0 0.0
    %3005 = vmatpush2.xpose.msra.mxu0 0.0
    %3006 = vmatprep.subr.mxu0 0.0
    %3007 = vmatpush2.xpose.msra.mxu0 0.0
    %3008 = vmatprep.subr.mxu0 0.0
    %3009 = vmatpush2.xpose.msra.mxu0 0.0
    %3010 = vmatprep.subr.mxu0 0.0
    %3011 = vmatpush2.xpose.msra.mxu0 0.0
    %3012 = vmatprep.subr.mxu0 0.0
    %3013 = vmatpush2.xpose.msra.mxu0 0.0
    %3014 = vmatprep.subr.mxu0 0.0
    %3015 = vmatpush2.xpose.msra.mxu0 0.0
    %3016 = vmatprep.subr.mxu0 0.0
    %3017 = vmatpush2.xpose.msra.mxu0 0.0
    %3018 = vmatprep.subr.mxu0 0.0
    %3019 = vmatpush2.xpose.msra.mxu0 0.0
    %3020 = vmatprep.subr.mxu0 0.0
    %3021 = vmatpush2.xpose.msra.mxu0 0.0
    %3022 = vmatprep.subr.mxu0 0.0
    %3023 = vmatpush2.xpose.msra.mxu0 0.0
    %3024 = vmatprep.subr.mxu0 0.0
    %3025 = vmatpush2.xpose.msra.mxu0 0.0
    %3026 = vmatprep.subr.mxu0 0.0
    %3027 = vmatpush2.xpose.msra.mxu0 0.0
    %3028 = vmatprep.subr.mxu0 0.0
    %3029 = vmatpush2.xpose.msra.mxu0 0.0
    %3030 = vmatprep.mubr.f32.mxu0 0.0
    %3031 = vmatmul.mubr.f32.gmra.mxu0 %v2962
    %v3032 = vpop.f32.mrf.mxu0
    %v3033 = vadd.f32 0.0, %v3032
    %v3034 = vpop.f32.mrf.mxu0
    %3035 = vdwg.mxu0
    %v3036 = vmul.f32 %v3033, 0.35355338
    %v3037 = vadd.f32 %v3036, %v26
    %v3038 = vsel %vm146, %v3037, -inf
    %3039 = vmax.xlane.f32.xlu0 %v3038
    %v3040 = vpop.xlane.xlu0 %3039
    %v3041 = vsub.f32 %v3037, %v3040
    %v3042 = vmul.f32 %v3041, 1.442695
    %v3043 = vpow.pop %v3042
    %v3044 = vsel %vm146, %v3043, 0.0
    %3045 = vadd.xlane.f32.xlu0 %v3044
    %v3046 = vpop.xlane.xlu0 %3045
    %v3047 = vrcp.pop %v3046
    %v3048 = vmul.f32 %v3043, %v3047
    %3049 = vrot.lane.b32.xlu0 %v2695, 56
    %v3050 = vpop.permute.xlu0 %3049
    %v3053 = vsel %vm146, %v3048, 0
    %3055 = vmatprep.subr.mxu0 0.0
    %3056 = vmatpush1.msra.mxu0 0.0
    %3057 = vmatprep.subr.mxu0 0.0
    %3058 = vmatpush1.msra.mxu0 0.0
    %3059 = vmatprep.subr.mxu0 0.0
    %3060 = vmatpush1.msra.mxu0 0.0
    %3061 = vmatprep.subr.mxu0 0.0
    %3062 = vmatpush1.msra.mxu0 0.0
    %3063 = vmatprep.subr.mxu0 0.0
    %3064 = vmatpush1.msra.mxu0 0.0
    %3065 = vmatprep.subr.mxu0 0.0
    %3066 = vmatpush1.msra.mxu0 0.0
    %3067 = vmatprep.subr.mxu0 0.0
    %3068 = vmatpush1.msra.mxu0 0.0
    %3069 = vmatprep.subr.mxu0 0.0
    %3070 = vmatpush1.msra.mxu0 0.0
    %3071 = vmatprep.subr.mxu0 0.0
    %3072 = vmatpush1.msra.mxu0 0.0
    %3073 = vmatprep.subr.mxu0 0.0
    %3074 = vmatpush1.msra.mxu0 0.0
    %3075 = vmatprep.subr.mxu0 0.0
    %3076 = vmatpush1.msra.mxu0 0.0
    %3077 = vmatprep.subr.mxu0 0.0
    %3078 = vmatpush1.msra.mxu0 0.0
    %3079 = vmatprep.subr.mxu0 0.0
    %3080 = vmatpush1.msra.mxu0 0.0
    %3081 = vmatprep.subr.mxu0 0.0
    %3082 = vmatpush1.msra.mxu0 0.0
    %3083 = vmatprep.subr.mxu0 0.0
    %3084 = vmatpush1.msra.mxu0 0.0
    %3085 = vmatprep.subr.mxu0 0.0
    %3086 = vmatpush1.msra.mxu0 %v3050
    %3087 = vmatprep.subr.mxu0 0.0
    %3088 = vmatpush2.msra.mxu0 0.0
    %3089 = vmatprep.subr.mxu0 0.0
    %3090 = vmatpush2.msra.mxu0 0.0
    %3091 = vmatprep.subr.mxu0 0.0
    %3092 = vmatpush2.msra.mxu0 0.0
    %3093 = vmatprep.subr.mxu0 0.0
    %3094 = vmatpush2.msra.mxu0 0.0
    %3095 = vmatprep.subr.mxu0 0.0
    %3096 = vmatpush2.msra.mxu0 0.0
    %3097 = vmatprep.subr.mxu0 0.0
    %3098 = vmatpush2.msra.mxu0 0.0
    %3099 = vmatprep.subr.mxu0 0.0
    %3100 = vmatpush2.msra.mxu0 0.0
    %3101 = vmatprep.subr.mxu0 0.0
    %3102 = vmatpush2.msra.mxu0 0.0
    %3103 = vmatprep.subr.mxu0 0.0
    %3104 = vmatpush2.msra.mxu0 0.0
    %3105 = vmatprep.subr.mxu0 0.0
    %3106 = vmatpush2.msra.mxu0 0.0
    %3107 = vmatprep.subr.mxu0 0.0
    %3108 = vmatpush2.msra.mxu0 0.0
    %3109 = vmatprep.subr.mxu0 0.0
    %3110 = vmatpush2.msra.mxu0 0.0
    %3111 = vmatprep.subr.mxu0 0.0
    %3112 = vmatpush2.msra.mxu0 0.0
    %3113 = vmatprep.subr.mxu0 0.0
    %3114 = vmatpush2.msra.mxu0 0.0
    %3115 = vmatprep.subr.mxu0 0.0
    %3116 = vmatpush2.msra.mxu0 0.0
    %3117 = vmatprep.subr.mxu0 0.0
    %3118 = vmatpush2.msra.mxu0 0.0
    %3119 = vmatprep.mubr.f32.mxu0 0.0
    %3120 = vmatmul.mubr.f32.gmra.mxu0 %v3053
    %v3121 = vpop.f32.mrf.mxu0
    %v3122 = vadd.f32 0.0, %v3121
    %v3123 = vpop.f32.mrf.mxu0
    %3124 = vdwg.mxu0
    %v3126 = vsel %vm146, %v3122, 0
    %3128 = vmatprep.subr.mxu0 0.0
    %3129 = vmatpush1.msra.mxu0 0.0
    %3130 = vmatprep.subr.mxu0 0.0
    %3131 = vmatpush1.msra.mxu0 0.0
    %3132 = vmatprep.subr.mxu0 0.0
    %3133 = vmatpush1.msra.mxu0 0.0
    %3134 = vmatprep.subr.mxu0 0.0
    %3135 = vmatpush1.msra.mxu0 0.0
    %3136 = vmatprep.subr.mxu0 0.0
    %3137 = vmatpush1.msra.mxu0 0.0
    %3138 = vmatprep.subr.mxu0 0.0
    %3139 = vmatpush1.msra.mxu0 0.0
    %3140 = vmatprep.subr.mxu0 0.0
    %3141 = vmatpush1.msra.mxu0 0.0
    %3142 = vmatprep.subr.mxu0 0.0
    %3143 = vmatpush1.msra.mxu0 0.0
    %3144 = vmatprep.subr.mxu0 0.0
    %3145 = vmatpush1.msra.mxu0 0.0
    %3146 = vmatprep.subr.mxu0 0.0
    %3147 = vmatpush1.msra.mxu0 0.0
    %3148 = vmatprep.subr.mxu0 0.0
    %3149 = vmatpush1.msra.mxu0 0.0
    %3150 = vmatprep.subr.mxu0 0.0
    %3151 = vmatpush1.msra.mxu0 0.0
    %3152 = vmatprep.subr.mxu0 0.0
    %3153 = vmatpush1.msra.mxu0 0.0
    %3154 = vmatprep.subr.mxu0 0.0
    %3155 = vmatpush1.msra.mxu0 0.0
    %3156 = vmatprep.subr.mxu0 0.0
    %3157 = vmatpush1.msra.mxu0 0.0
    %3158 = vmatprep.subr.mxu0 0.0
    %3159 = vmatpush1.msra.mxu0 %v2605
    %3160 = vmatprep.subr.mxu0 0.0
    %3161 = vmatpush2.msra.mxu0 0.0
    %3162 = vmatprep.subr.mxu0 0.0
    %3163 = vmatpush2.msra.mxu0 0.0
    %3164 = vmatprep.subr.mxu0 0.0
    %3165 = vmatpush2.msra.mxu0 0.0
    %3166 = vmatprep.subr.mxu0 0.0
    %3167 = vmatpush2.msra.mxu0 0.0
    %3168 = vmatprep.subr.mxu0 0.0
    %3169 = vmatpush2.msra.mxu0 0.0
    %3170 = vmatprep.subr.mxu0 0.0
    %3171 = vmatpush2.msra.mxu0 0.0
    %3172 = vmatprep.subr.mxu0 0.0
    %3173 = vmatpush2.msra.mxu0 0.0
    %3174 = vmatprep.subr.mxu0 0.0
    %3175 = vmatpush2.msra.mxu0 0.0
    %3176 = vmatprep.subr.mxu0 0.0
    %3177 = vmatpush2.msra.mxu0 0.0
    %3178 = vmatprep.subr.mxu0 0.0
    %3179 = vmatpush2.msra.mxu0 0.0
    %3180 = vmatprep.subr.mxu0 0.0
    %3181 = vmatpush2.msra.mxu0 0.0
    %3182 = vmatprep.subr.mxu0 0.0
    %3183 = vmatpush2.msra.mxu0 0.0
    %3184 = vmatprep.subr.mxu0 0.0
    %3185 = vmatpush2.msra.mxu0 0.0
    %3186 = vmatprep.subr.mxu0 0.0
    %3187 = vmatpush2.msra.mxu0 0.0
    %3188 = vmatprep.subr.mxu0 0.0
    %3189 = vmatpush2.msra.mxu0 0.0
    %3190 = vmatprep.subr.mxu0 0.0
    %3191 = vmatpush2.msra.mxu0 0.0
    %3192 = vmatprep.mubr.f32.mxu0 0.0
    %3193 = vmatmul.mubr.f32.gmra.mxu0 %v3126
    %v3194 = vpop.f32.mrf.mxu0
    %v3195 = vadd.f32 %v2872, %v3194
    %v3196 = vpop.f32.mrf.mxu0
    %3197 = vdwg.mxu0
    %v3198 = vsel %vm387, %v3195, -inf
    %3199 = vmax.xlane.f32.xlu0 %v3198
    %v3200 = vpop.xlane.xlu0 %3199
    %v3201 = vsub.f32 %v3195, %v3200
    %v3202 = vmul.f32 %v3201, 1.442695
    %v3203 = vpow.pop %v3202
    %v3204 = vsel %vm387, %v3203, 0.0
    %3205 = vadd.xlane.f32.xlu0 %v3204
    %v3206 = vpop.xlane.xlu0 %3205
    %v3207 = vlog2.pop %v3206
    %v3208 = vmul.f32 %v3207, 0.6931472
    %v3209 = vsub.f32 %v3201, %v3208
    %3210 = vrot.lane.b32.xlu0 %v2695, 112
    %v3211 = vpop.permute.xlu0 %3210
    %3212 = vrot.lane.b32.xlu0 %v2695, 80
    %v3213 = vpop.permute.xlu0 %3212
    %v3214 = vsel %vm146, %v3211, 0
    %v3216 = vsel %vm146, %v3213, 0
    %3218 = vmatprep.subr.mxu0 0.0
    %3219 = vmatpush1.xpose.msra.mxu0 0.0
    %3220 = vmatprep.subr.mxu0 0.0
    %3221 = vmatpush1.xpose.msra.mxu0 0.0
    %3222 = vmatprep.subr.mxu0 0.0
    %3223 = vmatpush1.xpose.msra.mxu0 0.0
    %3224 = vmatprep.subr.mxu0 0.0
    %3225 = vmatpush1.xpose.msra.mxu0 0.0
    %3226 = vmatprep.subr.mxu0 0.0
    %3227 = vmatpush1.xpose.msra.mxu0 0.0
    %3228 = vmatprep.subr.mxu0 0.0
    %3229 = vmatpush1.xpose.msra.mxu0 0.0
    %3230 = vmatprep.subr.mxu0 0.0
    %3231 = vmatpush1.xpose.msra.mxu0 0.0
    %3232 = vmatprep.subr.mxu0 0.0
    %3233 = vmatpush1.xpose.msra.mxu0 0.0
    %3234 = vmatprep.subr.mxu0 0.0
    %3235 = vmatpush1.xpose.msra.mxu0 0.0
    %3236 = vmatprep.subr.mxu0 0.0
    %3237 = vmatpush1.xpose.msra.mxu0 0.0
    %3238 = vmatprep.subr.mxu0 0.0
    %3239 = vmatpush1.xpose.msra.mxu0 0.0
    %3240 = vmatprep.subr.mxu0 0.0
    %3241 = vmatpush1.xpose.msra.mxu0 0.0
    %3242 = vmatprep.subr.mxu0 0.0
    %3243 = vmatpush1.xpose.msra.mxu0 0.0
    %3244 = vmatprep.subr.mxu0 0.0
    %3245 = vmatpush1.xpose.msra.mxu0 0.0
    %3246 = vmatprep.subr.mxu0 0.0
    %3247 = vmatpush1.xpose.msra.mxu0 0.0
    %3248 = vmatprep.subr.mxu0 0.0
    %3249 = vmatpush1.xpose.msra.mxu0 %v3216
    %3250 = vmatprep.subr.mxu0 0.0
    %3251 = vmatpush2.xpose.msra.mxu0 0.0
    %3252 = vmatprep.subr.mxu0 0.0
    %3253 = vmatpush2.xpose.msra.mxu0 0.0
    %3254 = vmatprep.subr.mxu0 0.0
    %3255 = vmatpush2.xpose.msra.mxu0 0.0
    %3256 = vmatprep.subr.mxu0 0.0
    %3257 = vmatpush2.xpose.msra.mxu0 0.0
    %3258 = vmatprep.subr.mxu0 0.0
    %3259 = vmatpush2.xpose.msra.mxu0 0.0
    %3260 = vmatprep.subr.mxu0 0.0
    %3261 = vmatpush2.xpose.msra.mxu0 0.0
    %3262 = vmatprep.subr.mxu0 0.0
    %3263 = vmatpush2.xpose.msra.mxu0 0.0
    %3264 = vmatprep.subr.mxu0 0.0
    %3265 = vmatpush2.xpose.msra.mxu0 0.0
    %3266 = vmatprep.subr.mxu0 0.0
    %3267 = vmatpush2.xpose.msra.mxu0 0.0
    %3268 = vmatprep.subr.mxu0 0.0
    %3269 = vmatpush2.xpose.msra.mxu0 0.0
    %3270 = vmatprep.subr.mxu0 0.0
    %3271 = vmatpush2.xpose.msra.mxu0 0.0
    %3272 = vmatprep.subr.mxu0 0.0
    %3273 = vmatpush2.xpose.msra.mxu0 0.0
    %3274 = vmatprep.subr.mxu0 0.0
    %3275 = vmatpush2.xpose.msra.mxu0 0.0
    %3276 = vmatprep.subr.mxu0 0.0
    %3277 = vmatpush2.xpose.msra.mxu0 0.0
    %3278 = vmatprep.subr.mxu0 0.0
    %3279 = vmatpush2.xpose.msra.mxu0 0.0
    %3280 = vmatprep.subr.mxu0 0.0
    %3281 = vmatpush2.xpose.msra.mxu0 0.0
    %3282 = vmatprep.mubr.f32.mxu0 0.0
    %3283 = vmatmul.mubr.f32.gmra.mxu0 %v3214
    %v3284 = vpop.f32.mrf.mxu0
    %v3285 = vadd.f32 0.0, %v3284
    %v3286 = vpop.f32.mrf.mxu0
    %3287 = vdwg.mxu0
    %v3288 = vmul.f32 %v3285, 0.35355338
    %v3289 = vadd.f32 %v3288, %v26
    %v3290 = vsel %vm146, %v3289, -inf
    %3291 = vmax.xlane.f32.xlu0 %v3290
    %v3292 = vpop.xlane.xlu0 %3291
    %v3293 = vsub.f32 %v3289, %v3292
    %v3294 = vmul.f32 %v3293, 1.442695
    %v3295 = vpow.pop %v3294
    %v3296 = vsel %vm146, %v3295, 0.0
    %3297 = vadd.xlane.f32.xlu0 %v3296
    %v3298 = vpop.xlane.xlu0 %3297
    %v3299 = vrcp.pop %v3298
    %v3300 = vmul.f32 %v3295, %v3299
    %3301 = vrot.lane.b32.xlu0 %v2695, 48
    %v3302 = vpop.permute.xlu0 %3301
    %v3305 = vsel %vm146, %v3300, 0
    %3307 = vmatprep.subr.mxu0 0.0
    %3308 = vmatpush1.msra.mxu0 0.0
    %3309 = vmatprep.subr.mxu0 0.0
    %3310 = vmatpush1.msra.mxu0 0.0
    %3311 = vmatprep.subr.mxu0 0.0
    %3312 = vmatpush1.msra.mxu0 0.0
    %3313 = vmatprep.subr.mxu0 0.0
    %3314 = vmatpush1.msra.mxu0 0.0
    %3315 = vmatprep.subr.mxu0 0.0
    %3316 = vmatpush1.msra.mxu0 0.0
    %3317 = vmatprep.subr.mxu0 0.0
    %3318 = vmatpush1.msra.mxu0 0.0
    %3319 = vmatprep.subr.mxu0 0.0
    %3320 = vmatpush1.msra.mxu0 0.0
    %3321 = vmatprep.subr.mxu0 0.0
    %3322 = vmatpush1.msra.mxu0 0.0
    %3323 = vmatprep.subr.mxu0 0.0
    %3324 = vmatpush1.msra.mxu0 0.0
    %3325 = vmatprep.subr.mxu0 0.0
    %3326 = vmatpush1.msra.mxu0 0.0
    %3327 = vmatprep.subr.mxu0 0.0
    %3328 = vmatpush1.msra.mxu0 0.0
    %3329 = vmatprep.subr.mxu0 0.0
    %3330 = vmatpush1.msra.mxu0 0.0
    %3331 = vmatprep.subr.mxu0 0.0
    %3332 = vmatpush1.msra.mxu0 0.0
    %3333 = vmatprep.subr.mxu0 0.0
    %3334 = vmatpush1.msra.mxu0 0.0
    %3335 = vmatprep.subr.mxu0 0.0
    %3336 = vmatpush1.msra.mxu0 0.0
    %3337 = vmatprep.subr.mxu0 0.0
    %3338 = vmatpush1.msra.mxu0 %v3302
    %3339 = vmatprep.subr.mxu0 0.0
    %3340 = vmatpush2.msra.mxu0 0.0
    %3341 = vmatprep.subr.mxu0 0.0
    %3342 = vmatpush2.msra.mxu0 0.0
    %3343 = vmatprep.subr.mxu0 0.0
    %3344 = vmatpush2.msra.mxu0 0.0
    %3345 = vmatprep.subr.mxu0 0.0
    %3346 = vmatpush2.msra.mxu0 0.0
    %3347 = vmatprep.subr.mxu0 0.0
    %3348 = vmatpush2.msra.mxu0 0.0
    %3349 = vmatprep.subr.mxu0 0.0
    %3350 = vmatpush2.msra.mxu0 0.0
    %3351 = vmatprep.subr.mxu0 0.0
    %3352 = vmatpush2.msra.mxu0 0.0
    %3353 = vmatprep.subr.mxu0 0.0
    %3354 = vmatpush2.msra.mxu0 0.0
    %3355 = vmatprep.subr.mxu0 0.0
    %3356 = vmatpush2.msra.mxu0 0.0
    %3357 = vmatprep.subr.mxu0 0.0
    %3358 = vmatpush2.msra.mxu0 0.0
    %3359 = vmatprep.subr.mxu0 0.0
    %3360 = vmatpush2.msra.mxu0 0.0
    %3361 = vmatprep.subr.mxu0 0.0
    %3362 = vmatpush2.msra.mxu0 0.0
    %3363 = vmatprep.subr.mxu0 0.0
    %3364 = vmatpush2.msra.mxu0 0.0
    %3365 = vmatprep.subr.mxu0 0.0
    %3366 = vmatpush2.msra.mxu0 0.0
    %3367 = vmatprep.subr.mxu0 0.0
    %3368 = vmatpush2.msra.mxu0 0.0
    %3369 = vmatprep.subr.mxu0 0.0
    %3370 = vmatpush2.msra.mxu0 0.0
    %3371 = vmatprep.mubr.f32.mxu0 0.0
    %3372 = vmatmul.mubr.f32.gmra.mxu0 %v3305
    %v3373 = vpop.f32.mrf.mxu0
    %v3374 = vadd.f32 0.0, %v3373
    %v3375 = vpop.f32.mrf.mxu0
    %3376 = vdwg.mxu0
    %v3378 = vsel %vm146, %v3374, 0
    %3380 = vmatprep.subr.mxu0 0.0
    %3381 = vmatpush1.msra.mxu0 0.0
    %3382 = vmatprep.subr.mxu0 0.0
    %3383 = vmatpush1.msra.mxu0 0.0
    %3384 = vmatprep.subr.mxu0 0.0
    %3385 = vmatpush1.msra.mxu0 0.0
    %3386 = vmatprep.subr.mxu0 0.0
    %3387 = vmatpush1.msra.mxu0 0.0
    %3388 = vmatprep.subr.mxu0 0.0
    %3389 = vmatpush1.msra.mxu0 0.0
    %3390 = vmatprep.subr.mxu0 0.0
    %3391 = vmatpush1.msra.mxu0 0.0
    %3392 = vmatprep.subr.mxu0 0.0
    %3393 = vmatpush1.msra.mxu0 0.0
    %3394 = vmatprep.subr.mxu0 0.0
    %3395 = vmatpush1.msra.mxu0 0.0
    %3396 = vmatprep.subr.mxu0 0.0
    %3397 = vmatpush1.msra.mxu0 0.0
    %3398 = vmatprep.subr.mxu0 0.0
    %3399 = vmatpush1.msra.mxu0 0.0
    %3400 = vmatprep.subr.mxu0 0.0
    %3401 = vmatpush1.msra.mxu0 0.0
    %3402 = vmatprep.subr.mxu0 0.0
    %3403 = vmatpush1.msra.mxu0 0.0
    %3404 = vmatprep.subr.mxu0 0.0
    %3405 = vmatpush1.msra.mxu0 0.0
    %3406 = vmatprep.subr.mxu0 0.0
    %3407 = vmatpush1.msra.mxu0 0.0
    %3408 = vmatprep.subr.mxu0 0.0
    %3409 = vmatpush1.msra.mxu0 0.0
    %3410 = vmatprep.subr.mxu0 0.0
    %3411 = vmatpush1.msra.mxu0 %v2605
    %3412 = vmatprep.subr.mxu0 0.0
    %3413 = vmatpush2.msra.mxu0 0.0
    %3414 = vmatprep.subr.mxu0 0.0
    %3415 = vmatpush2.msra.mxu0 0.0
    %3416 = vmatprep.subr.mxu0 0.0
    %3417 = vmatpush2.msra.mxu0 0.0
    %3418 = vmatprep.subr.mxu0 0.0
    %3419 = vmatpush2.msra.mxu0 0.0
    %3420 = vmatprep.subr.mxu0 0.0
    %3421 = vmatpush2.msra.mxu0 0.0
    %3422 = vmatprep.subr.mxu0 0.0
    %3423 = vmatpush2.msra.mxu0 0.0
    %3424 = vmatprep.subr.mxu0 0.0
    %3425 = vmatpush2.msra.mxu0 0.0
    %3426 = vmatprep.subr.mxu0 0.0
    %3427 = vmatpush2.msra.mxu0 0.0
    %3428 = vmatprep.subr.mxu0 0.0
    %3429 = vmatpush2.msra.mxu0 0.0
    %3430 = vmatprep.subr.mxu0 0.0
    %3431 = vmatpush2.msra.mxu0 0.0
    %3432 = vmatprep.subr.mxu0 0.0
    %3433 = vmatpush2.msra.mxu0 0.0
    %3434 = vmatprep.subr.mxu0 0.0
    %3435 = vmatpush2.msra.mxu0 0.0
    %3436 = vmatprep.subr.mxu0 0.0
    %3437 = vmatpush2.msra.mxu0 0.0
    %3438 = vmatprep.subr.mxu0 0.0
    %3439 = vmatpush2.msra.mxu0 0.0
    %3440 = vmatprep.subr.mxu0 0.0
    %3441 = vmatpush2.msra.mxu0 0.0
    %3442 = vmatprep.subr.mxu0 0.0
    %3443 = vmatpush2.msra.mxu0 0.0
    %3444 = vmatprep.mubr.f32.mxu0 0.0
    %3445 = vmatmul.mubr.f32.gmra.mxu0 %v3378
    %v3446 = vpop.f32.mrf.mxu0
    %v3447 = vadd.f32 %v2872, %v3446
    %v3448 = vpop.f32.mrf.mxu0
    %3449 = vdwg.mxu0
    %v3450 = vsel %vm387, %v3447, -inf
    %3451 = vmax.xlane.f32.xlu0 %v3450
    %v3452 = vpop.xlane.xlu0 %3451
    %v3453 = vsub.f32 %v3447, %v3452
    %v3454 = vmul.f32 %v3453, 1.442695
    %v3455 = vpow.pop %v3454
    %v3456 = vsel %vm387, %v3455, 0.0
    %3457 = vadd.xlane.f32.xlu0 %v3456
    %v3458 = vpop.xlane.xlu0 %3457
    %v3459 = vlog2.pop %v3458
    %v3460 = vmul.f32 %v3459, 0.6931472
    %v3461 = vsub.f32 %v3453, %v3460
    %3462 = vrot.lane.b32.xlu0 %v2695, 104
    %v3463 = vpop.permute.xlu0 %3462
    %3464 = vrot.lane.b32.xlu0 %v2695, 72
    %v3465 = vpop.permute.xlu0 %3464
    %v3466 = vsel %vm146, %v3463, 0
    %v3468 = vsel %vm146, %v3465, 0
    %3470 = vmatprep.subr.mxu0 0.0
    %3471 = vmatpush1.xpose.msra.mxu0 0.0
    %3472 = vmatprep.subr.mxu0 0.0
    %3473 = vmatpush1.xpose.msra.mxu0 0.0
    %3474 = vmatprep.subr.mxu0 0.0
    %3475 = vmatpush1.xpose.msra.mxu0 0.0
    %3476 = vmatprep.subr.mxu0 0.0
    %3477 = vmatpush1.xpose.msra.mxu0 0.0
    %3478 = vmatprep.subr.mxu0 0.0
    %3479 = vmatpush1.xpose.msra.mxu0 0.0
    %3480 = vmatprep.subr.mxu0 0.0
    %3481 = vmatpush1.xpose.msra.mxu0 0.0
    %3482 = vmatprep.subr.mxu0 0.0
    %3483 = vmatpush1.xpose.msra.mxu0 0.0
    %3484 = vmatprep.subr.mxu0 0.0
    %3485 = vmatpush1.xpose.msra.mxu0 0.0
    %3486 = vmatprep.subr.mxu0 0.0
    %3487 = vmatpush1.xpose.msra.mxu0 0.0
    %3488 = vmatprep.subr.mxu0 0.0
    %3489 = vmatpush1.xpose.msra.mxu0 0.0
    %3490 = vmatprep.subr.mxu0 0.0
    %3491 = vmatpush1.xpose.msra.mxu0 0.0
    %3492 = vmatprep.subr.mxu0 0.0
    %3493 = vmatpush1.xpose.msra.mxu0 0.0
    %3494 = vmatprep.subr.mxu0 0.0
    %3495 = vmatpush1.xpose.msra.mxu0 0.0
    %3496 = vmatprep.subr.mxu0 0.0
    %3497 = vmatpush1.xpose.msra.mxu0 0.0
    %3498 = vmatprep.subr.mxu0 0.0
    %3499 = vmatpush1.xpose.msra.mxu0 0.0
    %3500 = vmatprep.subr.mxu0 0.0
    %3501 = vmatpush1.xpose.msra.mxu0 %v3468
    %3502 = vmatprep.subr.mxu0 0.0
    %3503 = vmatpush2.xpose.msra.mxu0 0.0
    %3504 = vmatprep.subr.mxu0 0.0
    %3505 = vmatpush2.xpose.msra.mxu0 0.0
    %3506 = vmatprep.subr.mxu0 0.0
    %3507 = vmatpush2.xpose.msra.mxu0 0.0
    %3508 = vmatprep.subr.mxu0 0.0
    %3509 = vmatpush2.xpose.msra.mxu0 0.0
    %3510 = vmatprep.subr.mxu0 0.0
    %3511 = vmatpush2.xpose.msra.mxu0 0.0
    %3512 = vmatprep.subr.mxu0 0.0
    %3513 = vmatpush2.xpose.msra.mxu0 0.0
    %3514 = vmatprep.subr.mxu0 0.0
    %3515 = vmatpush2.xpose.msra.mxu0 0.0
    %3516 = vmatprep.subr.mxu0 0.0
    %3517 = vmatpush2.xpose.msra.mxu0 0.0
    %3518 = vmatprep.subr.mxu0 0.0
    %3519 = vmatpush2.xpose.msra.mxu0 0.0
    %3520 = vmatprep.subr.mxu0 0.0
    %3521 = vmatpush2.xpose.msra.mxu0 0.0
    %3522 = vmatprep.subr.mxu0 0.0
    %3523 = vmatpush2.xpose.msra.mxu0 0.0
    %3524 = vmatprep.subr.mxu0 0.0
    %3525 = vmatpush2.xpose.msra.mxu0 0.0
    %3526 = vmatprep.subr.mxu0 0.0
    %3527 = vmatpush2.xpose.msra.mxu0 0.0
    %3528 = vmatprep.subr.mxu0 0.0
    %3529 = vmatpush2.xpose.msra.mxu0 0.0
    %3530 = vmatprep.subr.mxu0 0.0
    %3531 = vmatpush2.xpose.msra.mxu0 0.0
    %3532 = vmatprep.subr.mxu0 0.0
    %3533 = vmatpush2.xpose.msra.mxu0 0.0
    %3534 = vmatprep.mubr.f32.mxu0 0.0
    %3535 = vmatmul.mubr.f32.gmra.mxu0 %v3466
    %v3536 = vpop.f32.mrf.mxu0
    %v3537 = vadd.f32 0.0, %v3536
    %v3538 = vpop.f32.mrf.mxu0
    %3539 = vdwg.mxu0
    %v3540 = vmul.f32 %v3537, 0.35355338
    %v3541 = vadd.f32 %v3540, %v26
    %v3542 = vsel %vm146, %v3541, -inf
    %3543 = vmax.xlane.f32.xlu0 %v3542
    %v3544 = vpop.xlane.xlu0 %3543
    %v3545 = vsub.f32 %v3541, %v3544
    %v3546 = vmul.f32 %v3545, 1.442695
    %v3547 = vpow.pop %v3546
    %v3548 = vsel %vm146, %v3547, 0.0
    %3549 = vadd.xlane.f32.xlu0 %v3548
    %v3550 = vpop.xlane.xlu0 %3549
    %v3551 = vrcp.pop %v3550
    %v3552 = vmul.f32 %v3547, %v3551
    %3553 = vrot.lane.b32.xlu0 %v2695, 40
    %v3554 = vpop.permute.xlu0 %3553
    %v3557 = vsel %vm146, %v3552, 0
    %3559 = vmatprep.subr.mxu0 0.0
    %3560 = vmatpush1.msra.mxu0 0.0
    %3561 = vmatprep.subr.mxu0 0.0
    %3562 = vmatpush1.msra.mxu0 0.0
    %3563 = vmatprep.subr.mxu0 0.0
    %3564 = vmatpush1.msra.mxu0 0.0
    %3565 = vmatprep.subr.mxu0 0.0
    %3566 = vmatpush1.msra.mxu0 0.0
    %3567 = vmatprep.subr.mxu0 0.0
    %3568 = vmatpush1.msra.mxu0 0.0
    %3569 = vmatprep.subr.mxu0 0.0
    %3570 = vmatpush1.msra.mxu0 0.0
    %3571 = vmatprep.subr.mxu0 0.0
    %3572 = vmatpush1.msra.mxu0 0.0
    %3573 = vmatprep.subr.mxu0 0.0
    %3574 = vmatpush1.msra.mxu0 0.0
    %3575 = vmatprep.subr.mxu0 0.0
    %3576 = vmatpush1.msra.mxu0 0.0
    %3577 = vmatprep.subr.mxu0 0.0
    %3578 = vmatpush1.msra.mxu0 0.0
    %3579 = vmatprep.subr.mxu0 0.0
    %3580 = vmatpush1.msra.mxu0 0.0
    %3581 = vmatprep.subr.mxu0 0.0
    %3582 = vmatpush1.msra.mxu0 0.0
    %3583 = vmatprep.subr.mxu0 0.0
    %3584 = vmatpush1.msra.mxu0 0.0
    %3585 = vmatprep.subr.mxu0 0.0
    %3586 = vmatpush1.msra.mxu0 0.0
    %3587 = vmatprep.subr.mxu0 0.0
    %3588 = vmatpush1.msra.mxu0 0.0
    %3589 = vmatprep.subr.mxu0 0.0
    %3590 = vmatpush1.msra.mxu0 %v3554
    %3591 = vmatprep.subr.mxu0 0.0
    %3592 = vmatpush2.msra.mxu0 0.0
    %3593 = vmatprep.subr.mxu0 0.0
    %3594 = vmatpush2.msra.mxu0 0.0
    %3595 = vmatprep.subr.mxu0 0.0
    %3596 = vmatpush2.msra.mxu0 0.0
    %3597 = vmatprep.subr.mxu0 0.0
    %3598 = vmatpush2.msra.mxu0 0.0
    %3599 = vmatprep.subr.mxu0 0.0
    %3600 = vmatpush2.msra.mxu0 0.0
    %3601 = vmatprep.subr.mxu0 0.0
    %3602 = vmatpush2.msra.mxu0 0.0
    %3603 = vmatprep.subr.mxu0 0.0
    %3604 = vmatpush2.msra.mxu0 0.0
    %3605 = vmatprep.subr.mxu0 0.0
    %3606 = vmatpush2.msra.mxu0 0.0
    %3607 = vmatprep.subr.mxu0 0.0
    %3608 = vmatpush2.msra.mxu0 0.0
    %3609 = vmatprep.subr.mxu0 0.0
    %3610 = vmatpush2.msra.mxu0 0.0
    %3611 = vmatprep.subr.mxu0 0.0
    %3612 = vmatpush2.msra.mxu0 0.0
    %3613 = vmatprep.subr.mxu0 0.0
    %3614 = vmatpush2.msra.mxu0 0.0
    %3615 = vmatprep.subr.mxu0 0.0
    %3616 = vmatpush2.msra.mxu0 0.0
    %3617 = vmatprep.subr.mxu0 0.0
    %3618 = vmatpush2.msra.mxu0 0.0
    %3619 = vmatprep.subr.mxu0 0.0
    %3620 = vmatpush2.msra.mxu0 0.0
    %3621 = vmatprep.subr.mxu0 0.0
    %3622 = vmatpush2.msra.mxu0 0.0
    %3623 = vmatprep.mubr.f32.mxu0 0.0
    %3624 = vmatmul.mubr.f32.gmra.mxu0 %v3557
    %v3625 = vpop.f32.mrf.mxu0
    %v3626 = vadd.f32 0.0, %v3625
    %v3627 = vpop.f32.mrf.mxu0
    %3628 = vdwg.mxu0
    %v3630 = vsel %vm146, %v3626, 0
    %3632 = vmatprep.subr.mxu0 0.0
    %3633 = vmatpush1.msra.mxu0 0.0
    %3634 = vmatprep.subr.mxu0 0.0
    %3635 = vmatpush1.msra.mxu0 0.0
    %3636 = vmatprep.subr.mxu0 0.0
    %3637 = vmatpush1.msra.mxu0 0.0
    %3638 = vmatprep.subr.mxu0 0.0
    %3639 = vmatpush1.msra.mxu0 0.0
    %3640 = vmatprep.subr.mxu0 0.0
    %3641 = vmatpush1.msra.mxu0 0.0
    %3642 = vmatprep.subr.mxu0 0.0
    %3643 = vmatpush1.msra.mxu0 0.0
    %3644 = vmatprep.subr.mxu0 0.0
    %3645 = vmatpush1.msra.mxu0 0.0
    %3646 = vmatprep.subr.mxu0 0.0
    %3647 = vmatpush1.msra.mxu0 0.0
    %3648 = vmatprep.subr.mxu0 0.0
    %3649 = vmatpush1.msra.mxu0 0.0
    %3650 = vmatprep.subr.mxu0 0.0
    %3651 = vmatpush1.msra.mxu0 0.0
    %3652 = vmatprep.subr.mxu0 0.0
    %3653 = vmatpush1.msra.mxu0 0.0
    %3654 = vmatprep.subr.mxu0 0.0
    %3655 = vmatpush1.msra.mxu0 0.0
    %3656 = vmatprep.subr.mxu0 0.0
    %3657 = vmatpush1.msra.mxu0 0.0
    %3658 = vmatprep.subr.mxu0 0.0
    %3659 = vmatpush1.msra.mxu0 0.0
    %3660 = vmatprep.subr.mxu0 0.0
    %3661 = vmatpush1.msra.mxu0 0.0
    %3662 = vmatprep.subr.mxu0 0.0
    %3663 = vmatpush1.msra.mxu0 %v2605
    %3664 = vmatprep.subr.mxu0 0.0
    %3665 = vmatpush2.msra.mxu0 0.0
    %3666 = vmatprep.subr.mxu0 0.0
    %3667 = vmatpush2.msra.mxu0 0.0
    %3668 = vmatprep.subr.mxu0 0.0
    %3669 = vmatpush2.msra.mxu0 0.0
    %3670 = vmatprep.subr.mxu0 0.0
    %3671 = vmatpush2.msra.mxu0 0.0
    %3672 = vmatprep.subr.mxu0 0.0
    %3673 = vmatpush2.msra.mxu0 0.0
    %3674 = vmatprep.subr.mxu0 0.0
    %3675 = vmatpush2.msra.mxu0 0.0
    %3676 = vmatprep.subr.mxu0 0.0
    %3677 = vmatpush2.msra.mxu0 0.0
    %3678 = vmatprep.subr.mxu0 0.0
    %3679 = vmatpush2.msra.mxu0 0.0
    %3680 = vmatprep.subr.mxu0 0.0
    %3681 = vmatpush2.msra.mxu0 0.0
    %3682 = vmatprep.subr.mxu0 0.0
    %3683 = vmatpush2.msra.mxu0 0.0
    %3684 = vmatprep.subr.mxu0 0.0
    %3685 = vmatpush2.msra.mxu0 0.0
    %3686 = vmatprep.subr.mxu0 0.0
    %3687 = vmatpush2.msra.mxu0 0.0
    %3688 = vmatprep.subr.mxu0 0.0
    %3689 = vmatpush2.msra.mxu0 0.0
    %3690 = vmatprep.subr.mxu0 0.0
    %3691 = vmatpush2.msra.mxu0 0.0
    %3692 = vmatprep.subr.mxu0 0.0
    %3693 = vmatpush2.msra.mxu0 0.0
    %3694 = vmatprep.subr.mxu0 0.0
    %3695 = vmatpush2.msra.mxu0 0.0
    %3696 = vmatprep.mubr.f32.mxu0 0.0
    %3697 = vmatmul.mubr.f32.gmra.mxu0 %v3630
    %v3698 = vpop.f32.mrf.mxu0
    %v3699 = vadd.f32 %v2872, %v3698
    %v3700 = vpop.f32.mrf.mxu0
    %3701 = vdwg.mxu0
    %v3702 = vsel %vm387, %v3699, -inf
    %3703 = vmax.xlane.f32.xlu0 %v3702
    %v3704 = vpop.xlane.xlu0 %3703
    %v3705 = vsub.f32 %v3699, %v3704
    %v3706 = vmul.f32 %v3705, 1.442695
    %v3707 = vpow.pop %v3706
    %v3708 = vsel %vm387, %v3707, 0.0
    %3709 = vadd.xlane.f32.xlu0 %v3708
    %v3710 = vpop.xlane.xlu0 %3709
    %v3711 = vlog2.pop %v3710
    %v3712 = vmul.f32 %v3711, 0.6931472
    %v3713 = vsub.f32 %v3705, %v3712
    %3714 = vrot.lane.b32.xlu0 %v3122, 8
    %v3715 = vpop.permute.xlu0 %3714
    %3717 = vrot.lane.b32.xlu0 %v3374, 16
    %v3718 = vpop.permute.xlu0 %3717
    %3720 = vrot.lane.b32.xlu0 %v3626, 24
    %v3721 = vpop.permute.xlu0 %3720
    %v3723 = vsel %vm146, %v2866, %v3715
    %v3724 = vsel %vm1166, %v3723, %v3718
    %v3725 = vsel %vm1168, %v3724, %v3721
    %3727 = vrot.lane.b32.xlu0 %v3209, 4
    %v3728 = vpop.permute.xlu0 %3727
    %3731 = vrot.lane.b32.xlu0 %v3461, 8
    %v3732 = vpop.permute.xlu0 %3731
    %3735 = vrot.lane.b32.xlu0 %v3713, 12
    %v3736 = vpop.permute.xlu0 %3735
    %v3738 = vsel %vm387, %v2957, %v3728
    %v3739 = vsel %vm146, %v3738, %v3732
    %v3740 = vsel %vm1184, %v3739, %v3736
    %3742 = vrot.lane.b32.xlu0 %v3740, 112
    %v3743 = vpop.permute.xlu0 %3742
    %vm3745 = vcmask 1048448
    %3746 = vst.msk [vmem:[#allocation2] sm:$0xff] %vm3745, %v3743
    %3748 = vrot.lane.b32.xlu0 %v2700, 96
    %v3749 = vpop.permute.xlu0 %3748
    %v3750 = vsel %vm146, %v2700, 0
    %v3752 = vsel %vm146, %v3749, 0
    %3754 = vmatprep.subr.mxu0 0.0
    %3755 = vmatpush1.xpose.msra.mxu0 0.0
    %3756 = vmatprep.subr.mxu0 0.0
    %3757 = vmatpush1.xpose.msra.mxu0 0.0
    %3758 = vmatprep.subr.mxu0 0.0
    %3759 = vmatpush1.xpose.msra.mxu0 0.0
    %3760 = vmatprep.subr.mxu0 0.0
    %3761 = vmatpush1.xpose.msra.mxu0 0.0
    %3762 = vmatprep.subr.mxu0 0.0
    %3763 = vmatpush1.xpose.msra.mxu0 0.0
    %3764 = vmatprep.subr.mxu0 0.0
    %3765 = vmatpush1.xpose.msra.mxu0 0.0
    %3766 = vmatprep.subr.mxu0 0.0
    %3767 = vmatpush1.xpose.msra.mxu0 0.0
    %3768 = vmatprep.subr.mxu0 0.0
    %3769 = vmatpush1.xpose.msra.mxu0 0.0
    %3770 = vmatprep.subr.mxu0 0.0
    %3771 = vmatpush1.xpose.msra.mxu0 0.0
    %3772 = vmatprep.subr.mxu0 0.0
    %3773 = vmatpush1.xpose.msra.mxu0 0.0
    %3774 = vmatprep.subr.mxu0 0.0
    %3775 = vmatpush1.xpose.msra.mxu0 0.0
    %3776 = vmatprep.subr.mxu0 0.0
    %3777 = vmatpush1.xpose.msra.mxu0 0.0
    %3778 = vmatprep.subr.mxu0 0.0
    %3779 = vmatpush1.xpose.msra.mxu0 0.0
    %3780 = vmatprep.subr.mxu0 0.0
    %3781 = vmatpush1.xpose.msra.mxu0 0.0
    %3782 = vmatprep.subr.mxu0 0.0
    %3783 = vmatpush1.xpose.msra.mxu0 0.0
    %3784 = vmatprep.subr.mxu0 0.0
    %3785 = vmatpush1.xpose.msra.mxu0 %v3752
    %3786 = vmatprep.subr.mxu0 0.0
    %3787 = vmatpush2.xpose.msra.mxu0 0.0
    %3788 = vmatprep.subr.mxu0 0.0
    %3789 = vmatpush2.xpose.msra.mxu0 0.0
    %3790 = vmatprep.subr.mxu0 0.0
    %3791 = vmatpush2.xpose.msra.mxu0 0.0
    %3792 = vmatprep.subr.mxu0 0.0
    %3793 = vmatpush2.xpose.msra.mxu0 0.0
    %3794 = vmatprep.subr.mxu0 0.0
    %3795 = vmatpush2.xpose.msra.mxu0 0.0
    %3796 = vmatprep.subr.mxu0 0.0
    %3797 = vmatpush2.xpose.msra.mxu0 0.0
    %3798 = vmatprep.subr.mxu0 0.0
    %3799 = vmatpush2.xpose.msra.mxu0 0.0
    %3800 = vmatprep.subr.mxu0 0.0
    %3801 = vmatpush2.xpose.msra.mxu0 0.0
    %3802 = vmatprep.subr.mxu0 0.0
    %3803 = vmatpush2.xpose.msra.mxu0 0.0
    %3804 = vmatprep.subr.mxu0 0.0
    %3805 = vmatpush2.xpose.msra.mxu0 0.0
    %3806 = vmatprep.subr.mxu0 0.0
    %3807 = vmatpush2.xpose.msra.mxu0 0.0
    %3808 = vmatprep.subr.mxu0 0.0
    %3809 = vmatpush2.xpose.msra.mxu0 0.0
    %3810 = vmatprep.subr.mxu0 0.0
    %3811 = vmatpush2.xpose.msra.mxu0 0.0
    %3812 = vmatprep.subr.mxu0 0.0
    %3813 = vmatpush2.xpose.msra.mxu0 0.0
    %3814 = vmatprep.subr.mxu0 0.0
    %3815 = vmatpush2.xpose.msra.mxu0 0.0
    %3816 = vmatprep.subr.mxu0 0.0
    %3817 = vmatpush2.xpose.msra.mxu0 0.0
    %3818 = vmatprep.mubr.f32.mxu0 0.0
    %3819 = vmatmul.mubr.f32.gmra.mxu0 %v3750
    %v3820 = vpop.f32.mrf.mxu0
    %v3821 = vadd.f32 0.0, %v3820
    %v3822 = vpop.f32.mrf.mxu0
    %3823 = vdwg.mxu0
    %v3824 = vmul.f32 %v3821, 0.35355338
    %v3825 = vadd.f32 %v3824, %v28
    %v3826 = vsel %vm146, %v3825, -inf
    %3827 = vmax.xlane.f32.xlu0 %v3826
    %v3828 = vpop.xlane.xlu0 %3827
    %v3829 = vsub.f32 %v3825, %v3828
    %v3830 = vmul.f32 %v3829, 1.442695
    %v3831 = vpow.pop %v3830
    %v3832 = vsel %vm146, %v3831, 0.0
    %3833 = vadd.xlane.f32.xlu0 %v3832
    %v3834 = vpop.xlane.xlu0 %3833
    %v3835 = vrcp.pop %v3834
    %v3836 = vmul.f32 %v3831, %v3835
    %3837 = vrot.lane.b32.xlu0 %v2700, 64
    %v3838 = vpop.permute.xlu0 %3837
    %v3841 = vsel %vm146, %v3836, 0
    %3843 = vmatprep.subr.mxu0 0.0
    %3844 = vmatpush1.msra.mxu0 0.0
    %3845 = vmatprep.subr.mxu0 0.0
    %3846 = vmatpush1.msra.mxu0 0.0
    %3847 = vmatprep.subr.mxu0 0.0
    %3848 = vmatpush1.msra.mxu0 0.0
    %3849 = vmatprep.subr.mxu0 0.0
    %3850 = vmatpush1.msra.mxu0 0.0
    %3851 = vmatprep.subr.mxu0 0.0
    %3852 = vmatpush1.msra.mxu0 0.0
    %3853 = vmatprep.subr.mxu0 0.0
    %3854 = vmatpush1.msra.mxu0 0.0
    %3855 = vmatprep.subr.mxu0 0.0
    %3856 = vmatpush1.msra.mxu0 0.0
    %3857 = vmatprep.subr.mxu0 0.0
    %3858 = vmatpush1.msra.mxu0 0.0
    %3859 = vmatprep.subr.mxu0 0.0
    %3860 = vmatpush1.msra.mxu0 0.0
    %3861 = vmatprep.subr.mxu0 0.0
    %3862 = vmatpush1.msra.mxu0 0.0
    %3863 = vmatprep.subr.mxu0 0.0
    %3864 = vmatpush1.msra.mxu0 0.0
    %3865 = vmatprep.subr.mxu0 0.0
    %3866 = vmatpush1.msra.mxu0 0.0
    %3867 = vmatprep.subr.mxu0 0.0
    %3868 = vmatpush1.msra.mxu0 0.0
    %3869 = vmatprep.subr.mxu0 0.0
    %3870 = vmatpush1.msra.mxu0 0.0
    %3871 = vmatprep.subr.mxu0 0.0
    %3872 = vmatpush1.msra.mxu0 0.0
    %3873 = vmatprep.subr.mxu0 0.0
    %3874 = vmatpush1.msra.mxu0 %v3838
    %3875 = vmatprep.subr.mxu0 0.0
    %3876 = vmatpush2.msra.mxu0 0.0
    %3877 = vmatprep.subr.mxu0 0.0
    %3878 = vmatpush2.msra.mxu0 0.0
    %3879 = vmatprep.subr.mxu0 0.0
    %3880 = vmatpush2.msra.mxu0 0.0
    %3881 = vmatprep.subr.mxu0 0.0
    %3882 = vmatpush2.msra.mxu0 0.0
    %3883 = vmatprep.subr.mxu0 0.0
    %3884 = vmatpush2.msra.mxu0 0.0
    %3885 = vmatprep.subr.mxu0 0.0
    %3886 = vmatpush2.msra.mxu0 0.0
    %3887 = vmatprep.subr.mxu0 0.0
    %3888 = vmatpush2.msra.mxu0 0.0
    %3889 = vmatprep.subr.mxu0 0.0
    %3890 = vmatpush2.msra.mxu0 0.0
    %3891 = vmatprep.subr.mxu0 0.0
    %3892 = vmatpush2.msra.mxu0 0.0
    %3893 = vmatprep.subr.mxu0 0.0
    %3894 = vmatpush2.msra.mxu0 0.0
    %3895 = vmatprep.subr.mxu0 0.0
    %3896 = vmatpush2.msra.mxu0 0.0
    %3897 = vmatprep.subr.mxu0 0.0
    %3898 = vmatpush2.msra.mxu0 0.0
    %3899 = vmatprep.subr.mxu0 0.0
    %3900 = vmatpush2.msra.mxu0 0.0
    %3901 = vmatprep.subr.mxu0 0.0
    %3902 = vmatpush2.msra.mxu0 0.0
    %3903 = vmatprep.subr.mxu0 0.0
    %3904 = vmatpush2.msra.mxu0 0.0
    %3905 = vmatprep.subr.mxu0 0.0
    %3906 = vmatpush2.msra.mxu0 0.0
    %3907 = vmatprep.mubr.f32.mxu0 0.0
    %3908 = vmatmul.mubr.f32.gmra.mxu0 %v3841
    %v3909 = vpop.f32.mrf.mxu0
    %v3910 = vadd.f32 0.0, %v3909
    %v3911 = vpop.f32.mrf.mxu0
    %3912 = vdwg.mxu0
    %v3914 = vsel %vm146, %v3910, 0
    %3916 = vmatprep.subr.mxu0 0.0
    %3917 = vmatpush1.msra.mxu0 0.0
    %3918 = vmatprep.subr.mxu0 0.0
    %3919 = vmatpush1.msra.mxu0 0.0
    %3920 = vmatprep.subr.mxu0 0.0
    %3921 = vmatpush1.msra.mxu0 0.0
    %3922 = vmatprep.subr.mxu0 0.0
    %3923 = vmatpush1.msra.mxu0 0.0
    %3924 = vmatprep.subr.mxu0 0.0
    %3925 = vmatpush1.msra.mxu0 0.0
    %3926 = vmatprep.subr.mxu0 0.0
    %3927 = vmatpush1.msra.mxu0 0.0
    %3928 = vmatprep.subr.mxu0 0.0
    %3929 = vmatpush1.msra.mxu0 0.0
    %3930 = vmatprep.subr.mxu0 0.0
    %3931 = vmatpush1.msra.mxu0 0.0
    %3932 = vmatprep.subr.mxu0 0.0
    %3933 = vmatpush1.msra.mxu0 0.0
    %3934 = vmatprep.subr.mxu0 0.0
    %3935 = vmatpush1.msra.mxu0 0.0
    %3936 = vmatprep.subr.mxu0 0.0
    %3937 = vmatpush1.msra.mxu0 0.0
    %3938 = vmatprep.subr.mxu0 0.0
    %3939 = vmatpush1.msra.mxu0 0.0
    %3940 = vmatprep.subr.mxu0 0.0
    %3941 = vmatpush1.msra.mxu0 0.0
    %3942 = vmatprep.subr.mxu0 0.0
    %3943 = vmatpush1.msra.mxu0 0.0
    %3944 = vmatprep.subr.mxu0 0.0
    %3945 = vmatpush1.msra.mxu0 0.0
    %3946 = vmatprep.subr.mxu0 0.0
    %3947 = vmatpush1.msra.mxu0 %v2605
    %3948 = vmatprep.subr.mxu0 0.0
    %3949 = vmatpush2.msra.mxu0 0.0
    %3950 = vmatprep.subr.mxu0 0.0
    %3951 = vmatpush2.msra.mxu0 0.0
    %3952 = vmatprep.subr.mxu0 0.0
    %3953 = vmatpush2.msra.mxu0 0.0
    %3954 = vmatprep.subr.mxu0 0.0
    %3955 = vmatpush2.msra.mxu0 0.0
    %3956 = vmatprep.subr.mxu0 0.0
    %3957 = vmatpush2.msra.mxu0 0.0
    %3958 = vmatprep.subr.mxu0 0.0
    %3959 = vmatpush2.msra.mxu0 0.0
    %3960 = vmatprep.subr.mxu0 0.0
    %3961 = vmatpush2.msra.mxu0 0.0
    %3962 = vmatprep.subr.mxu0 0.0
    %3963 = vmatpush2.msra.mxu0 0.0
    %3964 = vmatprep.subr.mxu0 0.0
    %3965 = vmatpush2.msra.mxu0 0.0
    %3966 = vmatprep.subr.mxu0 0.0
    %3967 = vmatpush2.msra.mxu0 0.0
    %3968 = vmatprep.subr.mxu0 0.0
    %3969 = vmatpush2.msra.mxu0 0.0
    %3970 = vmatprep.subr.mxu0 0.0
    %3971 = vmatpush2.msra.mxu0 0.0
    %3972 = vmatprep.subr.mxu0 0.0
    %3973 = vmatpush2.msra.mxu0 0.0
    %3974 = vmatprep.subr.mxu0 0.0
    %3975 = vmatpush2.msra.mxu0 0.0
    %3976 = vmatprep.subr.mxu0 0.0
    %3977 = vmatpush2.msra.mxu0 0.0
    %3978 = vmatprep.subr.mxu0 0.0
    %3979 = vmatpush2.msra.mxu0 0.0
    %3980 = vmatprep.mubr.f32.mxu0 0.0
    %3981 = vmatmul.mubr.f32.gmra.mxu0 %v3914
    %v3982 = vpop.f32.mrf.mxu0
    %v3983 = vadd.f32 %v2872, %v3982
    %v3984 = vpop.f32.mrf.mxu0
    %3985 = vdwg.mxu0
    %v3986 = vsel %vm387, %v3983, -inf
    %3987 = vmax.xlane.f32.xlu0 %v3986
    %v3988 = vpop.xlane.xlu0 %3987
    %v3989 = vsub.f32 %v3983, %v3988
    %v3990 = vmul.f32 %v3989, 1.442695
    %v3991 = vpow.pop %v3990
    %v3992 = vsel %vm387, %v3991, 0.0
    %3993 = vadd.xlane.f32.xlu0 %v3992
    %v3994 = vpop.xlane.xlu0 %3993
    %v3995 = vlog2.pop %v3994
    %v3996 = vmul.f32 %v3995, 0.6931472
    %v3997 = vsub.f32 %v3989, %v3996
    %3998 = vrot.lane.b32.xlu0 %v2700, 120
    %v3999 = vpop.permute.xlu0 %3998
    %4000 = vrot.lane.b32.xlu0 %v2700, 88
    %v4001 = vpop.permute.xlu0 %4000
    %v4002 = vsel %vm146, %v3999, 0
    %v4004 = vsel %vm146, %v4001, 0
    %4006 = vmatprep.subr.mxu0 0.0
    %4007 = vmatpush1.xpose.msra.mxu0 0.0
    %4008 = vmatprep.subr.mxu0 0.0
    %4009 = vmatpush1.xpose.msra.mxu0 0.0
    %4010 = vmatprep.subr.mxu0 0.0
    %4011 = vmatpush1.xpose.msra.mxu0 0.0
    %4012 = vmatprep.subr.mxu0 0.0
    %4013 = vmatpush1.xpose.msra.mxu0 0.0
    %4014 = vmatprep.subr.mxu0 0.0
    %4015 = vmatpush1.xpose.msra.mxu0 0.0
    %4016 = vmatprep.subr.mxu0 0.0
    %4017 = vmatpush1.xpose.msra.mxu0 0.0
    %4018 = vmatprep.subr.mxu0 0.0
    %4019 = vmatpush1.xpose.msra.mxu0 0.0
    %4020 = vmatprep.subr.mxu0 0.0
    %4021 = vmatpush1.xpose.msra.mxu0 0.0
    %4022 = vmatprep.subr.mxu0 0.0
    %4023 = vmatpush1.xpose.msra.mxu0 0.0
    %4024 = vmatprep.subr.mxu0 0.0
    %4025 = vmatpush1.xpose.msra.mxu0 0.0
    %4026 = vmatprep.subr.mxu0 0.0
    %4027 = vmatpush1.xpose.msra.mxu0 0.0
    %4028 = vmatprep.subr.mxu0 0.0
    %4029 = vmatpush1.xpose.msra.mxu0 0.0
    %4030 = vmatprep.subr.mxu0 0.0
    %4031 = vmatpush1.xpose.msra.mxu0 0.0
    %4032 = vmatprep.subr.mxu0 0.0
    %4033 = vmatpush1.xpose.msra.mxu0 0.0
    %4034 = vmatprep.subr.mxu0 0.0
    %4035 = vmatpush1.xpose.msra.mxu0 0.0
    %4036 = vmatprep.subr.mxu0 0.0
    %4037 = vmatpush1.xpose.msra.mxu0 %v4004
    %4038 = vmatprep.subr.mxu0 0.0
    %4039 = vmatpush2.xpose.msra.mxu0 0.0
    %4040 = vmatprep.subr.mxu0 0.0
    %4041 = vmatpush2.xpose.msra.mxu0 0.0
    %4042 = vmatprep.subr.mxu0 0.0
    %4043 = vmatpush2.xpose.msra.mxu0 0.0
    %4044 = vmatprep.subr.mxu0 0.0
    %4045 = vmatpush2.xpose.msra.mxu0 0.0
    %4046 = vmatprep.subr.mxu0 0.0
    %4047 = vmatpush2.xpose.msra.mxu0 0.0
    %4048 = vmatprep.subr.mxu0 0.0
    %4049 = vmatpush2.xpose.msra.mxu0 0.0
    %4050 = vmatprep.subr.mxu0 0.0
    %4051 = vmatpush2.xpose.msra.mxu0 0.0
    %4052 = vmatprep.subr.mxu0 0.0
    %4053 = vmatpush2.xpose.msra.mxu0 0.0
    %4054 = vmatprep.subr.mxu0 0.0
    %4055 = vmatpush2.xpose.msra.mxu0 0.0
    %4056 = vmatprep.subr.mxu0 0.0
    %4057 = vmatpush2.xpose.msra.mxu0 0.0
    %4058 = vmatprep.subr.mxu0 0.0
    %4059 = vmatpush2.xpose.msra.mxu0 0.0
    %4060 = vmatprep.subr.mxu0 0.0
    %4061 = vmatpush2.xpose.msra.mxu0 0.0
    %4062 = vmatprep.subr.mxu0 0.0
    %4063 = vmatpush2.xpose.msra.mxu0 0.0
    %4064 = vmatprep.subr.mxu0 0.0
    %4065 = vmatpush2.xpose.msra.mxu0 0.0
    %4066 = vmatprep.subr.mxu0 0.0
    %4067 = vmatpush2.xpose.msra.mxu0 0.0
    %4068 = vmatprep.subr.mxu0 0.0
    %4069 = vmatpush2.xpose.msra.mxu0 0.0
    %4070 = vmatprep.mubr.f32.mxu0 0.0
    %4071 = vmatmul.mubr.f32.gmra.mxu0 %v4002
    %v4072 = vpop.f32.mrf.mxu0
    %v4073 = vadd.f32 0.0, %v4072
    %v4074 = vpop.f32.mrf.mxu0
    %4075 = vdwg.mxu0
    %v4076 = vmul.f32 %v4073, 0.35355338
    %v4077 = vadd.f32 %v4076, %v28
    %v4078 = vsel %vm146, %v4077, -inf
    %4079 = vmax.xlane.f32.xlu0 %v4078
    %v4080 = vpop.xlane.xlu0 %4079
    %v4081 = vsub.f32 %v4077, %v4080
    %v4082 = vmul.f32 %v4081, 1.442695
    %v4083 = vpow.pop %v4082
    %v4084 = vsel %vm146, %v4083, 0.0
    %4085 = vadd.xlane.f32.xlu0 %v4084
    %v4086 = vpop.xlane.xlu0 %4085
    %v4087 = vrcp.pop %v4086
    %v4088 = vmul.f32 %v4083, %v4087
    %4089 = vrot.lane.b32.xlu0 %v2700, 56
    %v4090 = vpop.permute.xlu0 %4089
    %v4093 = vsel %vm146, %v4088, 0
    %4095 = vmatprep.subr.mxu0 0.0
    %4096 = vmatpush1.msra.mxu0 0.0
    %4097 = vmatprep.subr.mxu0 0.0
    %4098 = vmatpush1.msra.mxu0 0.0
    %4099 = vmatprep.subr.mxu0 0.0
    %4100 = vmatpush1.msra.mxu0 0.0
    %4101 = vmatprep.subr.mxu0 0.0
    %4102 = vmatpush1.msra.mxu0 0.0
    %4103 = vmatprep.subr.mxu0 0.0
    %4104 = vmatpush1.msra.mxu0 0.0
    %4105 = vmatprep.subr.mxu0 0.0
    %4106 = vmatpush1.msra.mxu0 0.0
    %4107 = vmatprep.subr.mxu0 0.0
    %4108 = vmatpush1.msra.mxu0 0.0
    %4109 = vmatprep.subr.mxu0 0.0
    %4110 = vmatpush1.msra.mxu0 0.0
    %4111 = vmatprep.subr.mxu0 0.0
    %4112 = vmatpush1.msra.mxu0 0.0
    %4113 = vmatprep.subr.mxu0 0.0
    %4114 = vmatpush1.msra.mxu0 0.0
    %4115 = vmatprep.subr.mxu0 0.0
    %4116 = vmatpush1.msra.mxu0 0.0
    %4117 = vmatprep.subr.mxu0 0.0
    %4118 = vmatpush1.msra.mxu0 0.0
    %4119 = vmatprep.subr.mxu0 0.0
    %4120 = vmatpush1.msra.mxu0 0.0
    %4121 = vmatprep.subr.mxu0 0.0
    %4122 = vmatpush1.msra.mxu0 0.0
    %4123 = vmatprep.subr.mxu0 0.0
    %4124 = vmatpush1.msra.mxu0 0.0
    %4125 = vmatprep.subr.mxu0 0.0
    %4126 = vmatpush1.msra.mxu0 %v4090
    %4127 = vmatprep.subr.mxu0 0.0
    %4128 = vmatpush2.msra.mxu0 0.0
    %4129 = vmatprep.subr.mxu0 0.0
    %4130 = vmatpush2.msra.mxu0 0.0
    %4131 = vmatprep.subr.mxu0 0.0
    %4132 = vmatpush2.msra.mxu0 0.0
    %4133 = vmatprep.subr.mxu0 0.0
    %4134 = vmatpush2.msra.mxu0 0.0
    %4135 = vmatprep.subr.mxu0 0.0
    %4136 = vmatpush2.msra.mxu0 0.0
    %4137 = vmatprep.subr.mxu0 0.0
    %4138 = vmatpush2.msra.mxu0 0.0
    %4139 = vmatprep.subr.mxu0 0.0
    %4140 = vmatpush2.msra.mxu0 0.0
    %4141 = vmatprep.subr.mxu0 0.0
    %4142 = vmatpush2.msra.mxu0 0.0
    %4143 = vmatprep.subr.mxu0 0.0
    %4144 = vmatpush2.msra.mxu0 0.0
    %4145 = vmatprep.subr.mxu0 0.0
    %4146 = vmatpush2.msra.mxu0 0.0
    %4147 = vmatprep.subr.mxu0 0.0
    %4148 = vmatpush2.msra.mxu0 0.0
    %4149 = vmatprep.subr.mxu0 0.0
    %4150 = vmatpush2.msra.mxu0 0.0
    %4151 = vmatprep.subr.mxu0 0.0
    %4152 = vmatpush2.msra.mxu0 0.0
    %4153 = vmatprep.subr.mxu0 0.0
    %4154 = vmatpush2.msra.mxu0 0.0
    %4155 = vmatprep.subr.mxu0 0.0
    %4156 = vmatpush2.msra.mxu0 0.0
    %4157 = vmatprep.subr.mxu0 0.0
    %4158 = vmatpush2.msra.mxu0 0.0
    %4159 = vmatprep.mubr.f32.mxu0 0.0
    %4160 = vmatmul.mubr.f32.gmra.mxu0 %v4093
    %v4161 = vpop.f32.mrf.mxu0
    %v4162 = vadd.f32 0.0, %v4161
    %v4163 = vpop.f32.mrf.mxu0
    %4164 = vdwg.mxu0
    %v4166 = vsel %vm146, %v4162, 0
    %4168 = vmatprep.subr.mxu0 0.0
    %4169 = vmatpush1.msra.mxu0 0.0
    %4170 = vmatprep.subr.mxu0 0.0
    %4171 = vmatpush1.msra.mxu0 0.0
    %4172 = vmatprep.subr.mxu0 0.0
    %4173 = vmatpush1.msra.mxu0 0.0
    %4174 = vmatprep.subr.mxu0 0.0
    %4175 = vmatpush1.msra.mxu0 0.0
    %4176 = vmatprep.subr.mxu0 0.0
    %4177 = vmatpush1.msra.mxu0 0.0
    %4178 = vmatprep.subr.mxu0 0.0
    %4179 = vmatpush1.msra.mxu0 0.0
    %4180 = vmatprep.subr.mxu0 0.0
    %4181 = vmatpush1.msra.mxu0 0.0
    %4182 = vmatprep.subr.mxu0 0.0
    %4183 = vmatpush1.msra.mxu0 0.0
    %4184 = vmatprep.subr.mxu0 0.0
    %4185 = vmatpush1.msra.mxu0 0.0
    %4186 = vmatprep.subr.mxu0 0.0
    %4187 = vmatpush1.msra.mxu0 0.0
    %4188 = vmatprep.subr.mxu0 0.0
    %4189 = vmatpush1.msra.mxu0 0.0
    %4190 = vmatprep.subr.mxu0 0.0
    %4191 = vmatpush1.msra.mxu0 0.0
    %4192 = vmatprep.subr.mxu0 0.0
    %4193 = vmatpush1.msra.mxu0 0.0
    %4194 = vmatprep.subr.mxu0 0.0
    %4195 = vmatpush1.msra.mxu0 0.0
    %4196 = vmatprep.subr.mxu0 0.0
    %4197 = vmatpush1.msra.mxu0 0.0
    %4198 = vmatprep.subr.mxu0 0.0
    %4199 = vmatpush1.msra.mxu0 %v2605
    %4200 = vmatprep.subr.mxu0 0.0
    %4201 = vmatpush2.msra.mxu0 0.0
    %4202 = vmatprep.subr.mxu0 0.0
    %4203 = vmatpush2.msra.mxu0 0.0
    %4204 = vmatprep.subr.mxu0 0.0
    %4205 = vmatpush2.msra.mxu0 0.0
    %4206 = vmatprep.subr.mxu0 0.0
    %4207 = vmatpush2.msra.mxu0 0.0
    %4208 = vmatprep.subr.mxu0 0.0
    %4209 = vmatpush2.msra.mxu0 0.0
    %4210 = vmatprep.subr.mxu0 0.0
    %4211 = vmatpush2.msra.mxu0 0.0
    %4212 = vmatprep.subr.mxu0 0.0
    %4213 = vmatpush2.msra.mxu0 0.0
    %4214 = vmatprep.subr.mxu0 0.0
    %4215 = vmatpush2.msra.mxu0 0.0
    %4216 = vmatprep.subr.mxu0 0.0
    %4217 = vmatpush2.msra.mxu0 0.0
    %4218 = vmatprep.subr.mxu0 0.0
    %4219 = vmatpush2.msra.mxu0 0.0
    %4220 = vmatprep.subr.mxu0 0.0
    %4221 = vmatpush2.msra.mxu0 0.0
    %4222 = vmatprep.subr.mxu0 0.0
    %4223 = vmatpush2.msra.mxu0 0.0
    %4224 = vmatprep.subr.mxu0 0.0
    %4225 = vmatpush2.msra.mxu0 0.0
    %4226 = vmatprep.subr.mxu0 0.0
    %4227 = vmatpush2.msra.mxu0 0.0
    %4228 = vmatprep.subr.mxu0 0.0
    %4229 = vmatpush2.msra.mxu0 0.0
    %4230 = vmatprep.subr.mxu0 0.0
    %4231 = vmatpush2.msra.mxu0 0.0
    %4232 = vmatprep.mubr.f32.mxu0 0.0
    %4233 = vmatmul.mubr.f32.gmra.mxu0 %v4166
    %v4234 = vpop.f32.mrf.mxu0
    %v4235 = vadd.f32 %v2872, %v4234
    %v4236 = vpop.f32.mrf.mxu0
    %4237 = vdwg.mxu0
    %v4238 = vsel %vm387, %v4235, -inf
    %4239 = vmax.xlane.f32.xlu0 %v4238
    %v4240 = vpop.xlane.xlu0 %4239
    %v4241 = vsub.f32 %v4235, %v4240
    %v4242 = vmul.f32 %v4241, 1.442695
    %v4243 = vpow.pop %v4242
    %v4244 = vsel %vm387, %v4243, 0.0
    %4245 = vadd.xlane.f32.xlu0 %v4244
    %v4246 = vpop.xlane.xlu0 %4245
    %v4247 = vlog2.pop %v4246
    %v4248 = vmul.f32 %v4247, 0.6931472
    %v4249 = vsub.f32 %v4241, %v4248
    %4250 = vrot.lane.b32.xlu0 %v2700, 112
    %v4251 = vpop.permute.xlu0 %4250
    %4252 = vrot.lane.b32.xlu0 %v2700, 80
    %v4253 = vpop.permute.xlu0 %4252
    %v4254 = vsel %vm146, %v4251, 0
    %v4256 = vsel %vm146, %v4253, 0
    %4258 = vmatprep.subr.mxu0 0.0
    %4259 = vmatpush1.xpose.msra.mxu0 0.0
    %4260 = vmatprep.subr.mxu0 0.0
    %4261 = vmatpush1.xpose.msra.mxu0 0.0
    %4262 = vmatprep.subr.mxu0 0.0
    %4263 = vmatpush1.xpose.msra.mxu0 0.0
    %4264 = vmatprep.subr.mxu0 0.0
    %4265 = vmatpush1.xpose.msra.mxu0 0.0
    %4266 = vmatprep.subr.mxu0 0.0
    %4267 = vmatpush1.xpose.msra.mxu0 0.0
    %4268 = vmatprep.subr.mxu0 0.0
    %4269 = vmatpush1.xpose.msra.mxu0 0.0
    %4270 = vmatprep.subr.mxu0 0.0
    %4271 = vmatpush1.xpose.msra.mxu0 0.0
    %4272 = vmatprep.subr.mxu0 0.0
    %4273 = vmatpush1.xpose.msra.mxu0 0.0
    %4274 = vmatprep.subr.mxu0 0.0
    %4275 = vmatpush1.xpose.msra.mxu0 0.0
    %4276 = vmatprep.subr.mxu0 0.0
    %4277 = vmatpush1.xpose.msra.mxu0 0.0
    %4278 = vmatprep.subr.mxu0 0.0
    %4279 = vmatpush1.xpose.msra.mxu0 0.0
    %4280 = vmatprep.subr.mxu0 0.0
    %4281 = vmatpush1.xpose.msra.mxu0 0.0
    %4282 = vmatprep.subr.mxu0 0.0
    %4283 = vmatpush1.xpose.msra.mxu0 0.0
    %4284 = vmatprep.subr.mxu0 0.0
    %4285 = vmatpush1.xpose.msra.mxu0 0.0
    %4286 = vmatprep.subr.mxu0 0.0
    %4287 = vmatpush1.xpose.msra.mxu0 0.0
    %4288 = vmatprep.subr.mxu0 0.0
    %4289 = vmatpush1.xpose.msra.mxu0 %v4256
    %4290 = vmatprep.subr.mxu0 0.0
    %4291 = vmatpush2.xpose.msra.mxu0 0.0
    %4292 = vmatprep.subr.mxu0 0.0
    %4293 = vmatpush2.xpose.msra.mxu0 0.0
    %4294 = vmatprep.subr.mxu0 0.0
    %4295 = vmatpush2.xpose.msra.mxu0 0.0
    %4296 = vmatprep.subr.mxu0 0.0
    %4297 = vmatpush2.xpose.msra.mxu0 0.0
    %4298 = vmatprep.subr.mxu0 0.0
    %4299 = vmatpush2.xpose.msra.mxu0 0.0
    %4300 = vmatprep.subr.mxu0 0.0
    %4301 = vmatpush2.xpose.msra.mxu0 0.0
    %4302 = vmatprep.subr.mxu0 0.0
    %4303 = vmatpush2.xpose.msra.mxu0 0.0
    %4304 = vmatprep.subr.mxu0 0.0
    %4305 = vmatpush2.xpose.msra.mxu0 0.0
    %4306 = vmatprep.subr.mxu0 0.0
    %4307 = vmatpush2.xpose.msra.mxu0 0.0
    %4308 = vmatprep.subr.mxu0 0.0
    %4309 = vmatpush2.xpose.msra.mxu0 0.0
    %4310 = vmatprep.subr.mxu0 0.0
    %4311 = vmatpush2.xpose.msra.mxu0 0.0
    %4312 = vmatprep.subr.mxu0 0.0
    %4313 = vmatpush2.xpose.msra.mxu0 0.0
    %4314 = vmatprep.subr.mxu0 0.0
    %4315 = vmatpush2.xpose.msra.mxu0 0.0
    %4316 = vmatprep.subr.mxu0 0.0
    %4317 = vmatpush2.xpose.msra.mxu0 0.0
    %4318 = vmatprep.subr.mxu0 0.0
    %4319 = vmatpush2.xpose.msra.mxu0 0.0
    %4320 = vmatprep.subr.mxu0 0.0
    %4321 = vmatpush2.xpose.msra.mxu0 0.0
    %4322 = vmatprep.mubr.f32.mxu0 0.0
    %4323 = vmatmul.mubr.f32.gmra.mxu0 %v4254
    %v4324 = vpop.f32.mrf.mxu0
    %v4325 = vadd.f32 0.0, %v4324
    %v4326 = vpop.f32.mrf.mxu0
    %4327 = vdwg.mxu0
    %v4328 = vmul.f32 %v4325, 0.35355338
    %v4329 = vadd.f32 %v4328, %v28
    %v4330 = vsel %vm146, %v4329, -inf
    %4331 = vmax.xlane.f32.xlu0 %v4330
    %v4332 = vpop.xlane.xlu0 %4331
    %v4333 = vsub.f32 %v4329, %v4332
    %v4334 = vmul.f32 %v4333, 1.442695
    %v4335 = vpow.pop %v4334
    %v4336 = vsel %vm146, %v4335, 0.0
    %4337 = vadd.xlane.f32.xlu0 %v4336
    %v4338 = vpop.xlane.xlu0 %4337
    %v4339 = vrcp.pop %v4338
    %v4340 = vmul.f32 %v4335, %v4339
    %4341 = vrot.lane.b32.xlu0 %v2700, 48
    %v4342 = vpop.permute.xlu0 %4341
    %v4345 = vsel %vm146, %v4340, 0
    %4347 = vmatprep.subr.mxu0 0.0
    %4348 = vmatpush1.msra.mxu0 0.0
    %4349 = vmatprep.subr.mxu0 0.0
    %4350 = vmatpush1.msra.mxu0 0.0
    %4351 = vmatprep.subr.mxu0 0.0
    %4352 = vmatpush1.msra.mxu0 0.0
    %4353 = vmatprep.subr.mxu0 0.0
    %4354 = vmatpush1.msra.mxu0 0.0
    %4355 = vmatprep.subr.mxu0 0.0
    %4356 = vmatpush1.msra.mxu0 0.0
    %4357 = vmatprep.subr.mxu0 0.0
    %4358 = vmatpush1.msra.mxu0 0.0
    %4359 = vmatprep.subr.mxu0 0.0
    %4360 = vmatpush1.msra.mxu0 0.0
    %4361 = vmatprep.subr.mxu0 0.0
    %4362 = vmatpush1.msra.mxu0 0.0
    %4363 = vmatprep.subr.mxu0 0.0
    %4364 = vmatpush1.msra.mxu0 0.0
    %4365 = vmatprep.subr.mxu0 0.0
    %4366 = vmatpush1.msra.mxu0 0.0
    %4367 = vmatprep.subr.mxu0 0.0
    %4368 = vmatpush1.msra.mxu0 0.0
    %4369 = vmatprep.subr.mxu0 0.0
    %4370 = vmatpush1.msra.mxu0 0.0
    %4371 = vmatprep.subr.mxu0 0.0
    %4372 = vmatpush1.msra.mxu0 0.0
    %4373 = vmatprep.subr.mxu0 0.0
    %4374 = vmatpush1.msra.mxu0 0.0
    %4375 = vmatprep.subr.mxu0 0.0
    %4376 = vmatpush1.msra.mxu0 0.0
    %4377 = vmatprep.subr.mxu0 0.0
    %4378 = vmatpush1.msra.mxu0 %v4342
    %4379 = vmatprep.subr.mxu0 0.0
    %4380 = vmatpush2.msra.mxu0 0.0
    %4381 = vmatprep.subr.mxu0 0.0
    %4382 = vmatpush2.msra.mxu0 0.0
    %4383 = vmatprep.subr.mxu0 0.0
    %4384 = vmatpush2.msra.mxu0 0.0
    %4385 = vmatprep.subr.mxu0 0.0
    %4386 = vmatpush2.msra.mxu0 0.0
    %4387 = vmatprep.subr.mxu0 0.0
    %4388 = vmatpush2.msra.mxu0 0.0
    %4389 = vmatprep.subr.mxu0 0.0
    %4390 = vmatpush2.msra.mxu0 0.0
    %4391 = vmatprep.subr.mxu0 0.0
    %4392 = vmatpush2.msra.mxu0 0.0
    %4393 = vmatprep.subr.mxu0 0.0
    %4394 = vmatpush2.msra.mxu0 0.0
    %4395 = vmatprep.subr.mxu0 0.0
    %4396 = vmatpush2.msra.mxu0 0.0
    %4397 = vmatprep.subr.mxu0 0.0
    %4398 = vmatpush2.msra.mxu0 0.0
    %4399 = vmatprep.subr.mxu0 0.0
    %4400 = vmatpush2.msra.mxu0 0.0
    %4401 = vmatprep.subr.mxu0 0.0
    %4402 = vmatpush2.msra.mxu0 0.0
    %4403 = vmatprep.subr.mxu0 0.0
    %4404 = vmatpush2.msra.mxu0 0.0
    %4405 = vmatprep.subr.mxu0 0.0
    %4406 = vmatpush2.msra.mxu0 0.0
    %4407 = vmatprep.subr.mxu0 0.0
    %4408 = vmatpush2.msra.mxu0 0.0
    %4409 = vmatprep.subr.mxu0 0.0
    %4410 = vmatpush2.msra.mxu0 0.0
    %4411 = vmatprep.mubr.f32.mxu0 0.0
    %4412 = vmatmul.mubr.f32.gmra.mxu0 %v4345
    %v4413 = vpop.f32.mrf.mxu0
    %v4414 = vadd.f32 0.0, %v4413
    %v4415 = vpop.f32.mrf.mxu0
    %4416 = vdwg.mxu0
    %v4418 = vsel %vm146, %v4414, 0
    %4420 = vmatprep.subr.mxu0 0.0
    %4421 = vmatpush1.msra.mxu0 0.0
    %4422 = vmatprep.subr.mxu0 0.0
    %4423 = vmatpush1.msra.mxu0 0.0
    %4424 = vmatprep.subr.mxu0 0.0
    %4425 = vmatpush1.msra.mxu0 0.0
    %4426 = vmatprep.subr.mxu0 0.0
    %4427 = vmatpush1.msra.mxu0 0.0
    %4428 = vmatprep.subr.mxu0 0.0
    %4429 = vmatpush1.msra.mxu0 0.0
    %4430 = vmatprep.subr.mxu0 0.0
    %4431 = vmatpush1.msra.mxu0 0.0
    %4432 = vmatprep.subr.mxu0 0.0
    %4433 = vmatpush1.msra.mxu0 0.0
    %4434 = vmatprep.subr.mxu0 0.0
    %4435 = vmatpush1.msra.mxu0 0.0
    %4436 = vmatprep.subr.mxu0 0.0
    %4437 = vmatpush1.msra.mxu0 0.0
    %4438 = vmatprep.subr.mxu0 0.0
    %4439 = vmatpush1.msra.mxu0 0.0
    %4440 = vmatprep.subr.mxu0 0.0
    %4441 = vmatpush1.msra.mxu0 0.0
    %4442 = vmatprep.subr.mxu0 0.0
    %4443 = vmatpush1.msra.mxu0 0.0
    %4444 = vmatprep.subr.mxu0 0.0
    %4445 = vmatpush1.msra.mxu0 0.0
    %4446 = vmatprep.subr.mxu0 0.0
    %4447 = vmatpush1.msra.mxu0 0.0
    %4448 = vmatprep.subr.mxu0 0.0
    %4449 = vmatpush1.msra.mxu0 0.0
    %4450 = vmatprep.subr.mxu0 0.0
    %4451 = vmatpush1.msra.mxu0 %v2605
    %4452 = vmatprep.subr.mxu0 0.0
    %4453 = vmatpush2.msra.mxu0 0.0
    %4454 = vmatprep.subr.mxu0 0.0
    %4455 = vmatpush2.msra.mxu0 0.0
    %4456 = vmatprep.subr.mxu0 0.0
    %4457 = vmatpush2.msra.mxu0 0.0
    %4458 = vmatprep.subr.mxu0 0.0
    %4459 = vmatpush2.msra.mxu0 0.0
    %4460 = vmatprep.subr.mxu0 0.0
    %4461 = vmatpush2.msra.mxu0 0.0
    %4462 = vmatprep.subr.mxu0 0.0
    %4463 = vmatpush2.msra.mxu0 0.0
    %4464 = vmatprep.subr.mxu0 0.0
    %4465 = vmatpush2.msra.mxu0 0.0
    %4466 = vmatprep.subr.mxu0 0.0
    %4467 = vmatpush2.msra.mxu0 0.0
    %4468 = vmatprep.subr.mxu0 0.0
    %4469 = vmatpush2.msra.mxu0 0.0
    %4470 = vmatprep.subr.mxu0 0.0
    %4471 = vmatpush2.msra.mxu0 0.0
    %4472 = vmatprep.subr.mxu0 0.0
    %4473 = vmatpush2.msra.mxu0 0.0
    %4474 = vmatprep.subr.mxu0 0.0
    %4475 = vmatpush2.msra.mxu0 0.0
    %4476 = vmatprep.subr.mxu0 0.0
    %4477 = vmatpush2.msra.mxu0 0.0
    %4478 = vmatprep.subr.mxu0 0.0
    %4479 = vmatpush2.msra.mxu0 0.0
    %4480 = vmatprep.subr.mxu0 0.0
    %4481 = vmatpush2.msra.mxu0 0.0
    %4482 = vmatprep.subr.mxu0 0.0
    %4483 = vmatpush2.msra.mxu0 0.0
    %4484 = vmatprep.mubr.f32.mxu0 0.0
    %4485 = vmatmul.mubr.f32.gmra.mxu0 %v4418
    %v4486 = vpop.f32.mrf.mxu0
    %v4487 = vadd.f32 %v2872, %v4486
    %v4488 = vpop.f32.mrf.mxu0
    %4489 = vdwg.mxu0
    %v4490 = vsel %vm387, %v4487, -inf
    %4491 = vmax.xlane.f32.xlu0 %v4490
    %v4492 = vpop.xlane.xlu0 %4491
    %v4493 = vsub.f32 %v4487, %v4492
    %v4494 = vmul.f32 %v4493, 1.442695
    %v4495 = vpow.pop %v4494
    %v4496 = vsel %vm387, %v4495, 0.0
    %4497 = vadd.xlane.f32.xlu0 %v4496
    %v4498 = vpop.xlane.xlu0 %4497
    %v4499 = vlog2.pop %v4498
    %v4500 = vmul.f32 %v4499, 0.6931472
    %v4501 = vsub.f32 %v4493, %v4500
    %4502 = vrot.lane.b32.xlu0 %v2700, 104
    %v4503 = vpop.permute.xlu0 %4502
    %4504 = vrot.lane.b32.xlu0 %v2700, 72
    %v4505 = vpop.permute.xlu0 %4504
    %v4506 = vsel %vm146, %v4503, 0
    %v4508 = vsel %vm146, %v4505, 0
    %4510 = vmatprep.subr.mxu0 0.0
    %4511 = vmatpush1.xpose.msra.mxu0 0.0
    %4512 = vmatprep.subr.mxu0 0.0
    %4513 = vmatpush1.xpose.msra.mxu0 0.0
    %4514 = vmatprep.subr.mxu0 0.0
    %4515 = vmatpush1.xpose.msra.mxu0 0.0
    %4516 = vmatprep.subr.mxu0 0.0
    %4517 = vmatpush1.xpose.msra.mxu0 0.0
    %4518 = vmatprep.subr.mxu0 0.0
    %4519 = vmatpush1.xpose.msra.mxu0 0.0
    %4520 = vmatprep.subr.mxu0 0.0
    %4521 = vmatpush1.xpose.msra.mxu0 0.0
    %4522 = vmatprep.subr.mxu0 0.0
    %4523 = vmatpush1.xpose.msra.mxu0 0.0
    %4524 = vmatprep.subr.mxu0 0.0
    %4525 = vmatpush1.xpose.msra.mxu0 0.0
    %4526 = vmatprep.subr.mxu0 0.0
    %4527 = vmatpush1.xpose.msra.mxu0 0.0
    %4528 = vmatprep.subr.mxu0 0.0
    %4529 = vmatpush1.xpose.msra.mxu0 0.0
    %4530 = vmatprep.subr.mxu0 0.0
    %4531 = vmatpush1.xpose.msra.mxu0 0.0
    %4532 = vmatprep.subr.mxu0 0.0
    %4533 = vmatpush1.xpose.msra.mxu0 0.0
    %4534 = vmatprep.subr.mxu0 0.0
    %4535 = vmatpush1.xpose.msra.mxu0 0.0
    %4536 = vmatprep.subr.mxu0 0.0
    %4537 = vmatpush1.xpose.msra.mxu0 0.0
    %4538 = vmatprep.subr.mxu0 0.0
    %4539 = vmatpush1.xpose.msra.mxu0 0.0
    %4540 = vmatprep.subr.mxu0 0.0
    %4541 = vmatpush1.xpose.msra.mxu0 %v4508
    %4542 = vmatprep.subr.mxu0 0.0
    %4543 = vmatpush2.xpose.msra.mxu0 0.0
    %4544 = vmatprep.subr.mxu0 0.0
    %4545 = vmatpush2.xpose.msra.mxu0 0.0
    %4546 = vmatprep.subr.mxu0 0.0
    %4547 = vmatpush2.xpose.msra.mxu0 0.0
    %4548 = vmatprep.subr.mxu0 0.0
    %4549 = vmatpush2.xpose.msra.mxu0 0.0
    %4550 = vmatprep.subr.mxu0 0.0
    %4551 = vmatpush2.xpose.msra.mxu0 0.0
    %4552 = vmatprep.subr.mxu0 0.0
    %4553 = vmatpush2.xpose.msra.mxu0 0.0
    %4554 = vmatprep.subr.mxu0 0.0
    %4555 = vmatpush2.xpose.msra.mxu0 0.0
    %4556 = vmatprep.subr.mxu0 0.0
    %4557 = vmatpush2.xpose.msra.mxu0 0.0
    %4558 = vmatprep.subr.mxu0 0.0
    %4559 = vmatpush2.xpose.msra.mxu0 0.0
    %4560 = vmatprep.subr.mxu0 0.0
    %4561 = vmatpush2.xpose.msra.mxu0 0.0
    %4562 = vmatprep.subr.mxu0 0.0
    %4563 = vmatpush2.xpose.msra.mxu0 0.0
    %4564 = vmatprep.subr.mxu0 0.0
    %4565 = vmatpush2.xpose.msra.mxu0 0.0
    %4566 = vmatprep.subr.mxu0 0.0
    %4567 = vmatpush2.xpose.msra.mxu0 0.0
    %4568 = vmatprep.subr.mxu0 0.0
    %4569 = vmatpush2.xpose.msra.mxu0 0.0
    %4570 = vmatprep.subr.mxu0 0.0
    %4571 = vmatpush2.xpose.msra.mxu0 0.0
    %4572 = vmatprep.subr.mxu0 0.0
    %4573 = vmatpush2.xpose.msra.mxu0 0.0
    %4574 = vmatprep.mubr.f32.mxu0 0.0
    %4575 = vmatmul.mubr.f32.gmra.mxu0 %v4506
    %v4576 = vpop.f32.mrf.mxu0
    %v4577 = vadd.f32 0.0, %v4576
    %v4578 = vpop.f32.mrf.mxu0
    %4579 = vdwg.mxu0
    %v4580 = vmul.f32 %v4577, 0.35355338
    %v4581 = vadd.f32 %v4580, %v28
    %v4582 = vsel %vm146, %v4581, -inf
    %4583 = vmax.xlane.f32.xlu0 %v4582
    %v4584 = vpop.xlane.xlu0 %4583
    %v4585 = vsub.f32 %v4581, %v4584
    %v4586 = vmul.f32 %v4585, 1.442695
    %v4587 = vpow.pop %v4586
    %v4588 = vsel %vm146, %v4587, 0.0
    %4589 = vadd.xlane.f32.xlu0 %v4588
    %v4590 = vpop.xlane.xlu0 %4589
    %v4591 = vrcp.pop %v4590
    %v4592 = vmul.f32 %v4587, %v4591
    %4593 = vrot.lane.b32.xlu0 %v2700, 40
    %v4594 = vpop.permute.xlu0 %4593
    %v4597 = vsel %vm146, %v4592, 0
    %4599 = vmatprep.subr.mxu0 0.0
    %4600 = vmatpush1.msra.mxu0 0.0
    %4601 = vmatprep.subr.mxu0 0.0
    %4602 = vmatpush1.msra.mxu0 0.0
    %4603 = vmatprep.subr.mxu0 0.0
    %4604 = vmatpush1.msra.mxu0 0.0
    %4605 = vmatprep.subr.mxu0 0.0
    %4606 = vmatpush1.msra.mxu0 0.0
    %4607 = vmatprep.subr.mxu0 0.0
    %4608 = vmatpush1.msra.mxu0 0.0
    %4609 = vmatprep.subr.mxu0 0.0
    %4610 = vmatpush1.msra.mxu0 0.0
    %4611 = vmatprep.subr.mxu0 0.0
    %4612 = vmatpush1.msra.mxu0 0.0
    %4613 = vmatprep.subr.mxu0 0.0
    %4614 = vmatpush1.msra.mxu0 0.0
    %4615 = vmatprep.subr.mxu0 0.0
    %4616 = vmatpush1.msra.mxu0 0.0
    %4617 = vmatprep.subr.mxu0 0.0
    %4618 = vmatpush1.msra.mxu0 0.0
    %4619 = vmatprep.subr.mxu0 0.0
    %4620 = vmatpush1.msra.mxu0 0.0
    %4621 = vmatprep.subr.mxu0 0.0
    %4622 = vmatpush1.msra.mxu0 0.0
    %4623 = vmatprep.subr.mxu0 0.0
    %4624 = vmatpush1.msra.mxu0 0.0
    %4625 = vmatprep.subr.mxu0 0.0
    %4626 = vmatpush1.msra.mxu0 0.0
    %4627 = vmatprep.subr.mxu0 0.0
    %4628 = vmatpush1.msra.mxu0 0.0
    %4629 = vmatprep.subr.mxu0 0.0
    %4630 = vmatpush1.msra.mxu0 %v4594
    %4631 = vmatprep.subr.mxu0 0.0
    %4632 = vmatpush2.msra.mxu0 0.0
    %4633 = vmatprep.subr.mxu0 0.0
    %4634 = vmatpush2.msra.mxu0 0.0
    %4635 = vmatprep.subr.mxu0 0.0
    %4636 = vmatpush2.msra.mxu0 0.0
    %4637 = vmatprep.subr.mxu0 0.0
    %4638 = vmatpush2.msra.mxu0 0.0
    %4639 = vmatprep.subr.mxu0 0.0
    %4640 = vmatpush2.msra.mxu0 0.0
    %4641 = vmatprep.subr.mxu0 0.0
    %4642 = vmatpush2.msra.mxu0 0.0
    %4643 = vmatprep.subr.mxu0 0.0
    %4644 = vmatpush2.msra.mxu0 0.0
    %4645 = vmatprep.subr.mxu0 0.0
    %4646 = vmatpush2.msra.mxu0 0.0
    %4647 = vmatprep.subr.mxu0 0.0
    %4648 = vmatpush2.msra.mxu0 0.0
    %4649 = vmatprep.subr.mxu0 0.0
    %4650 = vmatpush2.msra.mxu0 0.0
    %4651 = vmatprep.subr.mxu0 0.0
    %4652 = vmatpush2.msra.mxu0 0.0
    %4653 = vmatprep.subr.mxu0 0.0
    %4654 = vmatpush2.msra.mxu0 0.0
    %4655 = vmatprep.subr.mxu0 0.0
    %4656 = vmatpush2.msra.mxu0 0.0
    %4657 = vmatprep.subr.mxu0 0.0
    %4658 = vmatpush2.msra.mxu0 0.0
    %4659 = vmatprep.subr.mxu0 0.0
    %4660 = vmatpush2.msra.mxu0 0.0
    %4661 = vmatprep.subr.mxu0 0.0
    %4662 = vmatpush2.msra.mxu0 0.0
    %4663 = vmatprep.mubr.f32.mxu0 0.0
    %4664 = vmatmul.mubr.f32.gmra.mxu0 %v4597
    %v4665 = vpop.f32.mrf.mxu0
    %v4666 = vadd.f32 0.0, %v4665
    %v4667 = vpop.f32.mrf.mxu0
    %4668 = vdwg.mxu0
    %v4670 = vsel %vm146, %v4666, 0
    %4672 = vmatprep.subr.mxu0 0.0
    %4673 = vmatpush1.msra.mxu0 0.0
    %4674 = vmatprep.subr.mxu0 0.0
    %4675 = vmatpush1.msra.mxu0 0.0
    %4676 = vmatprep.subr.mxu0 0.0
    %4677 = vmatpush1.msra.mxu0 0.0
    %4678 = vmatprep.subr.mxu0 0.0
    %4679 = vmatpush1.msra.mxu0 0.0
    %4680 = vmatprep.subr.mxu0 0.0
    %4681 = vmatpush1.msra.mxu0 0.0
    %4682 = vmatprep.subr.mxu0 0.0
    %4683 = vmatpush1.msra.mxu0 0.0
    %4684 = vmatprep.subr.mxu0 0.0
    %4685 = vmatpush1.msra.mxu0 0.0
    %4686 = vmatprep.subr.mxu0 0.0
    %4687 = vmatpush1.msra.mxu0 0.0
    %4688 = vmatprep.subr.mxu0 0.0
    %4689 = vmatpush1.msra.mxu0 0.0
    %4690 = vmatprep.subr.mxu0 0.0
    %4691 = vmatpush1.msra.mxu0 0.0
    %4692 = vmatprep.subr.mxu0 0.0
    %4693 = vmatpush1.msra.mxu0 0.0
    %4694 = vmatprep.subr.mxu0 0.0
    %4695 = vmatpush1.msra.mxu0 0.0
    %4696 = vmatprep.subr.mxu0 0.0
    %4697 = vmatpush1.msra.mxu0 0.0
    %4698 = vmatprep.subr.mxu0 0.0
    %4699 = vmatpush1.msra.mxu0 0.0
    %4700 = vmatprep.subr.mxu0 0.0
    %4701 = vmatpush1.msra.mxu0 0.0
    %4702 = vmatprep.subr.mxu0 0.0
    %4703 = vmatpush1.msra.mxu0 %v2605
    %4704 = vmatprep.subr.mxu0 0.0
    %4705 = vmatpush2.msra.mxu0 0.0
    %4706 = vmatprep.subr.mxu0 0.0
    %4707 = vmatpush2.msra.mxu0 0.0
    %4708 = vmatprep.subr.mxu0 0.0
    %4709 = vmatpush2.msra.mxu0 0.0
    %4710 = vmatprep.subr.mxu0 0.0
    %4711 = vmatpush2.msra.mxu0 0.0
    %4712 = vmatprep.subr.mxu0 0.0
    %4713 = vmatpush2.msra.mxu0 0.0
    %4714 = vmatprep.subr.mxu0 0.0
    %4715 = vmatpush2.msra.mxu0 0.0
    %4716 = vmatprep.subr.mxu0 0.0
    %4717 = vmatpush2.msra.mxu0 0.0
    %4718 = vmatprep.subr.mxu0 0.0
    %4719 = vmatpush2.msra.mxu0 0.0
    %4720 = vmatprep.subr.mxu0 0.0
    %4721 = vmatpush2.msra.mxu0 0.0
    %4722 = vmatprep.subr.mxu0 0.0
    %4723 = vmatpush2.msra.mxu0 0.0
    %4724 = vmatprep.subr.mxu0 0.0
    %4725 = vmatpush2.msra.mxu0 0.0
    %4726 = vmatprep.subr.mxu0 0.0
    %4727 = vmatpush2.msra.mxu0 0.0
    %4728 = vmatprep.subr.mxu0 0.0
    %4729 = vmatpush2.msra.mxu0 0.0
    %4730 = vmatprep.subr.mxu0 0.0
    %4731 = vmatpush2.msra.mxu0 0.0
    %4732 = vmatprep.subr.mxu0 0.0
    %4733 = vmatpush2.msra.mxu0 0.0
    %4734 = vmatprep.subr.mxu0 0.0
    %4735 = vmatpush2.msra.mxu0 0.0
    %4736 = vmatprep.mubr.f32.mxu0 0.0
    %4737 = vmatmul.mubr.f32.gmra.mxu0 %v4670
    %v4738 = vpop.f32.mrf.mxu0
    %v4739 = vadd.f32 %v2872, %v4738
    %v4740 = vpop.f32.mrf.mxu0
    %4741 = vdwg.mxu0
    %v4742 = vsel %vm387, %v4739, -inf
    %4743 = vmax.xlane.f32.xlu0 %v4742
    %v4744 = vpop.xlane.xlu0 %4743
    %v4745 = vsub.f32 %v4739, %v4744
    %v4746 = vmul.f32 %v4745, 1.442695
    %v4747 = vpow.pop %v4746
    %v4748 = vsel %vm387, %v4747, 0.0
    %4749 = vadd.xlane.f32.xlu0 %v4748
    %v4750 = vpop.xlane.xlu0 %4749
    %v4751 = vlog2.pop %v4750
    %v4752 = vmul.f32 %v4751, 0.6931472
    %v4753 = vsub.f32 %v4745, %v4752
    %4754 = vrot.lane.b32.xlu0 %v4162, 8
    %v4755 = vpop.permute.xlu0 %4754
    %4757 = vrot.lane.b32.xlu0 %v4414, 16
    %v4758 = vpop.permute.xlu0 %4757
    %4760 = vrot.lane.b32.xlu0 %v4666, 24
    %v4761 = vpop.permute.xlu0 %4760
    %v4763 = vsel %vm146, %v3910, %v4755
    %v4764 = vsel %vm1166, %v4763, %v4758
    %v4765 = vsel %vm1168, %v4764, %v4761
    %4767 = vrot.lane.b32.xlu0 %v4249, 4
    %v4768 = vpop.permute.xlu0 %4767
    %4771 = vrot.lane.b32.xlu0 %v4501, 8
    %v4772 = vpop.permute.xlu0 %4771
    %4775 = vrot.lane.b32.xlu0 %v4753, 12
    %v4776 = vpop.permute.xlu0 %4775
    %v4778 = vsel %vm387, %v3997, %v4768
    %v4779 = vsel %vm146, %v4778, %v4772
    %v4780 = vsel %vm1184, %v4779, %v4776
    %4782 = vrot.lane.b32.xlu0 %v4780, 112
    %v4783 = vpop.permute.xlu0 %4782
    %4785 = vst.msk [vmem:[#allocation2 + $0x8] sm:$0xff] %vm3745, %v4783
    %v4786 = vlaneseq
    %v4787 = vshrl.u32 %v4786, 7
    %v4788 = vsub.s32 1, %v4787
    %v4789 = vrot.slane %v2607, %v4788
    %4794 = vrot.lane.b32.xlu0 %v2587, 32
    %v4795 = vpop.permute.xlu0 %4794
    %4796 = vrot.lane.b32.xlu0 %v2589, 32
    %v4797 = vpop.permute.xlu0 %4796
    %4798 = vrot.lane.b32.xlu0 %v2591, 32
    %v4799 = vpop.permute.xlu0 %4798
    %4800 = vrot.lane.b32.xlu0 %v2593, 32
    %v4801 = vpop.permute.xlu0 %4800
    %v4807 = vsel %vm63, %v3725, 0
    %v4810 = vsel %vm63, %v4765, 0
    %4812 = vmatprep.subr.mxu0 0.0
    %4813 = vmatpush1.msra.mxu0 0.0
    %4814 = vmatprep.subr.mxu0 0.0
    %4815 = vmatpush1.msra.mxu0 0.0
    %4816 = vmatprep.subr.mxu0 0.0
    %4817 = vmatpush1.msra.mxu0 0.0
    %4818 = vmatprep.subr.mxu0 0.0
    %4819 = vmatpush1.msra.mxu0 0.0
    %4820 = vmatprep.subr.mxu0 0.0
    %4821 = vmatpush1.msra.mxu0 0.0
    %4822 = vmatprep.subr.mxu0 0.0
    %4823 = vmatpush1.msra.mxu0 0.0
    %4824 = vmatprep.subr.mxu0 0.0
    %4825 = vmatpush1.msra.mxu0 0.0
    %4826 = vmatprep.subr.mxu0 0.0
    %4827 = vmatpush1.msra.mxu0 0.0
    %4828 = vmatprep.subr.mxu0 0.0
    %4829 = vmatpush1.msra.mxu0 0.0
    %4830 = vmatprep.subr.mxu0 0.0
    %4831 = vmatpush1.msra.mxu0 0.0
    %4832 = vmatprep.subr.mxu0 0.0
    %4833 = vmatpush1.msra.mxu0 0.0
    %4834 = vmatprep.subr.mxu0 0.0
    %4835 = vmatpush1.msra.mxu0 0.0
    %4836 = vmatprep.subr.mxu0 0.0
    %4837 = vmatpush1.msra.mxu0 %v4801
    %4838 = vmatprep.subr.mxu0 0.0
    %4839 = vmatpush1.msra.mxu0 %v4799
    %4840 = vmatprep.subr.mxu0 0.0
    %4841 = vmatpush1.msra.mxu0 %v4797
    %4842 = vmatprep.subr.mxu0 0.0
    %4843 = vmatpush1.msra.mxu0 %v4795
    %4844 = vmatprep.subr.mxu0 0.0
    %4845 = vmatpush2.msra.mxu0 0.0
    %4846 = vmatprep.subr.mxu0 0.0
    %4847 = vmatpush2.msra.mxu0 0.0
    %4848 = vmatprep.subr.mxu0 0.0
    %4849 = vmatpush2.msra.mxu0 0.0
    %4850 = vmatprep.subr.mxu0 0.0
    %4851 = vmatpush2.msra.mxu0 0.0
    %4852 = vmatprep.subr.mxu0 0.0
    %4853 = vmatpush2.msra.mxu0 0.0
    %4854 = vmatprep.subr.mxu0 0.0
    %4855 = vmatpush2.msra.mxu0 0.0
    %4856 = vmatprep.subr.mxu0 0.0
    %4857 = vmatpush2.msra.mxu0 0.0
    %4858 = vmatprep.subr.mxu0 0.0
    %4859 = vmatpush2.msra.mxu0 0.0
    %4860 = vmatprep.subr.mxu0 0.0
    %4861 = vmatpush2.msra.mxu0 0.0
    %4862 = vmatprep.subr.mxu0 0.0
    %4863 = vmatpush2.msra.mxu0 0.0
    %4864 = vmatprep.subr.mxu0 0.0
    %4865 = vmatpush2.msra.mxu0 0.0
    %4866 = vmatprep.subr.mxu0 0.0
    %4867 = vmatpush2.msra.mxu0 0.0
    %4868 = vmatprep.subr.mxu0 0.0
    %4869 = vmatpush2.msra.mxu0 0.0
    %4870 = vmatprep.subr.mxu0 0.0
    %4871 = vmatpush2.msra.mxu0 0.0
    %4872 = vmatprep.subr.mxu0 0.0
    %4873 = vmatpush2.msra.mxu0 0.0
    %4874 = vmatprep.subr.mxu0 0.0
    %4875 = vmatpush2.msra.mxu0 0.0
    %4876 = vmatprep.mubr.f32.mxu0 0.0
    %4877 = vmatmul.mubr.f32.gmra.mxu0 %v4807
    %v4878 = vpop.f32.mrf.mxu0
    %v4879 = vadd.f32 %v4789, %v4878
    %v4880 = vpop.f32.mrf.mxu0
    %4881 = vmatprep.mubr.f32.mxu0 0.0
    %4882 = vmatmul.mubr.f32.gmra.mxu0 %v4810
    %v4883 = vpop.f32.mrf.mxu0
    %v4884 = vadd.f32 %v4789, %v4883
    %v4885 = vpop.f32.mrf.mxu0
    %4886 = vdwg.mxu0
    %v4887 = vadd.f32 %v4879, %v2584
    %v4888 = vadd.f32 %v4884, %v2585
    %v4889 = vsel %vm63, %v4887, 0.0
    %4890 = vadd.xlane.f32.xlu0 %v4889
    %v4891 = vpop.xlane.xlu0 %4890
    %v4892 = vsel %vm63, %v4888, 0.0
    %4893 = vadd.xlane.f32.xlu0 %v4892
    %v4894 = vpop.xlane.xlu0 %4893
    %v4895 = vmul.f32 %v4891, %v2340
    %v4896 = vmul.f32 %v4894, %v2340
    %v4897 = vsub.f32 %v4887, %v4895
    %v4898 = vsub.f32 %v4888, %v4896
    %v4899 = vmul.f32 %v4897, %v4897
    %v4900 = vmul.f32 %v4898, %v4898
    %v4901 = vsel %vm63, %v4899, 0.0
    %4902 = vadd.xlane.f32.xlu0 %v4901
    %v4903 = vpop.xlane.xlu0 %4902
    %v4904 = vsel %vm63, %v4900, 0.0
    %4905 = vadd.xlane.f32.xlu0 %v4904
    %v4906 = vpop.xlane.xlu0 %4905
    %v4907 = vmul.f32 %v4903, %v2340
    %v4908 = vmul.f32 %v4906, %v2340
    %v4909 = vadd.f32 %v4907, 1e-05
    %v4910 = vadd.f32 %v4908, 1e-05
    %v4911 = vrsqrt.pop %v4909
    %v4912 = vrsqrt.pop %v4910
    %v4913 = vmul.f32 %v4897, %v4911
    %v4914 = vmul.f32 %v4898, %v4912
    %v4915 = vlaneseq
    %v4916 = vshrl.u32 %v4915, 7
    %v4917 = vsub.s32 4, %v4916
    %v4918 = vrot.slane %v2607, %v4917
    %v4919 = vmul.f32 %v4913, %v4918
    %v4920 = vmul.f32 %v4914, %v4918
    %v4921 = vlaneseq
    %v4922 = vshrl.u32 %v4921, 7
    %v4923 = vsub.s32 5, %v4922
    %v4924 = vrot.slane %v2607, %v4923
    %v4925 = vadd.f32 %v4919, %v4924
    %v4926 = vadd.f32 %v4920, %v4924
    %v4927 = vlaneseq
    %v4928 = vshrl.u32 %v4927, 7
    %v4929 = vsub.s32 2, %v4928
    %v4930 = vrot.slane %v2607, %v4929
    %v4932 = vsel %vm63, %v4925, 0
    %v4935 = vsel %vm63, %v4926, 0
    %4937 = vmatprep.subr.mxu0 0.0
    %4938 = vmatpush1.msra.mxu0 0.0
    %4939 = vmatprep.subr.mxu0 0.0
    %4940 = vmatpush1.msra.mxu0 0.0
    %4941 = vmatprep.subr.mxu0 0.0
    %4942 = vmatpush1.msra.mxu0 0.0
    %4943 = vmatprep.subr.mxu0 0.0
    %4944 = vmatpush1.msra.mxu0 0.0
    %4945 = vmatprep.subr.mxu0 0.0
    %4946 = vmatpush1.msra.mxu0 0.0
    %4947 = vmatprep.subr.mxu0 0.0
    %4948 = vmatpush1.msra.mxu0 0.0
    %4949 = vmatprep.subr.mxu0 0.0
    %4950 = vmatpush1.msra.mxu0 0.0
    %4951 = vmatprep.subr.mxu0 0.0
    %4952 = vmatpush1.msra.mxu0 0.0
    %4953 = vmatprep.subr.mxu0 0.0
    %4954 = vmatpush1.msra.mxu0 0.0
    %4955 = vmatprep.subr.mxu0 0.0
    %4956 = vmatpush1.msra.mxu0 0.0
    %4957 = vmatprep.subr.mxu0 0.0
    %4958 = vmatpush1.msra.mxu0 0.0
    %4959 = vmatprep.subr.mxu0 0.0
    %4960 = vmatpush1.msra.mxu0 0.0
    %4961 = vmatprep.subr.mxu0 0.0
    %4962 = vmatpush1.msra.mxu0 %v2594
    %4963 = vmatprep.subr.mxu0 0.0
    %4964 = vmatpush1.msra.mxu0 %v2592
    %4965 = vmatprep.subr.mxu0 0.0
    %4966 = vmatpush1.msra.mxu0 %v2590
    %4967 = vmatprep.subr.mxu0 0.0
    %4968 = vmatpush1.msra.mxu0 %v2588
    %4969 = vmatprep.subr.mxu0 0.0
    %4970 = vmatpush2.msra.mxu0 0.0
    %4971 = vmatprep.subr.mxu0 0.0
    %4972 = vmatpush2.msra.mxu0 0.0
    %4973 = vmatprep.subr.mxu0 0.0
    %4974 = vmatpush2.msra.mxu0 0.0
    %4975 = vmatprep.subr.mxu0 0.0
    %4976 = vmatpush2.msra.mxu0 0.0
    %4977 = vmatprep.subr.mxu0 0.0
    %4978 = vmatpush2.msra.mxu0 0.0
    %4979 = vmatprep.subr.mxu0 0.0
    %4980 = vmatpush2.msra.mxu0 0.0
    %4981 = vmatprep.subr.mxu0 0.0
    %4982 = vmatpush2.msra.mxu0 0.0
    %4983 = vmatprep.subr.mxu0 0.0
    %4984 = vmatpush2.msra.mxu0 0.0
    %4985 = vmatprep.subr.mxu0 0.0
    %4986 = vmatpush2.msra.mxu0 0.0
    %4987 = vmatprep.subr.mxu0 0.0
    %4988 = vmatpush2.msra.mxu0 0.0
    %4989 = vmatprep.subr.mxu0 0.0
    %4990 = vmatpush2.msra.mxu0 0.0
    %4991 = vmatprep.subr.mxu0 0.0
    %4992 = vmatpush2.msra.mxu0 0.0
    %4993 = vmatprep.subr.mxu0 0.0
    %4994 = vmatpush2.msra.mxu0 0.0
    %4995 = vmatprep.subr.mxu0 0.0
    %4996 = vmatpush2.msra.mxu0 0.0
    %4997 = vmatprep.subr.mxu0 0.0
    %4998 = vmatpush2.msra.mxu0 0.0
    %4999 = vmatprep.subr.mxu0 0.0
    %5000 = vmatpush2.msra.mxu0 0.0
    %5001 = vmatprep.mubr.f32.mxu0 0.0
    %5002 = vmatmul.mubr.f32.gmra.mxu0 %v4932
    %v5003 = vpop.f32.mrf.mxu0
    %v5004 = vadd.f32 %v4930, %v5003
    %v5005 = vpop.f32.mrf.mxu0
    %5006 = vmatprep.mubr.f32.mxu0 0.0
    %5007 = vmatmul.mubr.f32.gmra.mxu0 %v4935
    %v5008 = vpop.f32.mrf.mxu0
    %v5009 = vadd.f32 %v4930, %v5008
    %v5010 = vpop.f32.mrf.mxu0
    %5011 = vdwg.mxu0
    %v5012 = vmax.f32 %v5004, 0.0
    %v5013 = vmax.f32 %v5009, 0.0
    %v5014 = vlaneseq
    %v5015 = vshrl.u32 %v5014, 7
    %v5016 = vsub.s32 3, %v5015
    %v5017 = vrot.slane %v2607, %v5016
    %v5019 = vsel %vm2464, %v5012, 0
    %v5022 = vsel %vm2464, %v5013, 0
    %5024 = vmatprep.subr.mxu0 0.0
    %5025 = vmatpush1.msra.mxu0 0.0
    %5026 = vmatprep.subr.mxu0 0.0
    %5027 = vmatpush1.msra.mxu0 0.0
    %5028 = vmatprep.subr.mxu0 0.0
    %5029 = vmatpush1.msra.mxu0 0.0
    %5030 = vmatprep.subr.mxu0 0.0
    %5031 = vmatpush1.msra.mxu0 0.0
    %5032 = vmatprep.subr.mxu0 0.0
    %5033 = vmatpush1.msra.mxu0 0.0
    %5034 = vmatprep.subr.mxu0 0.0
    %5035 = vmatpush1.msra.mxu0 0.0
    %5036 = vmatprep.subr.mxu0 0.0
    %5037 = vmatpush1.msra.mxu0 0.0
    %5038 = vmatprep.subr.mxu0 0.0
    %5039 = vmatpush1.msra.mxu0 0.0
    %5040 = vmatprep.subr.mxu0 0.0
    %5041 = vmatpush1.msra.mxu0 %v2603
    %5042 = vmatprep.subr.mxu0 0.0
    %5043 = vmatpush1.msra.mxu0 %v2602
    %5044 = vmatprep.subr.mxu0 0.0
    %5045 = vmatpush1.msra.mxu0 %v2601
    %5046 = vmatprep.subr.mxu0 0.0
    %5047 = vmatpush1.msra.mxu0 %v2600
    %5048 = vmatprep.subr.mxu0 0.0
    %5049 = vmatpush1.msra.mxu0 %v2599
    %5050 = vmatprep.subr.mxu0 0.0
    %5051 = vmatpush1.msra.mxu0 %v2598
    %5052 = vmatprep.subr.mxu0 0.0
    %5053 = vmatpush1.msra.mxu0 %v2597
    %5054 = vmatprep.subr.mxu0 0.0
    %5055 = vmatpush1.msra.mxu0 %v2596
    %5056 = vmatprep.subr.mxu0 0.0
    %5057 = vmatpush2.msra.mxu0 0.0
    %5058 = vmatprep.subr.mxu0 0.0
    %5059 = vmatpush2.msra.mxu0 0.0
    %5060 = vmatprep.subr.mxu0 0.0
    %5061 = vmatpush2.msra.mxu0 0.0
    %5062 = vmatprep.subr.mxu0 0.0
    %5063 = vmatpush2.msra.mxu0 0.0
    %5064 = vmatprep.subr.mxu0 0.0
    %5065 = vmatpush2.msra.mxu0 0.0
    %5066 = vmatprep.subr.mxu0 0.0
    %5067 = vmatpush2.msra.mxu0 0.0
    %5068 = vmatprep.subr.mxu0 0.0
    %5069 = vmatpush2.msra.mxu0 0.0
    %5070 = vmatprep.subr.mxu0 0.0
    %5071 = vmatpush2.msra.mxu0 0.0
    %5072 = vmatprep.subr.mxu0 0.0
    %5073 = vmatpush2.msra.mxu0 0.0
    %5074 = vmatprep.subr.mxu0 0.0
    %5075 = vmatpush2.msra.mxu0 0.0
    %5076 = vmatprep.subr.mxu0 0.0
    %5077 = vmatpush2.msra.mxu0 0.0
    %5078 = vmatprep.subr.mxu0 0.0
    %5079 = vmatpush2.msra.mxu0 0.0
    %5080 = vmatprep.subr.mxu0 0.0
    %5081 = vmatpush2.msra.mxu0 0.0
    %5082 = vmatprep.subr.mxu0 0.0
    %5083 = vmatpush2.msra.mxu0 0.0
    %5084 = vmatprep.subr.mxu0 0.0
    %5085 = vmatpush2.msra.mxu0 0.0
    %5086 = vmatprep.subr.mxu0 0.0
    %5087 = vmatpush2.msra.mxu0 0.0
    %5088 = vmatprep.mubr.f32.mxu0 0.0
    %5089 = vmatmul.mubr.f32.gmra.mxu0 %v5019
    %v5090 = vpop.f32.mrf.mxu0
    %v5091 = vadd.f32 %v5017, %v5090
    %v5092 = vpop.f32.mrf.mxu0
    %5093 = vmatprep.mubr.f32.mxu0 0.0
    %5094 = vmatmul.mubr.f32.gmra.mxu0 %v5022
    %v5095 = vpop.f32.mrf.mxu0
    %v5096 = vadd.f32 %v5017, %v5095
    %v5097 = vpop.f32.mrf.mxu0
    %5098 = vdwg.mxu0
    %v5099 = vadd.f32 %v5091, %v4925
    %v5100 = vadd.f32 %v5096, %v4926
    %v5101 = vsel %vm63, %v5099, 0.0
    %5102 = vadd.xlane.f32.xlu0 %v5101
    %v5103 = vpop.xlane.xlu0 %5102
    %v5104 = vsel %vm63, %v5100, 0.0
    %5105 = vadd.xlane.f32.xlu0 %v5104
    %v5106 = vpop.xlane.xlu0 %5105
    %v5107 = vmul.f32 %v5103, %v2340
    %v5108 = vmul.f32 %v5106, %v2340
    %v5109 = vsub.f32 %v5099, %v5107
    %v5110 = vsub.f32 %v5100, %v5108
    %v5111 = vmul.f32 %v5109, %v5109
    %v5112 = vmul.f32 %v5110, %v5110
    %v5113 = vsel %vm63, %v5111, 0.0
    %5114 = vadd.xlane.f32.xlu0 %v5113
    %v5115 = vpop.xlane.xlu0 %5114
    %v5116 = vsel %vm63, %v5112, 0.0
    %5117 = vadd.xlane.f32.xlu0 %v5116
    %v5118 = vpop.xlane.xlu0 %5117
    %v5119 = vmul.f32 %v5115, %v2340
    %v5120 = vmul.f32 %v5118, %v2340
    %v5121 = vadd.f32 %v5119, 1e-05
    %v5122 = vadd.f32 %v5120, 1e-05
    %v5123 = vrsqrt.pop %v5121
    %v5124 = vrsqrt.pop %v5122
    %v5125 = vmul.f32 %v5109, %v5123
    %v5126 = vmul.f32 %v5110, %v5124
    %v5127 = vlaneseq
    %v5128 = vshrl.u32 %v5127, 7
    %v5129 = vsub.s32 6, %v5128
    %v5130 = vrot.slane %v2607, %v5129
    %v5131 = vmul.f32 %v5125, %v5130
    %v5132 = vmul.f32 %v5126, %v5130
    %v5133 = vlaneseq
    %v5134 = vshrl.u32 %v5133, 7
    %v5135 = vsub.s32 7, %v5134
    %v5136 = vrot.slane %v2607, %v5135
    %v5137 = vadd.f32 %v5131, %v5136
    %v5138 = vadd.f32 %v5132, %v5136
    %5139 = vst.msk [vmem:[#allocation2] sm:$0xff] %vm63, %v5137
    %5140 = vst.msk [vmem:[#allocation2 + $0x8] sm:$0xff] %vm63, %v5138
    // Predicated region
    $region26: #{tpu_custom_call.1} parent=1 // pred_check
      _
    $region27: #{tpu_custom_call.1} parent=1 // pred_check_branch
      %5142 = sbr.rel (0) target = $region29
    $region28: #{tpu_custom_call.1} parent=1 // pred_region
      %s5144 = ssub.s32 256, 256
      %5145 = vsyncadd [#allocation3], %s5144
      %s5146 = sshll.u32 [#allocation2], 4
      %s5147 = int_to_ptr.vmem [resolvable:$true] %s5146
      %5152 = dma.vmem_to_hbm [thread:$0]  %s5147, 256, %s6, [#allocation3], 128, 128, 8
    $region29: #{tpu_custom_call.1} parent=1 // pred_fallthru
      _
    // Predicated region
    $region30: #{tpu_custom_call.1} parent=1 // pred_check
      _
    $region31: #{tpu_custom_call.1} parent=1 // pred_check_branch
      %5154 = sbr.rel (0) target = $region33
    $region32: #{tpu_custom_call.1} parent=1 // pred_region
      %5155 = dma.done [#allocation3], 256
    $region33: #{tpu_custom_call.1} parent=1 // pred_fallthru
      _
    %5156 = vsyncpa [#allocation3], 1

</llo_original>
